<compile_context>
chip_gen: v7x
topology: tpu7x:2x2x1
jax: 0.10.0
libtpu: 0.0.40
codegen_flags: <defaults>
</compile_context>

<pallas_src>
import functools
import math

import jax
import jax.numpy as jnp
from jax.experimental import pallas as pl
from jax.experimental.pallas import tpu as pltpu


# --------------------------------------------------------------------------
# Fused whole-network kernel: one batch element per grid step.
# --------------------------------------------------------------------------
def _transformer_kernel(ids_ref, emb_ref, pe_ref,
                        wqkv_ref, bqkv_ref, wo_ref, bo_ref,
                        ln1g_ref, ln1b_ref, w1_ref, b1_ref,
                        w2_ref, b2_ref, ln2g_ref, ln2b_ref,
                        wout_ref, bout_ref, out_ref, *, nhead):
    S, D = pe_ref.shape          # (seq, d_model)
    V = emb_ref.shape[0]         # vocab
    L = wqkv_ref.shape[0]        # num layers
    H = nhead
    hd = D // H

    # --- embedding lookup via one-hot matmul (MXU), * sqrt(d_model), + pos enc
    ids = ids_ref[0]                                              # (S, 1) int32
    vocab_iota = jax.lax.broadcasted_iota(jnp.int32, (S, V), 1)   # (S, V)
    onehot = (ids == vocab_iota).astype(jnp.float32)              # (S, V)
    x = jnp.dot(onehot, emb_ref[...], preferred_element_type=jnp.float32)
    x = x * jnp.float32(math.sqrt(D)) + pe_ref[...]               # (S, D)

    def layer_norm(y, g, b):
        mu = jnp.mean(y, axis=-1, keepdims=True)
        yc = y - mu
        var = jnp.mean(yc * yc, axis=-1, keepdims=True)
        return yc * jax.lax.rsqrt(var + 1e-5) * g + b

    inv_sqrt_hd = jnp.float32(1.0 / math.sqrt(hd))

    for l in range(L):                      # static unrolled layer loop
        # ---------------- multi-head self-attention (post-norm) -------------
        # TODO(synk): optional src_mask (attn_mask) not implemented; the test
        # calls forward with src_mask=None so this matches the reference.
        qkv = jnp.dot(x, wqkv_ref[l],
                      preferred_element_type=jnp.float32) + bqkv_ref[l]  # (S, 3D)
        q = qkv[:, :D].reshape(S, H, hd)
        k = qkv[:, D:2 * D].reshape(S, H, hd)
        v = qkv[:, 2 * D:].reshape(S, H, hd)

        scores = jnp.einsum('qhd,khd->hqk', q, k,
                            preferred_element_type=jnp.float32) * inv_sqrt_hd
        smax = jnp.max(scores, axis=-1, keepdims=True)
        p = jnp.exp(scores - smax)
        p = p / jnp.sum(p, axis=-1, keepdims=True)                # softmax
        ctx = jnp.einsum('hqk,khd->qhd', p, v,
                         preferred_element_type=jnp.float32).reshape(S, D)
        attn = jnp.dot(ctx, wo_ref[l],
                       preferred_element_type=jnp.float32) + bo_ref[l]
        # TODO(synk): dropout(p=0.1) implemented as eval-mode identity.
        x = layer_norm(x + attn, ln1g_ref[l], ln1b_ref[l])

        # ---------------- feed-forward ---------------------------------------
        h = jnp.maximum(
            jnp.dot(x, w1_ref[l], preferred_element_type=jnp.float32) + b1_ref[l],
            0.0)
        y = jnp.dot(h, w2_ref[l], preferred_element_type=jnp.float32) + b2_ref[l]
        x = layer_norm(x + y, ln2g_ref[l], ln2b_ref[l])

    # ---------------- output projection --------------------------------------
    logits = jnp.dot(x, wout_ref[...],
                     preferred_element_type=jnp.float32) + bout_ref[...]
    out_ref[0] = logits.astype(out_ref.dtype)


def _full_spec(arr):
    nd = arr.ndim
    return pl.BlockSpec(arr.shape, lambda i, _nd=nd: (0,) * _nd)


@functools.partial(jax.jit, static_argnames=("nhead",))
def transformer_forward(params, src_tokens, *, nhead):
    """src_tokens: (B, S) int32 token ids -> (B, S, vocab) f32 logits."""
    B, S = src_tokens.shape
    emb = params["emb"]
    V, D = emb.shape
    pe = params["pe"][:S]                              # (S, D) constant buffer
    ids3 = src_tokens.reshape(B, S, 1).astype(jnp.int32)

    kernel = functools.partial(_transformer_kernel, nhead=nhead)

    in_specs = [
        pl.BlockSpec((1, S, 1), lambda i: (i, 0, 0)),  # token ids, per-batch
        _full_spec(emb), _full_spec(pe),
        _full_spec(params["wqkv"]), _full_spec(params["bqkv"]),
        _full_spec(params["wo"]), _full_spec(params["bo"]),
        _full_spec(params["ln1_g"]), _full_spec(params["ln1_b"]),
        _full_spec(params["w1"]), _full_spec(params["b1"]),
        _full_spec(params["w2"]), _full_spec(params["b2"]),
        _full_spec(params["ln2_g"]), _full_spec(params["ln2_b"]),
        _full_spec(params["wout"]), _full_spec(params["bout"]),
    ]

    return pl.pallas_call(
        kernel,
        out_shape=jax.ShapeDtypeStruct((B, S, V), jnp.float32),
        grid=(B,),
        in_specs=in_specs,
        out_specs=pl.BlockSpec((1, S, V), lambda i: (i, 0, 0)),
        compiler_params=pltpu.CompilerParams(
            dimension_semantics=("parallel",)),
    )(ids3, emb, pe,
      params["wqkv"], params["bqkv"], params["wo"], params["bo"],
      params["ln1_g"], params["ln1_b"], params["w1"], params["b1"],
      params["w2"], params["b2"], params["ln2_g"], params["ln2_b"],
      params["wout"], params["bout"])


# --------------------------------------------------------------------------
# Deterministic parameter init (shapes mirror the PyTorch module; embedding /
# fc_out follow _init_weights: uniform(-0.1, 0.1) weights, zero fc_out bias;
# encoder weights use uniform(+-1/sqrt(fan_in)) analogous to Linear defaults).
# --------------------------------------------------------------------------
def init_params(key, vocab_size, d_model, num_layers, dim_feedforward, max_len):
    D, F, L, V = d_model, dim_feedforward, num_layers, vocab_size
    ks = jax.random.split(key, 8)

    def u(k, shape, a):
        return jax.random.uniform(k, shape, jnp.float32, -a, a)

    inv_d = 1.0 / math.sqrt(D)
    inv_f = 1.0 / math.sqrt(F)

    # sinusoidal positional-encoding buffer (same formula as PositionalEncoding)
    pos = jnp.arange(max_len, dtype=jnp.float32)[:, None]
    div = jnp.exp(jnp.arange(0, D, 2, dtype=jnp.float32) *
                  (-math.log(10000.0) / D))
    pe = jnp.zeros((max_len, D), jnp.float32)
    pe = pe.at[:, 0::2].set(jnp.sin(pos * div))
    pe = pe.at[:, 1::2].set(jnp.cos(pos * div))

    return {
        "emb": u(ks[0], (V, D), 0.1),
        "pe": pe,
        # attention: in_proj stored transposed as (D, 3D) so x @ W works
        "wqkv": u(ks[1], (L, D, 3 * D), inv_d),
        "bqkv": jnp.zeros((L, 1, 3 * D), jnp.float32),
        "wo": u(ks[2], (L, D, D), inv_d),
        "bo": jnp.zeros((L, 1, D), jnp.float32),
        "ln1_g": jnp.ones((L, 1, D), jnp.float32),
        "ln1_b": jnp.zeros((L, 1, D), jnp.float32),
        # feed-forward
        "w1": u(ks[3], (L, D, F), inv_d),
        "b1": u(ks[4], (L, 1, F), inv_d),
        "w2": u(ks[5], (L, F, D), inv_f),
        "b2": u(ks[6], (L, 1, D), inv_f),
        "ln2_g": jnp.ones((L, 1, D), jnp.float32),
        "ln2_b": jnp.zeros((L, 1, D), jnp.float32),
        # output projection
        "wout": u(ks[7], (D, V), 0.1),
        "bout": jnp.zeros((1, V), jnp.float32),
    }


if __name__ == "__main__":
    # Small, lane-friendly config consistent with the module's forward:
    VOCAB, D_MODEL, NHEAD, N_LAYERS, D_FF, MAX_LEN = 128, 128, 8, 2, 256, 64
    B, S = 2, 8

    key = jax.random.PRNGKey(0)
    pkey, ikey = jax.random.split(key)
    params = init_params(pkey, VOCAB, D_MODEL, N_LAYERS, D_FF, MAX_LEN)
    src = jax.random.randint(ikey, (B, S), 0, VOCAB, dtype=jnp.int32)

    out = transformer_forward(params, src, nhead=NHEAD)
    out = jax.block_until_ready(out)

    assert out.shape == (B, S, VOCAB) and out.dtype == jnp.float32
    assert bool(jnp.all(jnp.isfinite(out)))
    print("KERNEL_OK")
</pallas_src>

<mosaic_0001>
module attributes {stable_mosaic.version = 11 : i64} {
  func.func @_transformer_kernel(%arg0: i32, %arg1: memref<1x8x1xi32, #tpu.memory_space<vmem>>, %arg2: memref<128x128xf32, #tpu.memory_space<vmem>>, %arg3: memref<8x128xf32, #tpu.memory_space<vmem>>, %arg4: memref<2x128x384xf32, #tpu.memory_space<vmem>>, %arg5: memref<2x1x384xf32, #tpu.memory_space<vmem>>, %arg6: memref<2x128x128xf32, #tpu.memory_space<vmem>>, %arg7: memref<2x1x128xf32, #tpu.memory_space<vmem>>, %arg8: memref<2x1x128xf32, #tpu.memory_space<vmem>>, %arg9: memref<2x1x128xf32, #tpu.memory_space<vmem>>, %arg10: memref<2x128x256xf32, #tpu.memory_space<vmem>>, %arg11: memref<2x1x256xf32, #tpu.memory_space<vmem>>, %arg12: memref<2x256x128xf32, #tpu.memory_space<vmem>>, %arg13: memref<2x1x128xf32, #tpu.memory_space<vmem>>, %arg14: memref<2x1x128xf32, #tpu.memory_space<vmem>>, %arg15: memref<2x1x128xf32, #tpu.memory_space<vmem>>, %arg16: memref<128x128xf32, #tpu.memory_space<vmem>>, %arg17: memref<1x128xf32, #tpu.memory_space<vmem>>, %arg18: memref<1x8x128xf32, #tpu.memory_space<vmem>>) attributes {dimension_semantics = [#tpu.dimension_semantics<parallel>], iteration_bounds = array<i64: 2>, scalar_prefetch = 0 : i64, scratch_operands = 0 : i64, tpu.core_type = #tpu.core_type<tc>, window_params = [{transform_indices = @transform_0, window_bounds = array<i64: 1, 8, 1>}, {pipeline_mode = #tpu.pipeline_mode<synchronous>, transform_indices = @transform_1, window_bounds = array<i64: 128, 128>}, {pipeline_mode = #tpu.pipeline_mode<synchronous>, transform_indices = @transform_2, window_bounds = array<i64: 8, 128>}, {pipeline_mode = #tpu.pipeline_mode<synchronous>, transform_indices = @transform_3, window_bounds = array<i64: 2, 128, 384>}, {pipeline_mode = #tpu.pipeline_mode<synchronous>, transform_indices = @transform_4, window_bounds = array<i64: 2, 1, 384>}, {pipeline_mode = #tpu.pipeline_mode<synchronous>, transform_indices = @transform_5, window_bounds = array<i64: 2, 128, 128>}, {pipeline_mode = #tpu.pipeline_mode<synchronous>, transform_indices = @transform_6, window_bounds = array<i64: 2, 1, 128>}, {pipeline_mode = #tpu.pipeline_mode<synchronous>, transform_indices = @transform_7, window_bounds = array<i64: 2, 1, 128>}, {pipeline_mode = #tpu.pipeline_mode<synchronous>, transform_indices = @transform_8, window_bounds = array<i64: 2, 1, 128>}, {pipeline_mode = #tpu.pipeline_mode<synchronous>, transform_indices = @transform_9, window_bounds = array<i64: 2, 128, 256>}, {pipeline_mode = #tpu.pipeline_mode<synchronous>, transform_indices = @transform_10, window_bounds = array<i64: 2, 1, 256>}, {pipeline_mode = #tpu.pipeline_mode<synchronous>, transform_indices = @transform_11, window_bounds = array<i64: 2, 256, 128>}, {pipeline_mode = #tpu.pipeline_mode<synchronous>, transform_indices = @transform_12, window_bounds = array<i64: 2, 1, 128>}, {pipeline_mode = #tpu.pipeline_mode<synchronous>, transform_indices = @transform_13, window_bounds = array<i64: 2, 1, 128>}, {pipeline_mode = #tpu.pipeline_mode<synchronous>, transform_indices = @transform_14, window_bounds = array<i64: 2, 1, 128>}, {pipeline_mode = #tpu.pipeline_mode<synchronous>, transform_indices = @transform_15, window_bounds = array<i64: 128, 128>}, {pipeline_mode = #tpu.pipeline_mode<synchronous>, transform_indices = @transform_16, window_bounds = array<i64: 1, 128>}, {transform_indices = @transform_17, window_bounds = array<i64: 1, 8, 128>}]} {
    %c0 = arith.constant 0 : index
    %c0_0 = arith.constant 0 : index
    %c0_1 = arith.constant 0 : index
    %0 = vector.load %arg1[%c0, %c0_0, %c0_1] : memref<1x8x1xi32, #tpu.memory_space<vmem>>, vector<1x8x1xi32>
    %1 = vector.shape_cast %0 : vector<1x8x1xi32> to vector<8x1xi32>
    %2 = tpu.iota {dimensions = array<i32: 1>} : vector<8x128xi32>
    %3 = vector.broadcast %1 : vector<8x1xi32> to vector<8x128xi32>
    %4 = arith.cmpi eq, %3, %2 : vector<8x128xi32>
    %5 = arith.extui %4 : vector<8x128xi1> to vector<8x128xi32>
    %6 = arith.sitofp %5 : vector<8x128xi32> to vector<8x128xf32>
    %c0_2 = arith.constant 0 : index
    %c0_3 = arith.constant 0 : index
    %7 = vector.load %arg2[%c0_2, %c0_3] : memref<128x128xf32, #tpu.memory_space<vmem>>, vector<128x128xf32>
    %cst = arith.constant dense<0.000000e+00> : vector<8x128xf32>
    %8 = tpu.matmul %6, %7, %cst {dimension_numbers = #tpu.dot_dimension_numbers<[1], [0], [0], [1], [0, 0, 1, 1], [], []>} : vector<8x128xf32>, vector<128x128xf32>, vector<8x128xf32> -> vector<8x128xf32>
    %cst_4 = arith.constant 11.3137083 : f32
    %9 = vector.broadcast %cst_4 : f32 to vector<8x128xf32>
    %10 = arith.mulf %8, %9 : vector<8x128xf32>
    %c0_5 = arith.constant 0 : index
    %c0_6 = arith.constant 0 : index
    %11 = vector.load %arg3[%c0_5, %c0_6] : memref<8x128xf32, #tpu.memory_space<vmem>>, vector<8x128xf32>
    %12 = arith.addf %10, %11 : vector<8x128xf32>
    %c0_7 = arith.constant 0 : index
    %c0_8 = arith.constant 0 : index
    %c0_9 = arith.constant 0 : index
    %13 = vector.load %arg4[%c0_7, %c0_8, %c0_9] : memref<2x128x384xf32, #tpu.memory_space<vmem>>, vector<1x128x384xf32>
    %14 = vector.shape_cast %13 : vector<1x128x384xf32> to vector<128x384xf32>
    %cst_10 = arith.constant dense<0.000000e+00> : vector<8x384xf32>
    %15 = tpu.matmul %12, %14, %cst_10 {dimension_numbers = #tpu.dot_dimension_numbers<[1], [0], [0], [1], [0, 0, 1, 1], [], []>} : vector<8x128xf32>, vector<128x384xf32>, vector<8x384xf32> -> vector<8x384xf32>
    %c0_11 = arith.constant 0 : index
    %c0_12 = arith.constant 0 : index
    %c0_13 = arith.constant 0 : index
    %16 = vector.load %arg5[%c0_11, %c0_12, %c0_13] : memref<2x1x384xf32, #tpu.memory_space<vmem>>, vector<1x1x384xf32>
    %17 = vector.shape_cast %16 : vector<1x1x384xf32> to vector<1x384xf32>
    %18 = vector.broadcast %17 : vector<1x384xf32> to vector<8x384xf32>
    %19 = arith.addf %15, %18 : vector<8x384xf32>
    %20 = vector.extract_strided_slice %19 {offsets = [0, 0], sizes = [8, 128], strides = [1, 1]} : vector<8x384xf32> to vector<8x128xf32>
    %21 = vector.shape_cast %20 : vector<8x128xf32> to vector<8x8x16xf32>
    %22 = vector.extract_strided_slice %19 {offsets = [0, 128], sizes = [8, 128], strides = [1, 1]} : vector<8x384xf32> to vector<8x128xf32>
    %23 = vector.shape_cast %22 : vector<8x128xf32> to vector<8x8x16xf32>
    %24 = vector.extract_strided_slice %19 {offsets = [0, 256], sizes = [8, 128], strides = [1, 1]} : vector<8x384xf32> to vector<8x128xf32>
    %25 = vector.shape_cast %24 : vector<8x128xf32> to vector<8x8x16xf32>
    "tpu.trace_start"() <{level = 10 : i32, message = "qhd,khd->hqk"}> : () -> ()
    %cst_14 = arith.constant dense<0.000000e+00> : vector<8x8x8xf32>
    %26 = tpu.matmul %21, %23, %cst_14 {dimension_numbers = #tpu.dot_dimension_numbers<[2], [2], [0], [0], [0, 1, 0, 0, 1, 0], [1], [1]>} : vector<8x8x16xf32>, vector<8x8x16xf32>, vector<8x8x8xf32> -> vector<8x8x8xf32>
    "tpu.trace_stop"() : () -> ()
    %cst_15 = arith.constant 2.500000e-01 : f32
    %27 = vector.broadcast %cst_15 : f32 to vector<8x8x8xf32>
    %28 = arith.mulf %26, %27 : vector<8x8x8xf32>
    %cst_16 = arith.constant dense<0xFF800000> : vector<8x8xf32>
    %29 = vector.multi_reduction <maximumf>, %28, %cst_16 [2] : vector<8x8x8xf32> to vector<8x8xf32>
    %30 = vector.shape_cast %29 : vector<8x8xf32> to vector<8x8x1xf32>
    %31 = vector.broadcast %30 : vector<8x8x1xf32> to vector<8x8x8xf32>
    %32 = arith.subf %28, %31 : vector<8x8x8xf32>
    %33 = math.exp %32 : vector<8x8x8xf32>
    %cst_17 = arith.constant dense<0.000000e+00> : vector<8x8xf32>
    %34 = vector.multi_reduction <add>, %33, %cst_17 [2] : vector<8x8x8xf32> to vector<8x8xf32>
    %35 = vector.shape_cast %34 : vector<8x8xf32> to vector<8x8x1xf32>
    %36 = vector.broadcast %35 : vector<8x8x1xf32> to vector<8x8x8xf32>
    %37 = arith.divf %33, %36 : vector<8x8x8xf32>
    "tpu.trace_start"() <{level = 10 : i32, message = "hqk,khd->qhd"}> : () -> ()
    %cst_18 = arith.constant dense<0.000000e+00> : vector<8x16x8xf32>
    %38 = tpu.matmul %25, %37, %cst_18 {dimension_numbers = #tpu.dot_dimension_numbers<[0], [2], [2], [1], [0, 1, 0, 2, 1, 1], [1], [0]>} : vector<8x8x16xf32>, vector<8x8x8xf32>, vector<8x16x8xf32> -> vector<8x16x8xf32>
    %39 = tpu.transpose %38, [2, 0, 1] : vector<8x16x8xf32> -> vector<8x8x16xf32>
    "tpu.trace_stop"() : () -> ()
    %40 = vector.shape_cast %39 : vector<8x8x16xf32> to vector<8x128xf32>
    %c0_19 = arith.constant 0 : index
    %c0_20 = arith.constant 0 : index
    %c0_21 = arith.constant 0 : index
    %41 = vector.load %arg6[%c0_19, %c0_20, %c0_21] : memref<2x128x128xf32, #tpu.memory_space<vmem>>, vector<1x128x128xf32>
    %42 = vector.shape_cast %41 : vector<1x128x128xf32> to vector<128x128xf32>
    %cst_22 = arith.constant dense<0.000000e+00> : vector<8x128xf32>
    %43 = tpu.matmul %40, %42, %cst_22 {dimension_numbers = #tpu.dot_dimension_numbers<[1], [0], [0], [1], [0, 0, 1, 1], [], []>} : vector<8x128xf32>, vector<128x128xf32>, vector<8x128xf32> -> vector<8x128xf32>
    %c0_23 = arith.constant 0 : index
    %c0_24 = arith.constant 0 : index
    %c0_25 = arith.constant 0 : index
    %44 = vector.load %arg7[%c0_23, %c0_24, %c0_25] : memref<2x1x128xf32, #tpu.memory_space<vmem>>, vector<1x1x128xf32>
    %45 = vector.shape_cast %44 : vector<1x1x128xf32> to vector<1x128xf32>
    %46 = vector.broadcast %45 : vector<1x128xf32> to vector<8x128xf32>
    %47 = arith.addf %43, %46 : vector<8x128xf32>
    %48 = arith.addf %12, %47 : vector<8x128xf32>
    %c0_26 = arith.constant 0 : index
    %c0_27 = arith.constant 0 : index
    %c0_28 = arith.constant 0 : index
    %49 = vector.load %arg8[%c0_26, %c0_27, %c0_28] : memref<2x1x128xf32, #tpu.memory_space<vmem>>, vector<1x1x128xf32>
    %50 = vector.shape_cast %49 : vector<1x1x128xf32> to vector<1x128xf32>
    %c0_29 = arith.constant 0 : index
    %c0_30 = arith.constant 0 : index
    %c0_31 = arith.constant 0 : index
    %51 = vector.load %arg9[%c0_29, %c0_30, %c0_31] : memref<2x1x128xf32, #tpu.memory_space<vmem>>, vector<1x1x128xf32>
    %52 = vector.shape_cast %51 : vector<1x1x128xf32> to vector<1x128xf32>
    %cst_32 = arith.constant dense<0.000000e+00> : vector<8xf32>
    %53 = vector.multi_reduction <add>, %48, %cst_32 [1] : vector<8x128xf32> to vector<8xf32>
    %54 = vector.shape_cast %53 : vector<8xf32> to vector<8x1xf32>
    %cst_33 = arith.constant 1.280000e+02 : f32
    %55 = vector.broadcast %cst_33 : f32 to vector<8x1xf32>
    %56 = arith.divf %54, %55 : vector<8x1xf32>
    %57 = vector.broadcast %56 : vector<8x1xf32> to vector<8x128xf32>
    %58 = arith.subf %48, %57 : vector<8x128xf32>
    %59 = arith.mulf %58, %58 : vector<8x128xf32>
    %cst_34 = arith.constant dense<0.000000e+00> : vector<8xf32>
    %60 = vector.multi_reduction <add>, %59, %cst_34 [1] : vector<8x128xf32> to vector<8xf32>
    %61 = vector.shape_cast %60 : vector<8xf32> to vector<8x1xf32>
    %cst_35 = arith.constant 1.280000e+02 : f32
    %62 = vector.broadcast %cst_35 : f32 to vector<8x1xf32>
    %63 = arith.divf %61, %62 : vector<8x1xf32>
    %cst_36 = arith.constant 9.99999974E-6 : f32
    %64 = vector.broadcast %cst_36 : f32 to vector<8x1xf32>
    %65 = arith.addf %63, %64 : vector<8x1xf32>
    %66 = math.rsqrt %65 : vector<8x1xf32>
    %67 = vector.broadcast %66 : vector<8x1xf32> to vector<8x128xf32>
    %68 = arith.mulf %58, %67 : vector<8x128xf32>
    %69 = vector.broadcast %50 : vector<1x128xf32> to vector<8x128xf32>
    %70 = arith.mulf %68, %69 : vector<8x128xf32>
    %71 = vector.broadcast %52 : vector<1x128xf32> to vector<8x128xf32>
    %72 = arith.addf %70, %71 : vector<8x128xf32>
    %c0_37 = arith.constant 0 : index
    %c0_38 = arith.constant 0 : index
    %c0_39 = arith.constant 0 : index
    %73 = vector.load %arg10[%c0_37, %c0_38, %c0_39] : memref<2x128x256xf32, #tpu.memory_space<vmem>>, vector<1x128x256xf32>
    %74 = vector.shape_cast %73 : vector<1x128x256xf32> to vector<128x256xf32>
    %cst_40 = arith.constant dense<0.000000e+00> : vector<8x256xf32>
    %75 = tpu.matmul %72, %74, %cst_40 {dimension_numbers = #tpu.dot_dimension_numbers<[1], [0], [0], [1], [0, 0, 1, 1], [], []>} : vector<8x128xf32>, vector<128x256xf32>, vector<8x256xf32> -> vector<8x256xf32>
    %c0_41 = arith.constant 0 : index
    %c0_42 = arith.constant 0 : index
    %c0_43 = arith.constant 0 : index
    %76 = vector.load %arg11[%c0_41, %c0_42, %c0_43] : memref<2x1x256xf32, #tpu.memory_space<vmem>>, vector<1x1x256xf32>
    %77 = vector.shape_cast %76 : vector<1x1x256xf32> to vector<1x256xf32>
    %78 = vector.broadcast %77 : vector<1x256xf32> to vector<8x256xf32>
    %79 = arith.addf %75, %78 : vector<8x256xf32>
    %cst_44 = arith.constant 0.000000e+00 : f32
    %80 = vector.broadcast %cst_44 : f32 to vector<8x256xf32>
    %81 = arith.maximumf %79, %80 : vector<8x256xf32>
    %c0_45 = arith.constant 0 : index
    %c0_46 = arith.constant 0 : index
    %c0_47 = arith.constant 0 : index
    %82 = vector.load %arg12[%c0_45, %c0_46, %c0_47] : memref<2x256x128xf32, #tpu.memory_space<vmem>>, vector<1x256x128xf32>
    %83 = vector.shape_cast %82 : vector<1x256x128xf32> to vector<256x128xf32>
    %cst_48 = arith.constant dense<0.000000e+00> : vector<8x128xf32>
    %84 = tpu.matmul %81, %83, %cst_48 {dimension_numbers = #tpu.dot_dimension_numbers<[1], [0], [0], [1], [0, 0, 1, 1], [], []>} : vector<8x256xf32>, vector<256x128xf32>, vector<8x128xf32> -> vector<8x128xf32>
    %c0_49 = arith.constant 0 : index
    %c0_50 = arith.constant 0 : index
    %c0_51 = arith.constant 0 : index
    %85 = vector.load %arg13[%c0_49, %c0_50, %c0_51] : memref<2x1x128xf32, #tpu.memory_space<vmem>>, vector<1x1x128xf32>
    %86 = vector.shape_cast %85 : vector<1x1x128xf32> to vector<1x128xf32>
    %87 = vector.broadcast %86 : vector<1x128xf32> to vector<8x128xf32>
    %88 = arith.addf %84, %87 : vector<8x128xf32>
    %89 = arith.addf %72, %88 : vector<8x128xf32>
    %c0_52 = arith.constant 0 : index
    %c0_53 = arith.constant 0 : index
    %c0_54 = arith.constant 0 : index
    %90 = vector.load %arg14[%c0_52, %c0_53, %c0_54] : memref<2x1x128xf32, #tpu.memory_space<vmem>>, vector<1x1x128xf32>
    %91 = vector.shape_cast %90 : vector<1x1x128xf32> to vector<1x128xf32>
    %c0_55 = arith.constant 0 : index
    %c0_56 = arith.constant 0 : index
    %c0_57 = arith.constant 0 : index
    %92 = vector.load %arg15[%c0_55, %c0_56, %c0_57] : memref<2x1x128xf32, #tpu.memory_space<vmem>>, vector<1x1x128xf32>
    %93 = vector.shape_cast %92 : vector<1x1x128xf32> to vector<1x128xf32>
    %cst_58 = arith.constant dense<0.000000e+00> : vector<8xf32>
    %94 = vector.multi_reduction <add>, %89, %cst_58 [1] : vector<8x128xf32> to vector<8xf32>
    %95 = vector.shape_cast %94 : vector<8xf32> to vector<8x1xf32>
    %cst_59 = arith.constant 1.280000e+02 : f32
    %96 = vector.broadcast %cst_59 : f32 to vector<8x1xf32>
    %97 = arith.divf %95, %96 : vector<8x1xf32>
    %98 = vector.broadcast %97 : vector<8x1xf32> to vector<8x128xf32>
    %99 = arith.subf %89, %98 : vector<8x128xf32>
    %100 = arith.mulf %99, %99 : vector<8x128xf32>
    %cst_60 = arith.constant dense<0.000000e+00> : vector<8xf32>
    %101 = vector.multi_reduction <add>, %100, %cst_60 [1] : vector<8x128xf32> to vector<8xf32>
    %102 = vector.shape_cast %101 : vector<8xf32> to vector<8x1xf32>
    %cst_61 = arith.constant 1.280000e+02 : f32
    %103 = vector.broadcast %cst_61 : f32 to vector<8x1xf32>
    %104 = arith.divf %102, %103 : vector<8x1xf32>
    %cst_62 = arith.constant 9.99999974E-6 : f32
    %105 = vector.broadcast %cst_62 : f32 to vector<8x1xf32>
    %106 = arith.addf %104, %105 : vector<8x1xf32>
    %107 = math.rsqrt %106 : vector<8x1xf32>
    %108 = vector.broadcast %107 : vector<8x1xf32> to vector<8x128xf32>
    %109 = arith.mulf %99, %108 : vector<8x128xf32>
    %110 = vector.broadcast %91 : vector<1x128xf32> to vector<8x128xf32>
    %111 = arith.mulf %109, %110 : vector<8x128xf32>
    %112 = vector.broadcast %93 : vector<1x128xf32> to vector<8x128xf32>
    %113 = arith.addf %111, %112 : vector<8x128xf32>
    %c1 = arith.constant 1 : index
    %c0_63 = arith.constant 0 : index
    %c0_64 = arith.constant 0 : index
    %114 = vector.load %arg4[%c1, %c0_63, %c0_64] : memref<2x128x384xf32, #tpu.memory_space<vmem>>, vector<1x128x384xf32>
    %115 = vector.shape_cast %114 : vector<1x128x384xf32> to vector<128x384xf32>
    %cst_65 = arith.constant dense<0.000000e+00> : vector<8x384xf32>
    %116 = tpu.matmul %113, %115, %cst_65 {dimension_numbers = #tpu.dot_dimension_numbers<[1], [0], [0], [1], [0, 0, 1, 1], [], []>} : vector<8x128xf32>, vector<128x384xf32>, vector<8x384xf32> -> vector<8x384xf32>
    %c1_66 = arith.constant 1 : index
    %c0_67 = arith.constant 0 : index
    %c0_68 = arith.constant 0 : index
    %117 = vector.load %arg5[%c1_66, %c0_67, %c0_68] : memref<2x1x384xf32, #tpu.memory_space<vmem>>, vector<1x1x384xf32>
    %118 = vector.shape_cast %117 : vector<1x1x384xf32> to vector<1x384xf32>
    %119 = vector.broadcast %118 : vector<1x384xf32> to vector<8x384xf32>
    %120 = arith.addf %116, %119 : vector<8x384xf32>
    %121 = vector.extract_strided_slice %120 {offsets = [0, 0], sizes = [8, 128], strides = [1, 1]} : vector<8x384xf32> to vector<8x128xf32>
    %122 = vector.shape_cast %121 : vector<8x128xf32> to vector<8x8x16xf32>
    %123 = vector.extract_strided_slice %120 {offsets = [0, 128], sizes = [8, 128], strides = [1, 1]} : vector<8x384xf32> to vector<8x128xf32>
    %124 = vector.shape_cast %123 : vector<8x128xf32> to vector<8x8x16xf32>
    %125 = vector.extract_strided_slice %120 {offsets = [0, 256], sizes = [8, 128], strides = [1, 1]} : vector<8x384xf32> to vector<8x128xf32>
    %126 = vector.shape_cast %125 : vector<8x128xf32> to vector<8x8x16xf32>
    "tpu.trace_start"() <{level = 10 : i32, message = "qhd,khd->hqk"}> : () -> ()
    %cst_69 = arith.constant dense<0.000000e+00> : vector<8x8x8xf32>
    %127 = tpu.matmul %122, %124, %cst_69 {dimension_numbers = #tpu.dot_dimension_numbers<[2], [2], [0], [0], [0, 1, 0, 0, 1, 0], [1], [1]>} : vector<8x8x16xf32>, vector<8x8x16xf32>, vector<8x8x8xf32> -> vector<8x8x8xf32>
    "tpu.trace_stop"() : () -> ()
    %cst_70 = arith.constant 2.500000e-01 : f32
    %128 = vector.broadcast %cst_70 : f32 to vector<8x8x8xf32>
    %129 = arith.mulf %127, %128 : vector<8x8x8xf32>
    %cst_71 = arith.constant dense<0xFF800000> : vector<8x8xf32>
    %130 = vector.multi_reduction <maximumf>, %129, %cst_71 [2] : vector<8x8x8xf32> to vector<8x8xf32>
    %131 = vector.shape_cast %130 : vector<8x8xf32> to vector<8x8x1xf32>
    %132 = vector.broadcast %131 : vector<8x8x1xf32> to vector<8x8x8xf32>
    %133 = arith.subf %129, %132 : vector<8x8x8xf32>
    %134 = math.exp %133 : vector<8x8x8xf32>
    %cst_72 = arith.constant dense<0.000000e+00> : vector<8x8xf32>
    %135 = vector.multi_reduction <add>, %134, %cst_72 [2] : vector<8x8x8xf32> to vector<8x8xf32>
    %136 = vector.shape_cast %135 : vector<8x8xf32> to vector<8x8x1xf32>
    %137 = vector.broadcast %136 : vector<8x8x1xf32> to vector<8x8x8xf32>
    %138 = arith.divf %134, %137 : vector<8x8x8xf32>
    "tpu.trace_start"() <{level = 10 : i32, message = "hqk,khd->qhd"}> : () -> ()
    %cst_73 = arith.constant dense<0.000000e+00> : vector<8x16x8xf32>
    %139 = tpu.matmul %126, %138, %cst_73 {dimension_numbers = #tpu.dot_dimension_numbers<[0], [2], [2], [1], [0, 1, 0, 2, 1, 1], [1], [0]>} : vector<8x8x16xf32>, vector<8x8x8xf32>, vector<8x16x8xf32> -> vector<8x16x8xf32>
    %140 = tpu.transpose %139, [2, 0, 1] : vector<8x16x8xf32> -> vector<8x8x16xf32>
    "tpu.trace_stop"() : () -> ()
    %141 = vector.shape_cast %140 : vector<8x8x16xf32> to vector<8x128xf32>
    %c1_74 = arith.constant 1 : index
    %c0_75 = arith.constant 0 : index
    %c0_76 = arith.constant 0 : index
    %142 = vector.load %arg6[%c1_74, %c0_75, %c0_76] : memref<2x128x128xf32, #tpu.memory_space<vmem>>, vector<1x128x128xf32>
    %143 = vector.shape_cast %142 : vector<1x128x128xf32> to vector<128x128xf32>
    %cst_77 = arith.constant dense<0.000000e+00> : vector<8x128xf32>
    %144 = tpu.matmul %141, %143, %cst_77 {dimension_numbers = #tpu.dot_dimension_numbers<[1], [0], [0], [1], [0, 0, 1, 1], [], []>} : vector<8x128xf32>, vector<128x128xf32>, vector<8x128xf32> -> vector<8x128xf32>
    %c1_78 = arith.constant 1 : index
    %c0_79 = arith.constant 0 : index
    %c0_80 = arith.constant 0 : index
    %145 = vector.load %arg7[%c1_78, %c0_79, %c0_80] : memref<2x1x128xf32, #tpu.memory_space<vmem>>, vector<1x1x128xf32>
    %146 = vector.shape_cast %145 : vector<1x1x128xf32> to vector<1x128xf32>
    %147 = vector.broadcast %146 : vector<1x128xf32> to vector<8x128xf32>
    %148 = arith.addf %144, %147 : vector<8x128xf32>
    %149 = arith.addf %113, %148 : vector<8x128xf32>
    %c1_81 = arith.constant 1 : index
    %c0_82 = arith.constant 0 : index
    %c0_83 = arith.constant 0 : index
    %150 = vector.load %arg8[%c1_81, %c0_82, %c0_83] : memref<2x1x128xf32, #tpu.memory_space<vmem>>, vector<1x1x128xf32>
    %151 = vector.shape_cast %150 : vector<1x1x128xf32> to vector<1x128xf32>
    %c1_84 = arith.constant 1 : index
    %c0_85 = arith.constant 0 : index
    %c0_86 = arith.constant 0 : index
    %152 = vector.load %arg9[%c1_84, %c0_85, %c0_86] : memref<2x1x128xf32, #tpu.memory_space<vmem>>, vector<1x1x128xf32>
    %153 = vector.shape_cast %152 : vector<1x1x128xf32> to vector<1x128xf32>
    %cst_87 = arith.constant dense<0.000000e+00> : vector<8xf32>
    %154 = vector.multi_reduction <add>, %149, %cst_87 [1] : vector<8x128xf32> to vector<8xf32>
    %155 = vector.shape_cast %154 : vector<8xf32> to vector<8x1xf32>
    %cst_88 = arith.constant 1.280000e+02 : f32
    %156 = vector.broadcast %cst_88 : f32 to vector<8x1xf32>
    %157 = arith.divf %155, %156 : vector<8x1xf32>
    %158 = vector.broadcast %157 : vector<8x1xf32> to vector<8x128xf32>
    %159 = arith.subf %149, %158 : vector<8x128xf32>
    %160 = arith.mulf %159, %159 : vector<8x128xf32>
    %cst_89 = arith.constant dense<0.000000e+00> : vector<8xf32>
    %161 = vector.multi_reduction <add>, %160, %cst_89 [1] : vector<8x128xf32> to vector<8xf32>
    %162 = vector.shape_cast %161 : vector<8xf32> to vector<8x1xf32>
    %cst_90 = arith.constant 1.280000e+02 : f32
    %163 = vector.broadcast %cst_90 : f32 to vector<8x1xf32>
    %164 = arith.divf %162, %163 : vector<8x1xf32>
    %cst_91 = arith.constant 9.99999974E-6 : f32
    %165 = vector.broadcast %cst_91 : f32 to vector<8x1xf32>
    %166 = arith.addf %164, %165 : vector<8x1xf32>
    %167 = math.rsqrt %166 : vector<8x1xf32>
    %168 = vector.broadcast %167 : vector<8x1xf32> to vector<8x128xf32>
    %169 = arith.mulf %159, %168 : vector<8x128xf32>
    %170 = vector.broadcast %151 : vector<1x128xf32> to vector<8x128xf32>
    %171 = arith.mulf %169, %170 : vector<8x128xf32>
    %172 = vector.broadcast %153 : vector<1x128xf32> to vector<8x128xf32>
    %173 = arith.addf %171, %172 : vector<8x128xf32>
    %c1_92 = arith.constant 1 : index
    %c0_93 = arith.constant 0 : index
    %c0_94 = arith.constant 0 : index
    %174 = vector.load %arg10[%c1_92, %c0_93, %c0_94] : memref<2x128x256xf32, #tpu.memory_space<vmem>>, vector<1x128x256xf32>
    %175 = vector.shape_cast %174 : vector<1x128x256xf32> to vector<128x256xf32>
    %cst_95 = arith.constant dense<0.000000e+00> : vector<8x256xf32>
    %176 = tpu.matmul %173, %175, %cst_95 {dimension_numbers = #tpu.dot_dimension_numbers<[1], [0], [0], [1], [0, 0, 1, 1], [], []>} : vector<8x128xf32>, vector<128x256xf32>, vector<8x256xf32> -> vector<8x256xf32>
    %c1_96 = arith.constant 1 : index
    %c0_97 = arith.constant 0 : index
    %c0_98 = arith.constant 0 : index
    %177 = vector.load %arg11[%c1_96, %c0_97, %c0_98] : memref<2x1x256xf32, #tpu.memory_space<vmem>>, vector<1x1x256xf32>
    %178 = vector.shape_cast %177 : vector<1x1x256xf32> to vector<1x256xf32>
    %179 = vector.broadcast %178 : vector<1x256xf32> to vector<8x256xf32>
    %180 = arith.addf %176, %179 : vector<8x256xf32>
    %cst_99 = arith.constant 0.000000e+00 : f32
    %181 = vector.broadcast %cst_99 : f32 to vector<8x256xf32>
    %182 = arith.maximumf %180, %181 : vector<8x256xf32>
    %c1_100 = arith.constant 1 : index
    %c0_101 = arith.constant 0 : index
    %c0_102 = arith.constant 0 : index
    %183 = vector.load %arg12[%c1_100, %c0_101, %c0_102] : memref<2x256x128xf32, #tpu.memory_space<vmem>>, vector<1x256x128xf32>
    %184 = vector.shape_cast %183 : vector<1x256x128xf32> to vector<256x128xf32>
    %cst_103 = arith.constant dense<0.000000e+00> : vector<8x128xf32>
    %185 = tpu.matmul %182, %184, %cst_103 {dimension_numbers = #tpu.dot_dimension_numbers<[1], [0], [0], [1], [0, 0, 1, 1], [], []>} : vector<8x256xf32>, vector<256x128xf32>, vector<8x128xf32> -> vector<8x128xf32>
    %c1_104 = arith.constant 1 : index
    %c0_105 = arith.constant 0 : index
    %c0_106 = arith.constant 0 : index
    %186 = vector.load %arg13[%c1_104, %c0_105, %c0_106] : memref<2x1x128xf32, #tpu.memory_space<vmem>>, vector<1x1x128xf32>
    %187 = vector.shape_cast %186 : vector<1x1x128xf32> to vector<1x128xf32>
    %188 = vector.broadcast %187 : vector<1x128xf32> to vector<8x128xf32>
    %189 = arith.addf %185, %188 : vector<8x128xf32>
    %190 = arith.addf %173, %189 : vector<8x128xf32>
    %c1_107 = arith.constant 1 : index
    %c0_108 = arith.constant 0 : index
    %c0_109 = arith.constant 0 : index
    %191 = vector.load %arg14[%c1_107, %c0_108, %c0_109] : memref<2x1x128xf32, #tpu.memory_space<vmem>>, vector<1x1x128xf32>
    %192 = vector.shape_cast %191 : vector<1x1x128xf32> to vector<1x128xf32>
    %c1_110 = arith.constant 1 : index
    %c0_111 = arith.constant 0 : index
    %c0_112 = arith.constant 0 : index
    %193 = vector.load %arg15[%c1_110, %c0_111, %c0_112] : memref<2x1x128xf32, #tpu.memory_space<vmem>>, vector<1x1x128xf32>
    %194 = vector.shape_cast %193 : vector<1x1x128xf32> to vector<1x128xf32>
    %cst_113 = arith.constant dense<0.000000e+00> : vector<8xf32>
    %195 = vector.multi_reduction <add>, %190, %cst_113 [1] : vector<8x128xf32> to vector<8xf32>
    %196 = vector.shape_cast %195 : vector<8xf32> to vector<8x1xf32>
    %cst_114 = arith.constant 1.280000e+02 : f32
    %197 = vector.broadcast %cst_114 : f32 to vector<8x1xf32>
    %198 = arith.divf %196, %197 : vector<8x1xf32>
    %199 = vector.broadcast %198 : vector<8x1xf32> to vector<8x128xf32>
    %200 = arith.subf %190, %199 : vector<8x128xf32>
    %201 = arith.mulf %200, %200 : vector<8x128xf32>
    %cst_115 = arith.constant dense<0.000000e+00> : vector<8xf32>
    %202 = vector.multi_reduction <add>, %201, %cst_115 [1] : vector<8x128xf32> to vector<8xf32>
    %203 = vector.shape_cast %202 : vector<8xf32> to vector<8x1xf32>
    %cst_116 = arith.constant 1.280000e+02 : f32
    %204 = vector.broadcast %cst_116 : f32 to vector<8x1xf32>
    %205 = arith.divf %203, %204 : vector<8x1xf32>
    %cst_117 = arith.constant 9.99999974E-6 : f32
    %206 = vector.broadcast %cst_117 : f32 to vector<8x1xf32>
    %207 = arith.addf %205, %206 : vector<8x1xf32>
    %208 = math.rsqrt %207 : vector<8x1xf32>
    %209 = vector.broadcast %208 : vector<8x1xf32> to vector<8x128xf32>
    %210 = arith.mulf %200, %209 : vector<8x128xf32>
    %211 = vector.broadcast %192 : vector<1x128xf32> to vector<8x128xf32>
    %212 = arith.mulf %210, %211 : vector<8x128xf32>
    %213 = vector.broadcast %194 : vector<1x128xf32> to vector<8x128xf32>
    %214 = arith.addf %212, %213 : vector<8x128xf32>
    %c0_118 = arith.constant 0 : index
    %c0_119 = arith.constant 0 : index
    %215 = vector.load %arg16[%c0_118, %c0_119] : memref<128x128xf32, #tpu.memory_space<vmem>>, vector<128x128xf32>
    %cst_120 = arith.constant dense<0.000000e+00> : vector<8x128xf32>
    %216 = tpu.matmul %214, %215, %cst_120 {dimension_numbers = #tpu.dot_dimension_numbers<[1], [0], [0], [1], [0, 0, 1, 1], [], []>} : vector<8x128xf32>, vector<128x128xf32>, vector<8x128xf32> -> vector<8x128xf32>
    %c0_121 = arith.constant 0 : index
    %c0_122 = arith.constant 0 : index
    %217 = vector.load %arg17[%c0_121, %c0_122] : memref<1x128xf32, #tpu.memory_space<vmem>>, vector<1x128xf32>
    %218 = vector.broadcast %217 : vector<1x128xf32> to vector<8x128xf32>
    %219 = arith.addf %216, %218 : vector<8x128xf32>
    %c0_123 = arith.constant 0 : index
    %c0_124 = arith.constant 0 : index
    %c0_125 = arith.constant 0 : index
    %220 = vector.load %arg18[%c0_123, %c0_124, %c0_125] : memref<1x8x128xf32, #tpu.memory_space<vmem>>, vector<1x8x128xf32>
    %221 = vector.shape_cast %220 : vector<1x8x128xf32> to vector<8x128xf32>
    %222 = vector.shape_cast %219 : vector<8x128xf32> to vector<1x8x128xf32>
    tpu.vector_store %arg18[%c0_123, %c0_124, %c0_125], %222 {strides = array<i32>} : memref<1x8x128xf32, #tpu.memory_space<vmem>>, vector<1x8x128xf32>,
    return
  }
  func.func @transform_0(%arg0: i32) -> (i32, i32, i32) {
    %c0_i32 = arith.constant 0 : i32
    %c0_i32_0 = arith.constant 0 : i32
    %c0_i32_1 = arith.constant 0 : i32
    return %arg0, %c0_i32, %c0_i32_0 : i32, i32, i32
  }
  func.func @transform_1(%arg0: i32) -> (i32, i32) {
    %c0_i32 = arith.constant 0 : i32
    %c0_i32_0 = arith.constant 0 : i32
    %c0_i32_1 = arith.constant 0 : i32
    return %c0_i32, %c0_i32_0 : i32, i32
  }
  func.func @transform_2(%arg0: i32) -> (i32, i32) {
    %c0_i32 = arith.constant 0 : i32
    %c0_i32_0 = arith.constant 0 : i32
    %c0_i32_1 = arith.constant 0 : i32
    return %c0_i32, %c0_i32_0 : i32, i32
  }
  func.func @transform_3(%arg0: i32) -> (i32, i32, i32) {
    %c0_i32 = arith.constant 0 : i32
    %c0_i32_0 = arith.constant 0 : i32
    %c0_i32_1 = arith.constant 0 : i32
    %c0_i32_2 = arith.constant 0 : i32
    return %c0_i32, %c0_i32_0, %c0_i32_1 : i32, i32, i32
  }
  func.func @transform_4(%arg0: i32) -> (i32, i32, i32) {
    %c0_i32 = arith.constant 0 : i32
    %c0_i32_0 = arith.constant 0 : i32
    %c0_i32_1 = arith.constant 0 : i32
    %c0_i32_2 = arith.constant 0 : i32
    return %c0_i32, %c0_i32_0, %c0_i32_1 : i32, i32, i32
  }
  func.func @transform_5(%arg0: i32) -> (i32, i32, i32) {
    %c0_i32 = arith.constant 0 : i32
    %c0_i32_0 = arith.constant 0 : i32
    %c0_i32_1 = arith.constant 0 : i32
    %c0_i32_2 = arith.constant 0 : i32
    return %c0_i32, %c0_i32_0, %c0_i32_1 : i32, i32, i32
  }
  func.func @transform_6(%arg0: i32) -> (i32, i32, i32) {
    %c0_i32 = arith.constant 0 : i32
    %c0_i32_0 = arith.constant 0 : i32
    %c0_i32_1 = arith.constant 0 : i32
    %c0_i32_2 = arith.constant 0 : i32
    return %c0_i32, %c0_i32_0, %c0_i32_1 : i32, i32, i32
  }
  func.func @transform_7(%arg0: i32) -> (i32, i32, i32) {
    %c0_i32 = arith.constant 0 : i32
    %c0_i32_0 = arith.constant 0 : i32
    %c0_i32_1 = arith.constant 0 : i32
    %c0_i32_2 = arith.constant 0 : i32
    return %c0_i32, %c0_i32_0, %c0_i32_1 : i32, i32, i32
  }
  func.func @transform_8(%arg0: i32) -> (i32, i32, i32) {
    %c0_i32 = arith.constant 0 : i32
    %c0_i32_0 = arith.constant 0 : i32
    %c0_i32_1 = arith.constant 0 : i32
    %c0_i32_2 = arith.constant 0 : i32
    return %c0_i32, %c0_i32_0, %c0_i32_1 : i32, i32, i32
  }
  func.func @transform_9(%arg0: i32) -> (i32, i32, i32) {
    %c0_i32 = arith.constant 0 : i32
    %c0_i32_0 = arith.constant 0 : i32
    %c0_i32_1 = arith.constant 0 : i32
    %c0_i32_2 = arith.constant 0 : i32
    return %c0_i32, %c0_i32_0, %c0_i32_1 : i32, i32, i32
  }
  func.func @transform_10(%arg0: i32) -> (i32, i32, i32) {
    %c0_i32 = arith.constant 0 : i32
    %c0_i32_0 = arith.constant 0 : i32
    %c0_i32_1 = arith.constant 0 : i32
    %c0_i32_2 = arith.constant 0 : i32
    return %c0_i32, %c0_i32_0, %c0_i32_1 : i32, i32, i32
  }
  func.func @transform_11(%arg0: i32) -> (i32, i32, i32) {
    %c0_i32 = arith.constant 0 : i32
    %c0_i32_0 = arith.constant 0 : i32
    %c0_i32_1 = arith.constant 0 : i32
    %c0_i32_2 = arith.constant 0 : i32
    return %c0_i32, %c0_i32_0, %c0_i32_1 : i32, i32, i32
  }
  func.func @transform_12(%arg0: i32) -> (i32, i32, i32) {
    %c0_i32 = arith.constant 0 : i32
    %c0_i32_0 = arith.constant 0 : i32
    %c0_i32_1 = arith.constant 0 : i32
    %c0_i32_2 = arith.constant 0 : i32
    return %c0_i32, %c0_i32_0, %c0_i32_1 : i32, i32, i32
  }
  func.func @transform_13(%arg0: i32) -> (i32, i32, i32) {
    %c0_i32 = arith.constant 0 : i32
    %c0_i32_0 = arith.constant 0 : i32
    %c0_i32_1 = arith.constant 0 : i32
    %c0_i32_2 = arith.constant 0 : i32
    return %c0_i32, %c0_i32_0, %c0_i32_1 : i32, i32, i32
  }
  func.func @transform_14(%arg0: i32) -> (i32, i32, i32) {
    %c0_i32 = arith.constant 0 : i32
    %c0_i32_0 = arith.constant 0 : i32
    %c0_i32_1 = arith.constant 0 : i32
    %c0_i32_2 = arith.constant 0 : i32
    return %c0_i32, %c0_i32_0, %c0_i32_1 : i32, i32, i32
  }
  func.func @transform_15(%arg0: i32) -> (i32, i32) {
    %c0_i32 = arith.constant 0 : i32
    %c0_i32_0 = arith.constant 0 : i32
    %c0_i32_1 = arith.constant 0 : i32
    return %c0_i32, %c0_i32_0 : i32, i32
  }
  func.func @transform_16(%arg0: i32) -> (i32, i32) {
    %c0_i32 = arith.constant 0 : i32
    %c0_i32_0 = arith.constant 0 : i32
    %c0_i32_1 = arith.constant 0 : i32
    return %c0_i32, %c0_i32_0 : i32, i32
  }
  func.func @transform_17(%arg0: i32) -> (i32, i32, i32) {
    %c0_i32 = arith.constant 0 : i32
    %c0_i32_0 = arith.constant 0 : i32
    %c0_i32_1 = arith.constant 0 : i32
    return %arg0, %c0_i32, %c0_i32_0 : i32, i32, i32
  }
}

</mosaic_0001>

<llo_original>
// kernel: transformer_forward.1
$region0: #{transformer_forward.1}
  #allocation0 [shape = 'u32[]', space=smem, size = 0x4, offset = 0x4, fixed_abs, tag = 'smem constant byte address 0x4 - core index']
  #allocation1 [shape = 'u32[144,128]{1,0:T(1,128)}', space=vmem, size = 0x12000, scoped, tag = 'internal scratch']
  %s0 = inlined_call_operand.vmem [shape: s32[2,8,1], index: 0, kind: input, shape index: {}]
  %s1 = inlined_call_operand.hbm [shape: f32[128,128], index: 1, kind: input, shape index: {}]
  %s2 = inlined_call_operand.vmem [shape: f32[8,128], index: 2, kind: input, shape index: {}]
  %s3 = inlined_call_operand.hbm [shape: f32[2,128,384], index: 3, kind: input, shape index: {}]
  %s4 = inlined_call_operand.vmem [shape: f32[2,1,384], index: 4, kind: input, shape index: {}]
  %s5 = inlined_call_operand.hbm [shape: f32[2,128,128], index: 5, kind: input, shape index: {}]
  %s6 = inlined_call_operand.vmem [shape: f32[2,1,128], index: 6, kind: input, shape index: {}]
  %s7 = inlined_call_operand.vmem [shape: f32[2,1,128], index: 7, kind: input, shape index: {}]
  %s8 = inlined_call_operand.vmem [shape: f32[2,1,128], index: 8, kind: input, shape index: {}]
  %s9 = inlined_call_operand.hbm [shape: f32[2,128,256], index: 9, kind: input, shape index: {}]
  %s10 = inlined_call_operand.vmem [shape: f32[2,1,256], index: 10, kind: input, shape index: {}]
  %s11 = inlined_call_operand.hbm [shape: f32[2,256,128], index: 11, kind: input, shape index: {}]
  %s12 = inlined_call_operand.vmem [shape: f32[2,1,128], index: 12, kind: input, shape index: {}]
  %s13 = inlined_call_operand.vmem [shape: f32[2,1,128], index: 13, kind: input, shape index: {}]
  %s14 = inlined_call_operand.vmem [shape: f32[2,1,128], index: 14, kind: input, shape index: {}]
  %s15 = inlined_call_operand.hbm [shape: f32[128,128], index: 15, kind: input, shape index: {}]
  %s16 = inlined_call_operand.vmem [shape: f32[1,128], index: 16, kind: input, shape index: {}]
  %s17 = inlined_call_operand.hbm [shape: f32[2,8,128], index: 17, kind: output, shape index: {}]
  %s18 = sld [smem:[#allocation0]]
  $region125: #{transformer_forward.1} parent=0
    _
  %s20 = ssub.s32 1, %s18
  %s21 = scalar_select 0, %s20, %s18
  $region1: #{transformer_forward.1} parent=0
    #allocation2 [shape = 'u8[65536]{0}', space=vmem, size = 0x10000, scoped, tag = 'input window, operand 1, single buffered']
    #allocation3 [shape = 's32[2]{0}', space=sflag, size = 0x8, scoped, tag = 'scoped memory for transformer_forward.1']
    #allocation4 [shape = 's32[2]{0}', space=sflag, size = 0x8, scoped, tag = 'scoped memory for transformer_forward.1']
    #allocation5 [shape = 'u8[393216]{0}', space=vmem, size = 0x60000, scoped, tag = 'input window, operand 3, single buffered']
    #allocation6 [shape = 's32[1]{0}', space=sflag, size = 0x4, scoped, tag = 'scoped memory for transformer_forward.1']
    #allocation7 [shape = 'u8[131072]{0}', space=vmem, size = 0x20000, scoped, tag = 'input window, operand 5, single buffered']
    #allocation8 [shape = 'u8[262144]{0}', space=vmem, size = 0x40000, scoped, tag = 'input window, operand 9, single buffered']
    #allocation9 [shape = 's32[1]{0}', space=sflag, size = 0x4, scoped, tag = 'scoped memory for transformer_forward.1']
    #allocation10 [shape = 'u8[262144]{0}', space=vmem, size = 0x40000, scoped, tag = 'input window, operand 11, single buffered']
    #allocation11 [shape = 'u8[65536]{0}', space=vmem, size = 0x10000, scoped, tag = 'input window, operand 15, single buffered']
    #allocation12 [shape = 's32[1]{0}', space=sflag, size = 0x4, scoped, tag = 'scoped memory for transformer_forward.1']
    #allocation13 [shape = 'u8[8192]{0}', space=vmem, size = 0x2000, scoped, tag = 'output window, operand 0']
    %22 = vsyncpa [#allocation3], 0
    %23 = vsyncpa [#allocation6], 0
    %24 = vsyncpa [#allocation9], 0
    %25 = vsyncpa [#allocation12], 0
    %26 = vsyncpa [#allocation4], 0
    %s27 = scalar_lea.sflag [#allocation4], 1
    %28 = vsyncpa %s27, 0
    loop: start=0, step=1, limit=4
    $region2: #{transformer_forward.1} parent=1 // loop_pre_header
      _
    $region3: #{transformer_forward.1} parent=1 // loop_header
      %s30 = sphi 0, %s34
      %p31 = scmp.ge.s32.totalorder %s30, 4
      %s40 = sphi 0, %s42
      %s43 = sphi 0, %s40
      %s44 = sphi 0, %s43
      %s60 = sphi 0, %s44
      %s64 = sphi 0, %s64
      %s66 = sphi 0, %s64
      %s67 = sphi 0, %s66
      %s81 = sphi 0, %s67
      %s85 = sphi 0, %s85
      %s87 = sphi 0, %s85
      %s88 = sphi 0, %s87
      %s102 = sphi 0, %s88
      %s106 = sphi 0, %s106
      %s108 = sphi 0, %s106
      %s109 = sphi 0, %s108
      %s123 = sphi 0, %s109
      %s127 = sphi 0, %s127
      %s129 = sphi 0, %s127
      %s130 = sphi 0, %s129
      %s144 = sphi 0, %s130
      %s148 = sphi 0, %s148
      %s150 = sphi 0, %s148
      %s151 = sphi 0, %s150
      %s165 = sphi 0, %s151
      %s169 = sphi 0, %s169
      %s171 = sphi 0, %s169
      %s172 = sphi 0, %s171
      %s186 = sphi 0, %s172
      %s190 = sphi 0, %s190
      %s192 = sphi 0, %s190
      %s193 = sphi 0, %s192
      %s207 = sphi 0, %s193
      %s211 = sphi 0, %s211
      %s213 = sphi 0, %s211
      %s214 = sphi 0, %s213
      %s228 = sphi 0, %s214
      %s232 = sphi 0, %s232
      %s234 = sphi 0, %s232
      %s235 = sphi 0, %s234
      %s249 = sphi 0, %s235
      %s253 = sphi 0, %s253
      %s255 = sphi 0, %s253
      %s256 = sphi 0, %s255
      %s270 = sphi 0, %s256
      %s274 = sphi 0, %s274
      %s276 = sphi 0, %s274
      %s277 = sphi 0, %s276
      %s291 = sphi 0, %s277
      %s295 = sphi 0, %s295
      %s297 = sphi 0, %s295
      %s298 = sphi 0, %s297
      %s312 = sphi 0, %s298
      %s316 = sphi 0, %s316
      %s318 = sphi 0, %s316
      %s319 = sphi 0, %s318
      %s333 = sphi 0, %s319
      %s337 = sphi 0, %s337
      %s339 = sphi 0, %s337
      %s340 = sphi 0, %s339
      %s354 = sphi 0, %s340
      %s358 = sphi 0, %s358
      %s360 = sphi 0, %s358
      %s361 = sphi 0, %s360
      %s375 = sphi 0, %s361
      %s379 = sphi 0, %s379
      %s381 = sphi 0, %s379
      %s382 = sphi 0, %s381
      %s396 = sphi 0, %s382
      %s402 = sphi 0, %s404
      %s405 = sphi 0, %s402
      %s406 = sphi 0, %s405
      %s422 = sphi 0, %s406
    $region4: #{transformer_forward.1} parent=1 // loop_header_branch
      %33 = sbr.rel (%p31) target = $region8
    $region5: #{transformer_forward.1} parent=1 // loop_body
      %s35 = ssub.s32 %s30, 1
      %s36 = ssub.s32 %s30, 2
      %s37 = sadd.s32 %s30, 1
      %s38 = ssub.s32 %s30, %s37
      %p39 = scmp.eq.s32.totalorder %s38, 0
      %s41 = sadd.s32 %s40, 1
      %s42 = scalar_select %p39, %s40, %s41
      %p45 = pneg %p39
      %p46 = scmp.eq.s32.totalorder %s30, 1
      %p47 = por %p45, %p46
      %p48 = scmp.ne.s32.totalorder %s40, %s43
      %p49 = scmp.eq.s32.totalorder %s30, 0
      %p50 = por %p48, %p49
      %p51 = scmp.ne.s32.totalorder %s40, %s43
      %p52 = scmp.eq.s32.totalorder %s35, 1
      %p53 = por %p51, %p52
      %p54 = scmp.ne.s32.totalorder %s43, %s44
      %p55 = scmp.eq.s32.totalorder %s35, 0
      %p56 = por %p54, %p55
      %p57 = scmp.ne.s32.totalorder %s43, %s44
      %p58 = scmp.eq.s32.totalorder %s36, 1
      %p59 = por %p57, %p58
      %p61 = scmp.ne.s32.totalorder %s44, %s60
      %p62 = scmp.eq.s32.totalorder %s36, 0
      %p63 = por %p61, %p62
      %s65 = sadd.s32 %s64, 1
      %p68 = scmp.eq.s32.totalorder %s30, 1
      %p69 = scmp.ne.s32.totalorder %s64, %s66
      %p70 = scmp.eq.s32.totalorder %s30, 0
      %p71 = por %p69, %p70
      %p72 = scmp.ne.s32.totalorder %s64, %s66
      %p73 = scmp.eq.s32.totalorder %s35, 1
      %p74 = por %p72, %p73
      %p75 = scmp.ne.s32.totalorder %s66, %s67
      %p76 = scmp.eq.s32.totalorder %s35, 0
      %p77 = por %p75, %p76
      %p78 = scmp.ne.s32.totalorder %s66, %s67
      %p79 = scmp.eq.s32.totalorder %s36, 1
      %p80 = por %p78, %p79
      %p82 = scmp.ne.s32.totalorder %s67, %s81
      %p83 = scmp.eq.s32.totalorder %s36, 0
      %p84 = por %p82, %p83
      %s86 = sadd.s32 %s85, 1
      %p89 = scmp.eq.s32.totalorder %s30, 1
      %p90 = scmp.ne.s32.totalorder %s85, %s87
      %p91 = scmp.eq.s32.totalorder %s30, 0
      %p92 = por %p90, %p91
      %p93 = scmp.ne.s32.totalorder %s85, %s87
      %p94 = scmp.eq.s32.totalorder %s35, 1
      %p95 = por %p93, %p94
      %p96 = scmp.ne.s32.totalorder %s87, %s88
      %p97 = scmp.eq.s32.totalorder %s35, 0
      %p98 = por %p96, %p97
      %p99 = scmp.ne.s32.totalorder %s87, %s88
      %p100 = scmp.eq.s32.totalorder %s36, 1
      %p101 = por %p99, %p100
      %p103 = scmp.ne.s32.totalorder %s88, %s102
      %p104 = scmp.eq.s32.totalorder %s36, 0
      %p105 = por %p103, %p104
      %s107 = sadd.s32 %s106, 1
      %p110 = scmp.eq.s32.totalorder %s30, 1
      %p111 = scmp.ne.s32.totalorder %s106, %s108
      %p112 = scmp.eq.s32.totalorder %s30, 0
      %p113 = por %p111, %p112
      %p114 = scmp.ne.s32.totalorder %s106, %s108
      %p115 = scmp.eq.s32.totalorder %s35, 1
      %p116 = por %p114, %p115
      %p117 = scmp.ne.s32.totalorder %s108, %s109
      %p118 = scmp.eq.s32.totalorder %s35, 0
      %p119 = por %p117, %p118
      %p120 = scmp.ne.s32.totalorder %s108, %s109
      %p121 = scmp.eq.s32.totalorder %s36, 1
      %p122 = por %p120, %p121
      %p124 = scmp.ne.s32.totalorder %s109, %s123
      %p125 = scmp.eq.s32.totalorder %s36, 0
      %p126 = por %p124, %p125
      %s128 = sadd.s32 %s127, 1
      %p131 = scmp.eq.s32.totalorder %s30, 1
      %p132 = scmp.ne.s32.totalorder %s127, %s129
      %p133 = scmp.eq.s32.totalorder %s30, 0
      %p134 = por %p132, %p133
      %p135 = scmp.ne.s32.totalorder %s127, %s129
      %p136 = scmp.eq.s32.totalorder %s35, 1
      %p137 = por %p135, %p136
      %p138 = scmp.ne.s32.totalorder %s129, %s130
      %p139 = scmp.eq.s32.totalorder %s35, 0
      %p140 = por %p138, %p139
      %p141 = scmp.ne.s32.totalorder %s129, %s130
      %p142 = scmp.eq.s32.totalorder %s36, 1
      %p143 = por %p141, %p142
      %p145 = scmp.ne.s32.totalorder %s130, %s144
      %p146 = scmp.eq.s32.totalorder %s36, 0
      %p147 = por %p145, %p146
      %s149 = sadd.s32 %s148, 1
      %p152 = scmp.eq.s32.totalorder %s30, 1
      %p153 = scmp.ne.s32.totalorder %s148, %s150
      %p154 = scmp.eq.s32.totalorder %s30, 0
      %p155 = por %p153, %p154
      %p156 = scmp.ne.s32.totalorder %s148, %s150
      %p157 = scmp.eq.s32.totalorder %s35, 1
      %p158 = por %p156, %p157
      %p159 = scmp.ne.s32.totalorder %s150, %s151
      %p160 = scmp.eq.s32.totalorder %s35, 0
      %p161 = por %p159, %p160
      %p162 = scmp.ne.s32.totalorder %s150, %s151
      %p163 = scmp.eq.s32.totalorder %s36, 1
      %p164 = por %p162, %p163
      %p166 = scmp.ne.s32.totalorder %s151, %s165
      %p167 = scmp.eq.s32.totalorder %s36, 0
      %p168 = por %p166, %p167
      %s170 = sadd.s32 %s169, 1
      %p173 = scmp.eq.s32.totalorder %s30, 1
      %p174 = scmp.ne.s32.totalorder %s169, %s171
      %p175 = scmp.eq.s32.totalorder %s30, 0
      %p176 = por %p174, %p175
      %p177 = scmp.ne.s32.totalorder %s169, %s171
      %p178 = scmp.eq.s32.totalorder %s35, 1
      %p179 = por %p177, %p178
      %p180 = scmp.ne.s32.totalorder %s171, %s172
      %p181 = scmp.eq.s32.totalorder %s35, 0
      %p182 = por %p180, %p181
      %p183 = scmp.ne.s32.totalorder %s171, %s172
      %p184 = scmp.eq.s32.totalorder %s36, 1
      %p185 = por %p183, %p184
      %p187 = scmp.ne.s32.totalorder %s172, %s186
      %p188 = scmp.eq.s32.totalorder %s36, 0
      %p189 = por %p187, %p188
      %s191 = sadd.s32 %s190, 1
      %p194 = scmp.eq.s32.totalorder %s30, 1
      %p195 = scmp.ne.s32.totalorder %s190, %s192
      %p196 = scmp.eq.s32.totalorder %s30, 0
      %p197 = por %p195, %p196
      %p198 = scmp.ne.s32.totalorder %s190, %s192
      %p199 = scmp.eq.s32.totalorder %s35, 1
      %p200 = por %p198, %p199
      %p201 = scmp.ne.s32.totalorder %s192, %s193
      %p202 = scmp.eq.s32.totalorder %s35, 0
      %p203 = por %p201, %p202
      %p204 = scmp.ne.s32.totalorder %s192, %s193
      %p205 = scmp.eq.s32.totalorder %s36, 1
      %p206 = por %p204, %p205
      %p208 = scmp.ne.s32.totalorder %s193, %s207
      %p209 = scmp.eq.s32.totalorder %s36, 0
      %p210 = por %p208, %p209
      %s212 = sadd.s32 %s211, 1
      %p215 = scmp.eq.s32.totalorder %s30, 1
      %p216 = scmp.ne.s32.totalorder %s211, %s213
      %p217 = scmp.eq.s32.totalorder %s30, 0
      %p218 = por %p216, %p217
      %p219 = scmp.ne.s32.totalorder %s211, %s213
      %p220 = scmp.eq.s32.totalorder %s35, 1
      %p221 = por %p219, %p220
      %p222 = scmp.ne.s32.totalorder %s213, %s214
      %p223 = scmp.eq.s32.totalorder %s35, 0
      %p224 = por %p222, %p223
      %p225 = scmp.ne.s32.totalorder %s213, %s214
      %p226 = scmp.eq.s32.totalorder %s36, 1
      %p227 = por %p225, %p226
      %p229 = scmp.ne.s32.totalorder %s214, %s228
      %p230 = scmp.eq.s32.totalorder %s36, 0
      %p231 = por %p229, %p230
      %s233 = sadd.s32 %s232, 1
      %p236 = scmp.eq.s32.totalorder %s30, 1
      %p237 = scmp.ne.s32.totalorder %s232, %s234
      %p238 = scmp.eq.s32.totalorder %s30, 0
      %p239 = por %p237, %p238
      %p240 = scmp.ne.s32.totalorder %s232, %s234
      %p241 = scmp.eq.s32.totalorder %s35, 1
      %p242 = por %p240, %p241
      %p243 = scmp.ne.s32.totalorder %s234, %s235
      %p244 = scmp.eq.s32.totalorder %s35, 0
      %p245 = por %p243, %p244
      %p246 = scmp.ne.s32.totalorder %s234, %s235
      %p247 = scmp.eq.s32.totalorder %s36, 1
      %p248 = por %p246, %p247
      %p250 = scmp.ne.s32.totalorder %s235, %s249
      %p251 = scmp.eq.s32.totalorder %s36, 0
      %p252 = por %p250, %p251
      %s254 = sadd.s32 %s253, 1
      %p257 = scmp.eq.s32.totalorder %s30, 1
      %p258 = scmp.ne.s32.totalorder %s253, %s255
      %p259 = scmp.eq.s32.totalorder %s30, 0
      %p260 = por %p258, %p259
      %p261 = scmp.ne.s32.totalorder %s253, %s255
      %p262 = scmp.eq.s32.totalorder %s35, 1
      %p263 = por %p261, %p262
      %p264 = scmp.ne.s32.totalorder %s255, %s256
      %p265 = scmp.eq.s32.totalorder %s35, 0
      %p266 = por %p264, %p265
      %p267 = scmp.ne.s32.totalorder %s255, %s256
      %p268 = scmp.eq.s32.totalorder %s36, 1
      %p269 = por %p267, %p268
      %p271 = scmp.ne.s32.totalorder %s256, %s270
      %p272 = scmp.eq.s32.totalorder %s36, 0
      %p273 = por %p271, %p272
      %s275 = sadd.s32 %s274, 1
      %p278 = scmp.eq.s32.totalorder %s30, 1
      %p279 = scmp.ne.s32.totalorder %s274, %s276
      %p280 = scmp.eq.s32.totalorder %s30, 0
      %p281 = por %p279, %p280
      %p282 = scmp.ne.s32.totalorder %s274, %s276
      %p283 = scmp.eq.s32.totalorder %s35, 1
      %p284 = por %p282, %p283
      %p285 = scmp.ne.s32.totalorder %s276, %s277
      %p286 = scmp.eq.s32.totalorder %s35, 0
      %p287 = por %p285, %p286
      %p288 = scmp.ne.s32.totalorder %s276, %s277
      %p289 = scmp.eq.s32.totalorder %s36, 1
      %p290 = por %p288, %p289
      %p292 = scmp.ne.s32.totalorder %s277, %s291
      %p293 = scmp.eq.s32.totalorder %s36, 0
      %p294 = por %p292, %p293
      %s296 = sadd.s32 %s295, 1
      %p299 = scmp.eq.s32.totalorder %s30, 1
      %p300 = scmp.ne.s32.totalorder %s295, %s297
      %p301 = scmp.eq.s32.totalorder %s30, 0
      %p302 = por %p300, %p301
      %p303 = scmp.ne.s32.totalorder %s295, %s297
      %p304 = scmp.eq.s32.totalorder %s35, 1
      %p305 = por %p303, %p304
      %p306 = scmp.ne.s32.totalorder %s297, %s298
      %p307 = scmp.eq.s32.totalorder %s35, 0
      %p308 = por %p306, %p307
      %p309 = scmp.ne.s32.totalorder %s297, %s298
      %p310 = scmp.eq.s32.totalorder %s36, 1
      %p311 = por %p309, %p310
      %p313 = scmp.ne.s32.totalorder %s298, %s312
      %p314 = scmp.eq.s32.totalorder %s36, 0
      %p315 = por %p313, %p314
      %s317 = sadd.s32 %s316, 1
      %p320 = scmp.eq.s32.totalorder %s30, 1
      %p321 = scmp.ne.s32.totalorder %s316, %s318
      %p322 = scmp.eq.s32.totalorder %s30, 0
      %p323 = por %p321, %p322
      %p324 = scmp.ne.s32.totalorder %s316, %s318
      %p325 = scmp.eq.s32.totalorder %s35, 1
      %p326 = por %p324, %p325
      %p327 = scmp.ne.s32.totalorder %s318, %s319
      %p328 = scmp.eq.s32.totalorder %s35, 0
      %p329 = por %p327, %p328
      %p330 = scmp.ne.s32.totalorder %s318, %s319
      %p331 = scmp.eq.s32.totalorder %s36, 1
      %p332 = por %p330, %p331
      %p334 = scmp.ne.s32.totalorder %s319, %s333
      %p335 = scmp.eq.s32.totalorder %s36, 0
      %p336 = por %p334, %p335
      %s338 = sadd.s32 %s337, 1
      %p341 = scmp.eq.s32.totalorder %s30, 1
      %p342 = scmp.ne.s32.totalorder %s337, %s339
      %p343 = scmp.eq.s32.totalorder %s30, 0
      %p344 = por %p342, %p343
      %p345 = scmp.ne.s32.totalorder %s337, %s339
      %p346 = scmp.eq.s32.totalorder %s35, 1
      %p347 = por %p345, %p346
      %p348 = scmp.ne.s32.totalorder %s339, %s340
      %p349 = scmp.eq.s32.totalorder %s35, 0
      %p350 = por %p348, %p349
      %p351 = scmp.ne.s32.totalorder %s339, %s340
      %p352 = scmp.eq.s32.totalorder %s36, 1
      %p353 = por %p351, %p352
      %p355 = scmp.ne.s32.totalorder %s340, %s354
      %p356 = scmp.eq.s32.totalorder %s36, 0
      %p357 = por %p355, %p356
      %s359 = sadd.s32 %s358, 1
      %p362 = scmp.eq.s32.totalorder %s30, 1
      %p363 = scmp.ne.s32.totalorder %s358, %s360
      %p364 = scmp.eq.s32.totalorder %s30, 0
      %p365 = por %p363, %p364
      %p366 = scmp.ne.s32.totalorder %s358, %s360
      %p367 = scmp.eq.s32.totalorder %s35, 1
      %p368 = por %p366, %p367
      %p369 = scmp.ne.s32.totalorder %s360, %s361
      %p370 = scmp.eq.s32.totalorder %s35, 0
      %p371 = por %p369, %p370
      %p372 = scmp.ne.s32.totalorder %s360, %s361
      %p373 = scmp.eq.s32.totalorder %s36, 1
      %p374 = por %p372, %p373
      %p376 = scmp.ne.s32.totalorder %s361, %s375
      %p377 = scmp.eq.s32.totalorder %s36, 0
      %p378 = por %p376, %p377
      %s380 = sadd.s32 %s379, 1
      %p383 = scmp.eq.s32.totalorder %s30, 1
      %p384 = scmp.ne.s32.totalorder %s379, %s381
      %p385 = scmp.eq.s32.totalorder %s30, 0
      %p386 = por %p384, %p385
      %p387 = scmp.ne.s32.totalorder %s379, %s381
      %p388 = scmp.eq.s32.totalorder %s35, 1
      %p389 = por %p387, %p388
      %p390 = scmp.ne.s32.totalorder %s381, %s382
      %p391 = scmp.eq.s32.totalorder %s35, 0
      %p392 = por %p390, %p391
      %p393 = scmp.ne.s32.totalorder %s381, %s382
      %p394 = scmp.eq.s32.totalorder %s36, 1
      %p395 = por %p393, %p394
      %p397 = scmp.ne.s32.totalorder %s382, %s396
      %p398 = scmp.eq.s32.totalorder %s36, 0
      %p399 = por %p397, %p398
      %s400 = ssub.s32 %s30, %s37
      %p401 = scmp.eq.s32.totalorder %s400, 0
      %s403 = sadd.s32 %s402, 1
      %s404 = scalar_select %p401, %s402, %s403
      %p407 = pneg %p401
      %p408 = scmp.eq.s32.totalorder %s30, 1
      %p409 = por %p407, %p408
      %p410 = scmp.ne.s32.totalorder %s402, %s405
      %p411 = scmp.eq.s32.totalorder %s30, 0
      %p412 = por %p410, %p411
      %p413 = scmp.ne.s32.totalorder %s402, %s405
      %p414 = scmp.eq.s32.totalorder %s35, 1
      %p415 = por %p413, %p414
      %p416 = scmp.ne.s32.totalorder %s405, %s406
      %p417 = scmp.eq.s32.totalorder %s35, 0
      %p418 = por %p416, %p417
      %p419 = scmp.ne.s32.totalorder %s405, %s406
      %p420 = scmp.eq.s32.totalorder %s36, 1
      %p421 = por %p419, %p420
      %p423 = scmp.ne.s32.totalorder %s406, %s422
      %p424 = scmp.eq.s32.totalorder %s36, 0
      %p425 = por %p423, %p424
      %p426 = scmp.le.s32.totalorder 1, %s30
      %p427 = scmp.lt.s32.totalorder %s30, 3
      %p428 = pnand %p426, %p427
      %p429 = pneg %p428
      // Predicated region
      $region9: #{transformer_forward.1} parent=5 // pred_check
        _
      $region10: #{transformer_forward.1} parent=5 // pred_check_branch
        %431 = sbr.rel (%p428) target = $region12
      $region11: #{transformer_forward.1} parent=5 // pred_region
        %s432 = ssub.s32 %s30, 1
        // Predicated region
        $region13: #{transformer_forward.1} parent=11 // pred_check
          %p433 = pneg %p77
        $region14: #{transformer_forward.1} parent=11 // pred_check_branch
          %435 = sbr.rel (%p433) target = $region16
        $region15: #{transformer_forward.1} parent=11 // pred_region
          %s437 = ssub.s32 2048, 2048
          %438 = vsyncadd [#allocation3], %s437
          %s439 = sshll.u32 [#allocation2], 4
          %s440 = int_to_ptr.vmem [resolvable:$true] %s439
          %445 = dma.hbm_to_vmem [thread:$0]  %s1, 2048, %s440, [#allocation3], 128, 128, 8
        $region16: #{transformer_forward.1} parent=11 // pred_fallthru
          _
        // Predicated region
        $region17: #{transformer_forward.1} parent=11 // pred_check
          %p446 = pneg %p98
        $region18: #{transformer_forward.1} parent=11 // pred_check_branch
          %448 = sbr.rel (%p446) target = $region20
        $region19: #{transformer_forward.1} parent=11 // pred_region
          _
        $region20: #{transformer_forward.1} parent=11 // pred_fallthru
          _
        // Predicated region
        $region21: #{transformer_forward.1} parent=11 // pred_check
          %p449 = pneg %p119
        $region22: #{transformer_forward.1} parent=11 // pred_check_branch
          %451 = sbr.rel (%p449) target = $region24
        $region23: #{transformer_forward.1} parent=11 // pred_region
          %s453 = ssub.s32 12288, 12288
          %454 = vsyncadd [#allocation6], %s453
          %s455 = sshll.u32 [#allocation5], 4
          %s456 = int_to_ptr.vmem [resolvable:$true] %s455
          %461 = dma.hbm_to_vmem [thread:$0]  %s3, 12288, %s456, [#allocation6], 384, 384, 24
        $region24: #{transformer_forward.1} parent=11 // pred_fallthru
          _
        // Predicated region
        $region25: #{transformer_forward.1} parent=11 // pred_check
          %p462 = pneg %p140
        $region26: #{transformer_forward.1} parent=11 // pred_check_branch
          %464 = sbr.rel (%p462) target = $region28
        $region27: #{transformer_forward.1} parent=11 // pred_region
          _
        $region28: #{transformer_forward.1} parent=11 // pred_fallthru
          _
        // Predicated region
        $region29: #{transformer_forward.1} parent=11 // pred_check
          %p465 = pneg %p161
        $region30: #{transformer_forward.1} parent=11 // pred_check_branch
          %467 = sbr.rel (%p465) target = $region32
        $region31: #{transformer_forward.1} parent=11 // pred_region
          %s469 = ssub.s32 4096, 4096
          %470 = vsyncadd [#allocation6], %s469
          %s471 = sshll.u32 [#allocation7], 4
          %s472 = int_to_ptr.vmem [resolvable:$true] %s471
          %477 = dma.hbm_to_vmem [thread:$0]  %s5, 4096, %s472, [#allocation6], 128, 128, 8
        $region32: #{transformer_forward.1} parent=11 // pred_fallthru
          _
        // Predicated region
        $region33: #{transformer_forward.1} parent=11 // pred_check
          %p478 = pneg %p182
        $region34: #{transformer_forward.1} parent=11 // pred_check_branch
          %480 = sbr.rel (%p478) target = $region36
        $region35: #{transformer_forward.1} parent=11 // pred_region
          _
        $region36: #{transformer_forward.1} parent=11 // pred_fallthru
          _
        // Predicated region
        $region37: #{transformer_forward.1} parent=11 // pred_check
          %p481 = pneg %p203
        $region38: #{transformer_forward.1} parent=11 // pred_check_branch
          %483 = sbr.rel (%p481) target = $region40
        $region39: #{transformer_forward.1} parent=11 // pred_region
          _
        $region40: #{transformer_forward.1} parent=11 // pred_fallthru
          _
        // Predicated region
        $region41: #{transformer_forward.1} parent=11 // pred_check
          %p484 = pneg %p224
        $region42: #{transformer_forward.1} parent=11 // pred_check_branch
          %486 = sbr.rel (%p484) target = $region44
        $region43: #{transformer_forward.1} parent=11 // pred_region
          _
        $region44: #{transformer_forward.1} parent=11 // pred_fallthru
          _
        // Predicated region
        $region45: #{transformer_forward.1} parent=11 // pred_check
          %p487 = pneg %p245
        $region46: #{transformer_forward.1} parent=11 // pred_check_branch
          %489 = sbr.rel (%p487) target = $region48
        $region47: #{transformer_forward.1} parent=11 // pred_region
          %s491 = ssub.s32 8192, 8192
          %492 = vsyncadd [#allocation9], %s491
          %s493 = sshll.u32 [#allocation8], 4
          %s494 = int_to_ptr.vmem [resolvable:$true] %s493
          %499 = dma.hbm_to_vmem [thread:$0]  %s9, 8192, %s494, [#allocation9], 256, 256, 16
        $region48: #{transformer_forward.1} parent=11 // pred_fallthru
          _
        // Predicated region
        $region49: #{transformer_forward.1} parent=11 // pred_check
          %p500 = pneg %p266
        $region50: #{transformer_forward.1} parent=11 // pred_check_branch
          %502 = sbr.rel (%p500) target = $region52
        $region51: #{transformer_forward.1} parent=11 // pred_region
          _
        $region52: #{transformer_forward.1} parent=11 // pred_fallthru
          _
        // Predicated region
        $region53: #{transformer_forward.1} parent=11 // pred_check
          %p503 = pneg %p287
        $region54: #{transformer_forward.1} parent=11 // pred_check_branch
          %505 = sbr.rel (%p503) target = $region56
        $region55: #{transformer_forward.1} parent=11 // pred_region
          %s507 = ssub.s32 8192, 8192
          %508 = vsyncadd [#allocation9], %s507
          %s509 = sshll.u32 [#allocation10], 4
          %s510 = int_to_ptr.vmem [resolvable:$true] %s509
          %515 = dma.hbm_to_vmem [thread:$0]  %s11, 8192, %s510, [#allocation9], 128, 128, 8
        $region56: #{transformer_forward.1} parent=11 // pred_fallthru
          _
        // Predicated region
        $region57: #{transformer_forward.1} parent=11 // pred_check
          %p516 = pneg %p308
        $region58: #{transformer_forward.1} parent=11 // pred_check_branch
          %518 = sbr.rel (%p516) target = $region60
        $region59: #{transformer_forward.1} parent=11 // pred_region
          _
        $region60: #{transformer_forward.1} parent=11 // pred_fallthru
          _
        // Predicated region
        $region61: #{transformer_forward.1} parent=11 // pred_check
          %p519 = pneg %p329
        $region62: #{transformer_forward.1} parent=11 // pred_check_branch
          %521 = sbr.rel (%p519) target = $region64
        $region63: #{transformer_forward.1} parent=11 // pred_region
          _
        $region64: #{transformer_forward.1} parent=11 // pred_fallthru
          _
        // Predicated region
        $region65: #{transformer_forward.1} parent=11 // pred_check
          %p522 = pneg %p350
        $region66: #{transformer_forward.1} parent=11 // pred_check_branch
          %524 = sbr.rel (%p522) target = $region68
        $region67: #{transformer_forward.1} parent=11 // pred_region
          _
        $region68: #{transformer_forward.1} parent=11 // pred_fallthru
          _
        // Predicated region
        $region69: #{transformer_forward.1} parent=11 // pred_check
          %p525 = pneg %p371
        $region70: #{transformer_forward.1} parent=11 // pred_check_branch
          %527 = sbr.rel (%p525) target = $region72
        $region71: #{transformer_forward.1} parent=11 // pred_region
          %s529 = ssub.s32 2048, 2048
          %530 = vsyncadd [#allocation12], %s529
          %s531 = sshll.u32 [#allocation11], 4
          %s532 = int_to_ptr.vmem [resolvable:$true] %s531
          %537 = dma.hbm_to_vmem [thread:$0]  %s15, 2048, %s532, [#allocation12], 128, 128, 8
        $region72: #{transformer_forward.1} parent=11 // pred_fallthru
          _
        // Predicated region
        $region73: #{transformer_forward.1} parent=11 // pred_check
          %p538 = pneg %p392
        $region74: #{transformer_forward.1} parent=11 // pred_check_branch
          %540 = sbr.rel (%p538) target = $region76
        $region75: #{transformer_forward.1} parent=11 // pred_region
          _
        $region76: #{transformer_forward.1} parent=11 // pred_fallthru
          _
      $region12: #{transformer_forward.1} parent=5 // pred_fallthru
        _
      %p541 = scmp.lt.s32.totalorder %s30, 2
      // Predicated region
      $region77: #{transformer_forward.1} parent=5 // pred_check
        %p542 = pneg %p541
      $region78: #{transformer_forward.1} parent=5 // pred_check_branch
        %544 = sbr.rel (%p542) target = $region80
      $region79: #{transformer_forward.1} parent=5 // pred_region
        // Predicated region
        $region81: #{transformer_forward.1} parent=79 // pred_check
          %p545 = pneg %p50
        $region82: #{transformer_forward.1} parent=79 // pred_check_branch
          %547 = sbr.rel (%p545) target = $region84
        $region83: #{transformer_forward.1} parent=79 // pred_region
          %p548 = scmp.lt.s32.totalorder %s30, 1
          %s549 = scalar_select %p548, %s30, 1
          %s550 = smul.addr %s549, 8
          %s551 = scalar_lea.vmem %s0, %s550
        $region84: #{transformer_forward.1} parent=79 // pred_fallthru
          _
      $region80: #{transformer_forward.1} parent=5 // pred_fallthru
        _
      %p552 = scmp.le.s32.totalorder 1, %s30
      %p553 = scmp.lt.s32.totalorder %s30, 3
      %p554 = pnand %p552, %p553
      %p555 = pneg %p554
      // Predicated region
      $region85: #{transformer_forward.1} parent=5 // pred_check
        _
      $region86: #{transformer_forward.1} parent=5 // pred_check_branch
        %557 = sbr.rel (%p554) target = $region88
      $region87: #{transformer_forward.1} parent=5 // pred_region
        %s558 = ssub.s32 %s30, 1
        // Predicated region
        $region89: #{transformer_forward.1} parent=87 // pred_check
          %p559 = pneg %p77
        $region90: #{transformer_forward.1} parent=87 // pred_check_branch
          %561 = sbr.rel (%p559) target = $region92
        $region91: #{transformer_forward.1} parent=87 // pred_region
          %562 = dma.done [#allocation3], 2048
        $region92: #{transformer_forward.1} parent=87 // pred_fallthru
          _
        // Predicated region
        $region93: #{transformer_forward.1} parent=87 // pred_check
          %p563 = pneg %p119
        $region94: #{transformer_forward.1} parent=87 // pred_check_branch
          %565 = sbr.rel (%p563) target = $region96
        $region95: #{transformer_forward.1} parent=87 // pred_region
          %566 = dma.done [#allocation6], 12288
        $region96: #{transformer_forward.1} parent=87 // pred_fallthru
          _
        // Predicated region
        $region97: #{transformer_forward.1} parent=87 // pred_check
          %p567 = pneg %p161
        $region98: #{transformer_forward.1} parent=87 // pred_check_branch
          %569 = sbr.rel (%p567) target = $region100
        $region99: #{transformer_forward.1} parent=87 // pred_region
          %570 = dma.done [#allocation6], 4096
        $region100: #{transformer_forward.1} parent=87 // pred_fallthru
          _
        // Predicated region
        $region101: #{transformer_forward.1} parent=87 // pred_check
          %p571 = pneg %p245
        $region102: #{transformer_forward.1} parent=87 // pred_check_branch
          %573 = sbr.rel (%p571) target = $region104
        $region103: #{transformer_forward.1} parent=87 // pred_region
          %574 = dma.done [#allocation9], 8192
        $region104: #{transformer_forward.1} parent=87 // pred_fallthru
          _
        // Predicated region
        $region105: #{transformer_forward.1} parent=87 // pred_check
          %p575 = pneg %p287
        $region106: #{transformer_forward.1} parent=87 // pred_check_branch
          %577 = sbr.rel (%p575) target = $region108
        $region107: #{transformer_forward.1} parent=87 // pred_region
          %578 = dma.done [#allocation9], 8192
        $region108: #{transformer_forward.1} parent=87 // pred_fallthru
          _
        // Predicated region
        $region109: #{transformer_forward.1} parent=87 // pred_check
          %p579 = pneg %p371
        $region110: #{transformer_forward.1} parent=87 // pred_check_branch
          %581 = sbr.rel (%p579) target = $region112
        $region111: #{transformer_forward.1} parent=87 // pred_region
          %582 = dma.done [#allocation12], 2048
        $region112: #{transformer_forward.1} parent=87 // pred_fallthru
          _
        %p583 = scmp.lt.s32.totalorder %s35, 1
        %s584 = scalar_select %p583, %s35, 1
        %s585 = smul.addr %s584, 8
        %s586 = scalar_lea.vmem %s0, %s585
        %p587 = pneg %p56
        %p588 = pneg %p53
        %p589 = pneg %p77
        %p590 = pneg %p74
        %p591 = pneg %p98
        %p592 = pneg %p95
        %p593 = pneg %p119
        %p594 = pneg %p116
        %p595 = pneg %p140
        %p596 = pneg %p137
        %p597 = pneg %p161
        %p598 = pneg %p158
        %p599 = pneg %p182
        %p600 = pneg %p179
        %p601 = pneg %p203
        %p602 = pneg %p200
        %p603 = pneg %p224
        %p604 = pneg %p221
        %p605 = pneg %p245
        %p606 = pneg %p242
        %p607 = pneg %p266
        %p608 = pneg %p263
        %p609 = pneg %p287
        %p610 = pneg %p284
        %p611 = pneg %p308
        %p612 = pneg %p305
        %p613 = pneg %p329
        %p614 = pneg %p326
        %p615 = pneg %p350
        %p616 = pneg %p347
        %p617 = pneg %p371
        %p618 = pneg %p368
        %p619 = pneg %p392
        %p620 = pneg %p389
        %p621 = pneg %p418
        %p622 = pneg %p415
        %s623 = sand.u32 %s405, 1
        %s624 = scalar_lea.sflag [#allocation4], %s623
        %s625 = sand.u32 %s405, 1
        %s626 = smul.addr %s625, 8
        %s627 = scalar_lea.vmem [#allocation13], %s626
        %p628 = scmp.lt.s32.totalorder %s35, 1
        %s629 = scalar_select %p628, %s35, 1
        %s630 = smul.addr %s629, 8
        %s631 = scalar_lea.vmem %s0, %s630
        %v632 = vld [vmem:[%s631] sm:$0xff]
        %v633 = vlaneseq
        %v634 = vand.u32 %v633, 127
        %635 = vset.pattern.permute.xlu0 0
        %636 = vperm.xlu0 %635, %v632
        %v637 = vpop.permute.xlu0 %636
        %vm638 = vcmp.eq.s32.totalorder %v637, %v634
        %v639 = vsel %vm638, 1, 0
        %v640 = vcvt.s32.f32 %v639
        %v641 = vld [vmem:[#allocation2] sm:$0xff]
        %v642 = vld [vmem:[#allocation2 + $0x8] sm:$0xff]
        %v643 = vld [vmem:[#allocation2 + $0x10] sm:$0xff]
        %v644 = vld [vmem:[#allocation2 + $0x18] sm:$0xff]
        %v645 = vld [vmem:[#allocation2 + $0x20] sm:$0xff]
        %v646 = vld [vmem:[#allocation2 + $0x28] sm:$0xff]
        %v647 = vld [vmem:[#allocation2 + $0x30] sm:$0xff]
        %v648 = vld [vmem:[#allocation2 + $0x38] sm:$0xff]
        %v649 = vld [vmem:[#allocation2 + $0x40] sm:$0xff]
        %v650 = vld [vmem:[#allocation2 + $0x48] sm:$0xff]
        %v651 = vld [vmem:[#allocation2 + $0x50] sm:$0xff]
        %v652 = vld [vmem:[#allocation2 + $0x58] sm:$0xff]
        %v653 = vld [vmem:[#allocation2 + $0x60] sm:$0xff]
        %v654 = vld [vmem:[#allocation2 + $0x68] sm:$0xff]
        %v655 = vld [vmem:[#allocation2 + $0x70] sm:$0xff]
        %v656 = vld [vmem:[#allocation2 + $0x78] sm:$0xff]
        %657 = vmatprep.subr.mxu0 0.0
        %658 = vmatpush1.msra.mxu0 %v641
        %659 = vmatprep.subr.mxu0 0.0
        %660 = vmatpush1.msra.mxu0 %v642
        %661 = vmatprep.subr.mxu0 0.0
        %662 = vmatpush1.msra.mxu0 %v643
        %663 = vmatprep.subr.mxu0 0.0
        %664 = vmatpush1.msra.mxu0 %v644
        %665 = vmatprep.subr.mxu0 0.0
        %666 = vmatpush1.msra.mxu0 %v645
        %667 = vmatprep.subr.mxu0 0.0
        %668 = vmatpush1.msra.mxu0 %v646
        %669 = vmatprep.subr.mxu0 0.0
        %670 = vmatpush1.msra.mxu0 %v647
        %671 = vmatprep.subr.mxu0 0.0
        %672 = vmatpush1.msra.mxu0 %v648
        %673 = vmatprep.subr.mxu0 0.0
        %674 = vmatpush1.msra.mxu0 %v649
        %675 = vmatprep.subr.mxu0 0.0
        %676 = vmatpush1.msra.mxu0 %v650
        %677 = vmatprep.subr.mxu0 0.0
        %678 = vmatpush1.msra.mxu0 %v651
        %679 = vmatprep.subr.mxu0 0.0
        %680 = vmatpush1.msra.mxu0 %v652
        %681 = vmatprep.subr.mxu0 0.0
        %682 = vmatpush1.msra.mxu0 %v653
        %683 = vmatprep.subr.mxu0 0.0
        %684 = vmatpush1.msra.mxu0 %v654
        %685 = vmatprep.subr.mxu0 0.0
        %686 = vmatpush1.msra.mxu0 %v655
        %687 = vmatprep.subr.mxu0 0.0
        %688 = vmatpush1.msra.mxu0 %v656
        %689 = vmatprep.subr.mxu0 0.0
        %690 = vmatpush1.msra.mxu0 0.0
        %691 = vmatprep.subr.mxu0 0.0
        %692 = vmatpush1.msra.mxu0 0.0
        %693 = vmatprep.subr.mxu0 0.0
        %694 = vmatpush1.msra.mxu0 0.0
        %695 = vmatprep.subr.mxu0 0.0
        %696 = vmatpush1.msra.mxu0 0.0
        %697 = vmatprep.subr.mxu0 0.0
        %698 = vmatpush1.msra.mxu0 0.0
        %699 = vmatprep.subr.mxu0 0.0
        %700 = vmatpush1.msra.mxu0 0.0
        %701 = vmatprep.subr.mxu0 0.0
        %702 = vmatpush1.msra.mxu0 0.0
        %703 = vmatprep.subr.mxu0 0.0
        %704 = vmatpush1.msra.mxu0 0.0
        %705 = vmatprep.subr.mxu0 0.0
        %706 = vmatpush1.msra.mxu0 0.0
        %707 = vmatprep.subr.mxu0 0.0
        %708 = vmatpush1.msra.mxu0 0.0
        %709 = vmatprep.subr.mxu0 0.0
        %710 = vmatpush1.msra.mxu0 0.0
        %711 = vmatprep.subr.mxu0 0.0
        %712 = vmatpush1.msra.mxu0 0.0
        %713 = vmatprep.subr.mxu0 0.0
        %714 = vmatpush1.msra.mxu0 0.0
        %715 = vmatprep.subr.mxu0 0.0
        %716 = vmatpush1.msra.mxu0 0.0
        %717 = vmatprep.subr.mxu0 0.0
        %718 = vmatpush1.msra.mxu0 0.0
        %719 = vmatprep.subr.mxu0 0.0
        %720 = vmatpush1.msra.mxu0 0.0
        %721 = vmatprep.mubr.f32.mxu0 0.0
        %722 = vmatmul.mubr.f32.gmra.mrb[0].mxu0 %v640
        %v723 = vpop.f32.mrb[0].mxu0
        %v724 = vadd.f32 0.0, %v723
        %v725 = vpop.f32.mrb[0].mxu0
        %726 = vdwg.mxu0
        %v727 = vmul.f32 %v724, 11.313708
        %v728 = vld [vmem:[%s2] sm:$0xff]
        %v729 = vadd.f32 %v727, %v728
        %v730 = vld [vmem:[#allocation5] sm:$0xff]
        %v731 = vld [vmem:[#allocation5 + $0x8] sm:$0xff]
        %v732 = vld [vmem:[#allocation5 + $0x10] sm:$0xff]
        %v733 = vld [vmem:[#allocation5 + $0x18] sm:$0xff]
        %v734 = vld [vmem:[#allocation5 + $0x20] sm:$0xff]
        %v735 = vld [vmem:[#allocation5 + $0x28] sm:$0xff]
        %v736 = vld [vmem:[#allocation5 + $0x30] sm:$0xff]
        %v737 = vld [vmem:[#allocation5 + $0x38] sm:$0xff]
        %v738 = vld [vmem:[#allocation5 + $0x40] sm:$0xff]
        %v739 = vld [vmem:[#allocation5 + $0x48] sm:$0xff]
        %v740 = vld [vmem:[#allocation5 + $0x50] sm:$0xff]
        %v741 = vld [vmem:[#allocation5 + $0x58] sm:$0xff]
        %v742 = vld [vmem:[#allocation5 + $0x60] sm:$0xff]
        %v743 = vld [vmem:[#allocation5 + $0x68] sm:$0xff]
        %v744 = vld [vmem:[#allocation5 + $0x70] sm:$0xff]
        %v745 = vld [vmem:[#allocation5 + $0x78] sm:$0xff]
        %v746 = vld [vmem:[#allocation5 + $0x80] sm:$0xff]
        %v747 = vld [vmem:[#allocation5 + $0x88] sm:$0xff]
        %v748 = vld [vmem:[#allocation5 + $0x90] sm:$0xff]
        %v749 = vld [vmem:[#allocation5 + $0x98] sm:$0xff]
        %v750 = vld [vmem:[#allocation5 + $0xa0] sm:$0xff]
        %v751 = vld [vmem:[#allocation5 + $0xa8] sm:$0xff]
        %v752 = vld [vmem:[#allocation5 + $0xb0] sm:$0xff]
        %v753 = vld [vmem:[#allocation5 + $0xb8] sm:$0xff]
        %v754 = vld [vmem:[#allocation5 + $0xc0] sm:$0xff]
        %v755 = vld [vmem:[#allocation5 + $0xc8] sm:$0xff]
        %v756 = vld [vmem:[#allocation5 + $0xd0] sm:$0xff]
        %v757 = vld [vmem:[#allocation5 + $0xd8] sm:$0xff]
        %v758 = vld [vmem:[#allocation5 + $0xe0] sm:$0xff]
        %v759 = vld [vmem:[#allocation5 + $0xe8] sm:$0xff]
        %v760 = vld [vmem:[#allocation5 + $0xf0] sm:$0xff]
        %v761 = vld [vmem:[#allocation5 + $0xf8] sm:$0xff]
        %v762 = vld [vmem:[#allocation5 + $0x100] sm:$0xff]
        %v763 = vld [vmem:[#allocation5 + $0x108] sm:$0xff]
        %v764 = vld [vmem:[#allocation5 + $0x110] sm:$0xff]
        %v765 = vld [vmem:[#allocation5 + $0x118] sm:$0xff]
        %v766 = vld [vmem:[#allocation5 + $0x120] sm:$0xff]
        %v767 = vld [vmem:[#allocation5 + $0x128] sm:$0xff]
        %v768 = vld [vmem:[#allocation5 + $0x130] sm:$0xff]
        %v769 = vld [vmem:[#allocation5 + $0x138] sm:$0xff]
        %v770 = vld [vmem:[#allocation5 + $0x140] sm:$0xff]
        %v771 = vld [vmem:[#allocation5 + $0x148] sm:$0xff]
        %v772 = vld [vmem:[#allocation5 + $0x150] sm:$0xff]
        %v773 = vld [vmem:[#allocation5 + $0x158] sm:$0xff]
        %v774 = vld [vmem:[#allocation5 + $0x160] sm:$0xff]
        %v775 = vld [vmem:[#allocation5 + $0x168] sm:$0xff]
        %v776 = vld [vmem:[#allocation5 + $0x170] sm:$0xff]
        %v777 = vld [vmem:[#allocation5 + $0x178] sm:$0xff]
        %v778 = vld [vmem:[%s4] sm:$0x7]
        %v780 = vlaneseq
        %v781 = vshrl.u32 %v780, 7
        %v782 = vsub.s32 0, %v781
        %v783 = vrot.slane %v778, %v782
        %v784 = vlaneseq
        %v785 = vshrl.u32 %v784, 7
        %v786 = vsub.s32 1, %v785
        %v787 = vrot.slane %v778, %v786
        %v788 = vlaneseq
        %v789 = vshrl.u32 %v788, 7
        %v790 = vsub.s32 2, %v789
        %v791 = vrot.slane %v778, %v790
        %795 = vmatprep.subr.mxu0 %v731
        %796 = vmatpush1.msra.mxu0 %v730
        %797 = vmatprep.subr.mxu0 %v734
        %798 = vmatpush1.msra.mxu0 %v733
        %799 = vmatprep.subr.mxu0 %v737
        %800 = vmatpush1.msra.mxu0 %v736
        %801 = vmatprep.subr.mxu0 %v740
        %802 = vmatpush1.msra.mxu0 %v739
        %803 = vmatprep.subr.mxu0 %v743
        %804 = vmatpush1.msra.mxu0 %v742
        %805 = vmatprep.subr.mxu0 %v746
        %806 = vmatpush1.msra.mxu0 %v745
        %807 = vmatprep.subr.mxu0 %v749
        %808 = vmatpush1.msra.mxu0 %v748
        %809 = vmatprep.subr.mxu0 %v752
        %810 = vmatpush1.msra.mxu0 %v751
        %811 = vmatprep.subr.mxu0 %v755
        %812 = vmatpush1.msra.mxu0 %v754
        %813 = vmatprep.subr.mxu0 %v758
        %814 = vmatpush1.msra.mxu0 %v757
        %815 = vmatprep.subr.mxu0 %v761
        %816 = vmatpush1.msra.mxu0 %v760
        %817 = vmatprep.subr.mxu0 %v764
        %818 = vmatpush1.msra.mxu0 %v763
        %819 = vmatprep.subr.mxu0 %v767
        %820 = vmatpush1.msra.mxu0 %v766
        %821 = vmatprep.subr.mxu0 %v770
        %822 = vmatpush1.msra.mxu0 %v769
        %823 = vmatprep.subr.mxu0 %v773
        %824 = vmatpush1.msra.mxu0 %v772
        %825 = vmatprep.subr.mxu0 %v776
        %826 = vmatpush1.msra.mxu0 %v775
        %827 = vmatprep.subr.mxu0 0.0
        %828 = vmatpush1.msra.mxu0 0.0
        %829 = vmatprep.subr.mxu0 0.0
        %830 = vmatpush1.msra.mxu0 0.0
        %831 = vmatprep.subr.mxu0 0.0
        %832 = vmatpush1.msra.mxu0 0.0
        %833 = vmatprep.subr.mxu0 0.0
        %834 = vmatpush1.msra.mxu0 0.0
        %835 = vmatprep.subr.mxu0 0.0
        %836 = vmatpush1.msra.mxu0 0.0
        %837 = vmatprep.subr.mxu0 0.0
        %838 = vmatpush1.msra.mxu0 0.0
        %839 = vmatprep.subr.mxu0 0.0
        %840 = vmatpush1.msra.mxu0 0.0
        %841 = vmatprep.subr.mxu0 0.0
        %842 = vmatpush1.msra.mxu0 0.0
        %843 = vmatprep.subr.mxu0 0.0
        %844 = vmatpush1.msra.mxu0 0.0
        %845 = vmatprep.subr.mxu0 0.0
        %846 = vmatpush1.msra.mxu0 0.0
        %847 = vmatprep.subr.mxu0 0.0
        %848 = vmatpush1.msra.mxu0 0.0
        %849 = vmatprep.subr.mxu0 0.0
        %850 = vmatpush1.msra.mxu0 0.0
        %851 = vmatprep.subr.mxu0 0.0
        %852 = vmatpush1.msra.mxu0 0.0
        %853 = vmatprep.subr.mxu0 0.0
        %854 = vmatpush1.msra.mxu0 0.0
        %855 = vmatprep.subr.mxu0 0.0
        %856 = vmatpush1.msra.mxu0 0.0
        %857 = vmatprep.subr.mxu0 0.0
        %858 = vmatpush1.msra.mxu0 0.0
        %859 = vmatprep.mubr.f32.mxu0 0.0
        %860 = vmatmul.mubr.f32.gmra.mrb[0].mxu0 %v729
        %v861 = vpop.f32.mrb[0].mxu0
        %v862 = vadd.f32 %v783, %v861
        %v863 = vpop.f32.mrb[0].mxu0
        %v864 = vadd.f32 %v787, %v863
        %865 = vdwg.mxu0
        %866 = vmatprep.subr.mxu0 0.0
        %867 = vmatpush1.msra.mxu0 %v732
        %868 = vmatprep.subr.mxu0 0.0
        %869 = vmatpush1.msra.mxu0 %v735
        %870 = vmatprep.subr.mxu0 0.0
        %871 = vmatpush1.msra.mxu0 %v738
        %872 = vmatprep.subr.mxu0 0.0
        %873 = vmatpush1.msra.mxu0 %v741
        %874 = vmatprep.subr.mxu0 0.0
        %875 = vmatpush1.msra.mxu0 %v744
        %876 = vmatprep.subr.mxu0 0.0
        %877 = vmatpush1.msra.mxu0 %v747
        %878 = vmatprep.subr.mxu0 0.0
        %879 = vmatpush1.msra.mxu0 %v750
        %880 = vmatprep.subr.mxu0 0.0
        %881 = vmatpush1.msra.mxu0 %v753
        %882 = vmatprep.subr.mxu0 0.0
        %883 = vmatpush1.msra.mxu0 %v756
        %884 = vmatprep.subr.mxu0 0.0
        %885 = vmatpush1.msra.mxu0 %v759
        %886 = vmatprep.subr.mxu0 0.0
        %887 = vmatpush1.msra.mxu0 %v762
        %888 = vmatprep.subr.mxu0 0.0
        %889 = vmatpush1.msra.mxu0 %v765
        %890 = vmatprep.subr.mxu0 0.0
        %891 = vmatpush1.msra.mxu0 %v768
        %892 = vmatprep.subr.mxu0 0.0
        %893 = vmatpush1.msra.mxu0 %v771
        %894 = vmatprep.subr.mxu0 0.0
        %895 = vmatpush1.msra.mxu0 %v774
        %896 = vmatprep.subr.mxu0 0.0
        %897 = vmatpush1.msra.mxu0 %v777
        %898 = vmatprep.subr.mxu0 0.0
        %899 = vmatpush1.msra.mxu0 0.0
        %900 = vmatprep.subr.mxu0 0.0
        %901 = vmatpush1.msra.mxu0 0.0
        %902 = vmatprep.subr.mxu0 0.0
        %903 = vmatpush1.msra.mxu0 0.0
        %904 = vmatprep.subr.mxu0 0.0
        %905 = vmatpush1.msra.mxu0 0.0
        %906 = vmatprep.subr.mxu0 0.0
        %907 = vmatpush1.msra.mxu0 0.0
        %908 = vmatprep.subr.mxu0 0.0
        %909 = vmatpush1.msra.mxu0 0.0
        %910 = vmatprep.subr.mxu0 0.0
        %911 = vmatpush1.msra.mxu0 0.0
        %912 = vmatprep.subr.mxu0 0.0
        %913 = vmatpush1.msra.mxu0 0.0
        %914 = vmatprep.subr.mxu0 0.0
        %915 = vmatpush1.msra.mxu0 0.0
        %916 = vmatprep.subr.mxu0 0.0
        %917 = vmatpush1.msra.mxu0 0.0
        %918 = vmatprep.subr.mxu0 0.0
        %919 = vmatpush1.msra.mxu0 0.0
        %920 = vmatprep.subr.mxu0 0.0
        %921 = vmatpush1.msra.mxu0 0.0
        %922 = vmatprep.subr.mxu0 0.0
        %923 = vmatpush1.msra.mxu0 0.0
        %924 = vmatprep.subr.mxu0 0.0
        %925 = vmatpush1.msra.mxu0 0.0
        %926 = vmatprep.subr.mxu0 0.0
        %927 = vmatpush1.msra.mxu0 0.0
        %928 = vmatprep.subr.mxu0 0.0
        %929 = vmatpush1.msra.mxu0 0.0
        %930 = vmatprep.mubr.f32.mxu0 0.0
        %931 = vmatmul.mubr.f32.gmra.mrb[0].mxu0 %v729
        %v932 = vpop.f32.mrb[0].mxu0
        %v933 = vadd.f32 %v791, %v932
        %v934 = vpop.f32.mrb[0].mxu0
        %935 = vdwg.mxu0
        %937 = vrot.lane.b32.xlu0 %v862, 112
        %v938 = vpop.permute.xlu0 %937
        %939 = vrot.lane.b32.xlu0 %v862, 96
        %v940 = vpop.permute.xlu0 %939
        %941 = vrot.lane.b32.xlu0 %v862, 80
        %v942 = vpop.permute.xlu0 %941
        %943 = vrot.lane.b32.xlu0 %v862, 64
        %v944 = vpop.permute.xlu0 %943
        %945 = vrot.lane.b32.xlu0 %v862, 48
        %v946 = vpop.permute.xlu0 %945
        %947 = vrot.lane.b32.xlu0 %v862, 32
        %v948 = vpop.permute.xlu0 %947
        %949 = vrot.lane.b32.xlu0 %v862, 16
        %v950 = vpop.permute.xlu0 %949
        %952 = vrot.lane.b32.xlu0 %v864, 112
        %v953 = vpop.permute.xlu0 %952
        %955 = vrot.lane.b32.xlu0 %v864, 96
        %v956 = vpop.permute.xlu0 %955
        %958 = vrot.lane.b32.xlu0 %v864, 80
        %v959 = vpop.permute.xlu0 %958
        %961 = vrot.lane.b32.xlu0 %v864, 64
        %v962 = vpop.permute.xlu0 %961
        %964 = vrot.lane.b32.xlu0 %v864, 48
        %v965 = vpop.permute.xlu0 %964
        %967 = vrot.lane.b32.xlu0 %v864, 32
        %v968 = vpop.permute.xlu0 %967
        %970 = vrot.lane.b32.xlu0 %v864, 16
        %v971 = vpop.permute.xlu0 %970
        %974 = vrot.lane.b32.xlu0 %v933, 112
        %v975 = vpop.permute.xlu0 %974
        %977 = vrot.lane.b32.xlu0 %v933, 96
        %v978 = vpop.permute.xlu0 %977
        %980 = vrot.lane.b32.xlu0 %v933, 80
        %v981 = vpop.permute.xlu0 %980
        %983 = vrot.lane.b32.xlu0 %v933, 64
        %v984 = vpop.permute.xlu0 %983
        %986 = vrot.lane.b32.xlu0 %v933, 48
        %v987 = vpop.permute.xlu0 %986
        %989 = vrot.lane.b32.xlu0 %v933, 32
        %v990 = vpop.permute.xlu0 %989
        %992 = vrot.lane.b32.xlu0 %v933, 16
        %v993 = vpop.permute.xlu0 %992
        %995 = vxpose.xlu0.b32.start [1/16] %v864, 128
        %996 = vxpose.xlu0.b32.cont [2/16] 0.0, 128
        %997 = vxpose.xlu0.b32.cont [3/16] 0.0, 128
        %998 = vxpose.xlu0.b32.cont [4/16] 0.0, 128
        %999 = vxpose.xlu0.b32.cont [5/16] 0.0, 128
        %1000 = vxpose.xlu0.b32.cont [6/16] 0.0, 128
        %1001 = vxpose.xlu0.b32.cont [7/16] 0.0, 128
        %1002 = vxpose.xlu0.b32.cont [8/16] 0.0, 128
        %1003 = vxpose.xlu0.b32.cont [9/16] 0.0, 128
        %1004 = vxpose.xlu0.b32.cont [10/16] 0.0, 128
        %1005 = vxpose.xlu0.b32.cont [11/16] 0.0, 128
        %1006 = vxpose.xlu0.b32.cont [12/16] 0.0, 128
        %1007 = vxpose.xlu0.b32.cont [13/16] 0.0, 128
        %1008 = vxpose.xlu0.b32.cont [14/16] 0.0, 128
        %1009 = vxpose.xlu0.b32.cont [15/16] 0.0, 128
        %1010 = vxpose.xlu0.b32.end [16/16] 0.0, 128
        %v1011 = vpop.trf.xlu0
        %v1012 = vpop.trf.xlu0
        %v1013 = vpop.trf.xlu0
        %v1014 = vpop.trf.xlu0
        %v1015 = vpop.trf.xlu0
        %v1016 = vpop.trf.xlu0
        %v1017 = vpop.trf.xlu0
        %v1018 = vpop.trf.xlu0
        %v1019 = vpop.trf.xlu0
        %v1020 = vpop.trf.xlu0
        %v1021 = vpop.trf.xlu0
        %v1022 = vpop.trf.xlu0
        %v1023 = vpop.trf.xlu0
        %v1024 = vpop.trf.xlu0
        %v1025 = vpop.trf.xlu0
        %v1026 = vpop.trf.xlu0
        %1027 = vxpose.xlu0.b32.start [1/16] %v953, 128
        %1028 = vxpose.xlu0.b32.cont [2/16] 0.0, 128
        %1029 = vxpose.xlu0.b32.cont [3/16] 0.0, 128
        %1030 = vxpose.xlu0.b32.cont [4/16] 0.0, 128
        %1031 = vxpose.xlu0.b32.cont [5/16] 0.0, 128
        %1032 = vxpose.xlu0.b32.cont [6/16] 0.0, 128
        %1033 = vxpose.xlu0.b32.cont [7/16] 0.0, 128
        %1034 = vxpose.xlu0.b32.cont [8/16] 0.0, 128
        %1035 = vxpose.xlu0.b32.cont [9/16] 0.0, 128
        %1036 = vxpose.xlu0.b32.cont [10/16] 0.0, 128
        %1037 = vxpose.xlu0.b32.cont [11/16] 0.0, 128
        %1038 = vxpose.xlu0.b32.cont [12/16] 0.0, 128
        %1039 = vxpose.xlu0.b32.cont [13/16] 0.0, 128
        %1040 = vxpose.xlu0.b32.cont [14/16] 0.0, 128
        %1041 = vxpose.xlu0.b32.cont [15/16] 0.0, 128
        %1042 = vxpose.xlu0.b32.end [16/16] 0.0, 128
        %v1043 = vpop.trf.xlu0
        %v1044 = vpop.trf.xlu0
        %v1045 = vpop.trf.xlu0
        %v1046 = vpop.trf.xlu0
        %v1047 = vpop.trf.xlu0
        %v1048 = vpop.trf.xlu0
        %v1049 = vpop.trf.xlu0
        %v1050 = vpop.trf.xlu0
        %v1051 = vpop.trf.xlu0
        %v1052 = vpop.trf.xlu0
        %v1053 = vpop.trf.xlu0
        %v1054 = vpop.trf.xlu0
        %v1055 = vpop.trf.xlu0
        %v1056 = vpop.trf.xlu0
        %v1057 = vpop.trf.xlu0
        %v1058 = vpop.trf.xlu0
        %1059 = vxpose.xlu0.b32.start [1/16] %v956, 128
        %1060 = vxpose.xlu0.b32.cont [2/16] 0.0, 128
        %1061 = vxpose.xlu0.b32.cont [3/16] 0.0, 128
        %1062 = vxpose.xlu0.b32.cont [4/16] 0.0, 128
        %1063 = vxpose.xlu0.b32.cont [5/16] 0.0, 128
        %1064 = vxpose.xlu0.b32.cont [6/16] 0.0, 128
        %1065 = vxpose.xlu0.b32.cont [7/16] 0.0, 128
        %1066 = vxpose.xlu0.b32.cont [8/16] 0.0, 128
        %1067 = vxpose.xlu0.b32.cont [9/16] 0.0, 128
        %1068 = vxpose.xlu0.b32.cont [10/16] 0.0, 128
        %1069 = vxpose.xlu0.b32.cont [11/16] 0.0, 128
        %1070 = vxpose.xlu0.b32.cont [12/16] 0.0, 128
        %1071 = vxpose.xlu0.b32.cont [13/16] 0.0, 128
        %1072 = vxpose.xlu0.b32.cont [14/16] 0.0, 128
        %1073 = vxpose.xlu0.b32.cont [15/16] 0.0, 128
        %1074 = vxpose.xlu0.b32.end [16/16] 0.0, 128
        %v1075 = vpop.trf.xlu0
        %v1076 = vpop.trf.xlu0
        %v1077 = vpop.trf.xlu0
        %v1078 = vpop.trf.xlu0
        %v1079 = vpop.trf.xlu0
        %v1080 = vpop.trf.xlu0
        %v1081 = vpop.trf.xlu0
        %v1082 = vpop.trf.xlu0
        %v1083 = vpop.trf.xlu0
        %v1084 = vpop.trf.xlu0
        %v1085 = vpop.trf.xlu0
        %v1086 = vpop.trf.xlu0
        %v1087 = vpop.trf.xlu0
        %v1088 = vpop.trf.xlu0
        %v1089 = vpop.trf.xlu0
        %v1090 = vpop.trf.xlu0
        %1091 = vxpose.xlu0.b32.start [1/16] %v959, 128
        %1092 = vxpose.xlu0.b32.cont [2/16] 0.0, 128
        %1093 = vxpose.xlu0.b32.cont [3/16] 0.0, 128
        %1094 = vxpose.xlu0.b32.cont [4/16] 0.0, 128
        %1095 = vxpose.xlu0.b32.cont [5/16] 0.0, 128
        %1096 = vxpose.xlu0.b32.cont [6/16] 0.0, 128
        %1097 = vxpose.xlu0.b32.cont [7/16] 0.0, 128
        %1098 = vxpose.xlu0.b32.cont [8/16] 0.0, 128
        %1099 = vxpose.xlu0.b32.cont [9/16] 0.0, 128
        %1100 = vxpose.xlu0.b32.cont [10/16] 0.0, 128
        %1101 = vxpose.xlu0.b32.cont [11/16] 0.0, 128
        %1102 = vxpose.xlu0.b32.cont [12/16] 0.0, 128
        %1103 = vxpose.xlu0.b32.cont [13/16] 0.0, 128
        %1104 = vxpose.xlu0.b32.cont [14/16] 0.0, 128
        %1105 = vxpose.xlu0.b32.cont [15/16] 0.0, 128
        %1106 = vxpose.xlu0.b32.end [16/16] 0.0, 128
        %v1107 = vpop.trf.xlu0
        %v1108 = vpop.trf.xlu0
        %v1109 = vpop.trf.xlu0
        %v1110 = vpop.trf.xlu0
        %v1111 = vpop.trf.xlu0
        %v1112 = vpop.trf.xlu0
        %v1113 = vpop.trf.xlu0
        %v1114 = vpop.trf.xlu0
        %v1115 = vpop.trf.xlu0
        %v1116 = vpop.trf.xlu0
        %v1117 = vpop.trf.xlu0
        %v1118 = vpop.trf.xlu0
        %v1119 = vpop.trf.xlu0
        %v1120 = vpop.trf.xlu0
        %v1121 = vpop.trf.xlu0
        %v1122 = vpop.trf.xlu0
        %1123 = vxpose.xlu0.b32.start [1/16] %v962, 128
        %1124 = vxpose.xlu0.b32.cont [2/16] 0.0, 128
        %1125 = vxpose.xlu0.b32.cont [3/16] 0.0, 128
        %1126 = vxpose.xlu0.b32.cont [4/16] 0.0, 128
        %1127 = vxpose.xlu0.b32.cont [5/16] 0.0, 128
        %1128 = vxpose.xlu0.b32.cont [6/16] 0.0, 128
        %1129 = vxpose.xlu0.b32.cont [7/16] 0.0, 128
        %1130 = vxpose.xlu0.b32.cont [8/16] 0.0, 128
        %1131 = vxpose.xlu0.b32.cont [9/16] 0.0, 128
        %1132 = vxpose.xlu0.b32.cont [10/16] 0.0, 128
        %1133 = vxpose.xlu0.b32.cont [11/16] 0.0, 128
        %1134 = vxpose.xlu0.b32.cont [12/16] 0.0, 128
        %1135 = vxpose.xlu0.b32.cont [13/16] 0.0, 128
        %1136 = vxpose.xlu0.b32.cont [14/16] 0.0, 128
        %1137 = vxpose.xlu0.b32.cont [15/16] 0.0, 128
        %1138 = vxpose.xlu0.b32.end [16/16] 0.0, 128
        %v1139 = vpop.trf.xlu0
        %v1140 = vpop.trf.xlu0
        %v1141 = vpop.trf.xlu0
        %v1142 = vpop.trf.xlu0
        %v1143 = vpop.trf.xlu0
        %v1144 = vpop.trf.xlu0
        %v1145 = vpop.trf.xlu0
        %v1146 = vpop.trf.xlu0
        %v1147 = vpop.trf.xlu0
        %v1148 = vpop.trf.xlu0
        %v1149 = vpop.trf.xlu0
        %v1150 = vpop.trf.xlu0
        %v1151 = vpop.trf.xlu0
        %v1152 = vpop.trf.xlu0
        %v1153 = vpop.trf.xlu0
        %v1154 = vpop.trf.xlu0
        %1155 = vxpose.xlu0.b32.start [1/16] %v965, 128
        %1156 = vxpose.xlu0.b32.cont [2/16] 0.0, 128
        %1157 = vxpose.xlu0.b32.cont [3/16] 0.0, 128
        %1158 = vxpose.xlu0.b32.cont [4/16] 0.0, 128
        %1159 = vxpose.xlu0.b32.cont [5/16] 0.0, 128
        %1160 = vxpose.xlu0.b32.cont [6/16] 0.0, 128
        %1161 = vxpose.xlu0.b32.cont [7/16] 0.0, 128
        %1162 = vxpose.xlu0.b32.cont [8/16] 0.0, 128
        %1163 = vxpose.xlu0.b32.cont [9/16] 0.0, 128
        %1164 = vxpose.xlu0.b32.cont [10/16] 0.0, 128
        %1165 = vxpose.xlu0.b32.cont [11/16] 0.0, 128
        %1166 = vxpose.xlu0.b32.cont [12/16] 0.0, 128
        %1167 = vxpose.xlu0.b32.cont [13/16] 0.0, 128
        %1168 = vxpose.xlu0.b32.cont [14/16] 0.0, 128
        %1169 = vxpose.xlu0.b32.cont [15/16] 0.0, 128
        %1170 = vxpose.xlu0.b32.end [16/16] 0.0, 128
        %v1171 = vpop.trf.xlu0
        %v1172 = vpop.trf.xlu0
        %v1173 = vpop.trf.xlu0
        %v1174 = vpop.trf.xlu0
        %v1175 = vpop.trf.xlu0
        %v1176 = vpop.trf.xlu0
        %v1177 = vpop.trf.xlu0
        %v1178 = vpop.trf.xlu0
        %v1179 = vpop.trf.xlu0
        %v1180 = vpop.trf.xlu0
        %v1181 = vpop.trf.xlu0
        %v1182 = vpop.trf.xlu0
        %v1183 = vpop.trf.xlu0
        %v1184 = vpop.trf.xlu0
        %v1185 = vpop.trf.xlu0
        %v1186 = vpop.trf.xlu0
        %1187 = vxpose.xlu0.b32.start [1/16] %v968, 128
        %1188 = vxpose.xlu0.b32.cont [2/16] 0.0, 128
        %1189 = vxpose.xlu0.b32.cont [3/16] 0.0, 128
        %1190 = vxpose.xlu0.b32.cont [4/16] 0.0, 128
        %1191 = vxpose.xlu0.b32.cont [5/16] 0.0, 128
        %1192 = vxpose.xlu0.b32.cont [6/16] 0.0, 128
        %1193 = vxpose.xlu0.b32.cont [7/16] 0.0, 128
        %1194 = vxpose.xlu0.b32.cont [8/16] 0.0, 128
        %1195 = vxpose.xlu0.b32.cont [9/16] 0.0, 128
        %1196 = vxpose.xlu0.b32.cont [10/16] 0.0, 128
        %1197 = vxpose.xlu0.b32.cont [11/16] 0.0, 128
        %1198 = vxpose.xlu0.b32.cont [12/16] 0.0, 128
        %1199 = vxpose.xlu0.b32.cont [13/16] 0.0, 128
        %1200 = vxpose.xlu0.b32.cont [14/16] 0.0, 128
        %1201 = vxpose.xlu0.b32.cont [15/16] 0.0, 128
        %1202 = vxpose.xlu0.b32.end [16/16] 0.0, 128
        %v1203 = vpop.trf.xlu0
        %v1204 = vpop.trf.xlu0
        %v1205 = vpop.trf.xlu0
        %v1206 = vpop.trf.xlu0
        %v1207 = vpop.trf.xlu0
        %v1208 = vpop.trf.xlu0
        %v1209 = vpop.trf.xlu0
        %v1210 = vpop.trf.xlu0
        %v1211 = vpop.trf.xlu0
        %v1212 = vpop.trf.xlu0
        %v1213 = vpop.trf.xlu0
        %v1214 = vpop.trf.xlu0
        %v1215 = vpop.trf.xlu0
        %v1216 = vpop.trf.xlu0
        %v1217 = vpop.trf.xlu0
        %v1218 = vpop.trf.xlu0
        %1219 = vxpose.xlu0.b32.start [1/16] %v971, 128
        %1220 = vxpose.xlu0.b32.cont [2/16] 0.0, 128
        %1221 = vxpose.xlu0.b32.cont [3/16] 0.0, 128
        %1222 = vxpose.xlu0.b32.cont [4/16] 0.0, 128
        %1223 = vxpose.xlu0.b32.cont [5/16] 0.0, 128
        %1224 = vxpose.xlu0.b32.cont [6/16] 0.0, 128
        %1225 = vxpose.xlu0.b32.cont [7/16] 0.0, 128
        %1226 = vxpose.xlu0.b32.cont [8/16] 0.0, 128
        %1227 = vxpose.xlu0.b32.cont [9/16] 0.0, 128
        %1228 = vxpose.xlu0.b32.cont [10/16] 0.0, 128
        %1229 = vxpose.xlu0.b32.cont [11/16] 0.0, 128
        %1230 = vxpose.xlu0.b32.cont [12/16] 0.0, 128
        %1231 = vxpose.xlu0.b32.cont [13/16] 0.0, 128
        %1232 = vxpose.xlu0.b32.cont [14/16] 0.0, 128
        %1233 = vxpose.xlu0.b32.cont [15/16] 0.0, 128
        %1234 = vxpose.xlu0.b32.end [16/16] 0.0, 128
        %v1235 = vpop.trf.xlu0
        %v1236 = vpop.trf.xlu0
        %v1237 = vpop.trf.xlu0
        %v1238 = vpop.trf.xlu0
        %v1239 = vpop.trf.xlu0
        %v1240 = vpop.trf.xlu0
        %v1241 = vpop.trf.xlu0
        %v1242 = vpop.trf.xlu0
        %v1243 = vpop.trf.xlu0
        %v1244 = vpop.trf.xlu0
        %v1245 = vpop.trf.xlu0
        %v1246 = vpop.trf.xlu0
        %v1247 = vpop.trf.xlu0
        %v1248 = vpop.trf.xlu0
        %v1249 = vpop.trf.xlu0
        %v1250 = vpop.trf.xlu0
        %vm1251 = vcmask 130048
        %v1252 = vsel %vm1251, %v862, 0
        %1254 = vmatprep.subr.mxu0 0.0
        %1255 = vmatpush1.msra.mxu0 %v1011
        %1256 = vmatprep.subr.mxu0 0.0
        %1257 = vmatpush1.msra.mxu0 %v1012
        %1258 = vmatprep.subr.mxu0 0.0
        %1259 = vmatpush1.msra.mxu0 0.0
        %1260 = vmatprep.subr.mxu0 0.0
        %1261 = vmatpush1.msra.mxu0 0.0
        %1262 = vmatprep.subr.mxu0 0.0
        %1263 = vmatpush1.msra.mxu0 0.0
        %1264 = vmatprep.subr.mxu0 0.0
        %1265 = vmatpush1.msra.mxu0 0.0
        %1266 = vmatprep.subr.mxu0 0.0
        %1267 = vmatpush1.msra.mxu0 0.0
        %1268 = vmatprep.subr.mxu0 0.0
        %1269 = vmatpush1.msra.mxu0 0.0
        %1270 = vmatprep.subr.mxu0 0.0
        %1271 = vmatpush1.msra.mxu0 0.0
        %1272 = vmatprep.subr.mxu0 0.0
        %1273 = vmatpush1.msra.mxu0 0.0
        %1274 = vmatprep.subr.mxu0 0.0
        %1275 = vmatpush1.msra.mxu0 0.0
        %1276 = vmatprep.subr.mxu0 0.0
        %1277 = vmatpush1.msra.mxu0 0.0
        %1278 = vmatprep.subr.mxu0 0.0
        %1279 = vmatpush1.msra.mxu0 0.0
        %1280 = vmatprep.subr.mxu0 0.0
        %1281 = vmatpush1.msra.mxu0 0.0
        %1282 = vmatprep.subr.mxu0 0.0
        %1283 = vmatpush1.msra.mxu0 0.0
        %1284 = vmatprep.subr.mxu0 0.0
        %1285 = vmatpush1.msra.mxu0 0.0
        %1286 = vmatprep.subr.mxu0 0.0
        %1287 = vmatpush1.msra.mxu0 0.0
        %1288 = vmatprep.subr.mxu0 0.0
        %1289 = vmatpush1.msra.mxu0 0.0
        %1290 = vmatprep.subr.mxu0 0.0
        %1291 = vmatpush1.msra.mxu0 0.0
        %1292 = vmatprep.subr.mxu0 0.0
        %1293 = vmatpush1.msra.mxu0 0.0
        %1294 = vmatprep.subr.mxu0 0.0
        %1295 = vmatpush1.msra.mxu0 0.0
        %1296 = vmatprep.subr.mxu0 0.0
        %1297 = vmatpush1.msra.mxu0 0.0
        %1298 = vmatprep.subr.mxu0 0.0
        %1299 = vmatpush1.msra.mxu0 0.0
        %1300 = vmatprep.subr.mxu0 0.0
        %1301 = vmatpush1.msra.mxu0 0.0
        %1302 = vmatprep.subr.mxu0 0.0
        %1303 = vmatpush1.msra.mxu0 0.0
        %1304 = vmatprep.subr.mxu0 0.0
        %1305 = vmatpush1.msra.mxu0 0.0
        %1306 = vmatprep.subr.mxu0 0.0
        %1307 = vmatpush1.msra.mxu0 0.0
        %1308 = vmatprep.subr.mxu0 0.0
        %1309 = vmatpush1.msra.mxu0 0.0
        %1310 = vmatprep.subr.mxu0 0.0
        %1311 = vmatpush1.msra.mxu0 0.0
        %1312 = vmatprep.subr.mxu0 0.0
        %1313 = vmatpush1.msra.mxu0 0.0
        %1314 = vmatprep.subr.mxu0 0.0
        %1315 = vmatpush1.msra.mxu0 0.0
        %1316 = vmatprep.subr.mxu0 0.0
        %1317 = vmatpush1.msra.mxu0 0.0
        %1318 = vmatprep.mubr.f32.mxu0 0.0
        %1319 = vmatmul.mubr.f32.gmra.mrb[0].mxu0 %v1252
        %v1320 = vpop.f32.mrb[0].mxu0
        %v1321 = vadd.f32 0.0, %v1320
        %v1322 = vpop.f32.mrb[0].mxu0
        %1323 = vdwg.mxu0
        %v1324 = vsel %vm1251, %v938, 0
        %1326 = vmatprep.subr.mxu0 0.0
        %1327 = vmatpush1.msra.mxu0 %v1043
        %1328 = vmatprep.subr.mxu0 0.0
        %1329 = vmatpush1.msra.mxu0 %v1044
        %1330 = vmatprep.subr.mxu0 0.0
        %1331 = vmatpush1.msra.mxu0 0.0
        %1332 = vmatprep.subr.mxu0 0.0
        %1333 = vmatpush1.msra.mxu0 0.0
        %1334 = vmatprep.subr.mxu0 0.0
        %1335 = vmatpush1.msra.mxu0 0.0
        %1336 = vmatprep.subr.mxu0 0.0
        %1337 = vmatpush1.msra.mxu0 0.0
        %1338 = vmatprep.subr.mxu0 0.0
        %1339 = vmatpush1.msra.mxu0 0.0
        %1340 = vmatprep.subr.mxu0 0.0
        %1341 = vmatpush1.msra.mxu0 0.0
        %1342 = vmatprep.subr.mxu0 0.0
        %1343 = vmatpush1.msra.mxu0 0.0
        %1344 = vmatprep.subr.mxu0 0.0
        %1345 = vmatpush1.msra.mxu0 0.0
        %1346 = vmatprep.subr.mxu0 0.0
        %1347 = vmatpush1.msra.mxu0 0.0
        %1348 = vmatprep.subr.mxu0 0.0
        %1349 = vmatpush1.msra.mxu0 0.0
        %1350 = vmatprep.subr.mxu0 0.0
        %1351 = vmatpush1.msra.mxu0 0.0
        %1352 = vmatprep.subr.mxu0 0.0
        %1353 = vmatpush1.msra.mxu0 0.0
        %1354 = vmatprep.subr.mxu0 0.0
        %1355 = vmatpush1.msra.mxu0 0.0
        %1356 = vmatprep.subr.mxu0 0.0
        %1357 = vmatpush1.msra.mxu0 0.0
        %1358 = vmatprep.subr.mxu0 0.0
        %1359 = vmatpush1.msra.mxu0 0.0
        %1360 = vmatprep.subr.mxu0 0.0
        %1361 = vmatpush1.msra.mxu0 0.0
        %1362 = vmatprep.subr.mxu0 0.0
        %1363 = vmatpush1.msra.mxu0 0.0
        %1364 = vmatprep.subr.mxu0 0.0
        %1365 = vmatpush1.msra.mxu0 0.0
        %1366 = vmatprep.subr.mxu0 0.0
        %1367 = vmatpush1.msra.mxu0 0.0
        %1368 = vmatprep.subr.mxu0 0.0
        %1369 = vmatpush1.msra.mxu0 0.0
        %1370 = vmatprep.subr.mxu0 0.0
        %1371 = vmatpush1.msra.mxu0 0.0
        %1372 = vmatprep.subr.mxu0 0.0
        %1373 = vmatpush1.msra.mxu0 0.0
        %1374 = vmatprep.subr.mxu0 0.0
        %1375 = vmatpush1.msra.mxu0 0.0
        %1376 = vmatprep.subr.mxu0 0.0
        %1377 = vmatpush1.msra.mxu0 0.0
        %1378 = vmatprep.subr.mxu0 0.0
        %1379 = vmatpush1.msra.mxu0 0.0
        %1380 = vmatprep.subr.mxu0 0.0
        %1381 = vmatpush1.msra.mxu0 0.0
        %1382 = vmatprep.subr.mxu0 0.0
        %1383 = vmatpush1.msra.mxu0 0.0
        %1384 = vmatprep.subr.mxu0 0.0
        %1385 = vmatpush1.msra.mxu0 0.0
        %1386 = vmatprep.subr.mxu0 0.0
        %1387 = vmatpush1.msra.mxu0 0.0
        %1388 = vmatprep.subr.mxu0 0.0
        %1389 = vmatpush1.msra.mxu0 0.0
        %1390 = vmatprep.mubr.f32.mxu0 0.0
        %1391 = vmatmul.mubr.f32.gmra.mrb[0].mxu0 %v1324
        %v1392 = vpop.f32.mrb[0].mxu0
        %v1393 = vadd.f32 0.0, %v1392
        %v1394 = vpop.f32.mrb[0].mxu0
        %1395 = vdwg.mxu0
        %v1396 = vsel %vm1251, %v940, 0
        %1398 = vmatprep.subr.mxu0 0.0
        %1399 = vmatpush1.msra.mxu0 %v1075
        %1400 = vmatprep.subr.mxu0 0.0
        %1401 = vmatpush1.msra.mxu0 %v1076
        %1402 = vmatprep.subr.mxu0 0.0
        %1403 = vmatpush1.msra.mxu0 0.0
        %1404 = vmatprep.subr.mxu0 0.0
        %1405 = vmatpush1.msra.mxu0 0.0
        %1406 = vmatprep.subr.mxu0 0.0
        %1407 = vmatpush1.msra.mxu0 0.0
        %1408 = vmatprep.subr.mxu0 0.0
        %1409 = vmatpush1.msra.mxu0 0.0
        %1410 = vmatprep.subr.mxu0 0.0
        %1411 = vmatpush1.msra.mxu0 0.0
        %1412 = vmatprep.subr.mxu0 0.0
        %1413 = vmatpush1.msra.mxu0 0.0
        %1414 = vmatprep.subr.mxu0 0.0
        %1415 = vmatpush1.msra.mxu0 0.0
        %1416 = vmatprep.subr.mxu0 0.0
        %1417 = vmatpush1.msra.mxu0 0.0
        %1418 = vmatprep.subr.mxu0 0.0
        %1419 = vmatpush1.msra.mxu0 0.0
        %1420 = vmatprep.subr.mxu0 0.0
        %1421 = vmatpush1.msra.mxu0 0.0
        %1422 = vmatprep.subr.mxu0 0.0
        %1423 = vmatpush1.msra.mxu0 0.0
        %1424 = vmatprep.subr.mxu0 0.0
        %1425 = vmatpush1.msra.mxu0 0.0
        %1426 = vmatprep.subr.mxu0 0.0
        %1427 = vmatpush1.msra.mxu0 0.0
        %1428 = vmatprep.subr.mxu0 0.0
        %1429 = vmatpush1.msra.mxu0 0.0
        %1430 = vmatprep.subr.mxu0 0.0
        %1431 = vmatpush1.msra.mxu0 0.0
        %1432 = vmatprep.subr.mxu0 0.0
        %1433 = vmatpush1.msra.mxu0 0.0
        %1434 = vmatprep.subr.mxu0 0.0
        %1435 = vmatpush1.msra.mxu0 0.0
        %1436 = vmatprep.subr.mxu0 0.0
        %1437 = vmatpush1.msra.mxu0 0.0
        %1438 = vmatprep.subr.mxu0 0.0
        %1439 = vmatpush1.msra.mxu0 0.0
        %1440 = vmatprep.subr.mxu0 0.0
        %1441 = vmatpush1.msra.mxu0 0.0
        %1442 = vmatprep.subr.mxu0 0.0
        %1443 = vmatpush1.msra.mxu0 0.0
        %1444 = vmatprep.subr.mxu0 0.0
        %1445 = vmatpush1.msra.mxu0 0.0
        %1446 = vmatprep.subr.mxu0 0.0
        %1447 = vmatpush1.msra.mxu0 0.0
        %1448 = vmatprep.subr.mxu0 0.0
        %1449 = vmatpush1.msra.mxu0 0.0
        %1450 = vmatprep.subr.mxu0 0.0
        %1451 = vmatpush1.msra.mxu0 0.0
        %1452 = vmatprep.subr.mxu0 0.0
        %1453 = vmatpush1.msra.mxu0 0.0
        %1454 = vmatprep.subr.mxu0 0.0
        %1455 = vmatpush1.msra.mxu0 0.0
        %1456 = vmatprep.subr.mxu0 0.0
        %1457 = vmatpush1.msra.mxu0 0.0
        %1458 = vmatprep.subr.mxu0 0.0
        %1459 = vmatpush1.msra.mxu0 0.0
        %1460 = vmatprep.subr.mxu0 0.0
        %1461 = vmatpush1.msra.mxu0 0.0
        %1462 = vmatprep.mubr.f32.mxu0 0.0
        %1463 = vmatmul.mubr.f32.gmra.mrb[0].mxu0 %v1396
        %v1464 = vpop.f32.mrb[0].mxu0
        %v1465 = vadd.f32 0.0, %v1464
        %v1466 = vpop.f32.mrb[0].mxu0
        %1467 = vdwg.mxu0
        %v1468 = vsel %vm1251, %v942, 0
        %1470 = vmatprep.subr.mxu0 0.0
        %1471 = vmatpush1.msra.mxu0 %v1107
        %1472 = vmatprep.subr.mxu0 0.0
        %1473 = vmatpush1.msra.mxu0 %v1108
        %1474 = vmatprep.subr.mxu0 0.0
        %1475 = vmatpush1.msra.mxu0 0.0
        %1476 = vmatprep.subr.mxu0 0.0
        %1477 = vmatpush1.msra.mxu0 0.0
        %1478 = vmatprep.subr.mxu0 0.0
        %1479 = vmatpush1.msra.mxu0 0.0
        %1480 = vmatprep.subr.mxu0 0.0
        %1481 = vmatpush1.msra.mxu0 0.0
        %1482 = vmatprep.subr.mxu0 0.0
        %1483 = vmatpush1.msra.mxu0 0.0
        %1484 = vmatprep.subr.mxu0 0.0
        %1485 = vmatpush1.msra.mxu0 0.0
        %1486 = vmatprep.subr.mxu0 0.0
        %1487 = vmatpush1.msra.mxu0 0.0
        %1488 = vmatprep.subr.mxu0 0.0
        %1489 = vmatpush1.msra.mxu0 0.0
        %1490 = vmatprep.subr.mxu0 0.0
        %1491 = vmatpush1.msra.mxu0 0.0
        %1492 = vmatprep.subr.mxu0 0.0
        %1493 = vmatpush1.msra.mxu0 0.0
        %1494 = vmatprep.subr.mxu0 0.0
        %1495 = vmatpush1.msra.mxu0 0.0
        %1496 = vmatprep.subr.mxu0 0.0
        %1497 = vmatpush1.msra.mxu0 0.0
        %1498 = vmatprep.subr.mxu0 0.0
        %1499 = vmatpush1.msra.mxu0 0.0
        %1500 = vmatprep.subr.mxu0 0.0
        %1501 = vmatpush1.msra.mxu0 0.0
        %1502 = vmatprep.subr.mxu0 0.0
        %1503 = vmatpush1.msra.mxu0 0.0
        %1504 = vmatprep.subr.mxu0 0.0
        %1505 = vmatpush1.msra.mxu0 0.0
        %1506 = vmatprep.subr.mxu0 0.0
        %1507 = vmatpush1.msra.mxu0 0.0
        %1508 = vmatprep.subr.mxu0 0.0
        %1509 = vmatpush1.msra.mxu0 0.0
        %1510 = vmatprep.subr.mxu0 0.0
        %1511 = vmatpush1.msra.mxu0 0.0
        %1512 = vmatprep.subr.mxu0 0.0
        %1513 = vmatpush1.msra.mxu0 0.0
        %1514 = vmatprep.subr.mxu0 0.0
        %1515 = vmatpush1.msra.mxu0 0.0
        %1516 = vmatprep.subr.mxu0 0.0
        %1517 = vmatpush1.msra.mxu0 0.0
        %1518 = vmatprep.subr.mxu0 0.0
        %1519 = vmatpush1.msra.mxu0 0.0
        %1520 = vmatprep.subr.mxu0 0.0
        %1521 = vmatpush1.msra.mxu0 0.0
        %1522 = vmatprep.subr.mxu0 0.0
        %1523 = vmatpush1.msra.mxu0 0.0
        %1524 = vmatprep.subr.mxu0 0.0
        %1525 = vmatpush1.msra.mxu0 0.0
        %1526 = vmatprep.subr.mxu0 0.0
        %1527 = vmatpush1.msra.mxu0 0.0
        %1528 = vmatprep.subr.mxu0 0.0
        %1529 = vmatpush1.msra.mxu0 0.0
        %1530 = vmatprep.subr.mxu0 0.0
        %1531 = vmatpush1.msra.mxu0 0.0
        %1532 = vmatprep.subr.mxu0 0.0
        %1533 = vmatpush1.msra.mxu0 0.0
        %1534 = vmatprep.mubr.f32.mxu0 0.0
        %1535 = vmatmul.mubr.f32.gmra.mrb[0].mxu0 %v1468
        %v1536 = vpop.f32.mrb[0].mxu0
        %v1537 = vadd.f32 0.0, %v1536
        %v1538 = vpop.f32.mrb[0].mxu0
        %1539 = vdwg.mxu0
        %v1540 = vsel %vm1251, %v944, 0
        %1542 = vmatprep.subr.mxu0 0.0
        %1543 = vmatpush1.msra.mxu0 %v1139
        %1544 = vmatprep.subr.mxu0 0.0
        %1545 = vmatpush1.msra.mxu0 %v1140
        %1546 = vmatprep.subr.mxu0 0.0
        %1547 = vmatpush1.msra.mxu0 0.0
        %1548 = vmatprep.subr.mxu0 0.0
        %1549 = vmatpush1.msra.mxu0 0.0
        %1550 = vmatprep.subr.mxu0 0.0
        %1551 = vmatpush1.msra.mxu0 0.0
        %1552 = vmatprep.subr.mxu0 0.0
        %1553 = vmatpush1.msra.mxu0 0.0
        %1554 = vmatprep.subr.mxu0 0.0
        %1555 = vmatpush1.msra.mxu0 0.0
        %1556 = vmatprep.subr.mxu0 0.0
        %1557 = vmatpush1.msra.mxu0 0.0
        %1558 = vmatprep.subr.mxu0 0.0
        %1559 = vmatpush1.msra.mxu0 0.0
        %1560 = vmatprep.subr.mxu0 0.0
        %1561 = vmatpush1.msra.mxu0 0.0
        %1562 = vmatprep.subr.mxu0 0.0
        %1563 = vmatpush1.msra.mxu0 0.0
        %1564 = vmatprep.subr.mxu0 0.0
        %1565 = vmatpush1.msra.mxu0 0.0
        %1566 = vmatprep.subr.mxu0 0.0
        %1567 = vmatpush1.msra.mxu0 0.0
        %1568 = vmatprep.subr.mxu0 0.0
        %1569 = vmatpush1.msra.mxu0 0.0
        %1570 = vmatprep.subr.mxu0 0.0
        %1571 = vmatpush1.msra.mxu0 0.0
        %1572 = vmatprep.subr.mxu0 0.0
        %1573 = vmatpush1.msra.mxu0 0.0
        %1574 = vmatprep.subr.mxu0 0.0
        %1575 = vmatpush1.msra.mxu0 0.0
        %1576 = vmatprep.subr.mxu0 0.0
        %1577 = vmatpush1.msra.mxu0 0.0
        %1578 = vmatprep.subr.mxu0 0.0
        %1579 = vmatpush1.msra.mxu0 0.0
        %1580 = vmatprep.subr.mxu0 0.0
        %1581 = vmatpush1.msra.mxu0 0.0
        %1582 = vmatprep.subr.mxu0 0.0
        %1583 = vmatpush1.msra.mxu0 0.0
        %1584 = vmatprep.subr.mxu0 0.0
        %1585 = vmatpush1.msra.mxu0 0.0
        %1586 = vmatprep.subr.mxu0 0.0
        %1587 = vmatpush1.msra.mxu0 0.0
        %1588 = vmatprep.subr.mxu0 0.0
        %1589 = vmatpush1.msra.mxu0 0.0
        %1590 = vmatprep.subr.mxu0 0.0
        %1591 = vmatpush1.msra.mxu0 0.0
        %1592 = vmatprep.subr.mxu0 0.0
        %1593 = vmatpush1.msra.mxu0 0.0
        %1594 = vmatprep.subr.mxu0 0.0
        %1595 = vmatpush1.msra.mxu0 0.0
        %1596 = vmatprep.subr.mxu0 0.0
        %1597 = vmatpush1.msra.mxu0 0.0
        %1598 = vmatprep.subr.mxu0 0.0
        %1599 = vmatpush1.msra.mxu0 0.0
        %1600 = vmatprep.subr.mxu0 0.0
        %1601 = vmatpush1.msra.mxu0 0.0
        %1602 = vmatprep.subr.mxu0 0.0
        %1603 = vmatpush1.msra.mxu0 0.0
        %1604 = vmatprep.subr.mxu0 0.0
        %1605 = vmatpush1.msra.mxu0 0.0
        %1606 = vmatprep.mubr.f32.mxu0 0.0
        %1607 = vmatmul.mubr.f32.gmra.mrb[0].mxu0 %v1540
        %v1608 = vpop.f32.mrb[0].mxu0
        %v1609 = vadd.f32 0.0, %v1608
        %v1610 = vpop.f32.mrb[0].mxu0
        %1611 = vdwg.mxu0
        %v1612 = vsel %vm1251, %v946, 0
        %1614 = vmatprep.subr.mxu0 0.0
        %1615 = vmatpush1.msra.mxu0 %v1171
        %1616 = vmatprep.subr.mxu0 0.0
        %1617 = vmatpush1.msra.mxu0 %v1172
        %1618 = vmatprep.subr.mxu0 0.0
        %1619 = vmatpush1.msra.mxu0 0.0
        %1620 = vmatprep.subr.mxu0 0.0
        %1621 = vmatpush1.msra.mxu0 0.0
        %1622 = vmatprep.subr.mxu0 0.0
        %1623 = vmatpush1.msra.mxu0 0.0
        %1624 = vmatprep.subr.mxu0 0.0
        %1625 = vmatpush1.msra.mxu0 0.0
        %1626 = vmatprep.subr.mxu0 0.0
        %1627 = vmatpush1.msra.mxu0 0.0
        %1628 = vmatprep.subr.mxu0 0.0
        %1629 = vmatpush1.msra.mxu0 0.0
        %1630 = vmatprep.subr.mxu0 0.0
        %1631 = vmatpush1.msra.mxu0 0.0
        %1632 = vmatprep.subr.mxu0 0.0
        %1633 = vmatpush1.msra.mxu0 0.0
        %1634 = vmatprep.subr.mxu0 0.0
        %1635 = vmatpush1.msra.mxu0 0.0
        %1636 = vmatprep.subr.mxu0 0.0
        %1637 = vmatpush1.msra.mxu0 0.0
        %1638 = vmatprep.subr.mxu0 0.0
        %1639 = vmatpush1.msra.mxu0 0.0
        %1640 = vmatprep.subr.mxu0 0.0
        %1641 = vmatpush1.msra.mxu0 0.0
        %1642 = vmatprep.subr.mxu0 0.0
        %1643 = vmatpush1.msra.mxu0 0.0
        %1644 = vmatprep.subr.mxu0 0.0
        %1645 = vmatpush1.msra.mxu0 0.0
        %1646 = vmatprep.subr.mxu0 0.0
        %1647 = vmatpush1.msra.mxu0 0.0
        %1648 = vmatprep.subr.mxu0 0.0
        %1649 = vmatpush1.msra.mxu0 0.0
        %1650 = vmatprep.subr.mxu0 0.0
        %1651 = vmatpush1.msra.mxu0 0.0
        %1652 = vmatprep.subr.mxu0 0.0
        %1653 = vmatpush1.msra.mxu0 0.0
        %1654 = vmatprep.subr.mxu0 0.0
        %1655 = vmatpush1.msra.mxu0 0.0
        %1656 = vmatprep.subr.mxu0 0.0
        %1657 = vmatpush1.msra.mxu0 0.0
        %1658 = vmatprep.subr.mxu0 0.0
        %1659 = vmatpush1.msra.mxu0 0.0
        %1660 = vmatprep.subr.mxu0 0.0
        %1661 = vmatpush1.msra.mxu0 0.0
        %1662 = vmatprep.subr.mxu0 0.0
        %1663 = vmatpush1.msra.mxu0 0.0
        %1664 = vmatprep.subr.mxu0 0.0
        %1665 = vmatpush1.msra.mxu0 0.0
        %1666 = vmatprep.subr.mxu0 0.0
        %1667 = vmatpush1.msra.mxu0 0.0
        %1668 = vmatprep.subr.mxu0 0.0
        %1669 = vmatpush1.msra.mxu0 0.0
        %1670 = vmatprep.subr.mxu0 0.0
        %1671 = vmatpush1.msra.mxu0 0.0
        %1672 = vmatprep.subr.mxu0 0.0
        %1673 = vmatpush1.msra.mxu0 0.0
        %1674 = vmatprep.subr.mxu0 0.0
        %1675 = vmatpush1.msra.mxu0 0.0
        %1676 = vmatprep.subr.mxu0 0.0
        %1677 = vmatpush1.msra.mxu0 0.0
        %1678 = vmatprep.mubr.f32.mxu0 0.0
        %1679 = vmatmul.mubr.f32.gmra.mrb[0].mxu0 %v1612
        %v1680 = vpop.f32.mrb[0].mxu0
        %v1681 = vadd.f32 0.0, %v1680
        %v1682 = vpop.f32.mrb[0].mxu0
        %1683 = vdwg.mxu0
        %v1684 = vsel %vm1251, %v948, 0
        %1686 = vmatprep.subr.mxu0 0.0
        %1687 = vmatpush1.msra.mxu0 %v1203
        %1688 = vmatprep.subr.mxu0 0.0
        %1689 = vmatpush1.msra.mxu0 %v1204
        %1690 = vmatprep.subr.mxu0 0.0
        %1691 = vmatpush1.msra.mxu0 0.0
        %1692 = vmatprep.subr.mxu0 0.0
        %1693 = vmatpush1.msra.mxu0 0.0
        %1694 = vmatprep.subr.mxu0 0.0
        %1695 = vmatpush1.msra.mxu0 0.0
        %1696 = vmatprep.subr.mxu0 0.0
        %1697 = vmatpush1.msra.mxu0 0.0
        %1698 = vmatprep.subr.mxu0 0.0
        %1699 = vmatpush1.msra.mxu0 0.0
        %1700 = vmatprep.subr.mxu0 0.0
        %1701 = vmatpush1.msra.mxu0 0.0
        %1702 = vmatprep.subr.mxu0 0.0
        %1703 = vmatpush1.msra.mxu0 0.0
        %1704 = vmatprep.subr.mxu0 0.0
        %1705 = vmatpush1.msra.mxu0 0.0
        %1706 = vmatprep.subr.mxu0 0.0
        %1707 = vmatpush1.msra.mxu0 0.0
        %1708 = vmatprep.subr.mxu0 0.0
        %1709 = vmatpush1.msra.mxu0 0.0
        %1710 = vmatprep.subr.mxu0 0.0
        %1711 = vmatpush1.msra.mxu0 0.0
        %1712 = vmatprep.subr.mxu0 0.0
        %1713 = vmatpush1.msra.mxu0 0.0
        %1714 = vmatprep.subr.mxu0 0.0
        %1715 = vmatpush1.msra.mxu0 0.0
        %1716 = vmatprep.subr.mxu0 0.0
        %1717 = vmatpush1.msra.mxu0 0.0
        %1718 = vmatprep.subr.mxu0 0.0
        %1719 = vmatpush1.msra.mxu0 0.0
        %1720 = vmatprep.subr.mxu0 0.0
        %1721 = vmatpush1.msra.mxu0 0.0
        %1722 = vmatprep.subr.mxu0 0.0
        %1723 = vmatpush1.msra.mxu0 0.0
        %1724 = vmatprep.subr.mxu0 0.0
        %1725 = vmatpush1.msra.mxu0 0.0
        %1726 = vmatprep.subr.mxu0 0.0
        %1727 = vmatpush1.msra.mxu0 0.0
        %1728 = vmatprep.subr.mxu0 0.0
        %1729 = vmatpush1.msra.mxu0 0.0
        %1730 = vmatprep.subr.mxu0 0.0
        %1731 = vmatpush1.msra.mxu0 0.0
        %1732 = vmatprep.subr.mxu0 0.0
        %1733 = vmatpush1.msra.mxu0 0.0
        %1734 = vmatprep.subr.mxu0 0.0
        %1735 = vmatpush1.msra.mxu0 0.0
        %1736 = vmatprep.subr.mxu0 0.0
        %1737 = vmatpush1.msra.mxu0 0.0
        %1738 = vmatprep.subr.mxu0 0.0
        %1739 = vmatpush1.msra.mxu0 0.0
        %1740 = vmatprep.subr.mxu0 0.0
        %1741 = vmatpush1.msra.mxu0 0.0
        %1742 = vmatprep.subr.mxu0 0.0
        %1743 = vmatpush1.msra.mxu0 0.0
        %1744 = vmatprep.subr.mxu0 0.0
        %1745 = vmatpush1.msra.mxu0 0.0
        %1746 = vmatprep.subr.mxu0 0.0
        %1747 = vmatpush1.msra.mxu0 0.0
        %1748 = vmatprep.subr.mxu0 0.0
        %1749 = vmatpush1.msra.mxu0 0.0
        %1750 = vmatprep.mubr.f32.mxu0 0.0
        %1751 = vmatmul.mubr.f32.gmra.mrb[0].mxu0 %v1684
        %v1752 = vpop.f32.mrb[0].mxu0
        %v1753 = vadd.f32 0.0, %v1752
        %v1754 = vpop.f32.mrb[0].mxu0
        %1755 = vdwg.mxu0
        %v1756 = vsel %vm1251, %v950, 0
        %1758 = vmatprep.subr.mxu0 0.0
        %1759 = vmatpush1.msra.mxu0 %v1235
        %1760 = vmatprep.subr.mxu0 0.0
        %1761 = vmatpush1.msra.mxu0 %v1236
        %1762 = vmatprep.subr.mxu0 0.0
        %1763 = vmatpush1.msra.mxu0 0.0
        %1764 = vmatprep.subr.mxu0 0.0
        %1765 = vmatpush1.msra.mxu0 0.0
        %1766 = vmatprep.subr.mxu0 0.0
        %1767 = vmatpush1.msra.mxu0 0.0
        %1768 = vmatprep.subr.mxu0 0.0
        %1769 = vmatpush1.msra.mxu0 0.0
        %1770 = vmatprep.subr.mxu0 0.0
        %1771 = vmatpush1.msra.mxu0 0.0
        %1772 = vmatprep.subr.mxu0 0.0
        %1773 = vmatpush1.msra.mxu0 0.0
        %1774 = vmatprep.subr.mxu0 0.0
        %1775 = vmatpush1.msra.mxu0 0.0
        %1776 = vmatprep.subr.mxu0 0.0
        %1777 = vmatpush1.msra.mxu0 0.0
        %1778 = vmatprep.subr.mxu0 0.0
        %1779 = vmatpush1.msra.mxu0 0.0
        %1780 = vmatprep.subr.mxu0 0.0
        %1781 = vmatpush1.msra.mxu0 0.0
        %1782 = vmatprep.subr.mxu0 0.0
        %1783 = vmatpush1.msra.mxu0 0.0
        %1784 = vmatprep.subr.mxu0 0.0
        %1785 = vmatpush1.msra.mxu0 0.0
        %1786 = vmatprep.subr.mxu0 0.0
        %1787 = vmatpush1.msra.mxu0 0.0
        %1788 = vmatprep.subr.mxu0 0.0
        %1789 = vmatpush1.msra.mxu0 0.0
        %1790 = vmatprep.subr.mxu0 0.0
        %1791 = vmatpush1.msra.mxu0 0.0
        %1792 = vmatprep.subr.mxu0 0.0
        %1793 = vmatpush1.msra.mxu0 0.0
        %1794 = vmatprep.subr.mxu0 0.0
        %1795 = vmatpush1.msra.mxu0 0.0
        %1796 = vmatprep.subr.mxu0 0.0
        %1797 = vmatpush1.msra.mxu0 0.0
        %1798 = vmatprep.subr.mxu0 0.0
        %1799 = vmatpush1.msra.mxu0 0.0
        %1800 = vmatprep.subr.mxu0 0.0
        %1801 = vmatpush1.msra.mxu0 0.0
        %1802 = vmatprep.subr.mxu0 0.0
        %1803 = vmatpush1.msra.mxu0 0.0
        %1804 = vmatprep.subr.mxu0 0.0
        %1805 = vmatpush1.msra.mxu0 0.0
        %1806 = vmatprep.subr.mxu0 0.0
        %1807 = vmatpush1.msra.mxu0 0.0
        %1808 = vmatprep.subr.mxu0 0.0
        %1809 = vmatpush1.msra.mxu0 0.0
        %1810 = vmatprep.subr.mxu0 0.0
        %1811 = vmatpush1.msra.mxu0 0.0
        %1812 = vmatprep.subr.mxu0 0.0
        %1813 = vmatpush1.msra.mxu0 0.0
        %1814 = vmatprep.subr.mxu0 0.0
        %1815 = vmatpush1.msra.mxu0 0.0
        %1816 = vmatprep.subr.mxu0 0.0
        %1817 = vmatpush1.msra.mxu0 0.0
        %1818 = vmatprep.subr.mxu0 0.0
        %1819 = vmatpush1.msra.mxu0 0.0
        %1820 = vmatprep.subr.mxu0 0.0
        %1821 = vmatpush1.msra.mxu0 0.0
        %1822 = vmatprep.mubr.f32.mxu0 0.0
        %1823 = vmatmul.mubr.f32.gmra.mrb[0].mxu0 %v1756
        %v1824 = vpop.f32.mrb[0].mxu0
        %v1825 = vadd.f32 0.0, %v1824
        %v1826 = vpop.f32.mrb[0].mxu0
        %1827 = vdwg.mxu0
        %v1828 = vmul.f32 %v1321, 0.25
        %v1829 = vmul.f32 %v1393, 0.25
        %v1830 = vmul.f32 %v1465, 0.25
        %v1831 = vmul.f32 %v1537, 0.25
        %v1832 = vmul.f32 %v1609, 0.25
        %v1833 = vmul.f32 %v1681, 0.25
        %v1834 = vmul.f32 %v1753, 0.25
        %v1835 = vmul.f32 %v1825, 0.25
        %vm1836 = vcmask 64512
        %v1837 = vsel %vm1836, %v1828, -inf
        %1838 = vmax.xlane.f32.xlu0 %v1837
        %v1839 = vpop.xlane.xlu0 %1838
        %v1840 = vsel %vm1836, %v1829, -inf
        %1841 = vmax.xlane.f32.xlu0 %v1840
        %v1842 = vpop.xlane.xlu0 %1841
        %v1843 = vsel %vm1836, %v1830, -inf
        %1844 = vmax.xlane.f32.xlu0 %v1843
        %v1845 = vpop.xlane.xlu0 %1844
        %v1846 = vsel %vm1836, %v1831, -inf
        %1847 = vmax.xlane.f32.xlu0 %v1846
        %v1848 = vpop.xlane.xlu0 %1847
        %v1849 = vsel %vm1836, %v1832, -inf
        %1850 = vmax.xlane.f32.xlu0 %v1849
        %v1851 = vpop.xlane.xlu0 %1850
        %v1852 = vsel %vm1836, %v1833, -inf
        %1853 = vmax.xlane.f32.xlu0 %v1852
        %v1854 = vpop.xlane.xlu0 %1853
        %v1855 = vsel %vm1836, %v1834, -inf
        %1856 = vmax.xlane.f32.xlu0 %v1855
        %v1857 = vpop.xlane.xlu0 %1856
        %v1858 = vsel %vm1836, %v1835, -inf
        %1859 = vmax.xlane.f32.xlu0 %v1858
        %v1860 = vpop.xlane.xlu0 %1859
        %v1861 = vsub.f32 %v1828, %v1839
        %v1862 = vsub.f32 %v1829, %v1842
        %v1863 = vsub.f32 %v1830, %v1845
        %v1864 = vsub.f32 %v1831, %v1848
        %v1865 = vsub.f32 %v1832, %v1851
        %v1866 = vsub.f32 %v1833, %v1854
        %v1867 = vsub.f32 %v1834, %v1857
        %v1868 = vsub.f32 %v1835, %v1860
        %v1869 = vmul.f32 %v1861, 1.442695
        %v1870 = vpow.pop %v1869
        %v1871 = vmul.f32 %v1862, 1.442695
        %v1872 = vpow.pop %v1871
        %v1873 = vmul.f32 %v1863, 1.442695
        %v1874 = vpow.pop %v1873
        %v1875 = vmul.f32 %v1864, 1.442695
        %v1876 = vpow.pop %v1875
        %v1877 = vmul.f32 %v1865, 1.442695
        %v1878 = vpow.pop %v1877
        %v1879 = vmul.f32 %v1866, 1.442695
        %v1880 = vpow.pop %v1879
        %v1881 = vmul.f32 %v1867, 1.442695
        %v1882 = vpow.pop %v1881
        %v1883 = vmul.f32 %v1868, 1.442695
        %v1884 = vpow.pop %v1883
        %v1885 = vsel %vm1836, %v1870, 0.0
        %1886 = vadd.xlane.f32.xlu0 %v1885
        %v1887 = vpop.xlane.xlu0 %1886
        %v1888 = vsel %vm1836, %v1872, 0.0
        %1889 = vadd.xlane.f32.xlu0 %v1888
        %v1890 = vpop.xlane.xlu0 %1889
        %v1891 = vsel %vm1836, %v1874, 0.0
        %1892 = vadd.xlane.f32.xlu0 %v1891
        %v1893 = vpop.xlane.xlu0 %1892
        %v1894 = vsel %vm1836, %v1876, 0.0
        %1895 = vadd.xlane.f32.xlu0 %v1894
        %v1896 = vpop.xlane.xlu0 %1895
        %v1897 = vsel %vm1836, %v1878, 0.0
        %1898 = vadd.xlane.f32.xlu0 %v1897
        %v1899 = vpop.xlane.xlu0 %1898
        %v1900 = vsel %vm1836, %v1880, 0.0
        %1901 = vadd.xlane.f32.xlu0 %v1900
        %v1902 = vpop.xlane.xlu0 %1901
        %v1903 = vsel %vm1836, %v1882, 0.0
        %1904 = vadd.xlane.f32.xlu0 %v1903
        %v1905 = vpop.xlane.xlu0 %1904
        %v1906 = vsel %vm1836, %v1884, 0.0
        %1907 = vadd.xlane.f32.xlu0 %v1906
        %v1908 = vpop.xlane.xlu0 %1907
        %v1909 = vrcp.pop %v1887
        %v1910 = vmul.f32 %v1870, %v1909
        %v1911 = vrcp.pop %v1890
        %v1912 = vmul.f32 %v1872, %v1911
        %v1913 = vrcp.pop %v1893
        %v1914 = vmul.f32 %v1874, %v1913
        %v1915 = vrcp.pop %v1896
        %v1916 = vmul.f32 %v1876, %v1915
        %v1917 = vrcp.pop %v1899
        %v1918 = vmul.f32 %v1878, %v1917
        %v1919 = vrcp.pop %v1902
        %v1920 = vmul.f32 %v1880, %v1919
        %v1921 = vrcp.pop %v1905
        %v1922 = vmul.f32 %v1882, %v1921
        %v1923 = vrcp.pop %v1908
        %v1924 = vmul.f32 %v1884, %v1923
        %1925 = vxpose.xlu0.b32.start [1/16] %v933, 128
        %1926 = vxpose.xlu0.b32.cont [2/16] 0.0, 128
        %1927 = vxpose.xlu0.b32.cont [3/16] 0.0, 128
        %1928 = vxpose.xlu0.b32.cont [4/16] 0.0, 128
        %1929 = vxpose.xlu0.b32.cont [5/16] 0.0, 128
        %1930 = vxpose.xlu0.b32.cont [6/16] 0.0, 128
        %1931 = vxpose.xlu0.b32.cont [7/16] 0.0, 128
        %1932 = vxpose.xlu0.b32.cont [8/16] 0.0, 128
        %1933 = vxpose.xlu0.b32.cont [9/16] 0.0, 128
        %1934 = vxpose.xlu0.b32.cont [10/16] 0.0, 128
        %1935 = vxpose.xlu0.b32.cont [11/16] 0.0, 128
        %1936 = vxpose.xlu0.b32.cont [12/16] 0.0, 128
        %1937 = vxpose.xlu0.b32.cont [13/16] 0.0, 128
        %1938 = vxpose.xlu0.b32.cont [14/16] 0.0, 128
        %1939 = vxpose.xlu0.b32.cont [15/16] 0.0, 128
        %1940 = vxpose.xlu0.b32.end [16/16] 0.0, 128
        %v1941 = vpop.trf.xlu0
        %v1942 = vpop.trf.xlu0
        %v1943 = vpop.trf.xlu0
        %v1944 = vpop.trf.xlu0
        %v1945 = vpop.trf.xlu0
        %v1946 = vpop.trf.xlu0
        %v1947 = vpop.trf.xlu0
        %v1948 = vpop.trf.xlu0
        %v1949 = vpop.trf.xlu0
        %v1950 = vpop.trf.xlu0
        %v1951 = vpop.trf.xlu0
        %v1952 = vpop.trf.xlu0
        %v1953 = vpop.trf.xlu0
        %v1954 = vpop.trf.xlu0
        %v1955 = vpop.trf.xlu0
        %v1956 = vpop.trf.xlu0
        %1957 = vxpose.xlu0.b32.start [1/16] %v975, 128
        %1958 = vxpose.xlu0.b32.cont [2/16] 0.0, 128
        %1959 = vxpose.xlu0.b32.cont [3/16] 0.0, 128
        %1960 = vxpose.xlu0.b32.cont [4/16] 0.0, 128
        %1961 = vxpose.xlu0.b32.cont [5/16] 0.0, 128
        %1962 = vxpose.xlu0.b32.cont [6/16] 0.0, 128
        %1963 = vxpose.xlu0.b32.cont [7/16] 0.0, 128
        %1964 = vxpose.xlu0.b32.cont [8/16] 0.0, 128
        %1965 = vxpose.xlu0.b32.cont [9/16] 0.0, 128
        %1966 = vxpose.xlu0.b32.cont [10/16] 0.0, 128
        %1967 = vxpose.xlu0.b32.cont [11/16] 0.0, 128
        %1968 = vxpose.xlu0.b32.cont [12/16] 0.0, 128
        %1969 = vxpose.xlu0.b32.cont [13/16] 0.0, 128
        %1970 = vxpose.xlu0.b32.cont [14/16] 0.0, 128
        %1971 = vxpose.xlu0.b32.cont [15/16] 0.0, 128
        %1972 = vxpose.xlu0.b32.end [16/16] 0.0, 128
        %v1973 = vpop.trf.xlu0
        %v1974 = vpop.trf.xlu0
        %v1975 = vpop.trf.xlu0
        %v1976 = vpop.trf.xlu0
        %v1977 = vpop.trf.xlu0
        %v1978 = vpop.trf.xlu0
        %v1979 = vpop.trf.xlu0
        %v1980 = vpop.trf.xlu0
        %v1981 = vpop.trf.xlu0
        %v1982 = vpop.trf.xlu0
        %v1983 = vpop.trf.xlu0
        %v1984 = vpop.trf.xlu0
        %v1985 = vpop.trf.xlu0
        %v1986 = vpop.trf.xlu0
        %v1987 = vpop.trf.xlu0
        %v1988 = vpop.trf.xlu0
        %1989 = vxpose.xlu0.b32.start [1/16] %v978, 128
        %1990 = vxpose.xlu0.b32.cont [2/16] 0.0, 128
        %1991 = vxpose.xlu0.b32.cont [3/16] 0.0, 128
        %1992 = vxpose.xlu0.b32.cont [4/16] 0.0, 128
        %1993 = vxpose.xlu0.b32.cont [5/16] 0.0, 128
        %1994 = vxpose.xlu0.b32.cont [6/16] 0.0, 128
        %1995 = vxpose.xlu0.b32.cont [7/16] 0.0, 128
        %1996 = vxpose.xlu0.b32.cont [8/16] 0.0, 128
        %1997 = vxpose.xlu0.b32.cont [9/16] 0.0, 128
        %1998 = vxpose.xlu0.b32.cont [10/16] 0.0, 128
        %1999 = vxpose.xlu0.b32.cont [11/16] 0.0, 128
        %2000 = vxpose.xlu0.b32.cont [12/16] 0.0, 128
        %2001 = vxpose.xlu0.b32.cont [13/16] 0.0, 128
        %2002 = vxpose.xlu0.b32.cont [14/16] 0.0, 128
        %2003 = vxpose.xlu0.b32.cont [15/16] 0.0, 128
        %2004 = vxpose.xlu0.b32.end [16/16] 0.0, 128
        %v2005 = vpop.trf.xlu0
        %v2006 = vpop.trf.xlu0
        %v2007 = vpop.trf.xlu0
        %v2008 = vpop.trf.xlu0
        %v2009 = vpop.trf.xlu0
        %v2010 = vpop.trf.xlu0
        %v2011 = vpop.trf.xlu0
        %v2012 = vpop.trf.xlu0
        %v2013 = vpop.trf.xlu0
        %v2014 = vpop.trf.xlu0
        %v2015 = vpop.trf.xlu0
        %v2016 = vpop.trf.xlu0
        %v2017 = vpop.trf.xlu0
        %v2018 = vpop.trf.xlu0
        %v2019 = vpop.trf.xlu0
        %v2020 = vpop.trf.xlu0
        %2021 = vxpose.xlu0.b32.start [1/16] %v981, 128
        %2022 = vxpose.xlu0.b32.cont [2/16] 0.0, 128
        %2023 = vxpose.xlu0.b32.cont [3/16] 0.0, 128
        %2024 = vxpose.xlu0.b32.cont [4/16] 0.0, 128
        %2025 = vxpose.xlu0.b32.cont [5/16] 0.0, 128
        %2026 = vxpose.xlu0.b32.cont [6/16] 0.0, 128
        %2027 = vxpose.xlu0.b32.cont [7/16] 0.0, 128
        %2028 = vxpose.xlu0.b32.cont [8/16] 0.0, 128
        %2029 = vxpose.xlu0.b32.cont [9/16] 0.0, 128
        %2030 = vxpose.xlu0.b32.cont [10/16] 0.0, 128
        %2031 = vxpose.xlu0.b32.cont [11/16] 0.0, 128
        %2032 = vxpose.xlu0.b32.cont [12/16] 0.0, 128
        %2033 = vxpose.xlu0.b32.cont [13/16] 0.0, 128
        %2034 = vxpose.xlu0.b32.cont [14/16] 0.0, 128
        %2035 = vxpose.xlu0.b32.cont [15/16] 0.0, 128
        %2036 = vxpose.xlu0.b32.end [16/16] 0.0, 128
        %v2037 = vpop.trf.xlu0
        %v2038 = vpop.trf.xlu0
        %v2039 = vpop.trf.xlu0
        %v2040 = vpop.trf.xlu0
        %v2041 = vpop.trf.xlu0
        %v2042 = vpop.trf.xlu0
        %v2043 = vpop.trf.xlu0
        %v2044 = vpop.trf.xlu0
        %v2045 = vpop.trf.xlu0
        %v2046 = vpop.trf.xlu0
        %v2047 = vpop.trf.xlu0
        %v2048 = vpop.trf.xlu0
        %v2049 = vpop.trf.xlu0
        %v2050 = vpop.trf.xlu0
        %v2051 = vpop.trf.xlu0
        %v2052 = vpop.trf.xlu0
        %2053 = vxpose.xlu0.b32.start [1/16] %v984, 128
        %2054 = vxpose.xlu0.b32.cont [2/16] 0.0, 128
        %2055 = vxpose.xlu0.b32.cont [3/16] 0.0, 128
        %2056 = vxpose.xlu0.b32.cont [4/16] 0.0, 128
        %2057 = vxpose.xlu0.b32.cont [5/16] 0.0, 128
        %2058 = vxpose.xlu0.b32.cont [6/16] 0.0, 128
        %2059 = vxpose.xlu0.b32.cont [7/16] 0.0, 128
        %2060 = vxpose.xlu0.b32.cont [8/16] 0.0, 128
        %2061 = vxpose.xlu0.b32.cont [9/16] 0.0, 128
        %2062 = vxpose.xlu0.b32.cont [10/16] 0.0, 128
        %2063 = vxpose.xlu0.b32.cont [11/16] 0.0, 128
        %2064 = vxpose.xlu0.b32.cont [12/16] 0.0, 128
        %2065 = vxpose.xlu0.b32.cont [13/16] 0.0, 128
        %2066 = vxpose.xlu0.b32.cont [14/16] 0.0, 128
        %2067 = vxpose.xlu0.b32.cont [15/16] 0.0, 128
        %2068 = vxpose.xlu0.b32.end [16/16] 0.0, 128
        %v2069 = vpop.trf.xlu0
        %v2070 = vpop.trf.xlu0
        %v2071 = vpop.trf.xlu0
        %v2072 = vpop.trf.xlu0
        %v2073 = vpop.trf.xlu0
        %v2074 = vpop.trf.xlu0
        %v2075 = vpop.trf.xlu0
        %v2076 = vpop.trf.xlu0
        %v2077 = vpop.trf.xlu0
        %v2078 = vpop.trf.xlu0
        %v2079 = vpop.trf.xlu0
        %v2080 = vpop.trf.xlu0
        %v2081 = vpop.trf.xlu0
        %v2082 = vpop.trf.xlu0
        %v2083 = vpop.trf.xlu0
        %v2084 = vpop.trf.xlu0
        %2085 = vxpose.xlu0.b32.start [1/16] %v987, 128
        %2086 = vxpose.xlu0.b32.cont [2/16] 0.0, 128
        %2087 = vxpose.xlu0.b32.cont [3/16] 0.0, 128
        %2088 = vxpose.xlu0.b32.cont [4/16] 0.0, 128
        %2089 = vxpose.xlu0.b32.cont [5/16] 0.0, 128
        %2090 = vxpose.xlu0.b32.cont [6/16] 0.0, 128
        %2091 = vxpose.xlu0.b32.cont [7/16] 0.0, 128
        %2092 = vxpose.xlu0.b32.cont [8/16] 0.0, 128
        %2093 = vxpose.xlu0.b32.cont [9/16] 0.0, 128
        %2094 = vxpose.xlu0.b32.cont [10/16] 0.0, 128
        %2095 = vxpose.xlu0.b32.cont [11/16] 0.0, 128
        %2096 = vxpose.xlu0.b32.cont [12/16] 0.0, 128
        %2097 = vxpose.xlu0.b32.cont [13/16] 0.0, 128
        %2098 = vxpose.xlu0.b32.cont [14/16] 0.0, 128
        %2099 = vxpose.xlu0.b32.cont [15/16] 0.0, 128
        %2100 = vxpose.xlu0.b32.end [16/16] 0.0, 128
        %v2101 = vpop.trf.xlu0
        %v2102 = vpop.trf.xlu0
        %v2103 = vpop.trf.xlu0
        %v2104 = vpop.trf.xlu0
        %v2105 = vpop.trf.xlu0
        %v2106 = vpop.trf.xlu0
        %v2107 = vpop.trf.xlu0
        %v2108 = vpop.trf.xlu0
        %v2109 = vpop.trf.xlu0
        %v2110 = vpop.trf.xlu0
        %v2111 = vpop.trf.xlu0
        %v2112 = vpop.trf.xlu0
        %v2113 = vpop.trf.xlu0
        %v2114 = vpop.trf.xlu0
        %v2115 = vpop.trf.xlu0
        %v2116 = vpop.trf.xlu0
        %2117 = vxpose.xlu0.b32.start [1/16] %v990, 128
        %2118 = vxpose.xlu0.b32.cont [2/16] 0.0, 128
        %2119 = vxpose.xlu0.b32.cont [3/16] 0.0, 128
        %2120 = vxpose.xlu0.b32.cont [4/16] 0.0, 128
        %2121 = vxpose.xlu0.b32.cont [5/16] 0.0, 128
        %2122 = vxpose.xlu0.b32.cont [6/16] 0.0, 128
        %2123 = vxpose.xlu0.b32.cont [7/16] 0.0, 128
        %2124 = vxpose.xlu0.b32.cont [8/16] 0.0, 128
        %2125 = vxpose.xlu0.b32.cont [9/16] 0.0, 128
        %2126 = vxpose.xlu0.b32.cont [10/16] 0.0, 128
        %2127 = vxpose.xlu0.b32.cont [11/16] 0.0, 128
        %2128 = vxpose.xlu0.b32.cont [12/16] 0.0, 128
        %2129 = vxpose.xlu0.b32.cont [13/16] 0.0, 128
        %2130 = vxpose.xlu0.b32.cont [14/16] 0.0, 128
        %2131 = vxpose.xlu0.b32.cont [15/16] 0.0, 128
        %2132 = vxpose.xlu0.b32.end [16/16] 0.0, 128
        %v2133 = vpop.trf.xlu0
        %v2134 = vpop.trf.xlu0
        %v2135 = vpop.trf.xlu0
        %v2136 = vpop.trf.xlu0
        %v2137 = vpop.trf.xlu0
        %v2138 = vpop.trf.xlu0
        %v2139 = vpop.trf.xlu0
        %v2140 = vpop.trf.xlu0
        %v2141 = vpop.trf.xlu0
        %v2142 = vpop.trf.xlu0
        %v2143 = vpop.trf.xlu0
        %v2144 = vpop.trf.xlu0
        %v2145 = vpop.trf.xlu0
        %v2146 = vpop.trf.xlu0
        %v2147 = vpop.trf.xlu0
        %v2148 = vpop.trf.xlu0
        %2149 = vxpose.xlu0.b32.start [1/16] %v993, 128
        %2150 = vxpose.xlu0.b32.cont [2/16] 0.0, 128
        %2151 = vxpose.xlu0.b32.cont [3/16] 0.0, 128
        %2152 = vxpose.xlu0.b32.cont [4/16] 0.0, 128
        %2153 = vxpose.xlu0.b32.cont [5/16] 0.0, 128
        %2154 = vxpose.xlu0.b32.cont [6/16] 0.0, 128
        %2155 = vxpose.xlu0.b32.cont [7/16] 0.0, 128
        %2156 = vxpose.xlu0.b32.cont [8/16] 0.0, 128
        %2157 = vxpose.xlu0.b32.cont [9/16] 0.0, 128
        %2158 = vxpose.xlu0.b32.cont [10/16] 0.0, 128
        %2159 = vxpose.xlu0.b32.cont [11/16] 0.0, 128
        %2160 = vxpose.xlu0.b32.cont [12/16] 0.0, 128
        %2161 = vxpose.xlu0.b32.cont [13/16] 0.0, 128
        %2162 = vxpose.xlu0.b32.cont [14/16] 0.0, 128
        %2163 = vxpose.xlu0.b32.cont [15/16] 0.0, 128
        %2164 = vxpose.xlu0.b32.end [16/16] 0.0, 128
        %v2165 = vpop.trf.xlu0
        %v2166 = vpop.trf.xlu0
        %v2167 = vpop.trf.xlu0
        %v2168 = vpop.trf.xlu0
        %v2169 = vpop.trf.xlu0
        %v2170 = vpop.trf.xlu0
        %v2171 = vpop.trf.xlu0
        %v2172 = vpop.trf.xlu0
        %v2173 = vpop.trf.xlu0
        %v2174 = vpop.trf.xlu0
        %v2175 = vpop.trf.xlu0
        %v2176 = vpop.trf.xlu0
        %v2177 = vpop.trf.xlu0
        %v2178 = vpop.trf.xlu0
        %v2179 = vpop.trf.xlu0
        %v2180 = vpop.trf.xlu0
        %v2182 = vsel %vm1836, %v1941, 0
        %v2185 = vsel %vm1836, %v1942, 0
        %v2188 = vsel %vm1836, %v1910, 0
        %2190 = vmatprep.subr.mxu0 0.0
        %2191 = vmatpush1.xpose.msra.mxu0 %v2188
        %2192 = vmatprep.subr.mxu0 0.0
        %2193 = vmatpush1.xpose.msra.mxu0 0.0
        %2194 = vmatprep.subr.mxu0 0.0
        %2195 = vmatpush1.xpose.msra.mxu0 0.0
        %2196 = vmatprep.subr.mxu0 0.0
        %2197 = vmatpush1.xpose.msra.mxu0 0.0
        %2198 = vmatprep.subr.mxu0 0.0
        %2199 = vmatpush1.xpose.msra.mxu0 0.0
        %2200 = vmatprep.subr.mxu0 0.0
        %2201 = vmatpush1.xpose.msra.mxu0 0.0
        %2202 = vmatprep.subr.mxu0 0.0
        %2203 = vmatpush1.xpose.msra.mxu0 0.0
        %2204 = vmatprep.subr.mxu0 0.0
        %2205 = vmatpush1.xpose.msra.mxu0 0.0
        %2206 = vmatprep.subr.mxu0 0.0
        %2207 = vmatpush1.xpose.msra.mxu0 0.0
        %2208 = vmatprep.subr.mxu0 0.0
        %2209 = vmatpush1.xpose.msra.mxu0 0.0
        %2210 = vmatprep.subr.mxu0 0.0
        %2211 = vmatpush1.xpose.msra.mxu0 0.0
        %2212 = vmatprep.subr.mxu0 0.0
        %2213 = vmatpush1.xpose.msra.mxu0 0.0
        %2214 = vmatprep.subr.mxu0 0.0
        %2215 = vmatpush1.xpose.msra.mxu0 0.0
        %2216 = vmatprep.subr.mxu0 0.0
        %2217 = vmatpush1.xpose.msra.mxu0 0.0
        %2218 = vmatprep.subr.mxu0 0.0
        %2219 = vmatpush1.xpose.msra.mxu0 0.0
        %2220 = vmatprep.subr.mxu0 0.0
        %2221 = vmatpush1.xpose.msra.mxu0 0.0
        %2222 = vmatprep.subr.mxu0 0.0
        %2223 = vmatpush1.xpose.msra.mxu0 0.0
        %2224 = vmatprep.subr.mxu0 0.0
        %2225 = vmatpush1.xpose.msra.mxu0 0.0
        %2226 = vmatprep.subr.mxu0 0.0
        %2227 = vmatpush1.xpose.msra.mxu0 0.0
        %2228 = vmatprep.subr.mxu0 0.0
        %2229 = vmatpush1.xpose.msra.mxu0 0.0
        %2230 = vmatprep.subr.mxu0 0.0
        %2231 = vmatpush1.xpose.msra.mxu0 0.0
        %2232 = vmatprep.subr.mxu0 0.0
        %2233 = vmatpush1.xpose.msra.mxu0 0.0
        %2234 = vmatprep.subr.mxu0 0.0
        %2235 = vmatpush1.xpose.msra.mxu0 0.0
        %2236 = vmatprep.subr.mxu0 0.0
        %2237 = vmatpush1.xpose.msra.mxu0 0.0
        %2238 = vmatprep.subr.mxu0 0.0
        %2239 = vmatpush1.xpose.msra.mxu0 0.0
        %2240 = vmatprep.subr.mxu0 0.0
        %2241 = vmatpush1.xpose.msra.mxu0 0.0
        %2242 = vmatprep.subr.mxu0 0.0
        %2243 = vmatpush1.xpose.msra.mxu0 0.0
        %2244 = vmatprep.subr.mxu0 0.0
        %2245 = vmatpush1.xpose.msra.mxu0 0.0
        %2246 = vmatprep.subr.mxu0 0.0
        %2247 = vmatpush1.xpose.msra.mxu0 0.0
        %2248 = vmatprep.subr.mxu0 0.0
        %2249 = vmatpush1.xpose.msra.mxu0 0.0
        %2250 = vmatprep.subr.mxu0 0.0
        %2251 = vmatpush1.xpose.msra.mxu0 0.0
        %2252 = vmatprep.subr.mxu0 0.0
        %2253 = vmatpush1.xpose.msra.mxu0 0.0
        %2254 = vmatprep.mubr.f32.mxu0 0.0
        %2255 = vmatmul.mubr.f32.gmra.mrb[0].mxu0 %v2182
        %v2256 = vpop.f32.mrb[0].mxu0
        %v2257 = vadd.f32 0.0, %v2256
        %v2258 = vpop.f32.mrb[0].mxu0
        %2259 = vmatprep.mubr.f32.mxu0 0.0
        %2260 = vmatmul.mubr.f32.gmra.mrb[0].mxu0 %v2185
        %v2261 = vpop.f32.mrb[0].mxu0
        %v2262 = vadd.f32 0.0, %v2261
        %v2263 = vpop.f32.mrb[0].mxu0
        %2264 = vdwg.mxu0
        %v2266 = vsel %vm1836, %v1973, 0
        %v2269 = vsel %vm1836, %v1974, 0
        %v2272 = vsel %vm1836, %v1912, 0
        %2274 = vmatprep.subr.mxu0 0.0
        %2275 = vmatpush1.xpose.msra.mxu0 %v2272
        %2276 = vmatprep.subr.mxu0 0.0
        %2277 = vmatpush1.xpose.msra.mxu0 0.0
        %2278 = vmatprep.subr.mxu0 0.0
        %2279 = vmatpush1.xpose.msra.mxu0 0.0
        %2280 = vmatprep.subr.mxu0 0.0
        %2281 = vmatpush1.xpose.msra.mxu0 0.0
        %2282 = vmatprep.subr.mxu0 0.0
        %2283 = vmatpush1.xpose.msra.mxu0 0.0
        %2284 = vmatprep.subr.mxu0 0.0
        %2285 = vmatpush1.xpose.msra.mxu0 0.0
        %2286 = vmatprep.subr.mxu0 0.0
        %2287 = vmatpush1.xpose.msra.mxu0 0.0
        %2288 = vmatprep.subr.mxu0 0.0
        %2289 = vmatpush1.xpose.msra.mxu0 0.0
        %2290 = vmatprep.subr.mxu0 0.0
        %2291 = vmatpush1.xpose.msra.mxu0 0.0
        %2292 = vmatprep.subr.mxu0 0.0
        %2293 = vmatpush1.xpose.msra.mxu0 0.0
        %2294 = vmatprep.subr.mxu0 0.0
        %2295 = vmatpush1.xpose.msra.mxu0 0.0
        %2296 = vmatprep.subr.mxu0 0.0
        %2297 = vmatpush1.xpose.msra.mxu0 0.0
        %2298 = vmatprep.subr.mxu0 0.0
        %2299 = vmatpush1.xpose.msra.mxu0 0.0
        %2300 = vmatprep.subr.mxu0 0.0
        %2301 = vmatpush1.xpose.msra.mxu0 0.0
        %2302 = vmatprep.subr.mxu0 0.0
        %2303 = vmatpush1.xpose.msra.mxu0 0.0
        %2304 = vmatprep.subr.mxu0 0.0
        %2305 = vmatpush1.xpose.msra.mxu0 0.0
        %2306 = vmatprep.subr.mxu0 0.0
        %2307 = vmatpush1.xpose.msra.mxu0 0.0
        %2308 = vmatprep.subr.mxu0 0.0
        %2309 = vmatpush1.xpose.msra.mxu0 0.0
        %2310 = vmatprep.subr.mxu0 0.0
        %2311 = vmatpush1.xpose.msra.mxu0 0.0
        %2312 = vmatprep.subr.mxu0 0.0
        %2313 = vmatpush1.xpose.msra.mxu0 0.0
        %2314 = vmatprep.subr.mxu0 0.0
        %2315 = vmatpush1.xpose.msra.mxu0 0.0
        %2316 = vmatprep.subr.mxu0 0.0
        %2317 = vmatpush1.xpose.msra.mxu0 0.0
        %2318 = vmatprep.subr.mxu0 0.0
        %2319 = vmatpush1.xpose.msra.mxu0 0.0
        %2320 = vmatprep.subr.mxu0 0.0
        %2321 = vmatpush1.xpose.msra.mxu0 0.0
        %2322 = vmatprep.subr.mxu0 0.0
        %2323 = vmatpush1.xpose.msra.mxu0 0.0
        %2324 = vmatprep.subr.mxu0 0.0
        %2325 = vmatpush1.xpose.msra.mxu0 0.0
        %2326 = vmatprep.subr.mxu0 0.0
        %2327 = vmatpush1.xpose.msra.mxu0 0.0
        %2328 = vmatprep.subr.mxu0 0.0
        %2329 = vmatpush1.xpose.msra.mxu0 0.0
        %2330 = vmatprep.subr.mxu0 0.0
        %2331 = vmatpush1.xpose.msra.mxu0 0.0
        %2332 = vmatprep.subr.mxu0 0.0
        %2333 = vmatpush1.xpose.msra.mxu0 0.0
        %2334 = vmatprep.subr.mxu0 0.0
        %2335 = vmatpush1.xpose.msra.mxu0 0.0
        %2336 = vmatprep.subr.mxu0 0.0
        %2337 = vmatpush1.xpose.msra.mxu0 0.0
        %2338 = vmatprep.mubr.f32.mxu0 0.0
        %2339 = vmatmul.mubr.f32.gmra.mrb[0].mxu0 %v2266
        %v2340 = vpop.f32.mrb[0].mxu0
        %v2341 = vadd.f32 0.0, %v2340
        %v2342 = vpop.f32.mrb[0].mxu0
        %2343 = vmatprep.mubr.f32.mxu0 0.0
        %2344 = vmatmul.mubr.f32.gmra.mrb[0].mxu0 %v2269
        %v2345 = vpop.f32.mrb[0].mxu0
        %v2346 = vadd.f32 0.0, %v2345
        %v2347 = vpop.f32.mrb[0].mxu0
        %2348 = vdwg.mxu0
        %v2350 = vsel %vm1836, %v2005, 0
        %v2353 = vsel %vm1836, %v2006, 0
        %v2356 = vsel %vm1836, %v1914, 0
        %2358 = vmatprep.subr.mxu0 0.0
        %2359 = vmatpush1.xpose.msra.mxu0 %v2356
        %2360 = vmatprep.subr.mxu0 0.0
        %2361 = vmatpush1.xpose.msra.mxu0 0.0
        %2362 = vmatprep.subr.mxu0 0.0
        %2363 = vmatpush1.xpose.msra.mxu0 0.0
        %2364 = vmatprep.subr.mxu0 0.0
        %2365 = vmatpush1.xpose.msra.mxu0 0.0
        %2366 = vmatprep.subr.mxu0 0.0
        %2367 = vmatpush1.xpose.msra.mxu0 0.0
        %2368 = vmatprep.subr.mxu0 0.0
        %2369 = vmatpush1.xpose.msra.mxu0 0.0
        %2370 = vmatprep.subr.mxu0 0.0
        %2371 = vmatpush1.xpose.msra.mxu0 0.0
        %2372 = vmatprep.subr.mxu0 0.0
        %2373 = vmatpush1.xpose.msra.mxu0 0.0
        %2374 = vmatprep.subr.mxu0 0.0
        %2375 = vmatpush1.xpose.msra.mxu0 0.0
        %2376 = vmatprep.subr.mxu0 0.0
        %2377 = vmatpush1.xpose.msra.mxu0 0.0
        %2378 = vmatprep.subr.mxu0 0.0
        %2379 = vmatpush1.xpose.msra.mxu0 0.0
        %2380 = vmatprep.subr.mxu0 0.0
        %2381 = vmatpush1.xpose.msra.mxu0 0.0
        %2382 = vmatprep.subr.mxu0 0.0
        %2383 = vmatpush1.xpose.msra.mxu0 0.0
        %2384 = vmatprep.subr.mxu0 0.0
        %2385 = vmatpush1.xpose.msra.mxu0 0.0
        %2386 = vmatprep.subr.mxu0 0.0
        %2387 = vmatpush1.xpose.msra.mxu0 0.0
        %2388 = vmatprep.subr.mxu0 0.0
        %2389 = vmatpush1.xpose.msra.mxu0 0.0
        %2390 = vmatprep.subr.mxu0 0.0
        %2391 = vmatpush1.xpose.msra.mxu0 0.0
        %2392 = vmatprep.subr.mxu0 0.0
        %2393 = vmatpush1.xpose.msra.mxu0 0.0
        %2394 = vmatprep.subr.mxu0 0.0
        %2395 = vmatpush1.xpose.msra.mxu0 0.0
        %2396 = vmatprep.subr.mxu0 0.0
        %2397 = vmatpush1.xpose.msra.mxu0 0.0
        %2398 = vmatprep.subr.mxu0 0.0
        %2399 = vmatpush1.xpose.msra.mxu0 0.0
        %2400 = vmatprep.subr.mxu0 0.0
        %2401 = vmatpush1.xpose.msra.mxu0 0.0
        %2402 = vmatprep.subr.mxu0 0.0
        %2403 = vmatpush1.xpose.msra.mxu0 0.0
        %2404 = vmatprep.subr.mxu0 0.0
        %2405 = vmatpush1.xpose.msra.mxu0 0.0
        %2406 = vmatprep.subr.mxu0 0.0
        %2407 = vmatpush1.xpose.msra.mxu0 0.0
        %2408 = vmatprep.subr.mxu0 0.0
        %2409 = vmatpush1.xpose.msra.mxu0 0.0
        %2410 = vmatprep.subr.mxu0 0.0
        %2411 = vmatpush1.xpose.msra.mxu0 0.0
        %2412 = vmatprep.subr.mxu0 0.0
        %2413 = vmatpush1.xpose.msra.mxu0 0.0
        %2414 = vmatprep.subr.mxu0 0.0
        %2415 = vmatpush1.xpose.msra.mxu0 0.0
        %2416 = vmatprep.subr.mxu0 0.0
        %2417 = vmatpush1.xpose.msra.mxu0 0.0
        %2418 = vmatprep.subr.mxu0 0.0
        %2419 = vmatpush1.xpose.msra.mxu0 0.0
        %2420 = vmatprep.subr.mxu0 0.0
        %2421 = vmatpush1.xpose.msra.mxu0 0.0
        %2422 = vmatprep.mubr.f32.mxu0 0.0
        %2423 = vmatmul.mubr.f32.gmra.mrb[0].mxu0 %v2350
        %v2424 = vpop.f32.mrb[0].mxu0
        %v2425 = vadd.f32 0.0, %v2424
        %v2426 = vpop.f32.mrb[0].mxu0
        %2427 = vmatprep.mubr.f32.mxu0 0.0
        %2428 = vmatmul.mubr.f32.gmra.mrb[0].mxu0 %v2353
        %v2429 = vpop.f32.mrb[0].mxu0
        %v2430 = vadd.f32 0.0, %v2429
        %v2431 = vpop.f32.mrb[0].mxu0
        %2432 = vdwg.mxu0
        %v2434 = vsel %vm1836, %v2037, 0
        %v2437 = vsel %vm1836, %v2038, 0
        %v2440 = vsel %vm1836, %v1916, 0
        %2442 = vmatprep.subr.mxu0 0.0
        %2443 = vmatpush1.xpose.msra.mxu0 %v2440
        %2444 = vmatprep.subr.mxu0 0.0
        %2445 = vmatpush1.xpose.msra.mxu0 0.0
        %2446 = vmatprep.subr.mxu0 0.0
        %2447 = vmatpush1.xpose.msra.mxu0 0.0
        %2448 = vmatprep.subr.mxu0 0.0
        %2449 = vmatpush1.xpose.msra.mxu0 0.0
        %2450 = vmatprep.subr.mxu0 0.0
        %2451 = vmatpush1.xpose.msra.mxu0 0.0
        %2452 = vmatprep.subr.mxu0 0.0
        %2453 = vmatpush1.xpose.msra.mxu0 0.0
        %2454 = vmatprep.subr.mxu0 0.0
        %2455 = vmatpush1.xpose.msra.mxu0 0.0
        %2456 = vmatprep.subr.mxu0 0.0
        %2457 = vmatpush1.xpose.msra.mxu0 0.0
        %2458 = vmatprep.subr.mxu0 0.0
        %2459 = vmatpush1.xpose.msra.mxu0 0.0
        %2460 = vmatprep.subr.mxu0 0.0
        %2461 = vmatpush1.xpose.msra.mxu0 0.0
        %2462 = vmatprep.subr.mxu0 0.0
        %2463 = vmatpush1.xpose.msra.mxu0 0.0
        %2464 = vmatprep.subr.mxu0 0.0
        %2465 = vmatpush1.xpose.msra.mxu0 0.0
        %2466 = vmatprep.subr.mxu0 0.0
        %2467 = vmatpush1.xpose.msra.mxu0 0.0
        %2468 = vmatprep.subr.mxu0 0.0
        %2469 = vmatpush1.xpose.msra.mxu0 0.0
        %2470 = vmatprep.subr.mxu0 0.0
        %2471 = vmatpush1.xpose.msra.mxu0 0.0
        %2472 = vmatprep.subr.mxu0 0.0
        %2473 = vmatpush1.xpose.msra.mxu0 0.0
        %2474 = vmatprep.subr.mxu0 0.0
        %2475 = vmatpush1.xpose.msra.mxu0 0.0
        %2476 = vmatprep.subr.mxu0 0.0
        %2477 = vmatpush1.xpose.msra.mxu0 0.0
        %2478 = vmatprep.subr.mxu0 0.0
        %2479 = vmatpush1.xpose.msra.mxu0 0.0
        %2480 = vmatprep.subr.mxu0 0.0
        %2481 = vmatpush1.xpose.msra.mxu0 0.0
        %2482 = vmatprep.subr.mxu0 0.0
        %2483 = vmatpush1.xpose.msra.mxu0 0.0
        %2484 = vmatprep.subr.mxu0 0.0
        %2485 = vmatpush1.xpose.msra.mxu0 0.0
        %2486 = vmatprep.subr.mxu0 0.0
        %2487 = vmatpush1.xpose.msra.mxu0 0.0
        %2488 = vmatprep.subr.mxu0 0.0
        %2489 = vmatpush1.xpose.msra.mxu0 0.0
        %2490 = vmatprep.subr.mxu0 0.0
        %2491 = vmatpush1.xpose.msra.mxu0 0.0
        %2492 = vmatprep.subr.mxu0 0.0
        %2493 = vmatpush1.xpose.msra.mxu0 0.0
        %2494 = vmatprep.subr.mxu0 0.0
        %2495 = vmatpush1.xpose.msra.mxu0 0.0
        %2496 = vmatprep.subr.mxu0 0.0
        %2497 = vmatpush1.xpose.msra.mxu0 0.0
        %2498 = vmatprep.subr.mxu0 0.0
        %2499 = vmatpush1.xpose.msra.mxu0 0.0
        %2500 = vmatprep.subr.mxu0 0.0
        %2501 = vmatpush1.xpose.msra.mxu0 0.0
        %2502 = vmatprep.subr.mxu0 0.0
        %2503 = vmatpush1.xpose.msra.mxu0 0.0
        %2504 = vmatprep.subr.mxu0 0.0
        %2505 = vmatpush1.xpose.msra.mxu0 0.0
        %2506 = vmatprep.mubr.f32.mxu0 0.0
        %2507 = vmatmul.mubr.f32.gmra.mrb[0].mxu0 %v2434
        %v2508 = vpop.f32.mrb[0].mxu0
        %v2509 = vadd.f32 0.0, %v2508
        %v2510 = vpop.f32.mrb[0].mxu0
        %2511 = vmatprep.mubr.f32.mxu0 0.0
        %2512 = vmatmul.mubr.f32.gmra.mrb[0].mxu0 %v2437
        %v2513 = vpop.f32.mrb[0].mxu0
        %v2514 = vadd.f32 0.0, %v2513
        %v2515 = vpop.f32.mrb[0].mxu0
        %2516 = vdwg.mxu0
        %v2518 = vsel %vm1836, %v2069, 0
        %v2521 = vsel %vm1836, %v2070, 0
        %v2524 = vsel %vm1836, %v1918, 0
        %2526 = vmatprep.subr.mxu0 0.0
        %2527 = vmatpush1.xpose.msra.mxu0 %v2524
        %2528 = vmatprep.subr.mxu0 0.0
        %2529 = vmatpush1.xpose.msra.mxu0 0.0
        %2530 = vmatprep.subr.mxu0 0.0
        %2531 = vmatpush1.xpose.msra.mxu0 0.0
        %2532 = vmatprep.subr.mxu0 0.0
        %2533 = vmatpush1.xpose.msra.mxu0 0.0
        %2534 = vmatprep.subr.mxu0 0.0
        %2535 = vmatpush1.xpose.msra.mxu0 0.0
        %2536 = vmatprep.subr.mxu0 0.0
        %2537 = vmatpush1.xpose.msra.mxu0 0.0
        %2538 = vmatprep.subr.mxu0 0.0
        %2539 = vmatpush1.xpose.msra.mxu0 0.0
        %2540 = vmatprep.subr.mxu0 0.0
        %2541 = vmatpush1.xpose.msra.mxu0 0.0
        %2542 = vmatprep.subr.mxu0 0.0
        %2543 = vmatpush1.xpose.msra.mxu0 0.0
        %2544 = vmatprep.subr.mxu0 0.0
        %2545 = vmatpush1.xpose.msra.mxu0 0.0
        %2546 = vmatprep.subr.mxu0 0.0
        %2547 = vmatpush1.xpose.msra.mxu0 0.0
        %2548 = vmatprep.subr.mxu0 0.0
        %2549 = vmatpush1.xpose.msra.mxu0 0.0
        %2550 = vmatprep.subr.mxu0 0.0
        %2551 = vmatpush1.xpose.msra.mxu0 0.0
        %2552 = vmatprep.subr.mxu0 0.0
        %2553 = vmatpush1.xpose.msra.mxu0 0.0
        %2554 = vmatprep.subr.mxu0 0.0
        %2555 = vmatpush1.xpose.msra.mxu0 0.0
        %2556 = vmatprep.subr.mxu0 0.0
        %2557 = vmatpush1.xpose.msra.mxu0 0.0
        %2558 = vmatprep.subr.mxu0 0.0
        %2559 = vmatpush1.xpose.msra.mxu0 0.0
        %2560 = vmatprep.subr.mxu0 0.0
        %2561 = vmatpush1.xpose.msra.mxu0 0.0
        %2562 = vmatprep.subr.mxu0 0.0
        %2563 = vmatpush1.xpose.msra.mxu0 0.0
        %2564 = vmatprep.subr.mxu0 0.0
        %2565 = vmatpush1.xpose.msra.mxu0 0.0
        %2566 = vmatprep.subr.mxu0 0.0
        %2567 = vmatpush1.xpose.msra.mxu0 0.0
        %2568 = vmatprep.subr.mxu0 0.0
        %2569 = vmatpush1.xpose.msra.mxu0 0.0
        %2570 = vmatprep.subr.mxu0 0.0
        %2571 = vmatpush1.xpose.msra.mxu0 0.0
        %2572 = vmatprep.subr.mxu0 0.0
        %2573 = vmatpush1.xpose.msra.mxu0 0.0
        %2574 = vmatprep.subr.mxu0 0.0
        %2575 = vmatpush1.xpose.msra.mxu0 0.0
        %2576 = vmatprep.subr.mxu0 0.0
        %2577 = vmatpush1.xpose.msra.mxu0 0.0
        %2578 = vmatprep.subr.mxu0 0.0
        %2579 = vmatpush1.xpose.msra.mxu0 0.0
        %2580 = vmatprep.subr.mxu0 0.0
        %2581 = vmatpush1.xpose.msra.mxu0 0.0
        %2582 = vmatprep.subr.mxu0 0.0
        %2583 = vmatpush1.xpose.msra.mxu0 0.0
        %2584 = vmatprep.subr.mxu0 0.0
        %2585 = vmatpush1.xpose.msra.mxu0 0.0
        %2586 = vmatprep.subr.mxu0 0.0
        %2587 = vmatpush1.xpose.msra.mxu0 0.0
        %2588 = vmatprep.subr.mxu0 0.0
        %2589 = vmatpush1.xpose.msra.mxu0 0.0
        %2590 = vmatprep.mubr.f32.mxu0 0.0
        %2591 = vmatmul.mubr.f32.gmra.mrb[0].mxu0 %v2518
        %v2592 = vpop.f32.mrb[0].mxu0
        %v2593 = vadd.f32 0.0, %v2592
        %v2594 = vpop.f32.mrb[0].mxu0
        %2595 = vmatprep.mubr.f32.mxu0 0.0
        %2596 = vmatmul.mubr.f32.gmra.mrb[0].mxu0 %v2521
        %v2597 = vpop.f32.mrb[0].mxu0
        %v2598 = vadd.f32 0.0, %v2597
        %v2599 = vpop.f32.mrb[0].mxu0
        %2600 = vdwg.mxu0
        %v2602 = vsel %vm1836, %v2101, 0
        %v2605 = vsel %vm1836, %v2102, 0
        %v2608 = vsel %vm1836, %v1920, 0
        %2610 = vmatprep.subr.mxu0 0.0
        %2611 = vmatpush1.xpose.msra.mxu0 %v2608
        %2612 = vmatprep.subr.mxu0 0.0
        %2613 = vmatpush1.xpose.msra.mxu0 0.0
        %2614 = vmatprep.subr.mxu0 0.0
        %2615 = vmatpush1.xpose.msra.mxu0 0.0
        %2616 = vmatprep.subr.mxu0 0.0
        %2617 = vmatpush1.xpose.msra.mxu0 0.0
        %2618 = vmatprep.subr.mxu0 0.0
        %2619 = vmatpush1.xpose.msra.mxu0 0.0
        %2620 = vmatprep.subr.mxu0 0.0
        %2621 = vmatpush1.xpose.msra.mxu0 0.0
        %2622 = vmatprep.subr.mxu0 0.0
        %2623 = vmatpush1.xpose.msra.mxu0 0.0
        %2624 = vmatprep.subr.mxu0 0.0
        %2625 = vmatpush1.xpose.msra.mxu0 0.0
        %2626 = vmatprep.subr.mxu0 0.0
        %2627 = vmatpush1.xpose.msra.mxu0 0.0
        %2628 = vmatprep.subr.mxu0 0.0
        %2629 = vmatpush1.xpose.msra.mxu0 0.0
        %2630 = vmatprep.subr.mxu0 0.0
        %2631 = vmatpush1.xpose.msra.mxu0 0.0
        %2632 = vmatprep.subr.mxu0 0.0
        %2633 = vmatpush1.xpose.msra.mxu0 0.0
        %2634 = vmatprep.subr.mxu0 0.0
        %2635 = vmatpush1.xpose.msra.mxu0 0.0
        %2636 = vmatprep.subr.mxu0 0.0
        %2637 = vmatpush1.xpose.msra.mxu0 0.0
        %2638 = vmatprep.subr.mxu0 0.0
        %2639 = vmatpush1.xpose.msra.mxu0 0.0
        %2640 = vmatprep.subr.mxu0 0.0
        %2641 = vmatpush1.xpose.msra.mxu0 0.0
        %2642 = vmatprep.subr.mxu0 0.0
        %2643 = vmatpush1.xpose.msra.mxu0 0.0
        %2644 = vmatprep.subr.mxu0 0.0
        %2645 = vmatpush1.xpose.msra.mxu0 0.0
        %2646 = vmatprep.subr.mxu0 0.0
        %2647 = vmatpush1.xpose.msra.mxu0 0.0
        %2648 = vmatprep.subr.mxu0 0.0
        %2649 = vmatpush1.xpose.msra.mxu0 0.0
        %2650 = vmatprep.subr.mxu0 0.0
        %2651 = vmatpush1.xpose.msra.mxu0 0.0
        %2652 = vmatprep.subr.mxu0 0.0
        %2653 = vmatpush1.xpose.msra.mxu0 0.0
        %2654 = vmatprep.subr.mxu0 0.0
        %2655 = vmatpush1.xpose.msra.mxu0 0.0
        %2656 = vmatprep.subr.mxu0 0.0
        %2657 = vmatpush1.xpose.msra.mxu0 0.0
        %2658 = vmatprep.subr.mxu0 0.0
        %2659 = vmatpush1.xpose.msra.mxu0 0.0
        %2660 = vmatprep.subr.mxu0 0.0
        %2661 = vmatpush1.xpose.msra.mxu0 0.0
        %2662 = vmatprep.subr.mxu0 0.0
        %2663 = vmatpush1.xpose.msra.mxu0 0.0
        %2664 = vmatprep.subr.mxu0 0.0
        %2665 = vmatpush1.xpose.msra.mxu0 0.0
        %2666 = vmatprep.subr.mxu0 0.0
        %2667 = vmatpush1.xpose.msra.mxu0 0.0
        %2668 = vmatprep.subr.mxu0 0.0
        %2669 = vmatpush1.xpose.msra.mxu0 0.0
        %2670 = vmatprep.subr.mxu0 0.0
        %2671 = vmatpush1.xpose.msra.mxu0 0.0
        %2672 = vmatprep.subr.mxu0 0.0
        %2673 = vmatpush1.xpose.msra.mxu0 0.0
        %2674 = vmatprep.mubr.f32.mxu0 0.0
        %2675 = vmatmul.mubr.f32.gmra.mrb[0].mxu0 %v2602
        %v2676 = vpop.f32.mrb[0].mxu0
        %v2677 = vadd.f32 0.0, %v2676
        %v2678 = vpop.f32.mrb[0].mxu0
        %2679 = vmatprep.mubr.f32.mxu0 0.0
        %2680 = vmatmul.mubr.f32.gmra.mrb[0].mxu0 %v2605
        %v2681 = vpop.f32.mrb[0].mxu0
        %v2682 = vadd.f32 0.0, %v2681
        %v2683 = vpop.f32.mrb[0].mxu0
        %2684 = vdwg.mxu0
        %v2686 = vsel %vm1836, %v2133, 0
        %v2689 = vsel %vm1836, %v2134, 0
        %v2692 = vsel %vm1836, %v1922, 0
        %2694 = vmatprep.subr.mxu0 0.0
        %2695 = vmatpush1.xpose.msra.mxu0 %v2692
        %2696 = vmatprep.subr.mxu0 0.0
        %2697 = vmatpush1.xpose.msra.mxu0 0.0
        %2698 = vmatprep.subr.mxu0 0.0
        %2699 = vmatpush1.xpose.msra.mxu0 0.0
        %2700 = vmatprep.subr.mxu0 0.0
        %2701 = vmatpush1.xpose.msra.mxu0 0.0
        %2702 = vmatprep.subr.mxu0 0.0
        %2703 = vmatpush1.xpose.msra.mxu0 0.0
        %2704 = vmatprep.subr.mxu0 0.0
        %2705 = vmatpush1.xpose.msra.mxu0 0.0
        %2706 = vmatprep.subr.mxu0 0.0
        %2707 = vmatpush1.xpose.msra.mxu0 0.0
        %2708 = vmatprep.subr.mxu0 0.0
        %2709 = vmatpush1.xpose.msra.mxu0 0.0
        %2710 = vmatprep.subr.mxu0 0.0
        %2711 = vmatpush1.xpose.msra.mxu0 0.0
        %2712 = vmatprep.subr.mxu0 0.0
        %2713 = vmatpush1.xpose.msra.mxu0 0.0
        %2714 = vmatprep.subr.mxu0 0.0
        %2715 = vmatpush1.xpose.msra.mxu0 0.0
        %2716 = vmatprep.subr.mxu0 0.0
        %2717 = vmatpush1.xpose.msra.mxu0 0.0
        %2718 = vmatprep.subr.mxu0 0.0
        %2719 = vmatpush1.xpose.msra.mxu0 0.0
        %2720 = vmatprep.subr.mxu0 0.0
        %2721 = vmatpush1.xpose.msra.mxu0 0.0
        %2722 = vmatprep.subr.mxu0 0.0
        %2723 = vmatpush1.xpose.msra.mxu0 0.0
        %2724 = vmatprep.subr.mxu0 0.0
        %2725 = vmatpush1.xpose.msra.mxu0 0.0
        %2726 = vmatprep.subr.mxu0 0.0
        %2727 = vmatpush1.xpose.msra.mxu0 0.0
        %2728 = vmatprep.subr.mxu0 0.0
        %2729 = vmatpush1.xpose.msra.mxu0 0.0
        %2730 = vmatprep.subr.mxu0 0.0
        %2731 = vmatpush1.xpose.msra.mxu0 0.0
        %2732 = vmatprep.subr.mxu0 0.0
        %2733 = vmatpush1.xpose.msra.mxu0 0.0
        %2734 = vmatprep.subr.mxu0 0.0
        %2735 = vmatpush1.xpose.msra.mxu0 0.0
        %2736 = vmatprep.subr.mxu0 0.0
        %2737 = vmatpush1.xpose.msra.mxu0 0.0
        %2738 = vmatprep.subr.mxu0 0.0
        %2739 = vmatpush1.xpose.msra.mxu0 0.0
        %2740 = vmatprep.subr.mxu0 0.0
        %2741 = vmatpush1.xpose.msra.mxu0 0.0
        %2742 = vmatprep.subr.mxu0 0.0
        %2743 = vmatpush1.xpose.msra.mxu0 0.0
        %2744 = vmatprep.subr.mxu0 0.0
        %2745 = vmatpush1.xpose.msra.mxu0 0.0
        %2746 = vmatprep.subr.mxu0 0.0
        %2747 = vmatpush1.xpose.msra.mxu0 0.0
        %2748 = vmatprep.subr.mxu0 0.0
        %2749 = vmatpush1.xpose.msra.mxu0 0.0
        %2750 = vmatprep.subr.mxu0 0.0
        %2751 = vmatpush1.xpose.msra.mxu0 0.0
        %2752 = vmatprep.subr.mxu0 0.0
        %2753 = vmatpush1.xpose.msra.mxu0 0.0
        %2754 = vmatprep.subr.mxu0 0.0
        %2755 = vmatpush1.xpose.msra.mxu0 0.0
        %2756 = vmatprep.subr.mxu0 0.0
        %2757 = vmatpush1.xpose.msra.mxu0 0.0
        %2758 = vmatprep.mubr.f32.mxu0 0.0
        %2759 = vmatmul.mubr.f32.gmra.mrb[0].mxu0 %v2686
        %v2760 = vpop.f32.mrb[0].mxu0
        %v2761 = vadd.f32 0.0, %v2760
        %v2762 = vpop.f32.mrb[0].mxu0
        %2763 = vmatprep.mubr.f32.mxu0 0.0
        %2764 = vmatmul.mubr.f32.gmra.mrb[0].mxu0 %v2689
        %v2765 = vpop.f32.mrb[0].mxu0
        %v2766 = vadd.f32 0.0, %v2765
        %v2767 = vpop.f32.mrb[0].mxu0
        %2768 = vdwg.mxu0
        %v2770 = vsel %vm1836, %v2165, 0
        %v2773 = vsel %vm1836, %v2166, 0
        %v2776 = vsel %vm1836, %v1924, 0
        %2778 = vmatprep.subr.mxu0 0.0
        %2779 = vmatpush1.xpose.msra.mxu0 %v2776
        %2780 = vmatprep.subr.mxu0 0.0
        %2781 = vmatpush1.xpose.msra.mxu0 0.0
        %2782 = vmatprep.subr.mxu0 0.0
        %2783 = vmatpush1.xpose.msra.mxu0 0.0
        %2784 = vmatprep.subr.mxu0 0.0
        %2785 = vmatpush1.xpose.msra.mxu0 0.0
        %2786 = vmatprep.subr.mxu0 0.0
        %2787 = vmatpush1.xpose.msra.mxu0 0.0
        %2788 = vmatprep.subr.mxu0 0.0
        %2789 = vmatpush1.xpose.msra.mxu0 0.0
        %2790 = vmatprep.subr.mxu0 0.0
        %2791 = vmatpush1.xpose.msra.mxu0 0.0
        %2792 = vmatprep.subr.mxu0 0.0
        %2793 = vmatpush1.xpose.msra.mxu0 0.0
        %2794 = vmatprep.subr.mxu0 0.0
        %2795 = vmatpush1.xpose.msra.mxu0 0.0
        %2796 = vmatprep.subr.mxu0 0.0
        %2797 = vmatpush1.xpose.msra.mxu0 0.0
        %2798 = vmatprep.subr.mxu0 0.0
        %2799 = vmatpush1.xpose.msra.mxu0 0.0
        %2800 = vmatprep.subr.mxu0 0.0
        %2801 = vmatpush1.xpose.msra.mxu0 0.0
        %2802 = vmatprep.subr.mxu0 0.0
        %2803 = vmatpush1.xpose.msra.mxu0 0.0
        %2804 = vmatprep.subr.mxu0 0.0
        %2805 = vmatpush1.xpose.msra.mxu0 0.0
        %2806 = vmatprep.subr.mxu0 0.0
        %2807 = vmatpush1.xpose.msra.mxu0 0.0
        %2808 = vmatprep.subr.mxu0 0.0
        %2809 = vmatpush1.xpose.msra.mxu0 0.0
        %2810 = vmatprep.subr.mxu0 0.0
        %2811 = vmatpush1.xpose.msra.mxu0 0.0
        %2812 = vmatprep.subr.mxu0 0.0
        %2813 = vmatpush1.xpose.msra.mxu0 0.0
        %2814 = vmatprep.subr.mxu0 0.0
        %2815 = vmatpush1.xpose.msra.mxu0 0.0
        %2816 = vmatprep.subr.mxu0 0.0
        %2817 = vmatpush1.xpose.msra.mxu0 0.0
        %2818 = vmatprep.subr.mxu0 0.0
        %2819 = vmatpush1.xpose.msra.mxu0 0.0
        %2820 = vmatprep.subr.mxu0 0.0
        %2821 = vmatpush1.xpose.msra.mxu0 0.0
        %2822 = vmatprep.subr.mxu0 0.0
        %2823 = vmatpush1.xpose.msra.mxu0 0.0
        %2824 = vmatprep.subr.mxu0 0.0
        %2825 = vmatpush1.xpose.msra.mxu0 0.0
        %2826 = vmatprep.subr.mxu0 0.0
        %2827 = vmatpush1.xpose.msra.mxu0 0.0
        %2828 = vmatprep.subr.mxu0 0.0
        %2829 = vmatpush1.xpose.msra.mxu0 0.0
        %2830 = vmatprep.subr.mxu0 0.0
        %2831 = vmatpush1.xpose.msra.mxu0 0.0
        %2832 = vmatprep.subr.mxu0 0.0
        %2833 = vmatpush1.xpose.msra.mxu0 0.0
        %2834 = vmatprep.subr.mxu0 0.0
        %2835 = vmatpush1.xpose.msra.mxu0 0.0
        %2836 = vmatprep.subr.mxu0 0.0
        %2837 = vmatpush1.xpose.msra.mxu0 0.0
        %2838 = vmatprep.subr.mxu0 0.0
        %2839 = vmatpush1.xpose.msra.mxu0 0.0
        %2840 = vmatprep.subr.mxu0 0.0
        %2841 = vmatpush1.xpose.msra.mxu0 0.0
        %2842 = vmatprep.mubr.f32.mxu0 0.0
        %2843 = vmatmul.mubr.f32.gmra.mrb[0].mxu0 %v2770
        %v2844 = vpop.f32.mrb[0].mxu0
        %v2845 = vadd.f32 0.0, %v2844
        %v2846 = vpop.f32.mrb[0].mxu0
        %2847 = vmatprep.mubr.f32.mxu0 0.0
        %2848 = vmatmul.mubr.f32.gmra.mrb[0].mxu0 %v2773
        %v2849 = vpop.f32.mrb[0].mxu0
        %v2850 = vadd.f32 0.0, %v2849
        %v2851 = vpop.f32.mrb[0].mxu0
        %2852 = vdwg.mxu0
        %2853 = vxpose.xlu0.b32.start [1/16] %v2257, 128
        %2854 = vxpose.xlu0.b32.cont [2/16] %v2262, 128
        %2855 = vxpose.xlu0.b32.cont [3/16] 0.0, 128
        %2856 = vxpose.xlu0.b32.cont [4/16] 0.0, 128
        %2857 = vxpose.xlu0.b32.cont [5/16] 0.0, 128
        %2858 = vxpose.xlu0.b32.cont [6/16] 0.0, 128
        %2859 = vxpose.xlu0.b32.cont [7/16] 0.0, 128
        %2860 = vxpose.xlu0.b32.cont [8/16] 0.0, 128
        %2861 = vxpose.xlu0.b32.cont [9/16] 0.0, 128
        %2862 = vxpose.xlu0.b32.cont [10/16] 0.0, 128
        %2863 = vxpose.xlu0.b32.cont [11/16] 0.0, 128
        %2864 = vxpose.xlu0.b32.cont [12/16] 0.0, 128
        %2865 = vxpose.xlu0.b32.cont [13/16] 0.0, 128
        %2866 = vxpose.xlu0.b32.cont [14/16] 0.0, 128
        %2867 = vxpose.xlu0.b32.cont [15/16] 0.0, 128
        %2868 = vxpose.xlu0.b32.end [16/16] 0.0, 128
        %v2869 = vpop.trf.xlu0
        %v2870 = vpop.trf.xlu0
        %v2871 = vpop.trf.xlu0
        %v2872 = vpop.trf.xlu0
        %v2873 = vpop.trf.xlu0
        %v2874 = vpop.trf.xlu0
        %v2875 = vpop.trf.xlu0
        %v2876 = vpop.trf.xlu0
        %v2877 = vpop.trf.xlu0
        %v2878 = vpop.trf.xlu0
        %v2879 = vpop.trf.xlu0
        %v2880 = vpop.trf.xlu0
        %v2881 = vpop.trf.xlu0
        %v2882 = vpop.trf.xlu0
        %v2883 = vpop.trf.xlu0
        %v2884 = vpop.trf.xlu0
        %2885 = vxpose.xlu0.b32.start [1/16] %v2341, 128
        %2886 = vxpose.xlu0.b32.cont [2/16] %v2346, 128
        %2887 = vxpose.xlu0.b32.cont [3/16] 0.0, 128
        %2888 = vxpose.xlu0.b32.cont [4/16] 0.0, 128
        %2889 = vxpose.xlu0.b32.cont [5/16] 0.0, 128
        %2890 = vxpose.xlu0.b32.cont [6/16] 0.0, 128
        %2891 = vxpose.xlu0.b32.cont [7/16] 0.0, 128
        %2892 = vxpose.xlu0.b32.cont [8/16] 0.0, 128
        %2893 = vxpose.xlu0.b32.cont [9/16] 0.0, 128
        %2894 = vxpose.xlu0.b32.cont [10/16] 0.0, 128
        %2895 = vxpose.xlu0.b32.cont [11/16] 0.0, 128
        %2896 = vxpose.xlu0.b32.cont [12/16] 0.0, 128
        %2897 = vxpose.xlu0.b32.cont [13/16] 0.0, 128
        %2898 = vxpose.xlu0.b32.cont [14/16] 0.0, 128
        %2899 = vxpose.xlu0.b32.cont [15/16] 0.0, 128
        %2900 = vxpose.xlu0.b32.end [16/16] 0.0, 128
        %v2901 = vpop.trf.xlu0
        %v2902 = vpop.trf.xlu0
        %v2903 = vpop.trf.xlu0
        %v2904 = vpop.trf.xlu0
        %v2905 = vpop.trf.xlu0
        %v2906 = vpop.trf.xlu0
        %v2907 = vpop.trf.xlu0
        %v2908 = vpop.trf.xlu0
        %v2909 = vpop.trf.xlu0
        %v2910 = vpop.trf.xlu0
        %v2911 = vpop.trf.xlu0
        %v2912 = vpop.trf.xlu0
        %v2913 = vpop.trf.xlu0
        %v2914 = vpop.trf.xlu0
        %v2915 = vpop.trf.xlu0
        %v2916 = vpop.trf.xlu0
        %2917 = vxpose.xlu0.b32.start [1/16] %v2425, 128
        %2918 = vxpose.xlu0.b32.cont [2/16] %v2430, 128
        %2919 = vxpose.xlu0.b32.cont [3/16] 0.0, 128
        %2920 = vxpose.xlu0.b32.cont [4/16] 0.0, 128
        %2921 = vxpose.xlu0.b32.cont [5/16] 0.0, 128
        %2922 = vxpose.xlu0.b32.cont [6/16] 0.0, 128
        %2923 = vxpose.xlu0.b32.cont [7/16] 0.0, 128
        %2924 = vxpose.xlu0.b32.cont [8/16] 0.0, 128
        %2925 = vxpose.xlu0.b32.cont [9/16] 0.0, 128
        %2926 = vxpose.xlu0.b32.cont [10/16] 0.0, 128
        %2927 = vxpose.xlu0.b32.cont [11/16] 0.0, 128
        %2928 = vxpose.xlu0.b32.cont [12/16] 0.0, 128
        %2929 = vxpose.xlu0.b32.cont [13/16] 0.0, 128
        %2930 = vxpose.xlu0.b32.cont [14/16] 0.0, 128
        %2931 = vxpose.xlu0.b32.cont [15/16] 0.0, 128
        %2932 = vxpose.xlu0.b32.end [16/16] 0.0, 128
        %v2933 = vpop.trf.xlu0
        %v2934 = vpop.trf.xlu0
        %v2935 = vpop.trf.xlu0
        %v2936 = vpop.trf.xlu0
        %v2937 = vpop.trf.xlu0
        %v2938 = vpop.trf.xlu0
        %v2939 = vpop.trf.xlu0
        %v2940 = vpop.trf.xlu0
        %v2941 = vpop.trf.xlu0
        %v2942 = vpop.trf.xlu0
        %v2943 = vpop.trf.xlu0
        %v2944 = vpop.trf.xlu0
        %v2945 = vpop.trf.xlu0
        %v2946 = vpop.trf.xlu0
        %v2947 = vpop.trf.xlu0
        %v2948 = vpop.trf.xlu0
        %2949 = vxpose.xlu0.b32.start [1/16] %v2509, 128
        %2950 = vxpose.xlu0.b32.cont [2/16] %v2514, 128
        %2951 = vxpose.xlu0.b32.cont [3/16] 0.0, 128
        %2952 = vxpose.xlu0.b32.cont [4/16] 0.0, 128
        %2953 = vxpose.xlu0.b32.cont [5/16] 0.0, 128
        %2954 = vxpose.xlu0.b32.cont [6/16] 0.0, 128
        %2955 = vxpose.xlu0.b32.cont [7/16] 0.0, 128
        %2956 = vxpose.xlu0.b32.cont [8/16] 0.0, 128
        %2957 = vxpose.xlu0.b32.cont [9/16] 0.0, 128
        %2958 = vxpose.xlu0.b32.cont [10/16] 0.0, 128
        %2959 = vxpose.xlu0.b32.cont [11/16] 0.0, 128
        %2960 = vxpose.xlu0.b32.cont [12/16] 0.0, 128
        %2961 = vxpose.xlu0.b32.cont [13/16] 0.0, 128
        %2962 = vxpose.xlu0.b32.cont [14/16] 0.0, 128
        %2963 = vxpose.xlu0.b32.cont [15/16] 0.0, 128
        %2964 = vxpose.xlu0.b32.end [16/16] 0.0, 128
        %v2965 = vpop.trf.xlu0
        %v2966 = vpop.trf.xlu0
        %v2967 = vpop.trf.xlu0
        %v2968 = vpop.trf.xlu0
        %v2969 = vpop.trf.xlu0
        %v2970 = vpop.trf.xlu0
        %v2971 = vpop.trf.xlu0
        %v2972 = vpop.trf.xlu0
        %v2973 = vpop.trf.xlu0
        %v2974 = vpop.trf.xlu0
        %v2975 = vpop.trf.xlu0
        %v2976 = vpop.trf.xlu0
        %v2977 = vpop.trf.xlu0
        %v2978 = vpop.trf.xlu0
        %v2979 = vpop.trf.xlu0
        %v2980 = vpop.trf.xlu0
        %2981 = vxpose.xlu0.b32.start [1/16] %v2593, 128
        %2982 = vxpose.xlu0.b32.cont [2/16] %v2598, 128
        %2983 = vxpose.xlu0.b32.cont [3/16] 0.0, 128
        %2984 = vxpose.xlu0.b32.cont [4/16] 0.0, 128
        %2985 = vxpose.xlu0.b32.cont [5/16] 0.0, 128
        %2986 = vxpose.xlu0.b32.cont [6/16] 0.0, 128
        %2987 = vxpose.xlu0.b32.cont [7/16] 0.0, 128
        %2988 = vxpose.xlu0.b32.cont [8/16] 0.0, 128
        %2989 = vxpose.xlu0.b32.cont [9/16] 0.0, 128
        %2990 = vxpose.xlu0.b32.cont [10/16] 0.0, 128
        %2991 = vxpose.xlu0.b32.cont [11/16] 0.0, 128
        %2992 = vxpose.xlu0.b32.cont [12/16] 0.0, 128
        %2993 = vxpose.xlu0.b32.cont [13/16] 0.0, 128
        %2994 = vxpose.xlu0.b32.cont [14/16] 0.0, 128
        %2995 = vxpose.xlu0.b32.cont [15/16] 0.0, 128
        %2996 = vxpose.xlu0.b32.end [16/16] 0.0, 128
        %v2997 = vpop.trf.xlu0
        %v2998 = vpop.trf.xlu0
        %v2999 = vpop.trf.xlu0
        %v3000 = vpop.trf.xlu0
        %v3001 = vpop.trf.xlu0
        %v3002 = vpop.trf.xlu0
        %v3003 = vpop.trf.xlu0
        %v3004 = vpop.trf.xlu0
        %v3005 = vpop.trf.xlu0
        %v3006 = vpop.trf.xlu0
        %v3007 = vpop.trf.xlu0
        %v3008 = vpop.trf.xlu0
        %v3009 = vpop.trf.xlu0
        %v3010 = vpop.trf.xlu0
        %v3011 = vpop.trf.xlu0
        %v3012 = vpop.trf.xlu0
        %3013 = vxpose.xlu0.b32.start [1/16] %v2677, 128
        %3014 = vxpose.xlu0.b32.cont [2/16] %v2682, 128
        %3015 = vxpose.xlu0.b32.cont [3/16] 0.0, 128
        %3016 = vxpose.xlu0.b32.cont [4/16] 0.0, 128
        %3017 = vxpose.xlu0.b32.cont [5/16] 0.0, 128
        %3018 = vxpose.xlu0.b32.cont [6/16] 0.0, 128
        %3019 = vxpose.xlu0.b32.cont [7/16] 0.0, 128
        %3020 = vxpose.xlu0.b32.cont [8/16] 0.0, 128
        %3021 = vxpose.xlu0.b32.cont [9/16] 0.0, 128
        %3022 = vxpose.xlu0.b32.cont [10/16] 0.0, 128
        %3023 = vxpose.xlu0.b32.cont [11/16] 0.0, 128
        %3024 = vxpose.xlu0.b32.cont [12/16] 0.0, 128
        %3025 = vxpose.xlu0.b32.cont [13/16] 0.0, 128
        %3026 = vxpose.xlu0.b32.cont [14/16] 0.0, 128
        %3027 = vxpose.xlu0.b32.cont [15/16] 0.0, 128
        %3028 = vxpose.xlu0.b32.end [16/16] 0.0, 128
        %v3029 = vpop.trf.xlu0
        %v3030 = vpop.trf.xlu0
        %v3031 = vpop.trf.xlu0
        %v3032 = vpop.trf.xlu0
        %v3033 = vpop.trf.xlu0
        %v3034 = vpop.trf.xlu0
        %v3035 = vpop.trf.xlu0
        %v3036 = vpop.trf.xlu0
        %v3037 = vpop.trf.xlu0
        %v3038 = vpop.trf.xlu0
        %v3039 = vpop.trf.xlu0
        %v3040 = vpop.trf.xlu0
        %v3041 = vpop.trf.xlu0
        %v3042 = vpop.trf.xlu0
        %v3043 = vpop.trf.xlu0
        %v3044 = vpop.trf.xlu0
        %3045 = vxpose.xlu0.b32.start [1/16] %v2761, 128
        %3046 = vxpose.xlu0.b32.cont [2/16] %v2766, 128
        %3047 = vxpose.xlu0.b32.cont [3/16] 0.0, 128
        %3048 = vxpose.xlu0.b32.cont [4/16] 0.0, 128
        %3049 = vxpose.xlu0.b32.cont [5/16] 0.0, 128
        %3050 = vxpose.xlu0.b32.cont [6/16] 0.0, 128
        %3051 = vxpose.xlu0.b32.cont [7/16] 0.0, 128
        %3052 = vxpose.xlu0.b32.cont [8/16] 0.0, 128
        %3053 = vxpose.xlu0.b32.cont [9/16] 0.0, 128
        %3054 = vxpose.xlu0.b32.cont [10/16] 0.0, 128
        %3055 = vxpose.xlu0.b32.cont [11/16] 0.0, 128
        %3056 = vxpose.xlu0.b32.cont [12/16] 0.0, 128
        %3057 = vxpose.xlu0.b32.cont [13/16] 0.0, 128
        %3058 = vxpose.xlu0.b32.cont [14/16] 0.0, 128
        %3059 = vxpose.xlu0.b32.cont [15/16] 0.0, 128
        %3060 = vxpose.xlu0.b32.end [16/16] 0.0, 128
        %v3061 = vpop.trf.xlu0
        %v3062 = vpop.trf.xlu0
        %v3063 = vpop.trf.xlu0
        %v3064 = vpop.trf.xlu0
        %v3065 = vpop.trf.xlu0
        %v3066 = vpop.trf.xlu0
        %v3067 = vpop.trf.xlu0
        %v3068 = vpop.trf.xlu0
        %v3069 = vpop.trf.xlu0
        %v3070 = vpop.trf.xlu0
        %v3071 = vpop.trf.xlu0
        %v3072 = vpop.trf.xlu0
        %v3073 = vpop.trf.xlu0
        %v3074 = vpop.trf.xlu0
        %v3075 = vpop.trf.xlu0
        %v3076 = vpop.trf.xlu0
        %3077 = vxpose.xlu0.b32.start [1/16] %v2845, 128
        %3078 = vxpose.xlu0.b32.cont [2/16] %v2850, 128
        %3079 = vxpose.xlu0.b32.cont [3/16] 0.0, 128
        %3080 = vxpose.xlu0.b32.cont [4/16] 0.0, 128
        %3081 = vxpose.xlu0.b32.cont [5/16] 0.0, 128
        %3082 = vxpose.xlu0.b32.cont [6/16] 0.0, 128
        %3083 = vxpose.xlu0.b32.cont [7/16] 0.0, 128
        %3084 = vxpose.xlu0.b32.cont [8/16] 0.0, 128
        %3085 = vxpose.xlu0.b32.cont [9/16] 0.0, 128
        %3086 = vxpose.xlu0.b32.cont [10/16] 0.0, 128
        %3087 = vxpose.xlu0.b32.cont [11/16] 0.0, 128
        %3088 = vxpose.xlu0.b32.cont [12/16] 0.0, 128
        %3089 = vxpose.xlu0.b32.cont [13/16] 0.0, 128
        %3090 = vxpose.xlu0.b32.cont [14/16] 0.0, 128
        %3091 = vxpose.xlu0.b32.cont [15/16] 0.0, 128
        %3092 = vxpose.xlu0.b32.end [16/16] 0.0, 128
        %v3093 = vpop.trf.xlu0
        %v3094 = vpop.trf.xlu0
        %v3095 = vpop.trf.xlu0
        %v3096 = vpop.trf.xlu0
        %v3097 = vpop.trf.xlu0
        %v3098 = vpop.trf.xlu0
        %v3099 = vpop.trf.xlu0
        %v3100 = vpop.trf.xlu0
        %v3101 = vpop.trf.xlu0
        %v3102 = vpop.trf.xlu0
        %v3103 = vpop.trf.xlu0
        %v3104 = vpop.trf.xlu0
        %v3105 = vpop.trf.xlu0
        %v3106 = vpop.trf.xlu0
        %v3107 = vpop.trf.xlu0
        %v3108 = vpop.trf.xlu0
        %v3109 = vcombine.low %v2869, %v2933
        %v3110 = vcombine.high %v2869, %v2933
        %v3112 = vunpack.c.l.s4 1983009808
        %v3113 = vunpack.c.0.s8 %v3112
        %v3114 = vlaneseq
        %v3115 = vshrl.u32 %v3114, 7
        %v3116 = vsub.s32 %v3113, %v3115
        %v3117 = vrot.slane %v3109, %v3116
        %v3119 = vunpack.c.l.s4 1983009808
        %v3120 = vunpack.c.0.s8 %v3119
        %v3121 = vlaneseq
        %v3122 = vshrl.u32 %v3121, 7
        %v3123 = vsub.s32 %v3120, %v3122
        %v3124 = vrot.slane %v3110, %v3123
        %v3125 = vcombine.low %v2901, %v2965
        %v3126 = vcombine.high %v2901, %v2965
        %v3128 = vunpack.c.l.s4 1983009808
        %v3129 = vunpack.c.0.s8 %v3128
        %v3130 = vlaneseq
        %v3131 = vshrl.u32 %v3130, 7
        %v3132 = vsub.s32 %v3129, %v3131
        %v3133 = vrot.slane %v3125, %v3132
        %v3135 = vunpack.c.l.s4 1983009808
        %v3136 = vunpack.c.0.s8 %v3135
        %v3137 = vlaneseq
        %v3138 = vshrl.u32 %v3137, 7
        %v3139 = vsub.s32 %v3136, %v3138
        %v3140 = vrot.slane %v3126, %v3139
        %v3141 = vcombine.low %v2997, %v3061
        %v3142 = vcombine.high %v2997, %v3061
        %v3144 = vunpack.c.l.s4 1983009808
        %v3145 = vunpack.c.0.s8 %v3144
        %v3146 = vlaneseq
        %v3147 = vshrl.u32 %v3146, 7
        %v3148 = vsub.s32 %v3145, %v3147
        %v3149 = vrot.slane %v3141, %v3148
        %v3151 = vunpack.c.l.s4 1983009808
        %v3152 = vunpack.c.0.s8 %v3151
        %v3153 = vlaneseq
        %v3154 = vshrl.u32 %v3153, 7
        %v3155 = vsub.s32 %v3152, %v3154
        %v3156 = vrot.slane %v3142, %v3155
        %v3157 = vcombine.low %v3029, %v3093
        %v3158 = vcombine.high %v3029, %v3093
        %v3160 = vunpack.c.l.s4 1983009808
        %v3161 = vunpack.c.0.s8 %v3160
        %v3162 = vlaneseq
        %v3163 = vshrl.u32 %v3162, 7
        %v3164 = vsub.s32 %v3161, %v3163
        %v3165 = vrot.slane %v3157, %v3164
        %v3167 = vunpack.c.l.s4 1983009808
        %v3168 = vunpack.c.0.s8 %v3167
        %v3169 = vlaneseq
        %v3170 = vshrl.u32 %v3169, 7
        %v3171 = vsub.s32 %v3168, %v3170
        %v3172 = vrot.slane %v3158, %v3171
        %v3173 = vcombine.low %v3117, %v3133
        %v3174 = vcombine.high %v3117, %v3133
        %v3176 = vunpack.c.l.s4 1934713408
        %v3177 = vunpack.c.0.s8 %v3176
        %v3178 = vlaneseq
        %v3179 = vshrl.u32 %v3178, 7
        %v3180 = vsub.s32 %v3177, %v3179
        %v3181 = vrot.slane %v3173, %v3180
        %v3183 = vunpack.c.l.s4 1934713408
        %v3184 = vunpack.c.0.s8 %v3183
        %v3185 = vlaneseq
        %v3186 = vshrl.u32 %v3185, 7
        %v3187 = vsub.s32 %v3184, %v3186
        %v3188 = vrot.slane %v3174, %v3187
        %v3189 = vcombine.low %v3124, %v3140
        %v3190 = vcombine.high %v3124, %v3140
        %v3192 = vunpack.c.l.s4 1934713408
        %v3193 = vunpack.c.0.s8 %v3192
        %v3194 = vlaneseq
        %v3195 = vshrl.u32 %v3194, 7
        %v3196 = vsub.s32 %v3193, %v3195
        %v3197 = vrot.slane %v3189, %v3196
        %v3199 = vunpack.c.l.s4 1934713408
        %v3200 = vunpack.c.0.s8 %v3199
        %v3201 = vlaneseq
        %v3202 = vshrl.u32 %v3201, 7
        %v3203 = vsub.s32 %v3200, %v3202
        %v3204 = vrot.slane %v3190, %v3203
        %v3205 = vcombine.low %v3149, %v3165
        %v3206 = vcombine.high %v3149, %v3165
        %v3208 = vunpack.c.l.s4 1934713408
        %v3209 = vunpack.c.0.s8 %v3208
        %v3210 = vlaneseq
        %v3211 = vshrl.u32 %v3210, 7
        %v3212 = vsub.s32 %v3209, %v3211
        %v3213 = vrot.slane %v3205, %v3212
        %v3215 = vunpack.c.l.s4 1934713408
        %v3216 = vunpack.c.0.s8 %v3215
        %v3217 = vlaneseq
        %v3218 = vshrl.u32 %v3217, 7
        %v3219 = vsub.s32 %v3216, %v3218
        %v3220 = vrot.slane %v3206, %v3219
        %v3221 = vcombine.low %v3156, %v3172
        %v3222 = vcombine.high %v3156, %v3172
        %v3224 = vunpack.c.l.s4 1934713408
        %v3225 = vunpack.c.0.s8 %v3224
        %v3226 = vlaneseq
        %v3227 = vshrl.u32 %v3226, 7
        %v3228 = vsub.s32 %v3225, %v3227
        %v3229 = vrot.slane %v3221, %v3228
        %v3231 = vunpack.c.l.s4 1934713408
        %v3232 = vunpack.c.0.s8 %v3231
        %v3233 = vlaneseq
        %v3234 = vshrl.u32 %v3233, 7
        %v3235 = vsub.s32 %v3232, %v3234
        %v3236 = vrot.slane %v3222, %v3235
        %v3237 = vcombine.low %v3181, %v3213
        %v3238 = vcombine.high %v3181, %v3213
        %v3239 = vcombine.low %v3188, %v3220
        %v3240 = vcombine.high %v3188, %v3220
        %v3241 = vcombine.low %v3197, %v3229
        %v3242 = vcombine.high %v3197, %v3229
        %v3243 = vcombine.low %v3204, %v3236
        %v3244 = vcombine.high %v3204, %v3236
        %v3245 = vcombine.low %v3237, %v3239
        %v3246 = vcombine.high %v3237, %v3239
        %v3248 = vunpack.c.l.s4 1983009808
        %v3249 = vunpack.c.0.s8 %v3248
        %v3250 = vlaneseq
        %v3251 = vshrl.u32 %v3250, 7
        %v3252 = vsub.s32 %v3249, %v3251
        %v3253 = vrot.slane %v3245, %v3252
        %v3255 = vunpack.c.l.s4 1983009808
        %v3256 = vunpack.c.0.s8 %v3255
        %v3257 = vlaneseq
        %v3258 = vshrl.u32 %v3257, 7
        %v3259 = vsub.s32 %v3256, %v3258
        %v3260 = vrot.slane %v3246, %v3259
        %v3261 = vcombine.low %v3238, %v3240
        %v3262 = vcombine.high %v3238, %v3240
        %v3264 = vunpack.c.l.s4 1983009808
        %v3265 = vunpack.c.0.s8 %v3264
        %v3266 = vlaneseq
        %v3267 = vshrl.u32 %v3266, 7
        %v3268 = vsub.s32 %v3265, %v3267
        %v3269 = vrot.slane %v3261, %v3268
        %v3271 = vunpack.c.l.s4 1983009808
        %v3272 = vunpack.c.0.s8 %v3271
        %v3273 = vlaneseq
        %v3274 = vshrl.u32 %v3273, 7
        %v3275 = vsub.s32 %v3272, %v3274
        %v3276 = vrot.slane %v3262, %v3275
        %v3277 = vcombine.low %v3241, %v3243
        %v3278 = vcombine.high %v3241, %v3243
        %v3280 = vunpack.c.l.s4 1983009808
        %v3281 = vunpack.c.0.s8 %v3280
        %v3282 = vlaneseq
        %v3283 = vshrl.u32 %v3282, 7
        %v3284 = vsub.s32 %v3281, %v3283
        %v3285 = vrot.slane %v3277, %v3284
        %v3287 = vunpack.c.l.s4 1983009808
        %v3288 = vunpack.c.0.s8 %v3287
        %v3289 = vlaneseq
        %v3290 = vshrl.u32 %v3289, 7
        %v3291 = vsub.s32 %v3288, %v3290
        %v3292 = vrot.slane %v3278, %v3291
        %v3293 = vcombine.low %v3242, %v3244
        %v3294 = vcombine.high %v3242, %v3244
        %v3296 = vunpack.c.l.s4 1983009808
        %v3297 = vunpack.c.0.s8 %v3296
        %v3298 = vlaneseq
        %v3299 = vshrl.u32 %v3298, 7
        %v3300 = vsub.s32 %v3297, %v3299
        %v3301 = vrot.slane %v3293, %v3300
        %v3303 = vunpack.c.l.s4 1983009808
        %v3304 = vunpack.c.0.s8 %v3303
        %v3305 = vlaneseq
        %v3306 = vshrl.u32 %v3305, 7
        %v3307 = vsub.s32 %v3304, %v3306
        %v3308 = vrot.slane %v3294, %v3307
        %v3309 = vcombine.low %v3253, %v3269
        %v3310 = vcombine.high %v3253, %v3269
        %v3312 = vunpack.c.l.s4 1934713408
        %v3313 = vunpack.c.0.s8 %v3312
        %v3314 = vlaneseq
        %v3315 = vshrl.u32 %v3314, 7
        %v3316 = vsub.s32 %v3313, %v3315
        %v3317 = vrot.slane %v3309, %v3316
        %v3319 = vunpack.c.l.s4 1934713408
        %v3320 = vunpack.c.0.s8 %v3319
        %v3321 = vlaneseq
        %v3322 = vshrl.u32 %v3321, 7
        %v3323 = vsub.s32 %v3320, %v3322
        %v3324 = vrot.slane %v3310, %v3323
        %v3325 = vcombine.low %v3260, %v3276
        %v3326 = vcombine.high %v3260, %v3276
        %v3328 = vunpack.c.l.s4 1934713408
        %v3329 = vunpack.c.0.s8 %v3328
        %v3330 = vlaneseq
        %v3331 = vshrl.u32 %v3330, 7
        %v3332 = vsub.s32 %v3329, %v3331
        %v3333 = vrot.slane %v3325, %v3332
        %v3335 = vunpack.c.l.s4 1934713408
        %v3336 = vunpack.c.0.s8 %v3335
        %v3337 = vlaneseq
        %v3338 = vshrl.u32 %v3337, 7
        %v3339 = vsub.s32 %v3336, %v3338
        %v3340 = vrot.slane %v3326, %v3339
        %v3341 = vcombine.low %v3285, %v3301
        %v3342 = vcombine.high %v3285, %v3301
        %v3344 = vunpack.c.l.s4 1934713408
        %v3345 = vunpack.c.0.s8 %v3344
        %v3346 = vlaneseq
        %v3347 = vshrl.u32 %v3346, 7
        %v3348 = vsub.s32 %v3345, %v3347
        %v3349 = vrot.slane %v3341, %v3348
        %v3351 = vunpack.c.l.s4 1934713408
        %v3352 = vunpack.c.0.s8 %v3351
        %v3353 = vlaneseq
        %v3354 = vshrl.u32 %v3353, 7
        %v3355 = vsub.s32 %v3352, %v3354
        %v3356 = vrot.slane %v3342, %v3355
        %v3357 = vcombine.low %v3292, %v3308
        %v3358 = vcombine.high %v3292, %v3308
        %v3360 = vunpack.c.l.s4 1934713408
        %v3361 = vunpack.c.0.s8 %v3360
        %v3362 = vlaneseq
        %v3363 = vshrl.u32 %v3362, 7
        %v3364 = vsub.s32 %v3361, %v3363
        %v3365 = vrot.slane %v3357, %v3364
        %v3367 = vunpack.c.l.s4 1934713408
        %v3368 = vunpack.c.0.s8 %v3367
        %v3369 = vlaneseq
        %v3370 = vshrl.u32 %v3369, 7
        %v3371 = vsub.s32 %v3368, %v3370
        %v3372 = vrot.slane %v3358, %v3371
        %v3373 = vcombine.low %v3317, %v3349
        %v3374 = vcombine.high %v3317, %v3349
        %v3375 = vcombine.low %v3324, %v3356
        %v3376 = vcombine.high %v3324, %v3356
        %v3377 = vcombine.low %v3333, %v3365
        %v3378 = vcombine.high %v3333, %v3365
        %v3379 = vcombine.low %v3340, %v3372
        %v3380 = vcombine.high %v3340, %v3372
        %3382 = vrot.lane.b32.xlu0 %v3374, 16
        %v3383 = vpop.permute.xlu0 %3382
        %3386 = vrot.lane.b32.xlu0 %v3375, 32
        %v3387 = vpop.permute.xlu0 %3386
        %3390 = vrot.lane.b32.xlu0 %v3376, 48
        %v3391 = vpop.permute.xlu0 %3390
        %3394 = vrot.lane.b32.xlu0 %v3377, 64
        %v3395 = vpop.permute.xlu0 %3394
        %3398 = vrot.lane.b32.xlu0 %v3378, 80
        %v3399 = vpop.permute.xlu0 %3398
        %3402 = vrot.lane.b32.xlu0 %v3379, 96
        %v3403 = vpop.permute.xlu0 %3402
        %3406 = vrot.lane.b32.xlu0 %v3380, 112
        %v3407 = vpop.permute.xlu0 %3406
        %v3409 = vsel %vm1251, %v3373, %v3383
        %vm3410 = vcmask 261120
        %v3411 = vsel %vm3410, %v3409, %v3387
        %vm3412 = vcmask 392192
        %v3413 = vsel %vm3412, %v3411, %v3391
        %vm3414 = vcmask 523264
        %v3415 = vsel %vm3414, %v3413, %v3395
        %vm3416 = vcmask 654336
        %v3417 = vsel %vm3416, %v3415, %v3399
        %vm3418 = vcmask 785408
        %v3419 = vsel %vm3418, %v3417, %v3403
        %vm3420 = vcmask 916480
        %v3421 = vsel %vm3420, %v3419, %v3407
        %v3422 = vld [vmem:[#allocation7] sm:$0xff]
        %v3423 = vld [vmem:[#allocation7 + $0x8] sm:$0xff]
        %v3424 = vld [vmem:[#allocation7 + $0x10] sm:$0xff]
        %v3425 = vld [vmem:[#allocation7 + $0x18] sm:$0xff]
        %v3426 = vld [vmem:[#allocation7 + $0x20] sm:$0xff]
        %v3427 = vld [vmem:[#allocation7 + $0x28] sm:$0xff]
        %v3428 = vld [vmem:[#allocation7 + $0x30] sm:$0xff]
        %v3429 = vld [vmem:[#allocation7 + $0x38] sm:$0xff]
        %v3430 = vld [vmem:[#allocation7 + $0x40] sm:$0xff]
        %v3431 = vld [vmem:[#allocation7 + $0x48] sm:$0xff]
        %v3432 = vld [vmem:[#allocation7 + $0x50] sm:$0xff]
        %v3433 = vld [vmem:[#allocation7 + $0x58] sm:$0xff]
        %v3434 = vld [vmem:[#allocation7 + $0x60] sm:$0xff]
        %v3435 = vld [vmem:[#allocation7 + $0x68] sm:$0xff]
        %v3436 = vld [vmem:[#allocation7 + $0x70] sm:$0xff]
        %v3437 = vld [vmem:[#allocation7 + $0x78] sm:$0xff]
        %v3438 = vld [vmem:[%s6] sm:$0x1]
        %v3440 = vlaneseq
        %v3441 = vshrl.u32 %v3440, 7
        %v3442 = vsub.s32 0, %v3441
        %v3443 = vrot.slane %v3438, %v3442
        %3445 = vmatprep.subr.mxu0 0.0
        %3446 = vmatpush1.msra.mxu0 %v3422
        %3447 = vmatprep.subr.mxu0 0.0
        %3448 = vmatpush1.msra.mxu0 %v3423
        %3449 = vmatprep.subr.mxu0 0.0
        %3450 = vmatpush1.msra.mxu0 %v3424
        %3451 = vmatprep.subr.mxu0 0.0
        %3452 = vmatpush1.msra.mxu0 %v3425
        %3453 = vmatprep.subr.mxu0 0.0
        %3454 = vmatpush1.msra.mxu0 %v3426
        %3455 = vmatprep.subr.mxu0 0.0
        %3456 = vmatpush1.msra.mxu0 %v3427
        %3457 = vmatprep.subr.mxu0 0.0
        %3458 = vmatpush1.msra.mxu0 %v3428
        %3459 = vmatprep.subr.mxu0 0.0
        %3460 = vmatpush1.msra.mxu0 %v3429
        %3461 = vmatprep.subr.mxu0 0.0
        %3462 = vmatpush1.msra.mxu0 %v3430
        %3463 = vmatprep.subr.mxu0 0.0
        %3464 = vmatpush1.msra.mxu0 %v3431
        %3465 = vmatprep.subr.mxu0 0.0
        %3466 = vmatpush1.msra.mxu0 %v3432
        %3467 = vmatprep.subr.mxu0 0.0
        %3468 = vmatpush1.msra.mxu0 %v3433
        %3469 = vmatprep.subr.mxu0 0.0
        %3470 = vmatpush1.msra.mxu0 %v3434
        %3471 = vmatprep.subr.mxu0 0.0
        %3472 = vmatpush1.msra.mxu0 %v3435
        %3473 = vmatprep.subr.mxu0 0.0
        %3474 = vmatpush1.msra.mxu0 %v3436
        %3475 = vmatprep.subr.mxu0 0.0
        %3476 = vmatpush1.msra.mxu0 %v3437
        %3477 = vmatprep.subr.mxu0 0.0
        %3478 = vmatpush1.msra.mxu0 0.0
        %3479 = vmatprep.subr.mxu0 0.0
        %3480 = vmatpush1.msra.mxu0 0.0
        %3481 = vmatprep.subr.mxu0 0.0
        %3482 = vmatpush1.msra.mxu0 0.0
        %3483 = vmatprep.subr.mxu0 0.0
        %3484 = vmatpush1.msra.mxu0 0.0
        %3485 = vmatprep.subr.mxu0 0.0
        %3486 = vmatpush1.msra.mxu0 0.0
        %3487 = vmatprep.subr.mxu0 0.0
        %3488 = vmatpush1.msra.mxu0 0.0
        %3489 = vmatprep.subr.mxu0 0.0
        %3490 = vmatpush1.msra.mxu0 0.0
        %3491 = vmatprep.subr.mxu0 0.0
        %3492 = vmatpush1.msra.mxu0 0.0
        %3493 = vmatprep.subr.mxu0 0.0
        %3494 = vmatpush1.msra.mxu0 0.0
        %3495 = vmatprep.subr.mxu0 0.0
        %3496 = vmatpush1.msra.mxu0 0.0
        %3497 = vmatprep.subr.mxu0 0.0
        %3498 = vmatpush1.msra.mxu0 0.0
        %3499 = vmatprep.subr.mxu0 0.0
        %3500 = vmatpush1.msra.mxu0 0.0
        %3501 = vmatprep.subr.mxu0 0.0
        %3502 = vmatpush1.msra.mxu0 0.0
        %3503 = vmatprep.subr.mxu0 0.0
        %3504 = vmatpush1.msra.mxu0 0.0
        %3505 = vmatprep.subr.mxu0 0.0
        %3506 = vmatpush1.msra.mxu0 0.0
        %3507 = vmatprep.subr.mxu0 0.0
        %3508 = vmatpush1.msra.mxu0 0.0
        %3509 = vmatprep.mubr.f32.mxu0 0.0
        %3510 = vmatmul.mubr.f32.gmra.mrb[0].mxu0 %v3421
        %v3511 = vpop.f32.mrb[0].mxu0
        %v3512 = vadd.f32 %v3443, %v3511
        %v3513 = vpop.f32.mrb[0].mxu0
        %3514 = vdwg.mxu0
        %v3515 = vadd.f32 %v729, %v3512
        %v3516 = vld [vmem:[%s7] sm:$0x1]
        %v3517 = vld [vmem:[%s8] sm:$0x1]
        %3518 = vadd.xlane.f32.xlu0 %v3515
        %v3519 = vpop.xlane.xlu0 %3518
        %v3520 = vrcp.pop 128.0
        %v3521 = vmul.f32 %v3519, %v3520
        %v3522 = vsub.f32 %v3515, %v3521
        %v3523 = vmul.f32 %v3522, %v3522
        %3524 = vadd.xlane.f32.xlu0 %v3523
        %v3525 = vpop.xlane.xlu0 %3524
        %v3526 = vmul.f32 %v3525, %v3520
        %v3527 = vadd.f32 %v3526, 1e-05
        %v3528 = vrsqrt.pop %v3527
        %v3529 = vmul.f32 %v3522, %v3528
        %v3531 = vlaneseq
        %v3532 = vshrl.u32 %v3531, 7
        %v3533 = vsub.s32 0, %v3532
        %v3534 = vrot.slane %v3516, %v3533
        %v3536 = vmul.f32 %v3529, %v3534
        %v3538 = vlaneseq
        %v3539 = vshrl.u32 %v3538, 7
        %v3540 = vsub.s32 0, %v3539
        %v3541 = vrot.slane %v3517, %v3540
        %v3543 = vadd.f32 %v3536, %v3541
        %v3544 = vld [vmem:[#allocation8] sm:$0xff]
        %v3545 = vld [vmem:[#allocation8 + $0x8] sm:$0xff]
        %v3546 = vld [vmem:[#allocation8 + $0x10] sm:$0xff]
        %v3547 = vld [vmem:[#allocation8 + $0x18] sm:$0xff]
        %v3548 = vld [vmem:[#allocation8 + $0x20] sm:$0xff]
        %v3549 = vld [vmem:[#allocation8 + $0x28] sm:$0xff]
        %v3550 = vld [vmem:[#allocation8 + $0x30] sm:$0xff]
        %v3551 = vld [vmem:[#allocation8 + $0x38] sm:$0xff]
        %v3552 = vld [vmem:[#allocation8 + $0x40] sm:$0xff]
        %v3553 = vld [vmem:[#allocation8 + $0x48] sm:$0xff]
        %v3554 = vld [vmem:[#allocation8 + $0x50] sm:$0xff]
        %v3555 = vld [vmem:[#allocation8 + $0x58] sm:$0xff]
        %v3556 = vld [vmem:[#allocation8 + $0x60] sm:$0xff]
        %v3557 = vld [vmem:[#allocation8 + $0x68] sm:$0xff]
        %v3558 = vld [vmem:[#allocation8 + $0x70] sm:$0xff]
        %v3559 = vld [vmem:[#allocation8 + $0x78] sm:$0xff]
        %v3560 = vld [vmem:[#allocation8 + $0x80] sm:$0xff]
        %v3561 = vld [vmem:[#allocation8 + $0x88] sm:$0xff]
        %v3562 = vld [vmem:[#allocation8 + $0x90] sm:$0xff]
        %v3563 = vld [vmem:[#allocation8 + $0x98] sm:$0xff]
        %v3564 = vld [vmem:[#allocation8 + $0xa0] sm:$0xff]
        %v3565 = vld [vmem:[#allocation8 + $0xa8] sm:$0xff]
        %v3566 = vld [vmem:[#allocation8 + $0xb0] sm:$0xff]
        %v3567 = vld [vmem:[#allocation8 + $0xb8] sm:$0xff]
        %v3568 = vld [vmem:[#allocation8 + $0xc0] sm:$0xff]
        %v3569 = vld [vmem:[#allocation8 + $0xc8] sm:$0xff]
        %v3570 = vld [vmem:[#allocation8 + $0xd0] sm:$0xff]
        %v3571 = vld [vmem:[#allocation8 + $0xd8] sm:$0xff]
        %v3572 = vld [vmem:[#allocation8 + $0xe0] sm:$0xff]
        %v3573 = vld [vmem:[#allocation8 + $0xe8] sm:$0xff]
        %v3574 = vld [vmem:[#allocation8 + $0xf0] sm:$0xff]
        %v3575 = vld [vmem:[#allocation8 + $0xf8] sm:$0xff]
        %v3576 = vld [vmem:[%s10] sm:$0x3]
        %v3578 = vlaneseq
        %v3579 = vshrl.u32 %v3578, 7
        %v3580 = vsub.s32 0, %v3579
        %v3581 = vrot.slane %v3576, %v3580
        %v3582 = vlaneseq
        %v3583 = vshrl.u32 %v3582, 7
        %v3584 = vsub.s32 1, %v3583
        %v3585 = vrot.slane %v3576, %v3584
        %3588 = vmatprep.subr.mxu0 %v3545
        %3589 = vmatpush1.msra.mxu0 %v3544
        %3590 = vmatprep.subr.mxu0 %v3547
        %3591 = vmatpush1.msra.mxu0 %v3546
        %3592 = vmatprep.subr.mxu0 %v3549
        %3593 = vmatpush1.msra.mxu0 %v3548
        %3594 = vmatprep.subr.mxu0 %v3551
        %3595 = vmatpush1.msra.mxu0 %v3550
        %3596 = vmatprep.subr.mxu0 %v3553
        %3597 = vmatpush1.msra.mxu0 %v3552
        %3598 = vmatprep.subr.mxu0 %v3555
        %3599 = vmatpush1.msra.mxu0 %v3554
        %3600 = vmatprep.subr.mxu0 %v3557
        %3601 = vmatpush1.msra.mxu0 %v3556
        %3602 = vmatprep.subr.mxu0 %v3559
        %3603 = vmatpush1.msra.mxu0 %v3558
        %3604 = vmatprep.subr.mxu0 %v3561
        %3605 = vmatpush1.msra.mxu0 %v3560
        %3606 = vmatprep.subr.mxu0 %v3563
        %3607 = vmatpush1.msra.mxu0 %v3562
        %3608 = vmatprep.subr.mxu0 %v3565
        %3609 = vmatpush1.msra.mxu0 %v3564
        %3610 = vmatprep.subr.mxu0 %v3567
        %3611 = vmatpush1.msra.mxu0 %v3566
        %3612 = vmatprep.subr.mxu0 %v3569
        %3613 = vmatpush1.msra.mxu0 %v3568
        %3614 = vmatprep.subr.mxu0 %v3571
        %3615 = vmatpush1.msra.mxu0 %v3570
        %3616 = vmatprep.subr.mxu0 %v3573
        %3617 = vmatpush1.msra.mxu0 %v3572
        %3618 = vmatprep.subr.mxu0 %v3575
        %3619 = vmatpush1.msra.mxu0 %v3574
        %3620 = vmatprep.subr.mxu0 0.0
        %3621 = vmatpush1.msra.mxu0 0.0
        %3622 = vmatprep.subr.mxu0 0.0
        %3623 = vmatpush1.msra.mxu0 0.0
        %3624 = vmatprep.subr.mxu0 0.0
        %3625 = vmatpush1.msra.mxu0 0.0
        %3626 = vmatprep.subr.mxu0 0.0
        %3627 = vmatpush1.msra.mxu0 0.0
        %3628 = vmatprep.subr.mxu0 0.0
        %3629 = vmatpush1.msra.mxu0 0.0
        %3630 = vmatprep.subr.mxu0 0.0
        %3631 = vmatpush1.msra.mxu0 0.0
        %3632 = vmatprep.subr.mxu0 0.0
        %3633 = vmatpush1.msra.mxu0 0.0
        %3634 = vmatprep.subr.mxu0 0.0
        %3635 = vmatpush1.msra.mxu0 0.0
        %3636 = vmatprep.subr.mxu0 0.0
        %3637 = vmatpush1.msra.mxu0 0.0
        %3638 = vmatprep.subr.mxu0 0.0
        %3639 = vmatpush1.msra.mxu0 0.0
        %3640 = vmatprep.subr.mxu0 0.0
        %3641 = vmatpush1.msra.mxu0 0.0
        %3642 = vmatprep.subr.mxu0 0.0
        %3643 = vmatpush1.msra.mxu0 0.0
        %3644 = vmatprep.subr.mxu0 0.0
        %3645 = vmatpush1.msra.mxu0 0.0
        %3646 = vmatprep.subr.mxu0 0.0
        %3647 = vmatpush1.msra.mxu0 0.0
        %3648 = vmatprep.subr.mxu0 0.0
        %3649 = vmatpush1.msra.mxu0 0.0
        %3650 = vmatprep.subr.mxu0 0.0
        %3651 = vmatpush1.msra.mxu0 0.0
        %3652 = vmatprep.mubr.f32.mxu0 0.0
        %3653 = vmatmul.mubr.f32.gmra.mrb[0].mxu0 %v3543
        %v3654 = vpop.f32.mrb[0].mxu0
        %v3655 = vadd.f32 %v3581, %v3654
        %v3656 = vpop.f32.mrb[0].mxu0
        %v3657 = vadd.f32 %v3585, %v3656
        %3658 = vdwg.mxu0
        %v3659 = vmax.f32 %v3655, 0.0
        %v3660 = vmax.f32 %v3657, 0.0
        %v3661 = vld [vmem:[#allocation10] sm:$0xff]
        %v3662 = vld [vmem:[#allocation10 + $0x8] sm:$0xff]
        %v3663 = vld [vmem:[#allocation10 + $0x10] sm:$0xff]
        %v3664 = vld [vmem:[#allocation10 + $0x18] sm:$0xff]
        %v3665 = vld [vmem:[#allocation10 + $0x20] sm:$0xff]
        %v3666 = vld [vmem:[#allocation10 + $0x28] sm:$0xff]
        %v3667 = vld [vmem:[#allocation10 + $0x30] sm:$0xff]
        %v3668 = vld [vmem:[#allocation10 + $0x38] sm:$0xff]
        %v3669 = vld [vmem:[#allocation10 + $0x40] sm:$0xff]
        %v3670 = vld [vmem:[#allocation10 + $0x48] sm:$0xff]
        %v3671 = vld [vmem:[#allocation10 + $0x50] sm:$0xff]
        %v3672 = vld [vmem:[#allocation10 + $0x58] sm:$0xff]
        %v3673 = vld [vmem:[#allocation10 + $0x60] sm:$0xff]
        %v3674 = vld [vmem:[#allocation10 + $0x68] sm:$0xff]
        %v3675 = vld [vmem:[#allocation10 + $0x70] sm:$0xff]
        %v3676 = vld [vmem:[#allocation10 + $0x78] sm:$0xff]
        %v3677 = vld [vmem:[#allocation10 + $0x80] sm:$0xff]
        %v3678 = vld [vmem:[#allocation10 + $0x88] sm:$0xff]
        %v3679 = vld [vmem:[#allocation10 + $0x90] sm:$0xff]
        %v3680 = vld [vmem:[#allocation10 + $0x98] sm:$0xff]
        %v3681 = vld [vmem:[#allocation10 + $0xa0] sm:$0xff]
        %v3682 = vld [vmem:[#allocation10 + $0xa8] sm:$0xff]
        %v3683 = vld [vmem:[#allocation10 + $0xb0] sm:$0xff]
        %v3684 = vld [vmem:[#allocation10 + $0xb8] sm:$0xff]
        %v3685 = vld [vmem:[#allocation10 + $0xc0] sm:$0xff]
        %v3686 = vld [vmem:[#allocation10 + $0xc8] sm:$0xff]
        %v3687 = vld [vmem:[#allocation10 + $0xd0] sm:$0xff]
        %v3688 = vld [vmem:[#allocation10 + $0xd8] sm:$0xff]
        %v3689 = vld [vmem:[#allocation10 + $0xe0] sm:$0xff]
        %v3690 = vld [vmem:[#allocation10 + $0xe8] sm:$0xff]
        %v3691 = vld [vmem:[#allocation10 + $0xf0] sm:$0xff]
        %v3692 = vld [vmem:[#allocation10 + $0xf8] sm:$0xff]
        %v3693 = vld [vmem:[%s12] sm:$0x1]
        %v3695 = vlaneseq
        %v3696 = vshrl.u32 %v3695, 7
        %v3697 = vsub.s32 0, %v3696
        %v3698 = vrot.slane %v3693, %v3697
        %3700 = vmatprep.subr.mxu0 0.0
        %3701 = vmatpush1.msra.mxu0 %v3661
        %3702 = vmatprep.subr.mxu0 0.0
        %3703 = vmatpush1.msra.mxu0 %v3662
        %3704 = vmatprep.subr.mxu0 0.0
        %3705 = vmatpush1.msra.mxu0 %v3663
        %3706 = vmatprep.subr.mxu0 0.0
        %3707 = vmatpush1.msra.mxu0 %v3664
        %3708 = vmatprep.subr.mxu0 0.0
        %3709 = vmatpush1.msra.mxu0 %v3665
        %3710 = vmatprep.subr.mxu0 0.0
        %3711 = vmatpush1.msra.mxu0 %v3666
        %3712 = vmatprep.subr.mxu0 0.0
        %3713 = vmatpush1.msra.mxu0 %v3667
        %3714 = vmatprep.subr.mxu0 0.0
        %3715 = vmatpush1.msra.mxu0 %v3668
        %3716 = vmatprep.subr.mxu0 0.0
        %3717 = vmatpush1.msra.mxu0 %v3669
        %3718 = vmatprep.subr.mxu0 0.0
        %3719 = vmatpush1.msra.mxu0 %v3670
        %3720 = vmatprep.subr.mxu0 0.0
        %3721 = vmatpush1.msra.mxu0 %v3671
        %3722 = vmatprep.subr.mxu0 0.0
        %3723 = vmatpush1.msra.mxu0 %v3672
        %3724 = vmatprep.subr.mxu0 0.0
        %3725 = vmatpush1.msra.mxu0 %v3673
        %3726 = vmatprep.subr.mxu0 0.0
        %3727 = vmatpush1.msra.mxu0 %v3674
        %3728 = vmatprep.subr.mxu0 0.0
        %3729 = vmatpush1.msra.mxu0 %v3675
        %3730 = vmatprep.subr.mxu0 0.0
        %3731 = vmatpush1.msra.mxu0 %v3676
        %3732 = vmatprep.subr.mxu0 0.0
        %3733 = vmatpush1.msra.mxu0 %v3677
        %3734 = vmatprep.subr.mxu0 0.0
        %3735 = vmatpush1.msra.mxu0 %v3678
        %3736 = vmatprep.subr.mxu0 0.0
        %3737 = vmatpush1.msra.mxu0 %v3679
        %3738 = vmatprep.subr.mxu0 0.0
        %3739 = vmatpush1.msra.mxu0 %v3680
        %3740 = vmatprep.subr.mxu0 0.0
        %3741 = vmatpush1.msra.mxu0 %v3681
        %3742 = vmatprep.subr.mxu0 0.0
        %3743 = vmatpush1.msra.mxu0 %v3682
        %3744 = vmatprep.subr.mxu0 0.0
        %3745 = vmatpush1.msra.mxu0 %v3683
        %3746 = vmatprep.subr.mxu0 0.0
        %3747 = vmatpush1.msra.mxu0 %v3684
        %3748 = vmatprep.subr.mxu0 0.0
        %3749 = vmatpush1.msra.mxu0 %v3685
        %3750 = vmatprep.subr.mxu0 0.0
        %3751 = vmatpush1.msra.mxu0 %v3686
        %3752 = vmatprep.subr.mxu0 0.0
        %3753 = vmatpush1.msra.mxu0 %v3687
        %3754 = vmatprep.subr.mxu0 0.0
        %3755 = vmatpush1.msra.mxu0 %v3688
        %3756 = vmatprep.subr.mxu0 0.0
        %3757 = vmatpush1.msra.mxu0 %v3689
        %3758 = vmatprep.subr.mxu0 0.0
        %3759 = vmatpush1.msra.mxu0 %v3690
        %3760 = vmatprep.subr.mxu0 0.0
        %3761 = vmatpush1.msra.mxu0 %v3691
        %3762 = vmatprep.subr.mxu0 0.0
        %3763 = vmatpush1.msra.mxu0 %v3692
        %3764 = vmatprep.mubr.f32.mxu0 %v3660
        %3765 = vmatmul.mubr.f32.gmra.mrb[0].mxu0 %v3659
        %v3766 = vpop.f32.mrb[0].mxu0
        %v3767 = vadd.f32 %v3698, %v3766
        %v3768 = vpop.f32.mrb[0].mxu0
        %3769 = vdwg.mxu0
        %v3770 = vadd.f32 %v3543, %v3767
        %v3771 = vld [vmem:[%s13] sm:$0x1]
        %v3772 = vld [vmem:[%s14] sm:$0x1]
        %3773 = vadd.xlane.f32.xlu0 %v3770
        %v3774 = vpop.xlane.xlu0 %3773
        %v3775 = vmul.f32 %v3774, %v3520
        %v3776 = vsub.f32 %v3770, %v3775
        %v3777 = vmul.f32 %v3776, %v3776
        %3778 = vadd.xlane.f32.xlu0 %v3777
        %v3779 = vpop.xlane.xlu0 %3778
        %v3780 = vmul.f32 %v3779, %v3520
        %v3781 = vadd.f32 %v3780, 1e-05
        %v3782 = vrsqrt.pop %v3781
        %v3783 = vmul.f32 %v3776, %v3782
        %v3785 = vlaneseq
        %v3786 = vshrl.u32 %v3785, 7
        %v3787 = vsub.s32 0, %v3786
        %v3788 = vrot.slane %v3771, %v3787
        %v3790 = vmul.f32 %v3783, %v3788
        %v3792 = vlaneseq
        %v3793 = vshrl.u32 %v3792, 7
        %v3794 = vsub.s32 0, %v3793
        %v3795 = vrot.slane %v3772, %v3794
        %v3797 = vadd.f32 %v3790, %v3795
        %s3798 = scalar_lea.vmem [#allocation5], 384
        %v3799 = vld [vmem:[%s3798] sm:$0xff]
        %v3800 = vld [vmem:[%s3798 + $0x8] sm:$0xff]
        %v3801 = vld [vmem:[%s3798 + $0x10] sm:$0xff]
        %v3802 = vld [vmem:[%s3798 + $0x18] sm:$0xff]
        %v3803 = vld [vmem:[%s3798 + $0x20] sm:$0xff]
        %v3804 = vld [vmem:[%s3798 + $0x28] sm:$0xff]
        %v3805 = vld [vmem:[%s3798 + $0x30] sm:$0xff]
        %v3806 = vld [vmem:[%s3798 + $0x38] sm:$0xff]
        %v3807 = vld [vmem:[%s3798 + $0x40] sm:$0xff]
        %v3808 = vld [vmem:[%s3798 + $0x48] sm:$0xff]
        %v3809 = vld [vmem:[%s3798 + $0x50] sm:$0xff]
        %v3810 = vld [vmem:[%s3798 + $0x58] sm:$0xff]
        %v3811 = vld [vmem:[%s3798 + $0x60] sm:$0xff]
        %v3812 = vld [vmem:[%s3798 + $0x68] sm:$0xff]
        %v3813 = vld [vmem:[%s3798 + $0x70] sm:$0xff]
        %v3814 = vld [vmem:[%s3798 + $0x78] sm:$0xff]
        %v3815 = vld [vmem:[%s3798 + $0x80] sm:$0xff]
        %v3816 = vld [vmem:[%s3798 + $0x88] sm:$0xff]
        %v3817 = vld [vmem:[%s3798 + $0x90] sm:$0xff]
        %v3818 = vld [vmem:[%s3798 + $0x98] sm:$0xff]
        %v3819 = vld [vmem:[%s3798 + $0xa0] sm:$0xff]
        %v3820 = vld [vmem:[%s3798 + $0xa8] sm:$0xff]
        %v3821 = vld [vmem:[%s3798 + $0xb0] sm:$0xff]
        %v3822 = vld [vmem:[%s3798 + $0xb8] sm:$0xff]
        %v3823 = vld [vmem:[%s3798 + $0xc0] sm:$0xff]
        %v3824 = vld [vmem:[%s3798 + $0xc8] sm:$0xff]
        %v3825 = vld [vmem:[%s3798 + $0xd0] sm:$0xff]
        %v3826 = vld [vmem:[%s3798 + $0xd8] sm:$0xff]
        %v3827 = vld [vmem:[%s3798 + $0xe0] sm:$0xff]
        %v3828 = vld [vmem:[%s3798 + $0xe8] sm:$0xff]
        %v3829 = vld [vmem:[%s3798 + $0xf0] sm:$0xff]
        %v3830 = vld [vmem:[%s3798 + $0xf8] sm:$0xff]
        %v3831 = vld [vmem:[%s3798 + $0x100] sm:$0xff]
        %v3832 = vld [vmem:[%s3798 + $0x108] sm:$0xff]
        %v3833 = vld [vmem:[%s3798 + $0x110] sm:$0xff]
        %v3834 = vld [vmem:[%s3798 + $0x118] sm:$0xff]
        %v3835 = vld [vmem:[%s3798 + $0x120] sm:$0xff]
        %v3836 = vld [vmem:[%s3798 + $0x128] sm:$0xff]
        %v3837 = vld [vmem:[%s3798 + $0x130] sm:$0xff]
        %v3838 = vld [vmem:[%s3798 + $0x138] sm:$0xff]
        %v3839 = vld [vmem:[%s3798 + $0x140] sm:$0xff]
        %v3840 = vld [vmem:[%s3798 + $0x148] sm:$0xff]
        %v3841 = vld [vmem:[%s3798 + $0x150] sm:$0xff]
        %v3842 = vld [vmem:[%s3798 + $0x158] sm:$0xff]
        %v3843 = vld [vmem:[%s3798 + $0x160] sm:$0xff]
        %v3844 = vld [vmem:[%s3798 + $0x168] sm:$0xff]
        %v3845 = vld [vmem:[%s3798 + $0x170] sm:$0xff]
        %v3846 = vld [vmem:[%s3798 + $0x178] sm:$0xff]
        %s3847 = scalar_lea.vmem %s4, 3
        %v3848 = vld [vmem:[%s3847] sm:$0x7]
        %v3850 = vlaneseq
        %v3851 = vshrl.u32 %v3850, 7
        %v3852 = vsub.s32 0, %v3851
        %v3853 = vrot.slane %v3848, %v3852
        %v3854 = vlaneseq
        %v3855 = vshrl.u32 %v3854, 7
        %v3856 = vsub.s32 1, %v3855
        %v3857 = vrot.slane %v3848, %v3856
        %v3858 = vlaneseq
        %v3859 = vshrl.u32 %v3858, 7
        %v3860 = vsub.s32 2, %v3859
        %v3861 = vrot.slane %v3848, %v3860
        %3865 = vmatprep.subr.mxu0 %v3800
        %3866 = vmatpush1.msra.mxu0 %v3799
        %3867 = vmatprep.subr.mxu0 %v3803
        %3868 = vmatpush1.msra.mxu0 %v3802
        %3869 = vmatprep.subr.mxu0 %v3806
        %3870 = vmatpush1.msra.mxu0 %v3805
        %3871 = vmatprep.subr.mxu0 %v3809
        %3872 = vmatpush1.msra.mxu0 %v3808
        %3873 = vmatprep.subr.mxu0 %v3812
        %3874 = vmatpush1.msra.mxu0 %v3811
        %3875 = vmatprep.subr.mxu0 %v3815
        %3876 = vmatpush1.msra.mxu0 %v3814
        %3877 = vmatprep.subr.mxu0 %v3818
        %3878 = vmatpush1.msra.mxu0 %v3817
        %3879 = vmatprep.subr.mxu0 %v3821
        %3880 = vmatpush1.msra.mxu0 %v3820
        %3881 = vmatprep.subr.mxu0 %v3824
        %3882 = vmatpush1.msra.mxu0 %v3823
        %3883 = vmatprep.subr.mxu0 %v3827
        %3884 = vmatpush1.msra.mxu0 %v3826
        %3885 = vmatprep.subr.mxu0 %v3830
        %3886 = vmatpush1.msra.mxu0 %v3829
        %3887 = vmatprep.subr.mxu0 %v3833
        %3888 = vmatpush1.msra.mxu0 %v3832
        %3889 = vmatprep.subr.mxu0 %v3836
        %3890 = vmatpush1.msra.mxu0 %v3835
        %3891 = vmatprep.subr.mxu0 %v3839
        %3892 = vmatpush1.msra.mxu0 %v3838
        %3893 = vmatprep.subr.mxu0 %v3842
        %3894 = vmatpush1.msra.mxu0 %v3841
        %3895 = vmatprep.subr.mxu0 %v3845
        %3896 = vmatpush1.msra.mxu0 %v3844
        %3897 = vmatprep.subr.mxu0 0.0
        %3898 = vmatpush1.msra.mxu0 0.0
        %3899 = vmatprep.subr.mxu0 0.0
        %3900 = vmatpush1.msra.mxu0 0.0
        %3901 = vmatprep.subr.mxu0 0.0
        %3902 = vmatpush1.msra.mxu0 0.0
        %3903 = vmatprep.subr.mxu0 0.0
        %3904 = vmatpush1.msra.mxu0 0.0
        %3905 = vmatprep.subr.mxu0 0.0
        %3906 = vmatpush1.msra.mxu0 0.0
        %3907 = vmatprep.subr.mxu0 0.0
        %3908 = vmatpush1.msra.mxu0 0.0
        %3909 = vmatprep.subr.mxu0 0.0
        %3910 = vmatpush1.msra.mxu0 0.0
        %3911 = vmatprep.subr.mxu0 0.0
        %3912 = vmatpush1.msra.mxu0 0.0
        %3913 = vmatprep.subr.mxu0 0.0
        %3914 = vmatpush1.msra.mxu0 0.0
        %3915 = vmatprep.subr.mxu0 0.0
        %3916 = vmatpush1.msra.mxu0 0.0
        %3917 = vmatprep.subr.mxu0 0.0
        %3918 = vmatpush1.msra.mxu0 0.0
        %3919 = vmatprep.subr.mxu0 0.0
        %3920 = vmatpush1.msra.mxu0 0.0
        %3921 = vmatprep.subr.mxu0 0.0
        %3922 = vmatpush1.msra.mxu0 0.0
        %3923 = vmatprep.subr.mxu0 0.0
        %3924 = vmatpush1.msra.mxu0 0.0
        %3925 = vmatprep.subr.mxu0 0.0
        %3926 = vmatpush1.msra.mxu0 0.0
        %3927 = vmatprep.subr.mxu0 0.0
        %3928 = vmatpush1.msra.mxu0 0.0
        %3929 = vmatprep.mubr.f32.mxu0 0.0
        %3930 = vmatmul.mubr.f32.gmra.mrb[0].mxu0 %v3797
        %v3931 = vpop.f32.mrb[0].mxu0
        %v3932 = vadd.f32 %v3853, %v3931
        %v3933 = vpop.f32.mrb[0].mxu0
        %v3934 = vadd.f32 %v3857, %v3933
        %3935 = vdwg.mxu0
        %3936 = vmatprep.subr.mxu0 0.0
        %3937 = vmatpush1.msra.mxu0 %v3801
        %3938 = vmatprep.subr.mxu0 0.0
        %3939 = vmatpush1.msra.mxu0 %v3804
        %3940 = vmatprep.subr.mxu0 0.0
        %3941 = vmatpush1.msra.mxu0 %v3807
        %3942 = vmatprep.subr.mxu0 0.0
        %3943 = vmatpush1.msra.mxu0 %v3810
        %3944 = vmatprep.subr.mxu0 0.0
        %3945 = vmatpush1.msra.mxu0 %v3813
        %3946 = vmatprep.subr.mxu0 0.0
        %3947 = vmatpush1.msra.mxu0 %v3816
        %3948 = vmatprep.subr.mxu0 0.0
        %3949 = vmatpush1.msra.mxu0 %v3819
        %3950 = vmatprep.subr.mxu0 0.0
        %3951 = vmatpush1.msra.mxu0 %v3822
        %3952 = vmatprep.subr.mxu0 0.0
        %3953 = vmatpush1.msra.mxu0 %v3825
        %3954 = vmatprep.subr.mxu0 0.0
        %3955 = vmatpush1.msra.mxu0 %v3828
        %3956 = vmatprep.subr.mxu0 0.0
        %3957 = vmatpush1.msra.mxu0 %v3831
        %3958 = vmatprep.subr.mxu0 0.0
        %3959 = vmatpush1.msra.mxu0 %v3834
        %3960 = vmatprep.subr.mxu0 0.0
        %3961 = vmatpush1.msra.mxu0 %v3837
        %3962 = vmatprep.subr.mxu0 0.0
        %3963 = vmatpush1.msra.mxu0 %v3840
        %3964 = vmatprep.subr.mxu0 0.0
        %3965 = vmatpush1.msra.mxu0 %v3843
        %3966 = vmatprep.subr.mxu0 0.0
        %3967 = vmatpush1.msra.mxu0 %v3846
        %3968 = vmatprep.subr.mxu0 0.0
        %3969 = vmatpush1.msra.mxu0 0.0
        %3970 = vmatprep.subr.mxu0 0.0
        %3971 = vmatpush1.msra.mxu0 0.0
        %3972 = vmatprep.subr.mxu0 0.0
        %3973 = vmatpush1.msra.mxu0 0.0
        %3974 = vmatprep.subr.mxu0 0.0
        %3975 = vmatpush1.msra.mxu0 0.0
        %3976 = vmatprep.subr.mxu0 0.0
        %3977 = vmatpush1.msra.mxu0 0.0
        %3978 = vmatprep.subr.mxu0 0.0
        %3979 = vmatpush1.msra.mxu0 0.0
        %3980 = vmatprep.subr.mxu0 0.0
        %3981 = vmatpush1.msra.mxu0 0.0
        %3982 = vmatprep.subr.mxu0 0.0
        %3983 = vmatpush1.msra.mxu0 0.0
        %3984 = vmatprep.subr.mxu0 0.0
        %3985 = vmatpush1.msra.mxu0 0.0
        %3986 = vmatprep.subr.mxu0 0.0
        %3987 = vmatpush1.msra.mxu0 0.0
        %3988 = vmatprep.subr.mxu0 0.0
        %3989 = vmatpush1.msra.mxu0 0.0
        %3990 = vmatprep.subr.mxu0 0.0
        %3991 = vmatpush1.msra.mxu0 0.0
        %3992 = vmatprep.subr.mxu0 0.0
        %3993 = vmatpush1.msra.mxu0 0.0
        %3994 = vmatprep.subr.mxu0 0.0
        %3995 = vmatpush1.msra.mxu0 0.0
        %3996 = vmatprep.subr.mxu0 0.0
        %3997 = vmatpush1.msra.mxu0 0.0
        %3998 = vmatprep.subr.mxu0 0.0
        %3999 = vmatpush1.msra.mxu0 0.0
        %4000 = vmatprep.mubr.f32.mxu0 0.0
        %4001 = vmatmul.mubr.f32.gmra.mrb[0].mxu0 %v3797
        %v4002 = vpop.f32.mrb[0].mxu0
        %v4003 = vadd.f32 %v3861, %v4002
        %v4004 = vpop.f32.mrb[0].mxu0
        %4005 = vdwg.mxu0
        %4007 = vrot.lane.b32.xlu0 %v3932, 112
        %v4008 = vpop.permute.xlu0 %4007
        %4009 = vrot.lane.b32.xlu0 %v3932, 96
        %v4010 = vpop.permute.xlu0 %4009
        %4011 = vrot.lane.b32.xlu0 %v3932, 80
        %v4012 = vpop.permute.xlu0 %4011
        %4013 = vrot.lane.b32.xlu0 %v3932, 64
        %v4014 = vpop.permute.xlu0 %4013
        %4015 = vrot.lane.b32.xlu0 %v3932, 48
        %v4016 = vpop.permute.xlu0 %4015
        %4017 = vrot.lane.b32.xlu0 %v3932, 32
        %v4018 = vpop.permute.xlu0 %4017
        %4019 = vrot.lane.b32.xlu0 %v3932, 16
        %v4020 = vpop.permute.xlu0 %4019
        %4022 = vrot.lane.b32.xlu0 %v3934, 112
        %v4023 = vpop.permute.xlu0 %4022
        %4025 = vrot.lane.b32.xlu0 %v3934, 96
        %v4026 = vpop.permute.xlu0 %4025
        %4028 = vrot.lane.b32.xlu0 %v3934, 80
        %v4029 = vpop.permute.xlu0 %4028
        %4031 = vrot.lane.b32.xlu0 %v3934, 64
        %v4032 = vpop.permute.xlu0 %4031
        %4034 = vrot.lane.b32.xlu0 %v3934, 48
        %v4035 = vpop.permute.xlu0 %4034
        %4037 = vrot.lane.b32.xlu0 %v3934, 32
        %v4038 = vpop.permute.xlu0 %4037
        %4040 = vrot.lane.b32.xlu0 %v3934, 16
        %v4041 = vpop.permute.xlu0 %4040
        %4044 = vrot.lane.b32.xlu0 %v4003, 112
        %v4045 = vpop.permute.xlu0 %4044
        %4047 = vrot.lane.b32.xlu0 %v4003, 96
        %v4048 = vpop.permute.xlu0 %4047
        %4050 = vrot.lane.b32.xlu0 %v4003, 80
        %v4051 = vpop.permute.xlu0 %4050
        %4053 = vrot.lane.b32.xlu0 %v4003, 64
        %v4054 = vpop.permute.xlu0 %4053
        %4056 = vrot.lane.b32.xlu0 %v4003, 48
        %v4057 = vpop.permute.xlu0 %4056
        %4059 = vrot.lane.b32.xlu0 %v4003, 32
        %v4060 = vpop.permute.xlu0 %4059
        %4062 = vrot.lane.b32.xlu0 %v4003, 16
        %v4063 = vpop.permute.xlu0 %4062
        %4065 = vxpose.xlu0.b32.start [1/16] %v3934, 128
        %4066 = vxpose.xlu0.b32.cont [2/16] 0.0, 128
        %4067 = vxpose.xlu0.b32.cont [3/16] 0.0, 128
        %4068 = vxpose.xlu0.b32.cont [4/16] 0.0, 128
        %4069 = vxpose.xlu0.b32.cont [5/16] 0.0, 128
        %4070 = vxpose.xlu0.b32.cont [6/16] 0.0, 128
        %4071 = vxpose.xlu0.b32.cont [7/16] 0.0, 128
        %4072 = vxpose.xlu0.b32.cont [8/16] 0.0, 128
        %4073 = vxpose.xlu0.b32.cont [9/16] 0.0, 128
        %4074 = vxpose.xlu0.b32.cont [10/16] 0.0, 128
        %4075 = vxpose.xlu0.b32.cont [11/16] 0.0, 128
        %4076 = vxpose.xlu0.b32.cont [12/16] 0.0, 128
        %4077 = vxpose.xlu0.b32.cont [13/16] 0.0, 128
        %4078 = vxpose.xlu0.b32.cont [14/16] 0.0, 128
        %4079 = vxpose.xlu0.b32.cont [15/16] 0.0, 128
        %4080 = vxpose.xlu0.b32.end [16/16] 0.0, 128
        %v4081 = vpop.trf.xlu0
        %v4082 = vpop.trf.xlu0
        %v4083 = vpop.trf.xlu0
        %v4084 = vpop.trf.xlu0
        %v4085 = vpop.trf.xlu0
        %v4086 = vpop.trf.xlu0
        %v4087 = vpop.trf.xlu0
        %v4088 = vpop.trf.xlu0
        %v4089 = vpop.trf.xlu0
        %v4090 = vpop.trf.xlu0
        %v4091 = vpop.trf.xlu0
        %v4092 = vpop.trf.xlu0
        %v4093 = vpop.trf.xlu0
        %v4094 = vpop.trf.xlu0
        %v4095 = vpop.trf.xlu0
        %v4096 = vpop.trf.xlu0
        %4097 = vxpose.xlu0.b32.start [1/16] %v4023, 128
        %4098 = vxpose.xlu0.b32.cont [2/16] 0.0, 128
        %4099 = vxpose.xlu0.b32.cont [3/16] 0.0, 128
        %4100 = vxpose.xlu0.b32.cont [4/16] 0.0, 128
        %4101 = vxpose.xlu0.b32.cont [5/16] 0.0, 128
        %4102 = vxpose.xlu0.b32.cont [6/16] 0.0, 128
        %4103 = vxpose.xlu0.b32.cont [7/16] 0.0, 128
        %4104 = vxpose.xlu0.b32.cont [8/16] 0.0, 128
        %4105 = vxpose.xlu0.b32.cont [9/16] 0.0, 128
        %4106 = vxpose.xlu0.b32.cont [10/16] 0.0, 128
        %4107 = vxpose.xlu0.b32.cont [11/16] 0.0, 128
        %4108 = vxpose.xlu0.b32.cont [12/16] 0.0, 128
        %4109 = vxpose.xlu0.b32.cont [13/16] 0.0, 128
        %4110 = vxpose.xlu0.b32.cont [14/16] 0.0, 128
        %4111 = vxpose.xlu0.b32.cont [15/16] 0.0, 128
        %4112 = vxpose.xlu0.b32.end [16/16] 0.0, 128
        %v4113 = vpop.trf.xlu0
        %v4114 = vpop.trf.xlu0
        %v4115 = vpop.trf.xlu0
        %v4116 = vpop.trf.xlu0
        %v4117 = vpop.trf.xlu0
        %v4118 = vpop.trf.xlu0
        %v4119 = vpop.trf.xlu0
        %v4120 = vpop.trf.xlu0
        %v4121 = vpop.trf.xlu0
        %v4122 = vpop.trf.xlu0
        %v4123 = vpop.trf.xlu0
        %v4124 = vpop.trf.xlu0
        %v4125 = vpop.trf.xlu0
        %v4126 = vpop.trf.xlu0
        %v4127 = vpop.trf.xlu0
        %v4128 = vpop.trf.xlu0
        %4129 = vxpose.xlu0.b32.start [1/16] %v4026, 128
        %4130 = vxpose.xlu0.b32.cont [2/16] 0.0, 128
        %4131 = vxpose.xlu0.b32.cont [3/16] 0.0, 128
        %4132 = vxpose.xlu0.b32.cont [4/16] 0.0, 128
        %4133 = vxpose.xlu0.b32.cont [5/16] 0.0, 128
        %4134 = vxpose.xlu0.b32.cont [6/16] 0.0, 128
        %4135 = vxpose.xlu0.b32.cont [7/16] 0.0, 128
        %4136 = vxpose.xlu0.b32.cont [8/16] 0.0, 128
        %4137 = vxpose.xlu0.b32.cont [9/16] 0.0, 128
        %4138 = vxpose.xlu0.b32.cont [10/16] 0.0, 128
        %4139 = vxpose.xlu0.b32.cont [11/16] 0.0, 128
        %4140 = vxpose.xlu0.b32.cont [12/16] 0.0, 128
        %4141 = vxpose.xlu0.b32.cont [13/16] 0.0, 128
        %4142 = vxpose.xlu0.b32.cont [14/16] 0.0, 128
        %4143 = vxpose.xlu0.b32.cont [15/16] 0.0, 128
        %4144 = vxpose.xlu0.b32.end [16/16] 0.0, 128
        %v4145 = vpop.trf.xlu0
        %v4146 = vpop.trf.xlu0
        %v4147 = vpop.trf.xlu0
        %v4148 = vpop.trf.xlu0
        %v4149 = vpop.trf.xlu0
        %v4150 = vpop.trf.xlu0
        %v4151 = vpop.trf.xlu0
        %v4152 = vpop.trf.xlu0
        %v4153 = vpop.trf.xlu0
        %v4154 = vpop.trf.xlu0
        %v4155 = vpop.trf.xlu0
        %v4156 = vpop.trf.xlu0
        %v4157 = vpop.trf.xlu0
        %v4158 = vpop.trf.xlu0
        %v4159 = vpop.trf.xlu0
        %v4160 = vpop.trf.xlu0
        %4161 = vxpose.xlu0.b32.start [1/16] %v4029, 128
        %4162 = vxpose.xlu0.b32.cont [2/16] 0.0, 128
        %4163 = vxpose.xlu0.b32.cont [3/16] 0.0, 128
        %4164 = vxpose.xlu0.b32.cont [4/16] 0.0, 128
        %4165 = vxpose.xlu0.b32.cont [5/16] 0.0, 128
        %4166 = vxpose.xlu0.b32.cont [6/16] 0.0, 128
        %4167 = vxpose.xlu0.b32.cont [7/16] 0.0, 128
        %4168 = vxpose.xlu0.b32.cont [8/16] 0.0, 128
        %4169 = vxpose.xlu0.b32.cont [9/16] 0.0, 128
        %4170 = vxpose.xlu0.b32.cont [10/16] 0.0, 128
        %4171 = vxpose.xlu0.b32.cont [11/16] 0.0, 128
        %4172 = vxpose.xlu0.b32.cont [12/16] 0.0, 128
        %4173 = vxpose.xlu0.b32.cont [13/16] 0.0, 128
        %4174 = vxpose.xlu0.b32.cont [14/16] 0.0, 128
        %4175 = vxpose.xlu0.b32.cont [15/16] 0.0, 128
        %4176 = vxpose.xlu0.b32.end [16/16] 0.0, 128
        %v4177 = vpop.trf.xlu0
        %v4178 = vpop.trf.xlu0
        %v4179 = vpop.trf.xlu0
        %v4180 = vpop.trf.xlu0
        %v4181 = vpop.trf.xlu0
        %v4182 = vpop.trf.xlu0
        %v4183 = vpop.trf.xlu0
        %v4184 = vpop.trf.xlu0
        %v4185 = vpop.trf.xlu0
        %v4186 = vpop.trf.xlu0
        %v4187 = vpop.trf.xlu0
        %v4188 = vpop.trf.xlu0
        %v4189 = vpop.trf.xlu0
        %v4190 = vpop.trf.xlu0
        %v4191 = vpop.trf.xlu0
        %v4192 = vpop.trf.xlu0
        %4193 = vxpose.xlu0.b32.start [1/16] %v4032, 128
        %4194 = vxpose.xlu0.b32.cont [2/16] 0.0, 128
        %4195 = vxpose.xlu0.b32.cont [3/16] 0.0, 128
        %4196 = vxpose.xlu0.b32.cont [4/16] 0.0, 128
        %4197 = vxpose.xlu0.b32.cont [5/16] 0.0, 128
        %4198 = vxpose.xlu0.b32.cont [6/16] 0.0, 128
        %4199 = vxpose.xlu0.b32.cont [7/16] 0.0, 128
        %4200 = vxpose.xlu0.b32.cont [8/16] 0.0, 128
        %4201 = vxpose.xlu0.b32.cont [9/16] 0.0, 128
        %4202 = vxpose.xlu0.b32.cont [10/16] 0.0, 128
        %4203 = vxpose.xlu0.b32.cont [11/16] 0.0, 128
        %4204 = vxpose.xlu0.b32.cont [12/16] 0.0, 128
        %4205 = vxpose.xlu0.b32.cont [13/16] 0.0, 128
        %4206 = vxpose.xlu0.b32.cont [14/16] 0.0, 128
        %4207 = vxpose.xlu0.b32.cont [15/16] 0.0, 128
        %4208 = vxpose.xlu0.b32.end [16/16] 0.0, 128
        %v4209 = vpop.trf.xlu0
        %v4210 = vpop.trf.xlu0
        %v4211 = vpop.trf.xlu0
        %v4212 = vpop.trf.xlu0
        %v4213 = vpop.trf.xlu0
        %v4214 = vpop.trf.xlu0
        %v4215 = vpop.trf.xlu0
        %v4216 = vpop.trf.xlu0
        %v4217 = vpop.trf.xlu0
        %v4218 = vpop.trf.xlu0
        %v4219 = vpop.trf.xlu0
        %v4220 = vpop.trf.xlu0
        %v4221 = vpop.trf.xlu0
        %v4222 = vpop.trf.xlu0
        %v4223 = vpop.trf.xlu0
        %v4224 = vpop.trf.xlu0
        %4225 = vxpose.xlu0.b32.start [1/16] %v4035, 128
        %4226 = vxpose.xlu0.b32.cont [2/16] 0.0, 128
        %4227 = vxpose.xlu0.b32.cont [3/16] 0.0, 128
        %4228 = vxpose.xlu0.b32.cont [4/16] 0.0, 128
        %4229 = vxpose.xlu0.b32.cont [5/16] 0.0, 128
        %4230 = vxpose.xlu0.b32.cont [6/16] 0.0, 128
        %4231 = vxpose.xlu0.b32.cont [7/16] 0.0, 128
        %4232 = vxpose.xlu0.b32.cont [8/16] 0.0, 128
        %4233 = vxpose.xlu0.b32.cont [9/16] 0.0, 128
        %4234 = vxpose.xlu0.b32.cont [10/16] 0.0, 128
        %4235 = vxpose.xlu0.b32.cont [11/16] 0.0, 128
        %4236 = vxpose.xlu0.b32.cont [12/16] 0.0, 128
        %4237 = vxpose.xlu0.b32.cont [13/16] 0.0, 128
        %4238 = vxpose.xlu0.b32.cont [14/16] 0.0, 128
        %4239 = vxpose.xlu0.b32.cont [15/16] 0.0, 128
        %4240 = vxpose.xlu0.b32.end [16/16] 0.0, 128
        %v4241 = vpop.trf.xlu0
        %v4242 = vpop.trf.xlu0
        %v4243 = vpop.trf.xlu0
        %v4244 = vpop.trf.xlu0
        %v4245 = vpop.trf.xlu0
        %v4246 = vpop.trf.xlu0
        %v4247 = vpop.trf.xlu0
        %v4248 = vpop.trf.xlu0
        %v4249 = vpop.trf.xlu0
        %v4250 = vpop.trf.xlu0
        %v4251 = vpop.trf.xlu0
        %v4252 = vpop.trf.xlu0
        %v4253 = vpop.trf.xlu0
        %v4254 = vpop.trf.xlu0
        %v4255 = vpop.trf.xlu0
        %v4256 = vpop.trf.xlu0
        %4257 = vxpose.xlu0.b32.start [1/16] %v4038, 128
        %4258 = vxpose.xlu0.b32.cont [2/16] 0.0, 128
        %4259 = vxpose.xlu0.b32.cont [3/16] 0.0, 128
        %4260 = vxpose.xlu0.b32.cont [4/16] 0.0, 128
        %4261 = vxpose.xlu0.b32.cont [5/16] 0.0, 128
        %4262 = vxpose.xlu0.b32.cont [6/16] 0.0, 128
        %4263 = vxpose.xlu0.b32.cont [7/16] 0.0, 128
        %4264 = vxpose.xlu0.b32.cont [8/16] 0.0, 128
        %4265 = vxpose.xlu0.b32.cont [9/16] 0.0, 128
        %4266 = vxpose.xlu0.b32.cont [10/16] 0.0, 128
        %4267 = vxpose.xlu0.b32.cont [11/16] 0.0, 128
        %4268 = vxpose.xlu0.b32.cont [12/16] 0.0, 128
        %4269 = vxpose.xlu0.b32.cont [13/16] 0.0, 128
        %4270 = vxpose.xlu0.b32.cont [14/16] 0.0, 128
        %4271 = vxpose.xlu0.b32.cont [15/16] 0.0, 128
        %4272 = vxpose.xlu0.b32.end [16/16] 0.0, 128
        %v4273 = vpop.trf.xlu0
        %v4274 = vpop.trf.xlu0
        %v4275 = vpop.trf.xlu0
        %v4276 = vpop.trf.xlu0
        %v4277 = vpop.trf.xlu0
        %v4278 = vpop.trf.xlu0
        %v4279 = vpop.trf.xlu0
        %v4280 = vpop.trf.xlu0
        %v4281 = vpop.trf.xlu0
        %v4282 = vpop.trf.xlu0
        %v4283 = vpop.trf.xlu0
        %v4284 = vpop.trf.xlu0
        %v4285 = vpop.trf.xlu0
        %v4286 = vpop.trf.xlu0
        %v4287 = vpop.trf.xlu0
        %v4288 = vpop.trf.xlu0
        %4289 = vxpose.xlu0.b32.start [1/16] %v4041, 128
        %4290 = vxpose.xlu0.b32.cont [2/16] 0.0, 128
        %4291 = vxpose.xlu0.b32.cont [3/16] 0.0, 128
        %4292 = vxpose.xlu0.b32.cont [4/16] 0.0, 128
        %4293 = vxpose.xlu0.b32.cont [5/16] 0.0, 128
        %4294 = vxpose.xlu0.b32.cont [6/16] 0.0, 128
        %4295 = vxpose.xlu0.b32.cont [7/16] 0.0, 128
        %4296 = vxpose.xlu0.b32.cont [8/16] 0.0, 128
        %4297 = vxpose.xlu0.b32.cont [9/16] 0.0, 128
        %4298 = vxpose.xlu0.b32.cont [10/16] 0.0, 128
        %4299 = vxpose.xlu0.b32.cont [11/16] 0.0, 128
        %4300 = vxpose.xlu0.b32.cont [12/16] 0.0, 128
        %4301 = vxpose.xlu0.b32.cont [13/16] 0.0, 128
        %4302 = vxpose.xlu0.b32.cont [14/16] 0.0, 128
        %4303 = vxpose.xlu0.b32.cont [15/16] 0.0, 128
        %4304 = vxpose.xlu0.b32.end [16/16] 0.0, 128
        %v4305 = vpop.trf.xlu0
        %v4306 = vpop.trf.xlu0
        %v4307 = vpop.trf.xlu0
        %v4308 = vpop.trf.xlu0
        %v4309 = vpop.trf.xlu0
        %v4310 = vpop.trf.xlu0
        %v4311 = vpop.trf.xlu0
        %v4312 = vpop.trf.xlu0
        %v4313 = vpop.trf.xlu0
        %v4314 = vpop.trf.xlu0
        %v4315 = vpop.trf.xlu0
        %v4316 = vpop.trf.xlu0
        %v4317 = vpop.trf.xlu0
        %v4318 = vpop.trf.xlu0
        %v4319 = vpop.trf.xlu0
        %v4320 = vpop.trf.xlu0
        %v4321 = vsel %vm1251, %v3932, 0
        %4323 = vmatprep.subr.mxu0 0.0
        %4324 = vmatpush1.msra.mxu0 %v4081
        %4325 = vmatprep.subr.mxu0 0.0
        %4326 = vmatpush1.msra.mxu0 %v4082
        %4327 = vmatprep.subr.mxu0 0.0
        %4328 = vmatpush1.msra.mxu0 0.0
        %4329 = vmatprep.subr.mxu0 0.0
        %4330 = vmatpush1.msra.mxu0 0.0
        %4331 = vmatprep.subr.mxu0 0.0
        %4332 = vmatpush1.msra.mxu0 0.0
        %4333 = vmatprep.subr.mxu0 0.0
        %4334 = vmatpush1.msra.mxu0 0.0
        %4335 = vmatprep.subr.mxu0 0.0
        %4336 = vmatpush1.msra.mxu0 0.0
        %4337 = vmatprep.subr.mxu0 0.0
        %4338 = vmatpush1.msra.mxu0 0.0
        %4339 = vmatprep.subr.mxu0 0.0
        %4340 = vmatpush1.msra.mxu0 0.0
        %4341 = vmatprep.subr.mxu0 0.0
        %4342 = vmatpush1.msra.mxu0 0.0
        %4343 = vmatprep.subr.mxu0 0.0
        %4344 = vmatpush1.msra.mxu0 0.0
        %4345 = vmatprep.subr.mxu0 0.0
        %4346 = vmatpush1.msra.mxu0 0.0
        %4347 = vmatprep.subr.mxu0 0.0
        %4348 = vmatpush1.msra.mxu0 0.0
        %4349 = vmatprep.subr.mxu0 0.0
        %4350 = vmatpush1.msra.mxu0 0.0
        %4351 = vmatprep.subr.mxu0 0.0
        %4352 = vmatpush1.msra.mxu0 0.0
        %4353 = vmatprep.subr.mxu0 0.0
        %4354 = vmatpush1.msra.mxu0 0.0
        %4355 = vmatprep.subr.mxu0 0.0
        %4356 = vmatpush1.msra.mxu0 0.0
        %4357 = vmatprep.subr.mxu0 0.0
        %4358 = vmatpush1.msra.mxu0 0.0
        %4359 = vmatprep.subr.mxu0 0.0
        %4360 = vmatpush1.msra.mxu0 0.0
        %4361 = vmatprep.subr.mxu0 0.0
        %4362 = vmatpush1.msra.mxu0 0.0
        %4363 = vmatprep.subr.mxu0 0.0
        %4364 = vmatpush1.msra.mxu0 0.0
        %4365 = vmatprep.subr.mxu0 0.0
        %4366 = vmatpush1.msra.mxu0 0.0
        %4367 = vmatprep.subr.mxu0 0.0
        %4368 = vmatpush1.msra.mxu0 0.0
        %4369 = vmatprep.subr.mxu0 0.0
        %4370 = vmatpush1.msra.mxu0 0.0
        %4371 = vmatprep.subr.mxu0 0.0
        %4372 = vmatpush1.msra.mxu0 0.0
        %4373 = vmatprep.subr.mxu0 0.0
        %4374 = vmatpush1.msra.mxu0 0.0
        %4375 = vmatprep.subr.mxu0 0.0
        %4376 = vmatpush1.msra.mxu0 0.0
        %4377 = vmatprep.subr.mxu0 0.0
        %4378 = vmatpush1.msra.mxu0 0.0
        %4379 = vmatprep.subr.mxu0 0.0
        %4380 = vmatpush1.msra.mxu0 0.0
        %4381 = vmatprep.subr.mxu0 0.0
        %4382 = vmatpush1.msra.mxu0 0.0
        %4383 = vmatprep.subr.mxu0 0.0
        %4384 = vmatpush1.msra.mxu0 0.0
        %4385 = vmatprep.subr.mxu0 0.0
        %4386 = vmatpush1.msra.mxu0 0.0
        %4387 = vmatprep.mubr.f32.mxu0 0.0
        %4388 = vmatmul.mubr.f32.gmra.mrb[0].mxu0 %v4321
        %v4389 = vpop.f32.mrb[0].mxu0
        %v4390 = vadd.f32 0.0, %v4389
        %v4391 = vpop.f32.mrb[0].mxu0
        %4392 = vdwg.mxu0
        %v4393 = vsel %vm1251, %v4008, 0
        %4395 = vmatprep.subr.mxu0 0.0
        %4396 = vmatpush1.msra.mxu0 %v4113
        %4397 = vmatprep.subr.mxu0 0.0
        %4398 = vmatpush1.msra.mxu0 %v4114
        %4399 = vmatprep.subr.mxu0 0.0
        %4400 = vmatpush1.msra.mxu0 0.0
        %4401 = vmatprep.subr.mxu0 0.0
        %4402 = vmatpush1.msra.mxu0 0.0
        %4403 = vmatprep.subr.mxu0 0.0
        %4404 = vmatpush1.msra.mxu0 0.0
        %4405 = vmatprep.subr.mxu0 0.0
        %4406 = vmatpush1.msra.mxu0 0.0
        %4407 = vmatprep.subr.mxu0 0.0
        %4408 = vmatpush1.msra.mxu0 0.0
        %4409 = vmatprep.subr.mxu0 0.0
        %4410 = vmatpush1.msra.mxu0 0.0
        %4411 = vmatprep.subr.mxu0 0.0
        %4412 = vmatpush1.msra.mxu0 0.0
        %4413 = vmatprep.subr.mxu0 0.0
        %4414 = vmatpush1.msra.mxu0 0.0
        %4415 = vmatprep.subr.mxu0 0.0
        %4416 = vmatpush1.msra.mxu0 0.0
        %4417 = vmatprep.subr.mxu0 0.0
        %4418 = vmatpush1.msra.mxu0 0.0
        %4419 = vmatprep.subr.mxu0 0.0
        %4420 = vmatpush1.msra.mxu0 0.0
        %4421 = vmatprep.subr.mxu0 0.0
        %4422 = vmatpush1.msra.mxu0 0.0
        %4423 = vmatprep.subr.mxu0 0.0
        %4424 = vmatpush1.msra.mxu0 0.0
        %4425 = vmatprep.subr.mxu0 0.0
        %4426 = vmatpush1.msra.mxu0 0.0
        %4427 = vmatprep.subr.mxu0 0.0
        %4428 = vmatpush1.msra.mxu0 0.0
        %4429 = vmatprep.subr.mxu0 0.0
        %4430 = vmatpush1.msra.mxu0 0.0
        %4431 = vmatprep.subr.mxu0 0.0
        %4432 = vmatpush1.msra.mxu0 0.0
        %4433 = vmatprep.subr.mxu0 0.0
        %4434 = vmatpush1.msra.mxu0 0.0
        %4435 = vmatprep.subr.mxu0 0.0
        %4436 = vmatpush1.msra.mxu0 0.0
        %4437 = vmatprep.subr.mxu0 0.0
        %4438 = vmatpush1.msra.mxu0 0.0
        %4439 = vmatprep.subr.mxu0 0.0
        %4440 = vmatpush1.msra.mxu0 0.0
        %4441 = vmatprep.subr.mxu0 0.0
        %4442 = vmatpush1.msra.mxu0 0.0
        %4443 = vmatprep.subr.mxu0 0.0
        %4444 = vmatpush1.msra.mxu0 0.0
        %4445 = vmatprep.subr.mxu0 0.0
        %4446 = vmatpush1.msra.mxu0 0.0
        %4447 = vmatprep.subr.mxu0 0.0
        %4448 = vmatpush1.msra.mxu0 0.0
        %4449 = vmatprep.subr.mxu0 0.0
        %4450 = vmatpush1.msra.mxu0 0.0
        %4451 = vmatprep.subr.mxu0 0.0
        %4452 = vmatpush1.msra.mxu0 0.0
        %4453 = vmatprep.subr.mxu0 0.0
        %4454 = vmatpush1.msra.mxu0 0.0
        %4455 = vmatprep.subr.mxu0 0.0
        %4456 = vmatpush1.msra.mxu0 0.0
        %4457 = vmatprep.subr.mxu0 0.0
        %4458 = vmatpush1.msra.mxu0 0.0
        %4459 = vmatprep.mubr.f32.mxu0 0.0
        %4460 = vmatmul.mubr.f32.gmra.mrb[0].mxu0 %v4393
        %v4461 = vpop.f32.mrb[0].mxu0
        %v4462 = vadd.f32 0.0, %v4461
        %v4463 = vpop.f32.mrb[0].mxu0
        %4464 = vdwg.mxu0
        %v4465 = vsel %vm1251, %v4010, 0
        %4467 = vmatprep.subr.mxu0 0.0
        %4468 = vmatpush1.msra.mxu0 %v4145
        %4469 = vmatprep.subr.mxu0 0.0
        %4470 = vmatpush1.msra.mxu0 %v4146
        %4471 = vmatprep.subr.mxu0 0.0
        %4472 = vmatpush1.msra.mxu0 0.0
        %4473 = vmatprep.subr.mxu0 0.0
        %4474 = vmatpush1.msra.mxu0 0.0
        %4475 = vmatprep.subr.mxu0 0.0
        %4476 = vmatpush1.msra.mxu0 0.0
        %4477 = vmatprep.subr.mxu0 0.0
        %4478 = vmatpush1.msra.mxu0 0.0
        %4479 = vmatprep.subr.mxu0 0.0
        %4480 = vmatpush1.msra.mxu0 0.0
        %4481 = vmatprep.subr.mxu0 0.0
        %4482 = vmatpush1.msra.mxu0 0.0
        %4483 = vmatprep.subr.mxu0 0.0
        %4484 = vmatpush1.msra.mxu0 0.0
        %4485 = vmatprep.subr.mxu0 0.0
        %4486 = vmatpush1.msra.mxu0 0.0
        %4487 = vmatprep.subr.mxu0 0.0
        %4488 = vmatpush1.msra.mxu0 0.0
        %4489 = vmatprep.subr.mxu0 0.0
        %4490 = vmatpush1.msra.mxu0 0.0
        %4491 = vmatprep.subr.mxu0 0.0
        %4492 = vmatpush1.msra.mxu0 0.0
        %4493 = vmatprep.subr.mxu0 0.0
        %4494 = vmatpush1.msra.mxu0 0.0
        %4495 = vmatprep.subr.mxu0 0.0
        %4496 = vmatpush1.msra.mxu0 0.0
        %4497 = vmatprep.subr.mxu0 0.0
        %4498 = vmatpush1.msra.mxu0 0.0
        %4499 = vmatprep.subr.mxu0 0.0
        %4500 = vmatpush1.msra.mxu0 0.0
        %4501 = vmatprep.subr.mxu0 0.0
        %4502 = vmatpush1.msra.mxu0 0.0
        %4503 = vmatprep.subr.mxu0 0.0
        %4504 = vmatpush1.msra.mxu0 0.0
        %4505 = vmatprep.subr.mxu0 0.0
        %4506 = vmatpush1.msra.mxu0 0.0
        %4507 = vmatprep.subr.mxu0 0.0
        %4508 = vmatpush1.msra.mxu0 0.0
        %4509 = vmatprep.subr.mxu0 0.0
        %4510 = vmatpush1.msra.mxu0 0.0
        %4511 = vmatprep.subr.mxu0 0.0
        %4512 = vmatpush1.msra.mxu0 0.0
        %4513 = vmatprep.subr.mxu0 0.0
        %4514 = vmatpush1.msra.mxu0 0.0
        %4515 = vmatprep.subr.mxu0 0.0
        %4516 = vmatpush1.msra.mxu0 0.0
        %4517 = vmatprep.subr.mxu0 0.0
        %4518 = vmatpush1.msra.mxu0 0.0
        %4519 = vmatprep.subr.mxu0 0.0
        %4520 = vmatpush1.msra.mxu0 0.0
        %4521 = vmatprep.subr.mxu0 0.0
        %4522 = vmatpush1.msra.mxu0 0.0
        %4523 = vmatprep.subr.mxu0 0.0
        %4524 = vmatpush1.msra.mxu0 0.0
        %4525 = vmatprep.subr.mxu0 0.0
        %4526 = vmatpush1.msra.mxu0 0.0
        %4527 = vmatprep.subr.mxu0 0.0
        %4528 = vmatpush1.msra.mxu0 0.0
        %4529 = vmatprep.subr.mxu0 0.0
        %4530 = vmatpush1.msra.mxu0 0.0
        %4531 = vmatprep.mubr.f32.mxu0 0.0
        %4532 = vmatmul.mubr.f32.gmra.mrb[0].mxu0 %v4465
        %v4533 = vpop.f32.mrb[0].mxu0
        %v4534 = vadd.f32 0.0, %v4533
        %v4535 = vpop.f32.mrb[0].mxu0
        %4536 = vdwg.mxu0
        %v4537 = vsel %vm1251, %v4012, 0
        %4539 = vmatprep.subr.mxu0 0.0
        %4540 = vmatpush1.msra.mxu0 %v4177
        %4541 = vmatprep.subr.mxu0 0.0
        %4542 = vmatpush1.msra.mxu0 %v4178
        %4543 = vmatprep.subr.mxu0 0.0
        %4544 = vmatpush1.msra.mxu0 0.0
        %4545 = vmatprep.subr.mxu0 0.0
        %4546 = vmatpush1.msra.mxu0 0.0
        %4547 = vmatprep.subr.mxu0 0.0
        %4548 = vmatpush1.msra.mxu0 0.0
        %4549 = vmatprep.subr.mxu0 0.0
        %4550 = vmatpush1.msra.mxu0 0.0
        %4551 = vmatprep.subr.mxu0 0.0
        %4552 = vmatpush1.msra.mxu0 0.0
        %4553 = vmatprep.subr.mxu0 0.0
        %4554 = vmatpush1.msra.mxu0 0.0
        %4555 = vmatprep.subr.mxu0 0.0
        %4556 = vmatpush1.msra.mxu0 0.0
        %4557 = vmatprep.subr.mxu0 0.0
        %4558 = vmatpush1.msra.mxu0 0.0
        %4559 = vmatprep.subr.mxu0 0.0
        %4560 = vmatpush1.msra.mxu0 0.0
        %4561 = vmatprep.subr.mxu0 0.0
        %4562 = vmatpush1.msra.mxu0 0.0
        %4563 = vmatprep.subr.mxu0 0.0
        %4564 = vmatpush1.msra.mxu0 0.0
        %4565 = vmatprep.subr.mxu0 0.0
        %4566 = vmatpush1.msra.mxu0 0.0
        %4567 = vmatprep.subr.mxu0 0.0
        %4568 = vmatpush1.msra.mxu0 0.0
        %4569 = vmatprep.subr.mxu0 0.0
        %4570 = vmatpush1.msra.mxu0 0.0
        %4571 = vmatprep.subr.mxu0 0.0
        %4572 = vmatpush1.msra.mxu0 0.0
        %4573 = vmatprep.subr.mxu0 0.0
        %4574 = vmatpush1.msra.mxu0 0.0
        %4575 = vmatprep.subr.mxu0 0.0
        %4576 = vmatpush1.msra.mxu0 0.0
        %4577 = vmatprep.subr.mxu0 0.0
        %4578 = vmatpush1.msra.mxu0 0.0
        %4579 = vmatprep.subr.mxu0 0.0
        %4580 = vmatpush1.msra.mxu0 0.0
        %4581 = vmatprep.subr.mxu0 0.0
        %4582 = vmatpush1.msra.mxu0 0.0
        %4583 = vmatprep.subr.mxu0 0.0
        %4584 = vmatpush1.msra.mxu0 0.0
        %4585 = vmatprep.subr.mxu0 0.0
        %4586 = vmatpush1.msra.mxu0 0.0
        %4587 = vmatprep.subr.mxu0 0.0
        %4588 = vmatpush1.msra.mxu0 0.0
        %4589 = vmatprep.subr.mxu0 0.0
        %4590 = vmatpush1.msra.mxu0 0.0
        %4591 = vmatprep.subr.mxu0 0.0
        %4592 = vmatpush1.msra.mxu0 0.0
        %4593 = vmatprep.subr.mxu0 0.0
        %4594 = vmatpush1.msra.mxu0 0.0
        %4595 = vmatprep.subr.mxu0 0.0
        %4596 = vmatpush1.msra.mxu0 0.0
        %4597 = vmatprep.subr.mxu0 0.0
        %4598 = vmatpush1.msra.mxu0 0.0
        %4599 = vmatprep.subr.mxu0 0.0
        %4600 = vmatpush1.msra.mxu0 0.0
        %4601 = vmatprep.subr.mxu0 0.0
        %4602 = vmatpush1.msra.mxu0 0.0
        %4603 = vmatprep.mubr.f32.mxu0 0.0
        %4604 = vmatmul.mubr.f32.gmra.mrb[0].mxu0 %v4537
        %v4605 = vpop.f32.mrb[0].mxu0
        %v4606 = vadd.f32 0.0, %v4605
        %v4607 = vpop.f32.mrb[0].mxu0
        %4608 = vdwg.mxu0
        %v4609 = vsel %vm1251, %v4014, 0
        %4611 = vmatprep.subr.mxu0 0.0
        %4612 = vmatpush1.msra.mxu0 %v4209
        %4613 = vmatprep.subr.mxu0 0.0
        %4614 = vmatpush1.msra.mxu0 %v4210
        %4615 = vmatprep.subr.mxu0 0.0
        %4616 = vmatpush1.msra.mxu0 0.0
        %4617 = vmatprep.subr.mxu0 0.0
        %4618 = vmatpush1.msra.mxu0 0.0
        %4619 = vmatprep.subr.mxu0 0.0
        %4620 = vmatpush1.msra.mxu0 0.0
        %4621 = vmatprep.subr.mxu0 0.0
        %4622 = vmatpush1.msra.mxu0 0.0
        %4623 = vmatprep.subr.mxu0 0.0
        %4624 = vmatpush1.msra.mxu0 0.0
        %4625 = vmatprep.subr.mxu0 0.0
        %4626 = vmatpush1.msra.mxu0 0.0
        %4627 = vmatprep.subr.mxu0 0.0
        %4628 = vmatpush1.msra.mxu0 0.0
        %4629 = vmatprep.subr.mxu0 0.0
        %4630 = vmatpush1.msra.mxu0 0.0
        %4631 = vmatprep.subr.mxu0 0.0
        %4632 = vmatpush1.msra.mxu0 0.0
        %4633 = vmatprep.subr.mxu0 0.0
        %4634 = vmatpush1.msra.mxu0 0.0
        %4635 = vmatprep.subr.mxu0 0.0
        %4636 = vmatpush1.msra.mxu0 0.0
        %4637 = vmatprep.subr.mxu0 0.0
        %4638 = vmatpush1.msra.mxu0 0.0
        %4639 = vmatprep.subr.mxu0 0.0
        %4640 = vmatpush1.msra.mxu0 0.0
        %4641 = vmatprep.subr.mxu0 0.0
        %4642 = vmatpush1.msra.mxu0 0.0
        %4643 = vmatprep.subr.mxu0 0.0
        %4644 = vmatpush1.msra.mxu0 0.0
        %4645 = vmatprep.subr.mxu0 0.0
        %4646 = vmatpush1.msra.mxu0 0.0
        %4647 = vmatprep.subr.mxu0 0.0
        %4648 = vmatpush1.msra.mxu0 0.0
        %4649 = vmatprep.subr.mxu0 0.0
        %4650 = vmatpush1.msra.mxu0 0.0
        %4651 = vmatprep.subr.mxu0 0.0
        %4652 = vmatpush1.msra.mxu0 0.0
        %4653 = vmatprep.subr.mxu0 0.0
        %4654 = vmatpush1.msra.mxu0 0.0
        %4655 = vmatprep.subr.mxu0 0.0
        %4656 = vmatpush1.msra.mxu0 0.0
        %4657 = vmatprep.subr.mxu0 0.0
        %4658 = vmatpush1.msra.mxu0 0.0
        %4659 = vmatprep.subr.mxu0 0.0
        %4660 = vmatpush1.msra.mxu0 0.0
        %4661 = vmatprep.subr.mxu0 0.0
        %4662 = vmatpush1.msra.mxu0 0.0
        %4663 = vmatprep.subr.mxu0 0.0
        %4664 = vmatpush1.msra.mxu0 0.0
        %4665 = vmatprep.subr.mxu0 0.0
        %4666 = vmatpush1.msra.mxu0 0.0
        %4667 = vmatprep.subr.mxu0 0.0
        %4668 = vmatpush1.msra.mxu0 0.0
        %4669 = vmatprep.subr.mxu0 0.0
        %4670 = vmatpush1.msra.mxu0 0.0
        %4671 = vmatprep.subr.mxu0 0.0
        %4672 = vmatpush1.msra.mxu0 0.0
        %4673 = vmatprep.subr.mxu0 0.0
        %4674 = vmatpush1.msra.mxu0 0.0
        %4675 = vmatprep.mubr.f32.mxu0 0.0
        %4676 = vmatmul.mubr.f32.gmra.mrb[0].mxu0 %v4609
        %v4677 = vpop.f32.mrb[0].mxu0
        %v4678 = vadd.f32 0.0, %v4677
        %v4679 = vpop.f32.mrb[0].mxu0
        %4680 = vdwg.mxu0
        %v4681 = vsel %vm1251, %v4016, 0
        %4683 = vmatprep.subr.mxu0 0.0
        %4684 = vmatpush1.msra.mxu0 %v4241
        %4685 = vmatprep.subr.mxu0 0.0
        %4686 = vmatpush1.msra.mxu0 %v4242
        %4687 = vmatprep.subr.mxu0 0.0
        %4688 = vmatpush1.msra.mxu0 0.0
        %4689 = vmatprep.subr.mxu0 0.0
        %4690 = vmatpush1.msra.mxu0 0.0
        %4691 = vmatprep.subr.mxu0 0.0
        %4692 = vmatpush1.msra.mxu0 0.0
        %4693 = vmatprep.subr.mxu0 0.0
        %4694 = vmatpush1.msra.mxu0 0.0
        %4695 = vmatprep.subr.mxu0 0.0
        %4696 = vmatpush1.msra.mxu0 0.0
        %4697 = vmatprep.subr.mxu0 0.0
        %4698 = vmatpush1.msra.mxu0 0.0
        %4699 = vmatprep.subr.mxu0 0.0
        %4700 = vmatpush1.msra.mxu0 0.0
        %4701 = vmatprep.subr.mxu0 0.0
        %4702 = vmatpush1.msra.mxu0 0.0
        %4703 = vmatprep.subr.mxu0 0.0
        %4704 = vmatpush1.msra.mxu0 0.0
        %4705 = vmatprep.subr.mxu0 0.0
        %4706 = vmatpush1.msra.mxu0 0.0
        %4707 = vmatprep.subr.mxu0 0.0
        %4708 = vmatpush1.msra.mxu0 0.0
        %4709 = vmatprep.subr.mxu0 0.0
        %4710 = vmatpush1.msra.mxu0 0.0
        %4711 = vmatprep.subr.mxu0 0.0
        %4712 = vmatpush1.msra.mxu0 0.0
        %4713 = vmatprep.subr.mxu0 0.0
        %4714 = vmatpush1.msra.mxu0 0.0
        %4715 = vmatprep.subr.mxu0 0.0
        %4716 = vmatpush1.msra.mxu0 0.0
        %4717 = vmatprep.subr.mxu0 0.0
        %4718 = vmatpush1.msra.mxu0 0.0
        %4719 = vmatprep.subr.mxu0 0.0
        %4720 = vmatpush1.msra.mxu0 0.0
        %4721 = vmatprep.subr.mxu0 0.0
        %4722 = vmatpush1.msra.mxu0 0.0
        %4723 = vmatprep.subr.mxu0 0.0
        %4724 = vmatpush1.msra.mxu0 0.0
        %4725 = vmatprep.subr.mxu0 0.0
        %4726 = vmatpush1.msra.mxu0 0.0
        %4727 = vmatprep.subr.mxu0 0.0
        %4728 = vmatpush1.msra.mxu0 0.0
        %4729 = vmatprep.subr.mxu0 0.0
        %4730 = vmatpush1.msra.mxu0 0.0
        %4731 = vmatprep.subr.mxu0 0.0
        %4732 = vmatpush1.msra.mxu0 0.0
        %4733 = vmatprep.subr.mxu0 0.0
        %4734 = vmatpush1.msra.mxu0 0.0
        %4735 = vmatprep.subr.mxu0 0.0
        %4736 = vmatpush1.msra.mxu0 0.0
        %4737 = vmatprep.subr.mxu0 0.0
        %4738 = vmatpush1.msra.mxu0 0.0
        %4739 = vmatprep.subr.mxu0 0.0
        %4740 = vmatpush1.msra.mxu0 0.0
        %4741 = vmatprep.subr.mxu0 0.0
        %4742 = vmatpush1.msra.mxu0 0.0
        %4743 = vmatprep.subr.mxu0 0.0
        %4744 = vmatpush1.msra.mxu0 0.0
        %4745 = vmatprep.subr.mxu0 0.0
        %4746 = vmatpush1.msra.mxu0 0.0
        %4747 = vmatprep.mubr.f32.mxu0 0.0
        %4748 = vmatmul.mubr.f32.gmra.mrb[0].mxu0 %v4681
        %v4749 = vpop.f32.mrb[0].mxu0
        %v4750 = vadd.f32 0.0, %v4749
        %v4751 = vpop.f32.mrb[0].mxu0
        %4752 = vdwg.mxu0
        %v4753 = vsel %vm1251, %v4018, 0
        %4755 = vmatprep.subr.mxu0 0.0
        %4756 = vmatpush1.msra.mxu0 %v4273
        %4757 = vmatprep.subr.mxu0 0.0
        %4758 = vmatpush1.msra.mxu0 %v4274
        %4759 = vmatprep.subr.mxu0 0.0
        %4760 = vmatpush1.msra.mxu0 0.0
        %4761 = vmatprep.subr.mxu0 0.0
        %4762 = vmatpush1.msra.mxu0 0.0
        %4763 = vmatprep.subr.mxu0 0.0
        %4764 = vmatpush1.msra.mxu0 0.0
        %4765 = vmatprep.subr.mxu0 0.0
        %4766 = vmatpush1.msra.mxu0 0.0
        %4767 = vmatprep.subr.mxu0 0.0
        %4768 = vmatpush1.msra.mxu0 0.0
        %4769 = vmatprep.subr.mxu0 0.0
        %4770 = vmatpush1.msra.mxu0 0.0
        %4771 = vmatprep.subr.mxu0 0.0
        %4772 = vmatpush1.msra.mxu0 0.0
        %4773 = vmatprep.subr.mxu0 0.0
        %4774 = vmatpush1.msra.mxu0 0.0
        %4775 = vmatprep.subr.mxu0 0.0
        %4776 = vmatpush1.msra.mxu0 0.0
        %4777 = vmatprep.subr.mxu0 0.0
        %4778 = vmatpush1.msra.mxu0 0.0
        %4779 = vmatprep.subr.mxu0 0.0
        %4780 = vmatpush1.msra.mxu0 0.0
        %4781 = vmatprep.subr.mxu0 0.0
        %4782 = vmatpush1.msra.mxu0 0.0
        %4783 = vmatprep.subr.mxu0 0.0
        %4784 = vmatpush1.msra.mxu0 0.0
        %4785 = vmatprep.subr.mxu0 0.0
        %4786 = vmatpush1.msra.mxu0 0.0
        %4787 = vmatprep.subr.mxu0 0.0
        %4788 = vmatpush1.msra.mxu0 0.0
        %4789 = vmatprep.subr.mxu0 0.0
        %4790 = vmatpush1.msra.mxu0 0.0
        %4791 = vmatprep.subr.mxu0 0.0
        %4792 = vmatpush1.msra.mxu0 0.0
        %4793 = vmatprep.subr.mxu0 0.0
        %4794 = vmatpush1.msra.mxu0 0.0
        %4795 = vmatprep.subr.mxu0 0.0
        %4796 = vmatpush1.msra.mxu0 0.0
        %4797 = vmatprep.subr.mxu0 0.0
        %4798 = vmatpush1.msra.mxu0 0.0
        %4799 = vmatprep.subr.mxu0 0.0
        %4800 = vmatpush1.msra.mxu0 0.0
        %4801 = vmatprep.subr.mxu0 0.0
        %4802 = vmatpush1.msra.mxu0 0.0
        %4803 = vmatprep.subr.mxu0 0.0
        %4804 = vmatpush1.msra.mxu0 0.0
        %4805 = vmatprep.subr.mxu0 0.0
        %4806 = vmatpush1.msra.mxu0 0.0
        %4807 = vmatprep.subr.mxu0 0.0
        %4808 = vmatpush1.msra.mxu0 0.0
        %4809 = vmatprep.subr.mxu0 0.0
        %4810 = vmatpush1.msra.mxu0 0.0
        %4811 = vmatprep.subr.mxu0 0.0
        %4812 = vmatpush1.msra.mxu0 0.0
        %4813 = vmatprep.subr.mxu0 0.0
        %4814 = vmatpush1.msra.mxu0 0.0
        %4815 = vmatprep.subr.mxu0 0.0
        %4816 = vmatpush1.msra.mxu0 0.0
        %4817 = vmatprep.subr.mxu0 0.0
        %4818 = vmatpush1.msra.mxu0 0.0
        %4819 = vmatprep.mubr.f32.mxu0 0.0
        %4820 = vmatmul.mubr.f32.gmra.mrb[0].mxu0 %v4753
        %v4821 = vpop.f32.mrb[0].mxu0
        %v4822 = vadd.f32 0.0, %v4821
        %v4823 = vpop.f32.mrb[0].mxu0
        %4824 = vdwg.mxu0
        %v4825 = vsel %vm1251, %v4020, 0
        %4827 = vmatprep.subr.mxu0 0.0
        %4828 = vmatpush1.msra.mxu0 %v4305
        %4829 = vmatprep.subr.mxu0 0.0
        %4830 = vmatpush1.msra.mxu0 %v4306
        %4831 = vmatprep.subr.mxu0 0.0
        %4832 = vmatpush1.msra.mxu0 0.0
        %4833 = vmatprep.subr.mxu0 0.0
        %4834 = vmatpush1.msra.mxu0 0.0
        %4835 = vmatprep.subr.mxu0 0.0
        %4836 = vmatpush1.msra.mxu0 0.0
        %4837 = vmatprep.subr.mxu0 0.0
        %4838 = vmatpush1.msra.mxu0 0.0
        %4839 = vmatprep.subr.mxu0 0.0
        %4840 = vmatpush1.msra.mxu0 0.0
        %4841 = vmatprep.subr.mxu0 0.0
        %4842 = vmatpush1.msra.mxu0 0.0
        %4843 = vmatprep.subr.mxu0 0.0
        %4844 = vmatpush1.msra.mxu0 0.0
        %4845 = vmatprep.subr.mxu0 0.0
        %4846 = vmatpush1.msra.mxu0 0.0
        %4847 = vmatprep.subr.mxu0 0.0
        %4848 = vmatpush1.msra.mxu0 0.0
        %4849 = vmatprep.subr.mxu0 0.0
        %4850 = vmatpush1.msra.mxu0 0.0
        %4851 = vmatprep.subr.mxu0 0.0
        %4852 = vmatpush1.msra.mxu0 0.0
        %4853 = vmatprep.subr.mxu0 0.0
        %4854 = vmatpush1.msra.mxu0 0.0
        %4855 = vmatprep.subr.mxu0 0.0
        %4856 = vmatpush1.msra.mxu0 0.0
        %4857 = vmatprep.subr.mxu0 0.0
        %4858 = vmatpush1.msra.mxu0 0.0
        %4859 = vmatprep.subr.mxu0 0.0
        %4860 = vmatpush1.msra.mxu0 0.0
        %4861 = vmatprep.subr.mxu0 0.0
        %4862 = vmatpush1.msra.mxu0 0.0
        %4863 = vmatprep.subr.mxu0 0.0
        %4864 = vmatpush1.msra.mxu0 0.0
        %4865 = vmatprep.subr.mxu0 0.0
        %4866 = vmatpush1.msra.mxu0 0.0
        %4867 = vmatprep.subr.mxu0 0.0
        %4868 = vmatpush1.msra.mxu0 0.0
        %4869 = vmatprep.subr.mxu0 0.0
        %4870 = vmatpush1.msra.mxu0 0.0
        %4871 = vmatprep.subr.mxu0 0.0
        %4872 = vmatpush1.msra.mxu0 0.0
        %4873 = vmatprep.subr.mxu0 0.0
        %4874 = vmatpush1.msra.mxu0 0.0
        %4875 = vmatprep.subr.mxu0 0.0
        %4876 = vmatpush1.msra.mxu0 0.0
        %4877 = vmatprep.subr.mxu0 0.0
        %4878 = vmatpush1.msra.mxu0 0.0
        %4879 = vmatprep.subr.mxu0 0.0
        %4880 = vmatpush1.msra.mxu0 0.0
        %4881 = vmatprep.subr.mxu0 0.0
        %4882 = vmatpush1.msra.mxu0 0.0
        %4883 = vmatprep.subr.mxu0 0.0
        %4884 = vmatpush1.msra.mxu0 0.0
        %4885 = vmatprep.subr.mxu0 0.0
        %4886 = vmatpush1.msra.mxu0 0.0
        %4887 = vmatprep.subr.mxu0 0.0
        %4888 = vmatpush1.msra.mxu0 0.0
        %4889 = vmatprep.subr.mxu0 0.0
        %4890 = vmatpush1.msra.mxu0 0.0
        %4891 = vmatprep.mubr.f32.mxu0 0.0
        %4892 = vmatmul.mubr.f32.gmra.mrb[0].mxu0 %v4825
        %v4893 = vpop.f32.mrb[0].mxu0
        %v4894 = vadd.f32 0.0, %v4893
        %v4895 = vpop.f32.mrb[0].mxu0
        %4896 = vdwg.mxu0
        %v4897 = vmul.f32 %v4390, 0.25
        %v4898 = vmul.f32 %v4462, 0.25
        %v4899 = vmul.f32 %v4534, 0.25
        %v4900 = vmul.f32 %v4606, 0.25
        %v4901 = vmul.f32 %v4678, 0.25
        %v4902 = vmul.f32 %v4750, 0.25
        %v4903 = vmul.f32 %v4822, 0.25
        %v4904 = vmul.f32 %v4894, 0.25
        %v4905 = vsel %vm1836, %v4897, -inf
        %4906 = vmax.xlane.f32.xlu0 %v4905
        %v4907 = vpop.xlane.xlu0 %4906
        %v4908 = vsel %vm1836, %v4898, -inf
        %4909 = vmax.xlane.f32.xlu0 %v4908
        %v4910 = vpop.xlane.xlu0 %4909
        %v4911 = vsel %vm1836, %v4899, -inf
        %4912 = vmax.xlane.f32.xlu0 %v4911
        %v4913 = vpop.xlane.xlu0 %4912
        %v4914 = vsel %vm1836, %v4900, -inf
        %4915 = vmax.xlane.f32.xlu0 %v4914
        %v4916 = vpop.xlane.xlu0 %4915
        %v4917 = vsel %vm1836, %v4901, -inf
        %4918 = vmax.xlane.f32.xlu0 %v4917
        %v4919 = vpop.xlane.xlu0 %4918
        %v4920 = vsel %vm1836, %v4902, -inf
        %4921 = vmax.xlane.f32.xlu0 %v4920
        %v4922 = vpop.xlane.xlu0 %4921
        %v4923 = vsel %vm1836, %v4903, -inf
        %4924 = vmax.xlane.f32.xlu0 %v4923
        %v4925 = vpop.xlane.xlu0 %4924
        %v4926 = vsel %vm1836, %v4904, -inf
        %4927 = vmax.xlane.f32.xlu0 %v4926
        %v4928 = vpop.xlane.xlu0 %4927
        %v4929 = vsub.f32 %v4897, %v4907
        %v4930 = vsub.f32 %v4898, %v4910
        %v4931 = vsub.f32 %v4899, %v4913
        %v4932 = vsub.f32 %v4900, %v4916
        %v4933 = vsub.f32 %v4901, %v4919
        %v4934 = vsub.f32 %v4902, %v4922
        %v4935 = vsub.f32 %v4903, %v4925
        %v4936 = vsub.f32 %v4904, %v4928
        %v4937 = vmul.f32 %v4929, 1.442695
        %v4938 = vpow.pop %v4937
        %v4939 = vmul.f32 %v4930, 1.442695
        %v4940 = vpow.pop %v4939
        %v4941 = vmul.f32 %v4931, 1.442695
        %v4942 = vpow.pop %v4941
        %v4943 = vmul.f32 %v4932, 1.442695
        %v4944 = vpow.pop %v4943
        %v4945 = vmul.f32 %v4933, 1.442695
        %v4946 = vpow.pop %v4945
        %v4947 = vmul.f32 %v4934, 1.442695
        %v4948 = vpow.pop %v4947
        %v4949 = vmul.f32 %v4935, 1.442695
        %v4950 = vpow.pop %v4949
        %v4951 = vmul.f32 %v4936, 1.442695
        %v4952 = vpow.pop %v4951
        %v4953 = vsel %vm1836, %v4938, 0.0
        %4954 = vadd.xlane.f32.xlu0 %v4953
        %v4955 = vpop.xlane.xlu0 %4954
        %v4956 = vsel %vm1836, %v4940, 0.0
        %4957 = vadd.xlane.f32.xlu0 %v4956
        %v4958 = vpop.xlane.xlu0 %4957
        %v4959 = vsel %vm1836, %v4942, 0.0
        %4960 = vadd.xlane.f32.xlu0 %v4959
        %v4961 = vpop.xlane.xlu0 %4960
        %v4962 = vsel %vm1836, %v4944, 0.0
        %4963 = vadd.xlane.f32.xlu0 %v4962
        %v4964 = vpop.xlane.xlu0 %4963
        %v4965 = vsel %vm1836, %v4946, 0.0
        %4966 = vadd.xlane.f32.xlu0 %v4965
        %v4967 = vpop.xlane.xlu0 %4966
        %v4968 = vsel %vm1836, %v4948, 0.0
        %4969 = vadd.xlane.f32.xlu0 %v4968
        %v4970 = vpop.xlane.xlu0 %4969
        %v4971 = vsel %vm1836, %v4950, 0.0
        %4972 = vadd.xlane.f32.xlu0 %v4971
        %v4973 = vpop.xlane.xlu0 %4972
        %v4974 = vsel %vm1836, %v4952, 0.0
        %4975 = vadd.xlane.f32.xlu0 %v4974
        %v4976 = vpop.xlane.xlu0 %4975
        %v4977 = vrcp.pop %v4955
        %v4978 = vmul.f32 %v4938, %v4977
        %v4979 = vrcp.pop %v4958
        %v4980 = vmul.f32 %v4940, %v4979
        %v4981 = vrcp.pop %v4961
        %v4982 = vmul.f32 %v4942, %v4981
        %v4983 = vrcp.pop %v4964
        %v4984 = vmul.f32 %v4944, %v4983
        %v4985 = vrcp.pop %v4967
        %v4986 = vmul.f32 %v4946, %v4985
        %v4987 = vrcp.pop %v4970
        %v4988 = vmul.f32 %v4948, %v4987
        %v4989 = vrcp.pop %v4973
        %v4990 = vmul.f32 %v4950, %v4989
        %v4991 = vrcp.pop %v4976
        %v4992 = vmul.f32 %v4952, %v4991
        %4993 = vxpose.xlu0.b32.start [1/16] %v4003, 128
        %4994 = vxpose.xlu0.b32.cont [2/16] 0.0, 128
        %4995 = vxpose.xlu0.b32.cont [3/16] 0.0, 128
        %4996 = vxpose.xlu0.b32.cont [4/16] 0.0, 128
        %4997 = vxpose.xlu0.b32.cont [5/16] 0.0, 128
        %4998 = vxpose.xlu0.b32.cont [6/16] 0.0, 128
        %4999 = vxpose.xlu0.b32.cont [7/16] 0.0, 128
        %5000 = vxpose.xlu0.b32.cont [8/16] 0.0, 128
        %5001 = vxpose.xlu0.b32.cont [9/16] 0.0, 128
        %5002 = vxpose.xlu0.b32.cont [10/16] 0.0, 128
        %5003 = vxpose.xlu0.b32.cont [11/16] 0.0, 128
        %5004 = vxpose.xlu0.b32.cont [12/16] 0.0, 128
        %5005 = vxpose.xlu0.b32.cont [13/16] 0.0, 128
        %5006 = vxpose.xlu0.b32.cont [14/16] 0.0, 128
        %5007 = vxpose.xlu0.b32.cont [15/16] 0.0, 128
        %5008 = vxpose.xlu0.b32.end [16/16] 0.0, 128
        %v5009 = vpop.trf.xlu0
        %v5010 = vpop.trf.xlu0
        %v5011 = vpop.trf.xlu0
        %v5012 = vpop.trf.xlu0
        %v5013 = vpop.trf.xlu0
        %v5014 = vpop.trf.xlu0
        %v5015 = vpop.trf.xlu0
        %v5016 = vpop.trf.xlu0
        %v5017 = vpop.trf.xlu0
        %v5018 = vpop.trf.xlu0
        %v5019 = vpop.trf.xlu0
        %v5020 = vpop.trf.xlu0
        %v5021 = vpop.trf.xlu0
        %v5022 = vpop.trf.xlu0
        %v5023 = vpop.trf.xlu0
        %v5024 = vpop.trf.xlu0
        %5025 = vxpose.xlu0.b32.start [1/16] %v4045, 128
        %5026 = vxpose.xlu0.b32.cont [2/16] 0.0, 128
        %5027 = vxpose.xlu0.b32.cont [3/16] 0.0, 128
        %5028 = vxpose.xlu0.b32.cont [4/16] 0.0, 128
        %5029 = vxpose.xlu0.b32.cont [5/16] 0.0, 128
        %5030 = vxpose.xlu0.b32.cont [6/16] 0.0, 128
        %5031 = vxpose.xlu0.b32.cont [7/16] 0.0, 128
        %5032 = vxpose.xlu0.b32.cont [8/16] 0.0, 128
        %5033 = vxpose.xlu0.b32.cont [9/16] 0.0, 128
        %5034 = vxpose.xlu0.b32.cont [10/16] 0.0, 128
        %5035 = vxpose.xlu0.b32.cont [11/16] 0.0, 128
        %5036 = vxpose.xlu0.b32.cont [12/16] 0.0, 128
        %5037 = vxpose.xlu0.b32.cont [13/16] 0.0, 128
        %5038 = vxpose.xlu0.b32.cont [14/16] 0.0, 128
        %5039 = vxpose.xlu0.b32.cont [15/16] 0.0, 128
        %5040 = vxpose.xlu0.b32.end [16/16] 0.0, 128
        %v5041 = vpop.trf.xlu0
        %v5042 = vpop.trf.xlu0
        %v5043 = vpop.trf.xlu0
        %v5044 = vpop.trf.xlu0
        %v5045 = vpop.trf.xlu0
        %v5046 = vpop.trf.xlu0
        %v5047 = vpop.trf.xlu0
        %v5048 = vpop.trf.xlu0
        %v5049 = vpop.trf.xlu0
        %v5050 = vpop.trf.xlu0
        %v5051 = vpop.trf.xlu0
        %v5052 = vpop.trf.xlu0
        %v5053 = vpop.trf.xlu0
        %v5054 = vpop.trf.xlu0
        %v5055 = vpop.trf.xlu0
        %v5056 = vpop.trf.xlu0
        %5057 = vxpose.xlu0.b32.start [1/16] %v4048, 128
        %5058 = vxpose.xlu0.b32.cont [2/16] 0.0, 128
        %5059 = vxpose.xlu0.b32.cont [3/16] 0.0, 128
        %5060 = vxpose.xlu0.b32.cont [4/16] 0.0, 128
        %5061 = vxpose.xlu0.b32.cont [5/16] 0.0, 128
        %5062 = vxpose.xlu0.b32.cont [6/16] 0.0, 128
        %5063 = vxpose.xlu0.b32.cont [7/16] 0.0, 128
        %5064 = vxpose.xlu0.b32.cont [8/16] 0.0, 128
        %5065 = vxpose.xlu0.b32.cont [9/16] 0.0, 128
        %5066 = vxpose.xlu0.b32.cont [10/16] 0.0, 128
        %5067 = vxpose.xlu0.b32.cont [11/16] 0.0, 128
        %5068 = vxpose.xlu0.b32.cont [12/16] 0.0, 128
        %5069 = vxpose.xlu0.b32.cont [13/16] 0.0, 128
        %5070 = vxpose.xlu0.b32.cont [14/16] 0.0, 128
        %5071 = vxpose.xlu0.b32.cont [15/16] 0.0, 128
        %5072 = vxpose.xlu0.b32.end [16/16] 0.0, 128
        %v5073 = vpop.trf.xlu0
        %v5074 = vpop.trf.xlu0
        %v5075 = vpop.trf.xlu0
        %v5076 = vpop.trf.xlu0
        %v5077 = vpop.trf.xlu0
        %v5078 = vpop.trf.xlu0
        %v5079 = vpop.trf.xlu0
        %v5080 = vpop.trf.xlu0
        %v5081 = vpop.trf.xlu0
        %v5082 = vpop.trf.xlu0
        %v5083 = vpop.trf.xlu0
        %v5084 = vpop.trf.xlu0
        %v5085 = vpop.trf.xlu0
        %v5086 = vpop.trf.xlu0
        %v5087 = vpop.trf.xlu0
        %v5088 = vpop.trf.xlu0
        %5089 = vxpose.xlu0.b32.start [1/16] %v4051, 128
        %5090 = vxpose.xlu0.b32.cont [2/16] 0.0, 128
        %5091 = vxpose.xlu0.b32.cont [3/16] 0.0, 128
        %5092 = vxpose.xlu0.b32.cont [4/16] 0.0, 128
        %5093 = vxpose.xlu0.b32.cont [5/16] 0.0, 128
        %5094 = vxpose.xlu0.b32.cont [6/16] 0.0, 128
        %5095 = vxpose.xlu0.b32.cont [7/16] 0.0, 128
        %5096 = vxpose.xlu0.b32.cont [8/16] 0.0, 128
        %5097 = vxpose.xlu0.b32.cont [9/16] 0.0, 128
        %5098 = vxpose.xlu0.b32.cont [10/16] 0.0, 128
        %5099 = vxpose.xlu0.b32.cont [11/16] 0.0, 128
        %5100 = vxpose.xlu0.b32.cont [12/16] 0.0, 128
        %5101 = vxpose.xlu0.b32.cont [13/16] 0.0, 128
        %5102 = vxpose.xlu0.b32.cont [14/16] 0.0, 128
        %5103 = vxpose.xlu0.b32.cont [15/16] 0.0, 128
        %5104 = vxpose.xlu0.b32.end [16/16] 0.0, 128
        %v5105 = vpop.trf.xlu0
        %v5106 = vpop.trf.xlu0
        %v5107 = vpop.trf.xlu0
        %v5108 = vpop.trf.xlu0
        %v5109 = vpop.trf.xlu0
        %v5110 = vpop.trf.xlu0
        %v5111 = vpop.trf.xlu0
        %v5112 = vpop.trf.xlu0
        %v5113 = vpop.trf.xlu0
        %v5114 = vpop.trf.xlu0
        %v5115 = vpop.trf.xlu0
        %v5116 = vpop.trf.xlu0
        %v5117 = vpop.trf.xlu0
        %v5118 = vpop.trf.xlu0
        %v5119 = vpop.trf.xlu0
        %v5120 = vpop.trf.xlu0
        %5121 = vxpose.xlu0.b32.start [1/16] %v4054, 128
        %5122 = vxpose.xlu0.b32.cont [2/16] 0.0, 128
        %5123 = vxpose.xlu0.b32.cont [3/16] 0.0, 128
        %5124 = vxpose.xlu0.b32.cont [4/16] 0.0, 128
        %5125 = vxpose.xlu0.b32.cont [5/16] 0.0, 128
        %5126 = vxpose.xlu0.b32.cont [6/16] 0.0, 128
        %5127 = vxpose.xlu0.b32.cont [7/16] 0.0, 128
        %5128 = vxpose.xlu0.b32.cont [8/16] 0.0, 128
        %5129 = vxpose.xlu0.b32.cont [9/16] 0.0, 128
        %5130 = vxpose.xlu0.b32.cont [10/16] 0.0, 128
        %5131 = vxpose.xlu0.b32.cont [11/16] 0.0, 128
        %5132 = vxpose.xlu0.b32.cont [12/16] 0.0, 128
        %5133 = vxpose.xlu0.b32.cont [13/16] 0.0, 128
        %5134 = vxpose.xlu0.b32.cont [14/16] 0.0, 128
        %5135 = vxpose.xlu0.b32.cont [15/16] 0.0, 128
        %5136 = vxpose.xlu0.b32.end [16/16] 0.0, 128
        %v5137 = vpop.trf.xlu0
        %v5138 = vpop.trf.xlu0
        %v5139 = vpop.trf.xlu0
        %v5140 = vpop.trf.xlu0
        %v5141 = vpop.trf.xlu0
        %v5142 = vpop.trf.xlu0
        %v5143 = vpop.trf.xlu0
        %v5144 = vpop.trf.xlu0
        %v5145 = vpop.trf.xlu0
        %v5146 = vpop.trf.xlu0
        %v5147 = vpop.trf.xlu0
        %v5148 = vpop.trf.xlu0
        %v5149 = vpop.trf.xlu0
        %v5150 = vpop.trf.xlu0
        %v5151 = vpop.trf.xlu0
        %v5152 = vpop.trf.xlu0
        %5153 = vxpose.xlu0.b32.start [1/16] %v4057, 128
        %5154 = vxpose.xlu0.b32.cont [2/16] 0.0, 128
        %5155 = vxpose.xlu0.b32.cont [3/16] 0.0, 128
        %5156 = vxpose.xlu0.b32.cont [4/16] 0.0, 128
        %5157 = vxpose.xlu0.b32.cont [5/16] 0.0, 128
        %5158 = vxpose.xlu0.b32.cont [6/16] 0.0, 128
        %5159 = vxpose.xlu0.b32.cont [7/16] 0.0, 128
        %5160 = vxpose.xlu0.b32.cont [8/16] 0.0, 128
        %5161 = vxpose.xlu0.b32.cont [9/16] 0.0, 128
        %5162 = vxpose.xlu0.b32.cont [10/16] 0.0, 128
        %5163 = vxpose.xlu0.b32.cont [11/16] 0.0, 128
        %5164 = vxpose.xlu0.b32.cont [12/16] 0.0, 128
        %5165 = vxpose.xlu0.b32.cont [13/16] 0.0, 128
        %5166 = vxpose.xlu0.b32.cont [14/16] 0.0, 128
        %5167 = vxpose.xlu0.b32.cont [15/16] 0.0, 128
        %5168 = vxpose.xlu0.b32.end [16/16] 0.0, 128
        %v5169 = vpop.trf.xlu0
        %v5170 = vpop.trf.xlu0
        %v5171 = vpop.trf.xlu0
        %v5172 = vpop.trf.xlu0
        %v5173 = vpop.trf.xlu0
        %v5174 = vpop.trf.xlu0
        %v5175 = vpop.trf.xlu0
        %v5176 = vpop.trf.xlu0
        %v5177 = vpop.trf.xlu0
        %v5178 = vpop.trf.xlu0
        %v5179 = vpop.trf.xlu0
        %v5180 = vpop.trf.xlu0
        %v5181 = vpop.trf.xlu0
        %v5182 = vpop.trf.xlu0
        %v5183 = vpop.trf.xlu0
        %v5184 = vpop.trf.xlu0
        %5185 = vxpose.xlu0.b32.start [1/16] %v4060, 128
        %5186 = vxpose.xlu0.b32.cont [2/16] 0.0, 128
        %5187 = vxpose.xlu0.b32.cont [3/16] 0.0, 128
        %5188 = vxpose.xlu0.b32.cont [4/16] 0.0, 128
        %5189 = vxpose.xlu0.b32.cont [5/16] 0.0, 128
        %5190 = vxpose.xlu0.b32.cont [6/16] 0.0, 128
        %5191 = vxpose.xlu0.b32.cont [7/16] 0.0, 128
        %5192 = vxpose.xlu0.b32.cont [8/16] 0.0, 128
        %5193 = vxpose.xlu0.b32.cont [9/16] 0.0, 128
        %5194 = vxpose.xlu0.b32.cont [10/16] 0.0, 128
        %5195 = vxpose.xlu0.b32.cont [11/16] 0.0, 128
        %5196 = vxpose.xlu0.b32.cont [12/16] 0.0, 128
        %5197 = vxpose.xlu0.b32.cont [13/16] 0.0, 128
        %5198 = vxpose.xlu0.b32.cont [14/16] 0.0, 128
        %5199 = vxpose.xlu0.b32.cont [15/16] 0.0, 128
        %5200 = vxpose.xlu0.b32.end [16/16] 0.0, 128
        %v5201 = vpop.trf.xlu0
        %v5202 = vpop.trf.xlu0
        %v5203 = vpop.trf.xlu0
        %v5204 = vpop.trf.xlu0
        %v5205 = vpop.trf.xlu0
        %v5206 = vpop.trf.xlu0
        %v5207 = vpop.trf.xlu0
        %v5208 = vpop.trf.xlu0
        %v5209 = vpop.trf.xlu0
        %v5210 = vpop.trf.xlu0
        %v5211 = vpop.trf.xlu0
        %v5212 = vpop.trf.xlu0
        %v5213 = vpop.trf.xlu0
        %v5214 = vpop.trf.xlu0
        %v5215 = vpop.trf.xlu0
        %v5216 = vpop.trf.xlu0
        %5217 = vxpose.xlu0.b32.start [1/16] %v4063, 128
        %5218 = vxpose.xlu0.b32.cont [2/16] 0.0, 128
        %5219 = vxpose.xlu0.b32.cont [3/16] 0.0, 128
        %5220 = vxpose.xlu0.b32.cont [4/16] 0.0, 128
        %5221 = vxpose.xlu0.b32.cont [5/16] 0.0, 128
        %5222 = vxpose.xlu0.b32.cont [6/16] 0.0, 128
        %5223 = vxpose.xlu0.b32.cont [7/16] 0.0, 128
        %5224 = vxpose.xlu0.b32.cont [8/16] 0.0, 128
        %5225 = vxpose.xlu0.b32.cont [9/16] 0.0, 128
        %5226 = vxpose.xlu0.b32.cont [10/16] 0.0, 128
        %5227 = vxpose.xlu0.b32.cont [11/16] 0.0, 128
        %5228 = vxpose.xlu0.b32.cont [12/16] 0.0, 128
        %5229 = vxpose.xlu0.b32.cont [13/16] 0.0, 128
        %5230 = vxpose.xlu0.b32.cont [14/16] 0.0, 128
        %5231 = vxpose.xlu0.b32.cont [15/16] 0.0, 128
        %5232 = vxpose.xlu0.b32.end [16/16] 0.0, 128
        %v5233 = vpop.trf.xlu0
        %v5234 = vpop.trf.xlu0
        %v5235 = vpop.trf.xlu0
        %v5236 = vpop.trf.xlu0
        %v5237 = vpop.trf.xlu0
        %v5238 = vpop.trf.xlu0
        %v5239 = vpop.trf.xlu0
        %v5240 = vpop.trf.xlu0
        %v5241 = vpop.trf.xlu0
        %v5242 = vpop.trf.xlu0
        %v5243 = vpop.trf.xlu0
        %v5244 = vpop.trf.xlu0
        %v5245 = vpop.trf.xlu0
        %v5246 = vpop.trf.xlu0
        %v5247 = vpop.trf.xlu0
        %v5248 = vpop.trf.xlu0
        %v5250 = vsel %vm1836, %v5009, 0
        %v5253 = vsel %vm1836, %v5010, 0
        %v5256 = vsel %vm1836, %v4978, 0
        %5258 = vmatprep.subr.mxu0 0.0
        %5259 = vmatpush1.xpose.msra.mxu0 %v5256
        %5260 = vmatprep.subr.mxu0 0.0
        %5261 = vmatpush1.xpose.msra.mxu0 0.0
        %5262 = vmatprep.subr.mxu0 0.0
        %5263 = vmatpush1.xpose.msra.mxu0 0.0
        %5264 = vmatprep.subr.mxu0 0.0
        %5265 = vmatpush1.xpose.msra.mxu0 0.0
        %5266 = vmatprep.subr.mxu0 0.0
        %5267 = vmatpush1.xpose.msra.mxu0 0.0
        %5268 = vmatprep.subr.mxu0 0.0
        %5269 = vmatpush1.xpose.msra.mxu0 0.0
        %5270 = vmatprep.subr.mxu0 0.0
        %5271 = vmatpush1.xpose.msra.mxu0 0.0
        %5272 = vmatprep.subr.mxu0 0.0
        %5273 = vmatpush1.xpose.msra.mxu0 0.0
        %5274 = vmatprep.subr.mxu0 0.0
        %5275 = vmatpush1.xpose.msra.mxu0 0.0
        %5276 = vmatprep.subr.mxu0 0.0
        %5277 = vmatpush1.xpose.msra.mxu0 0.0
        %5278 = vmatprep.subr.mxu0 0.0
        %5279 = vmatpush1.xpose.msra.mxu0 0.0
        %5280 = vmatprep.subr.mxu0 0.0
        %5281 = vmatpush1.xpose.msra.mxu0 0.0
        %5282 = vmatprep.subr.mxu0 0.0
        %5283 = vmatpush1.xpose.msra.mxu0 0.0
        %5284 = vmatprep.subr.mxu0 0.0
        %5285 = vmatpush1.xpose.msra.mxu0 0.0
        %5286 = vmatprep.subr.mxu0 0.0
        %5287 = vmatpush1.xpose.msra.mxu0 0.0
        %5288 = vmatprep.subr.mxu0 0.0
        %5289 = vmatpush1.xpose.msra.mxu0 0.0
        %5290 = vmatprep.subr.mxu0 0.0
        %5291 = vmatpush1.xpose.msra.mxu0 0.0
        %5292 = vmatprep.subr.mxu0 0.0
        %5293 = vmatpush1.xpose.msra.mxu0 0.0
        %5294 = vmatprep.subr.mxu0 0.0
        %5295 = vmatpush1.xpose.msra.mxu0 0.0
        %5296 = vmatprep.subr.mxu0 0.0
        %5297 = vmatpush1.xpose.msra.mxu0 0.0
        %5298 = vmatprep.subr.mxu0 0.0
        %5299 = vmatpush1.xpose.msra.mxu0 0.0
        %5300 = vmatprep.subr.mxu0 0.0
        %5301 = vmatpush1.xpose.msra.mxu0 0.0
        %5302 = vmatprep.subr.mxu0 0.0
        %5303 = vmatpush1.xpose.msra.mxu0 0.0
        %5304 = vmatprep.subr.mxu0 0.0
        %5305 = vmatpush1.xpose.msra.mxu0 0.0
        %5306 = vmatprep.subr.mxu0 0.0
        %5307 = vmatpush1.xpose.msra.mxu0 0.0
        %5308 = vmatprep.subr.mxu0 0.0
        %5309 = vmatpush1.xpose.msra.mxu0 0.0
        %5310 = vmatprep.subr.mxu0 0.0
        %5311 = vmatpush1.xpose.msra.mxu0 0.0
        %5312 = vmatprep.subr.mxu0 0.0
        %5313 = vmatpush1.xpose.msra.mxu0 0.0
        %5314 = vmatprep.subr.mxu0 0.0
        %5315 = vmatpush1.xpose.msra.mxu0 0.0
        %5316 = vmatprep.subr.mxu0 0.0
        %5317 = vmatpush1.xpose.msra.mxu0 0.0
        %5318 = vmatprep.subr.mxu0 0.0
        %5319 = vmatpush1.xpose.msra.mxu0 0.0
        %5320 = vmatprep.subr.mxu0 0.0
        %5321 = vmatpush1.xpose.msra.mxu0 0.0
        %5322 = vmatprep.mubr.f32.mxu0 0.0
        %5323 = vmatmul.mubr.f32.gmra.mrb[0].mxu0 %v5250
        %v5324 = vpop.f32.mrb[0].mxu0
        %v5325 = vadd.f32 0.0, %v5324
        %v5326 = vpop.f32.mrb[0].mxu0
        %5327 = vmatprep.mubr.f32.mxu0 0.0
        %5328 = vmatmul.mubr.f32.gmra.mrb[0].mxu0 %v5253
        %v5329 = vpop.f32.mrb[0].mxu0
        %v5330 = vadd.f32 0.0, %v5329
        %v5331 = vpop.f32.mrb[0].mxu0
        %5332 = vdwg.mxu0
        %v5334 = vsel %vm1836, %v5041, 0
        %v5337 = vsel %vm1836, %v5042, 0
        %v5340 = vsel %vm1836, %v4980, 0
        %5342 = vmatprep.subr.mxu0 0.0
        %5343 = vmatpush1.xpose.msra.mxu0 %v5340
        %5344 = vmatprep.subr.mxu0 0.0
        %5345 = vmatpush1.xpose.msra.mxu0 0.0
        %5346 = vmatprep.subr.mxu0 0.0
        %5347 = vmatpush1.xpose.msra.mxu0 0.0
        %5348 = vmatprep.subr.mxu0 0.0
        %5349 = vmatpush1.xpose.msra.mxu0 0.0
        %5350 = vmatprep.subr.mxu0 0.0
        %5351 = vmatpush1.xpose.msra.mxu0 0.0
        %5352 = vmatprep.subr.mxu0 0.0
        %5353 = vmatpush1.xpose.msra.mxu0 0.0
        %5354 = vmatprep.subr.mxu0 0.0
        %5355 = vmatpush1.xpose.msra.mxu0 0.0
        %5356 = vmatprep.subr.mxu0 0.0
        %5357 = vmatpush1.xpose.msra.mxu0 0.0
        %5358 = vmatprep.subr.mxu0 0.0
        %5359 = vmatpush1.xpose.msra.mxu0 0.0
        %5360 = vmatprep.subr.mxu0 0.0
        %5361 = vmatpush1.xpose.msra.mxu0 0.0
        %5362 = vmatprep.subr.mxu0 0.0
        %5363 = vmatpush1.xpose.msra.mxu0 0.0
        %5364 = vmatprep.subr.mxu0 0.0
        %5365 = vmatpush1.xpose.msra.mxu0 0.0
        %5366 = vmatprep.subr.mxu0 0.0
        %5367 = vmatpush1.xpose.msra.mxu0 0.0
        %5368 = vmatprep.subr.mxu0 0.0
        %5369 = vmatpush1.xpose.msra.mxu0 0.0
        %5370 = vmatprep.subr.mxu0 0.0
        %5371 = vmatpush1.xpose.msra.mxu0 0.0
        %5372 = vmatprep.subr.mxu0 0.0
        %5373 = vmatpush1.xpose.msra.mxu0 0.0
        %5374 = vmatprep.subr.mxu0 0.0
        %5375 = vmatpush1.xpose.msra.mxu0 0.0
        %5376 = vmatprep.subr.mxu0 0.0
        %5377 = vmatpush1.xpose.msra.mxu0 0.0
        %5378 = vmatprep.subr.mxu0 0.0
        %5379 = vmatpush1.xpose.msra.mxu0 0.0
        %5380 = vmatprep.subr.mxu0 0.0
        %5381 = vmatpush1.xpose.msra.mxu0 0.0
        %5382 = vmatprep.subr.mxu0 0.0
        %5383 = vmatpush1.xpose.msra.mxu0 0.0
        %5384 = vmatprep.subr.mxu0 0.0
        %5385 = vmatpush1.xpose.msra.mxu0 0.0
        %5386 = vmatprep.subr.mxu0 0.0
        %5387 = vmatpush1.xpose.msra.mxu0 0.0
        %5388 = vmatprep.subr.mxu0 0.0
        %5389 = vmatpush1.xpose.msra.mxu0 0.0
        %5390 = vmatprep.subr.mxu0 0.0
        %5391 = vmatpush1.xpose.msra.mxu0 0.0
        %5392 = vmatprep.subr.mxu0 0.0
        %5393 = vmatpush1.xpose.msra.mxu0 0.0
        %5394 = vmatprep.subr.mxu0 0.0
        %5395 = vmatpush1.xpose.msra.mxu0 0.0
        %5396 = vmatprep.subr.mxu0 0.0
        %5397 = vmatpush1.xpose.msra.mxu0 0.0
        %5398 = vmatprep.subr.mxu0 0.0
        %5399 = vmatpush1.xpose.msra.mxu0 0.0
        %5400 = vmatprep.subr.mxu0 0.0
        %5401 = vmatpush1.xpose.msra.mxu0 0.0
        %5402 = vmatprep.subr.mxu0 0.0
        %5403 = vmatpush1.xpose.msra.mxu0 0.0
        %5404 = vmatprep.subr.mxu0 0.0
        %5405 = vmatpush1.xpose.msra.mxu0 0.0
        %5406 = vmatprep.mubr.f32.mxu0 0.0
        %5407 = vmatmul.mubr.f32.gmra.mrb[0].mxu0 %v5334
        %v5408 = vpop.f32.mrb[0].mxu0
        %v5409 = vadd.f32 0.0, %v5408
        %v5410 = vpop.f32.mrb[0].mxu0
        %5411 = vmatprep.mubr.f32.mxu0 0.0
        %5412 = vmatmul.mubr.f32.gmra.mrb[0].mxu0 %v5337
        %v5413 = vpop.f32.mrb[0].mxu0
        %v5414 = vadd.f32 0.0, %v5413
        %v5415 = vpop.f32.mrb[0].mxu0
        %5416 = vdwg.mxu0
        %v5418 = vsel %vm1836, %v5073, 0
        %v5421 = vsel %vm1836, %v5074, 0
        %v5424 = vsel %vm1836, %v4982, 0
        %5426 = vmatprep.subr.mxu0 0.0
        %5427 = vmatpush1.xpose.msra.mxu0 %v5424
        %5428 = vmatprep.subr.mxu0 0.0
        %5429 = vmatpush1.xpose.msra.mxu0 0.0
        %5430 = vmatprep.subr.mxu0 0.0
        %5431 = vmatpush1.xpose.msra.mxu0 0.0
        %5432 = vmatprep.subr.mxu0 0.0
        %5433 = vmatpush1.xpose.msra.mxu0 0.0
        %5434 = vmatprep.subr.mxu0 0.0
        %5435 = vmatpush1.xpose.msra.mxu0 0.0
        %5436 = vmatprep.subr.mxu0 0.0
        %5437 = vmatpush1.xpose.msra.mxu0 0.0
        %5438 = vmatprep.subr.mxu0 0.0
        %5439 = vmatpush1.xpose.msra.mxu0 0.0
        %5440 = vmatprep.subr.mxu0 0.0
        %5441 = vmatpush1.xpose.msra.mxu0 0.0
        %5442 = vmatprep.subr.mxu0 0.0
        %5443 = vmatpush1.xpose.msra.mxu0 0.0
        %5444 = vmatprep.subr.mxu0 0.0
        %5445 = vmatpush1.xpose.msra.mxu0 0.0
        %5446 = vmatprep.subr.mxu0 0.0
        %5447 = vmatpush1.xpose.msra.mxu0 0.0
        %5448 = vmatprep.subr.mxu0 0.0
        %5449 = vmatpush1.xpose.msra.mxu0 0.0
        %5450 = vmatprep.subr.mxu0 0.0
        %5451 = vmatpush1.xpose.msra.mxu0 0.0
        %5452 = vmatprep.subr.mxu0 0.0
        %5453 = vmatpush1.xpose.msra.mxu0 0.0
        %5454 = vmatprep.subr.mxu0 0.0
        %5455 = vmatpush1.xpose.msra.mxu0 0.0
        %5456 = vmatprep.subr.mxu0 0.0
        %5457 = vmatpush1.xpose.msra.mxu0 0.0
        %5458 = vmatprep.subr.mxu0 0.0
        %5459 = vmatpush1.xpose.msra.mxu0 0.0
        %5460 = vmatprep.subr.mxu0 0.0
        %5461 = vmatpush1.xpose.msra.mxu0 0.0
        %5462 = vmatprep.subr.mxu0 0.0
        %5463 = vmatpush1.xpose.msra.mxu0 0.0
        %5464 = vmatprep.subr.mxu0 0.0
        %5465 = vmatpush1.xpose.msra.mxu0 0.0
        %5466 = vmatprep.subr.mxu0 0.0
        %5467 = vmatpush1.xpose.msra.mxu0 0.0
        %5468 = vmatprep.subr.mxu0 0.0
        %5469 = vmatpush1.xpose.msra.mxu0 0.0
        %5470 = vmatprep.subr.mxu0 0.0
        %5471 = vmatpush1.xpose.msra.mxu0 0.0
        %5472 = vmatprep.subr.mxu0 0.0
        %5473 = vmatpush1.xpose.msra.mxu0 0.0
        %5474 = vmatprep.subr.mxu0 0.0
        %5475 = vmatpush1.xpose.msra.mxu0 0.0
        %5476 = vmatprep.subr.mxu0 0.0
        %5477 = vmatpush1.xpose.msra.mxu0 0.0
        %5478 = vmatprep.subr.mxu0 0.0
        %5479 = vmatpush1.xpose.msra.mxu0 0.0
        %5480 = vmatprep.subr.mxu0 0.0
        %5481 = vmatpush1.xpose.msra.mxu0 0.0
        %5482 = vmatprep.subr.mxu0 0.0
        %5483 = vmatpush1.xpose.msra.mxu0 0.0
        %5484 = vmatprep.subr.mxu0 0.0
        %5485 = vmatpush1.xpose.msra.mxu0 0.0
        %5486 = vmatprep.subr.mxu0 0.0
        %5487 = vmatpush1.xpose.msra.mxu0 0.0
        %5488 = vmatprep.subr.mxu0 0.0
        %5489 = vmatpush1.xpose.msra.mxu0 0.0
        %5490 = vmatprep.mubr.f32.mxu0 0.0
        %5491 = vmatmul.mubr.f32.gmra.mrb[0].mxu0 %v5418
        %v5492 = vpop.f32.mrb[0].mxu0
        %v5493 = vadd.f32 0.0, %v5492
        %v5494 = vpop.f32.mrb[0].mxu0
        %5495 = vmatprep.mubr.f32.mxu0 0.0
        %5496 = vmatmul.mubr.f32.gmra.mrb[0].mxu0 %v5421
        %v5497 = vpop.f32.mrb[0].mxu0
        %v5498 = vadd.f32 0.0, %v5497
        %v5499 = vpop.f32.mrb[0].mxu0
        %5500 = vdwg.mxu0
        %v5502 = vsel %vm1836, %v5105, 0
        %v5505 = vsel %vm1836, %v5106, 0
        %v5508 = vsel %vm1836, %v4984, 0
        %5510 = vmatprep.subr.mxu0 0.0
        %5511 = vmatpush1.xpose.msra.mxu0 %v5508
        %5512 = vmatprep.subr.mxu0 0.0
        %5513 = vmatpush1.xpose.msra.mxu0 0.0
        %5514 = vmatprep.subr.mxu0 0.0
        %5515 = vmatpush1.xpose.msra.mxu0 0.0
        %5516 = vmatprep.subr.mxu0 0.0
        %5517 = vmatpush1.xpose.msra.mxu0 0.0
        %5518 = vmatprep.subr.mxu0 0.0
        %5519 = vmatpush1.xpose.msra.mxu0 0.0
        %5520 = vmatprep.subr.mxu0 0.0
        %5521 = vmatpush1.xpose.msra.mxu0 0.0
        %5522 = vmatprep.subr.mxu0 0.0
        %5523 = vmatpush1.xpose.msra.mxu0 0.0
        %5524 = vmatprep.subr.mxu0 0.0
        %5525 = vmatpush1.xpose.msra.mxu0 0.0
        %5526 = vmatprep.subr.mxu0 0.0
        %5527 = vmatpush1.xpose.msra.mxu0 0.0
        %5528 = vmatprep.subr.mxu0 0.0
        %5529 = vmatpush1.xpose.msra.mxu0 0.0
        %5530 = vmatprep.subr.mxu0 0.0
        %5531 = vmatpush1.xpose.msra.mxu0 0.0
        %5532 = vmatprep.subr.mxu0 0.0
        %5533 = vmatpush1.xpose.msra.mxu0 0.0
        %5534 = vmatprep.subr.mxu0 0.0
        %5535 = vmatpush1.xpose.msra.mxu0 0.0
        %5536 = vmatprep.subr.mxu0 0.0
        %5537 = vmatpush1.xpose.msra.mxu0 0.0
        %5538 = vmatprep.subr.mxu0 0.0
        %5539 = vmatpush1.xpose.msra.mxu0 0.0
        %5540 = vmatprep.subr.mxu0 0.0
        %5541 = vmatpush1.xpose.msra.mxu0 0.0
        %5542 = vmatprep.subr.mxu0 0.0
        %5543 = vmatpush1.xpose.msra.mxu0 0.0
        %5544 = vmatprep.subr.mxu0 0.0
        %5545 = vmatpush1.xpose.msra.mxu0 0.0
        %5546 = vmatprep.subr.mxu0 0.0
        %5547 = vmatpush1.xpose.msra.mxu0 0.0
        %5548 = vmatprep.subr.mxu0 0.0
        %5549 = vmatpush1.xpose.msra.mxu0 0.0
        %5550 = vmatprep.subr.mxu0 0.0
        %5551 = vmatpush1.xpose.msra.mxu0 0.0
        %5552 = vmatprep.subr.mxu0 0.0
        %5553 = vmatpush1.xpose.msra.mxu0 0.0
        %5554 = vmatprep.subr.mxu0 0.0
        %5555 = vmatpush1.xpose.msra.mxu0 0.0
        %5556 = vmatprep.subr.mxu0 0.0
        %5557 = vmatpush1.xpose.msra.mxu0 0.0
        %5558 = vmatprep.subr.mxu0 0.0
        %5559 = vmatpush1.xpose.msra.mxu0 0.0
        %5560 = vmatprep.subr.mxu0 0.0
        %5561 = vmatpush1.xpose.msra.mxu0 0.0
        %5562 = vmatprep.subr.mxu0 0.0
        %5563 = vmatpush1.xpose.msra.mxu0 0.0
        %5564 = vmatprep.subr.mxu0 0.0
        %5565 = vmatpush1.xpose.msra.mxu0 0.0
        %5566 = vmatprep.subr.mxu0 0.0
        %5567 = vmatpush1.xpose.msra.mxu0 0.0
        %5568 = vmatprep.subr.mxu0 0.0
        %5569 = vmatpush1.xpose.msra.mxu0 0.0
        %5570 = vmatprep.subr.mxu0 0.0
        %5571 = vmatpush1.xpose.msra.mxu0 0.0
        %5572 = vmatprep.subr.mxu0 0.0
        %5573 = vmatpush1.xpose.msra.mxu0 0.0
        %5574 = vmatprep.mubr.f32.mxu0 0.0
        %5575 = vmatmul.mubr.f32.gmra.mrb[0].mxu0 %v5502
        %v5576 = vpop.f32.mrb[0].mxu0
        %v5577 = vadd.f32 0.0, %v5576
        %v5578 = vpop.f32.mrb[0].mxu0
        %5579 = vmatprep.mubr.f32.mxu0 0.0
        %5580 = vmatmul.mubr.f32.gmra.mrb[0].mxu0 %v5505
        %v5581 = vpop.f32.mrb[0].mxu0
        %v5582 = vadd.f32 0.0, %v5581
        %v5583 = vpop.f32.mrb[0].mxu0
        %5584 = vdwg.mxu0
        %v5586 = vsel %vm1836, %v5137, 0
        %v5589 = vsel %vm1836, %v5138, 0
        %v5592 = vsel %vm1836, %v4986, 0
        %5594 = vmatprep.subr.mxu0 0.0
        %5595 = vmatpush1.xpose.msra.mxu0 %v5592
        %5596 = vmatprep.subr.mxu0 0.0
        %5597 = vmatpush1.xpose.msra.mxu0 0.0
        %5598 = vmatprep.subr.mxu0 0.0
        %5599 = vmatpush1.xpose.msra.mxu0 0.0
        %5600 = vmatprep.subr.mxu0 0.0
        %5601 = vmatpush1.xpose.msra.mxu0 0.0
        %5602 = vmatprep.subr.mxu0 0.0
        %5603 = vmatpush1.xpose.msra.mxu0 0.0
        %5604 = vmatprep.subr.mxu0 0.0
        %5605 = vmatpush1.xpose.msra.mxu0 0.0
        %5606 = vmatprep.subr.mxu0 0.0
        %5607 = vmatpush1.xpose.msra.mxu0 0.0
        %5608 = vmatprep.subr.mxu0 0.0
        %5609 = vmatpush1.xpose.msra.mxu0 0.0
        %5610 = vmatprep.subr.mxu0 0.0
        %5611 = vmatpush1.xpose.msra.mxu0 0.0
        %5612 = vmatprep.subr.mxu0 0.0
        %5613 = vmatpush1.xpose.msra.mxu0 0.0
        %5614 = vmatprep.subr.mxu0 0.0
        %5615 = vmatpush1.xpose.msra.mxu0 0.0
        %5616 = vmatprep.subr.mxu0 0.0
        %5617 = vmatpush1.xpose.msra.mxu0 0.0
        %5618 = vmatprep.subr.mxu0 0.0
        %5619 = vmatpush1.xpose.msra.mxu0 0.0
        %5620 = vmatprep.subr.mxu0 0.0
        %5621 = vmatpush1.xpose.msra.mxu0 0.0
        %5622 = vmatprep.subr.mxu0 0.0
        %5623 = vmatpush1.xpose.msra.mxu0 0.0
        %5624 = vmatprep.subr.mxu0 0.0
        %5625 = vmatpush1.xpose.msra.mxu0 0.0
        %5626 = vmatprep.subr.mxu0 0.0
        %5627 = vmatpush1.xpose.msra.mxu0 0.0
        %5628 = vmatprep.subr.mxu0 0.0
        %5629 = vmatpush1.xpose.msra.mxu0 0.0
        %5630 = vmatprep.subr.mxu0 0.0
        %5631 = vmatpush1.xpose.msra.mxu0 0.0
        %5632 = vmatprep.subr.mxu0 0.0
        %5633 = vmatpush1.xpose.msra.mxu0 0.0
        %5634 = vmatprep.subr.mxu0 0.0
        %5635 = vmatpush1.xpose.msra.mxu0 0.0
        %5636 = vmatprep.subr.mxu0 0.0
        %5637 = vmatpush1.xpose.msra.mxu0 0.0
        %5638 = vmatprep.subr.mxu0 0.0
        %5639 = vmatpush1.xpose.msra.mxu0 0.0
        %5640 = vmatprep.subr.mxu0 0.0
        %5641 = vmatpush1.xpose.msra.mxu0 0.0
        %5642 = vmatprep.subr.mxu0 0.0
        %5643 = vmatpush1.xpose.msra.mxu0 0.0
        %5644 = vmatprep.subr.mxu0 0.0
        %5645 = vmatpush1.xpose.msra.mxu0 0.0
        %5646 = vmatprep.subr.mxu0 0.0
        %5647 = vmatpush1.xpose.msra.mxu0 0.0
        %5648 = vmatprep.subr.mxu0 0.0
        %5649 = vmatpush1.xpose.msra.mxu0 0.0
        %5650 = vmatprep.subr.mxu0 0.0
        %5651 = vmatpush1.xpose.msra.mxu0 0.0
        %5652 = vmatprep.subr.mxu0 0.0
        %5653 = vmatpush1.xpose.msra.mxu0 0.0
        %5654 = vmatprep.subr.mxu0 0.0
        %5655 = vmatpush1.xpose.msra.mxu0 0.0
        %5656 = vmatprep.subr.mxu0 0.0
        %5657 = vmatpush1.xpose.msra.mxu0 0.0
        %5658 = vmatprep.mubr.f32.mxu0 0.0
        %5659 = vmatmul.mubr.f32.gmra.mrb[0].mxu0 %v5586
        %v5660 = vpop.f32.mrb[0].mxu0
        %v5661 = vadd.f32 0.0, %v5660
        %v5662 = vpop.f32.mrb[0].mxu0
        %5663 = vmatprep.mubr.f32.mxu0 0.0
        %5664 = vmatmul.mubr.f32.gmra.mrb[0].mxu0 %v5589
        %v5665 = vpop.f32.mrb[0].mxu0
        %v5666 = vadd.f32 0.0, %v5665
        %v5667 = vpop.f32.mrb[0].mxu0
        %5668 = vdwg.mxu0
        %v5670 = vsel %vm1836, %v5169, 0
        %v5673 = vsel %vm1836, %v5170, 0
        %v5676 = vsel %vm1836, %v4988, 0
        %5678 = vmatprep.subr.mxu0 0.0
        %5679 = vmatpush1.xpose.msra.mxu0 %v5676
        %5680 = vmatprep.subr.mxu0 0.0
        %5681 = vmatpush1.xpose.msra.mxu0 0.0
        %5682 = vmatprep.subr.mxu0 0.0
        %5683 = vmatpush1.xpose.msra.mxu0 0.0
        %5684 = vmatprep.subr.mxu0 0.0
        %5685 = vmatpush1.xpose.msra.mxu0 0.0
        %5686 = vmatprep.subr.mxu0 0.0
        %5687 = vmatpush1.xpose.msra.mxu0 0.0
        %5688 = vmatprep.subr.mxu0 0.0
        %5689 = vmatpush1.xpose.msra.mxu0 0.0
        %5690 = vmatprep.subr.mxu0 0.0
        %5691 = vmatpush1.xpose.msra.mxu0 0.0
        %5692 = vmatprep.subr.mxu0 0.0
        %5693 = vmatpush1.xpose.msra.mxu0 0.0
        %5694 = vmatprep.subr.mxu0 0.0
        %5695 = vmatpush1.xpose.msra.mxu0 0.0
        %5696 = vmatprep.subr.mxu0 0.0
        %5697 = vmatpush1.xpose.msra.mxu0 0.0
        %5698 = vmatprep.subr.mxu0 0.0
        %5699 = vmatpush1.xpose.msra.mxu0 0.0
        %5700 = vmatprep.subr.mxu0 0.0
        %5701 = vmatpush1.xpose.msra.mxu0 0.0
        %5702 = vmatprep.subr.mxu0 0.0
        %5703 = vmatpush1.xpose.msra.mxu0 0.0
        %5704 = vmatprep.subr.mxu0 0.0
        %5705 = vmatpush1.xpose.msra.mxu0 0.0
        %5706 = vmatprep.subr.mxu0 0.0
        %5707 = vmatpush1.xpose.msra.mxu0 0.0
        %5708 = vmatprep.subr.mxu0 0.0
        %5709 = vmatpush1.xpose.msra.mxu0 0.0
        %5710 = vmatprep.subr.mxu0 0.0
        %5711 = vmatpush1.xpose.msra.mxu0 0.0
        %5712 = vmatprep.subr.mxu0 0.0
        %5713 = vmatpush1.xpose.msra.mxu0 0.0
        %5714 = vmatprep.subr.mxu0 0.0
        %5715 = vmatpush1.xpose.msra.mxu0 0.0
        %5716 = vmatprep.subr.mxu0 0.0
        %5717 = vmatpush1.xpose.msra.mxu0 0.0
        %5718 = vmatprep.subr.mxu0 0.0
        %5719 = vmatpush1.xpose.msra.mxu0 0.0
        %5720 = vmatprep.subr.mxu0 0.0
        %5721 = vmatpush1.xpose.msra.mxu0 0.0
        %5722 = vmatprep.subr.mxu0 0.0
        %5723 = vmatpush1.xpose.msra.mxu0 0.0
        %5724 = vmatprep.subr.mxu0 0.0
        %5725 = vmatpush1.xpose.msra.mxu0 0.0
        %5726 = vmatprep.subr.mxu0 0.0
        %5727 = vmatpush1.xpose.msra.mxu0 0.0
        %5728 = vmatprep.subr.mxu0 0.0
        %5729 = vmatpush1.xpose.msra.mxu0 0.0
        %5730 = vmatprep.subr.mxu0 0.0
        %5731 = vmatpush1.xpose.msra.mxu0 0.0
        %5732 = vmatprep.subr.mxu0 0.0
        %5733 = vmatpush1.xpose.msra.mxu0 0.0
        %5734 = vmatprep.subr.mxu0 0.0
        %5735 = vmatpush1.xpose.msra.mxu0 0.0
        %5736 = vmatprep.subr.mxu0 0.0
        %5737 = vmatpush1.xpose.msra.mxu0 0.0
        %5738 = vmatprep.subr.mxu0 0.0
        %5739 = vmatpush1.xpose.msra.mxu0 0.0
        %5740 = vmatprep.subr.mxu0 0.0
        %5741 = vmatpush1.xpose.msra.mxu0 0.0
        %5742 = vmatprep.mubr.f32.mxu0 0.0
        %5743 = vmatmul.mubr.f32.gmra.mrb[0].mxu0 %v5670
        %v5744 = vpop.f32.mrb[0].mxu0
        %v5745 = vadd.f32 0.0, %v5744
        %v5746 = vpop.f32.mrb[0].mxu0
        %5747 = vmatprep.mubr.f32.mxu0 0.0
        %5748 = vmatmul.mubr.f32.gmra.mrb[0].mxu0 %v5673
        %v5749 = vpop.f32.mrb[0].mxu0
        %v5750 = vadd.f32 0.0, %v5749
        %v5751 = vpop.f32.mrb[0].mxu0
        %5752 = vdwg.mxu0
        %v5754 = vsel %vm1836, %v5201, 0
        %v5757 = vsel %vm1836, %v5202, 0
        %v5760 = vsel %vm1836, %v4990, 0
        %5762 = vmatprep.subr.mxu0 0.0
        %5763 = vmatpush1.xpose.msra.mxu0 %v5760
        %5764 = vmatprep.subr.mxu0 0.0
        %5765 = vmatpush1.xpose.msra.mxu0 0.0
        %5766 = vmatprep.subr.mxu0 0.0
        %5767 = vmatpush1.xpose.msra.mxu0 0.0
        %5768 = vmatprep.subr.mxu0 0.0
        %5769 = vmatpush1.xpose.msra.mxu0 0.0
        %5770 = vmatprep.subr.mxu0 0.0
        %5771 = vmatpush1.xpose.msra.mxu0 0.0
        %5772 = vmatprep.subr.mxu0 0.0
        %5773 = vmatpush1.xpose.msra.mxu0 0.0
        %5774 = vmatprep.subr.mxu0 0.0
        %5775 = vmatpush1.xpose.msra.mxu0 0.0
        %5776 = vmatprep.subr.mxu0 0.0
        %5777 = vmatpush1.xpose.msra.mxu0 0.0
        %5778 = vmatprep.subr.mxu0 0.0
        %5779 = vmatpush1.xpose.msra.mxu0 0.0
        %5780 = vmatprep.subr.mxu0 0.0
        %5781 = vmatpush1.xpose.msra.mxu0 0.0
        %5782 = vmatprep.subr.mxu0 0.0
        %5783 = vmatpush1.xpose.msra.mxu0 0.0
        %5784 = vmatprep.subr.mxu0 0.0
        %5785 = vmatpush1.xpose.msra.mxu0 0.0
        %5786 = vmatprep.subr.mxu0 0.0
        %5787 = vmatpush1.xpose.msra.mxu0 0.0
        %5788 = vmatprep.subr.mxu0 0.0
        %5789 = vmatpush1.xpose.msra.mxu0 0.0
        %5790 = vmatprep.subr.mxu0 0.0
        %5791 = vmatpush1.xpose.msra.mxu0 0.0
        %5792 = vmatprep.subr.mxu0 0.0
        %5793 = vmatpush1.xpose.msra.mxu0 0.0
        %5794 = vmatprep.subr.mxu0 0.0
        %5795 = vmatpush1.xpose.msra.mxu0 0.0
        %5796 = vmatprep.subr.mxu0 0.0
        %5797 = vmatpush1.xpose.msra.mxu0 0.0
        %5798 = vmatprep.subr.mxu0 0.0
        %5799 = vmatpush1.xpose.msra.mxu0 0.0
        %5800 = vmatprep.subr.mxu0 0.0
        %5801 = vmatpush1.xpose.msra.mxu0 0.0
        %5802 = vmatprep.subr.mxu0 0.0
        %5803 = vmatpush1.xpose.msra.mxu0 0.0
        %5804 = vmatprep.subr.mxu0 0.0
        %5805 = vmatpush1.xpose.msra.mxu0 0.0
        %5806 = vmatprep.subr.mxu0 0.0
        %5807 = vmatpush1.xpose.msra.mxu0 0.0
        %5808 = vmatprep.subr.mxu0 0.0
        %5809 = vmatpush1.xpose.msra.mxu0 0.0
        %5810 = vmatprep.subr.mxu0 0.0
        %5811 = vmatpush1.xpose.msra.mxu0 0.0
        %5812 = vmatprep.subr.mxu0 0.0
        %5813 = vmatpush1.xpose.msra.mxu0 0.0
        %5814 = vmatprep.subr.mxu0 0.0
        %5815 = vmatpush1.xpose.msra.mxu0 0.0
        %5816 = vmatprep.subr.mxu0 0.0
        %5817 = vmatpush1.xpose.msra.mxu0 0.0
        %5818 = vmatprep.subr.mxu0 0.0
        %5819 = vmatpush1.xpose.msra.mxu0 0.0
        %5820 = vmatprep.subr.mxu0 0.0
        %5821 = vmatpush1.xpose.msra.mxu0 0.0
        %5822 = vmatprep.subr.mxu0 0.0
        %5823 = vmatpush1.xpose.msra.mxu0 0.0
        %5824 = vmatprep.subr.mxu0 0.0
        %5825 = vmatpush1.xpose.msra.mxu0 0.0
        %5826 = vmatprep.mubr.f32.mxu0 0.0
        %5827 = vmatmul.mubr.f32.gmra.mrb[0].mxu0 %v5754
        %v5828 = vpop.f32.mrb[0].mxu0
        %v5829 = vadd.f32 0.0, %v5828
        %v5830 = vpop.f32.mrb[0].mxu0
        %5831 = vmatprep.mubr.f32.mxu0 0.0
        %5832 = vmatmul.mubr.f32.gmra.mrb[0].mxu0 %v5757
        %v5833 = vpop.f32.mrb[0].mxu0
        %v5834 = vadd.f32 0.0, %v5833
        %v5835 = vpop.f32.mrb[0].mxu0
        %5836 = vdwg.mxu0
        %v5838 = vsel %vm1836, %v5233, 0
        %v5841 = vsel %vm1836, %v5234, 0
        %v5844 = vsel %vm1836, %v4992, 0
        %5846 = vmatprep.subr.mxu0 0.0
        %5847 = vmatpush1.xpose.msra.mxu0 %v5844
        %5848 = vmatprep.subr.mxu0 0.0
        %5849 = vmatpush1.xpose.msra.mxu0 0.0
        %5850 = vmatprep.subr.mxu0 0.0
        %5851 = vmatpush1.xpose.msra.mxu0 0.0
        %5852 = vmatprep.subr.mxu0 0.0
        %5853 = vmatpush1.xpose.msra.mxu0 0.0
        %5854 = vmatprep.subr.mxu0 0.0
        %5855 = vmatpush1.xpose.msra.mxu0 0.0
        %5856 = vmatprep.subr.mxu0 0.0
        %5857 = vmatpush1.xpose.msra.mxu0 0.0
        %5858 = vmatprep.subr.mxu0 0.0
        %5859 = vmatpush1.xpose.msra.mxu0 0.0
        %5860 = vmatprep.subr.mxu0 0.0
        %5861 = vmatpush1.xpose.msra.mxu0 0.0
        %5862 = vmatprep.subr.mxu0 0.0
        %5863 = vmatpush1.xpose.msra.mxu0 0.0
        %5864 = vmatprep.subr.mxu0 0.0
        %5865 = vmatpush1.xpose.msra.mxu0 0.0
        %5866 = vmatprep.subr.mxu0 0.0
        %5867 = vmatpush1.xpose.msra.mxu0 0.0
        %5868 = vmatprep.subr.mxu0 0.0
        %5869 = vmatpush1.xpose.msra.mxu0 0.0
        %5870 = vmatprep.subr.mxu0 0.0
        %5871 = vmatpush1.xpose.msra.mxu0 0.0
        %5872 = vmatprep.subr.mxu0 0.0
        %5873 = vmatpush1.xpose.msra.mxu0 0.0
        %5874 = vmatprep.subr.mxu0 0.0
        %5875 = vmatpush1.xpose.msra.mxu0 0.0
        %5876 = vmatprep.subr.mxu0 0.0
        %5877 = vmatpush1.xpose.msra.mxu0 0.0
        %5878 = vmatprep.subr.mxu0 0.0
        %5879 = vmatpush1.xpose.msra.mxu0 0.0
        %5880 = vmatprep.subr.mxu0 0.0
        %5881 = vmatpush1.xpose.msra.mxu0 0.0
        %5882 = vmatprep.subr.mxu0 0.0
        %5883 = vmatpush1.xpose.msra.mxu0 0.0
        %5884 = vmatprep.subr.mxu0 0.0
        %5885 = vmatpush1.xpose.msra.mxu0 0.0
        %5886 = vmatprep.subr.mxu0 0.0
        %5887 = vmatpush1.xpose.msra.mxu0 0.0
        %5888 = vmatprep.subr.mxu0 0.0
        %5889 = vmatpush1.xpose.msra.mxu0 0.0
        %5890 = vmatprep.subr.mxu0 0.0
        %5891 = vmatpush1.xpose.msra.mxu0 0.0
        %5892 = vmatprep.subr.mxu0 0.0
        %5893 = vmatpush1.xpose.msra.mxu0 0.0
        %5894 = vmatprep.subr.mxu0 0.0
        %5895 = vmatpush1.xpose.msra.mxu0 0.0
        %5896 = vmatprep.subr.mxu0 0.0
        %5897 = vmatpush1.xpose.msra.mxu0 0.0
        %5898 = vmatprep.subr.mxu0 0.0
        %5899 = vmatpush1.xpose.msra.mxu0 0.0
        %5900 = vmatprep.subr.mxu0 0.0
        %5901 = vmatpush1.xpose.msra.mxu0 0.0
        %5902 = vmatprep.subr.mxu0 0.0
        %5903 = vmatpush1.xpose.msra.mxu0 0.0
        %5904 = vmatprep.subr.mxu0 0.0
        %5905 = vmatpush1.xpose.msra.mxu0 0.0
        %5906 = vmatprep.subr.mxu0 0.0
        %5907 = vmatpush1.xpose.msra.mxu0 0.0
        %5908 = vmatprep.subr.mxu0 0.0
        %5909 = vmatpush1.xpose.msra.mxu0 0.0
        %5910 = vmatprep.mubr.f32.mxu0 0.0
        %5911 = vmatmul.mubr.f32.gmra.mrb[0].mxu0 %v5838
        %v5912 = vpop.f32.mrb[0].mxu0
        %v5913 = vadd.f32 0.0, %v5912
        %v5914 = vpop.f32.mrb[0].mxu0
        %5915 = vmatprep.mubr.f32.mxu0 0.0
        %5916 = vmatmul.mubr.f32.gmra.mrb[0].mxu0 %v5841
        %v5917 = vpop.f32.mrb[0].mxu0
        %v5918 = vadd.f32 0.0, %v5917
        %v5919 = vpop.f32.mrb[0].mxu0
        %5920 = vdwg.mxu0
        %5921 = vxpose.xlu0.b32.start [1/16] %v5325, 128
        %5922 = vxpose.xlu0.b32.cont [2/16] %v5330, 128
        %5923 = vxpose.xlu0.b32.cont [3/16] 0.0, 128
        %5924 = vxpose.xlu0.b32.cont [4/16] 0.0, 128
        %5925 = vxpose.xlu0.b32.cont [5/16] 0.0, 128
        %5926 = vxpose.xlu0.b32.cont [6/16] 0.0, 128
        %5927 = vxpose.xlu0.b32.cont [7/16] 0.0, 128
        %5928 = vxpose.xlu0.b32.cont [8/16] 0.0, 128
        %5929 = vxpose.xlu0.b32.cont [9/16] 0.0, 128
        %5930 = vxpose.xlu0.b32.cont [10/16] 0.0, 128
        %5931 = vxpose.xlu0.b32.cont [11/16] 0.0, 128
        %5932 = vxpose.xlu0.b32.cont [12/16] 0.0, 128
        %5933 = vxpose.xlu0.b32.cont [13/16] 0.0, 128
        %5934 = vxpose.xlu0.b32.cont [14/16] 0.0, 128
        %5935 = vxpose.xlu0.b32.cont [15/16] 0.0, 128
        %5936 = vxpose.xlu0.b32.end [16/16] 0.0, 128
        %v5937 = vpop.trf.xlu0
        %v5938 = vpop.trf.xlu0
        %v5939 = vpop.trf.xlu0
        %v5940 = vpop.trf.xlu0
        %v5941 = vpop.trf.xlu0
        %v5942 = vpop.trf.xlu0
        %v5943 = vpop.trf.xlu0
        %v5944 = vpop.trf.xlu0
        %v5945 = vpop.trf.xlu0
        %v5946 = vpop.trf.xlu0
        %v5947 = vpop.trf.xlu0
        %v5948 = vpop.trf.xlu0
        %v5949 = vpop.trf.xlu0
        %v5950 = vpop.trf.xlu0
        %v5951 = vpop.trf.xlu0
        %v5952 = vpop.trf.xlu0
        %5953 = vxpose.xlu0.b32.start [1/16] %v5409, 128
        %5954 = vxpose.xlu0.b32.cont [2/16] %v5414, 128
        %5955 = vxpose.xlu0.b32.cont [3/16] 0.0, 128
        %5956 = vxpose.xlu0.b32.cont [4/16] 0.0, 128
        %5957 = vxpose.xlu0.b32.cont [5/16] 0.0, 128
        %5958 = vxpose.xlu0.b32.cont [6/16] 0.0, 128
        %5959 = vxpose.xlu0.b32.cont [7/16] 0.0, 128
        %5960 = vxpose.xlu0.b32.cont [8/16] 0.0, 128
        %5961 = vxpose.xlu0.b32.cont [9/16] 0.0, 128
        %5962 = vxpose.xlu0.b32.cont [10/16] 0.0, 128
        %5963 = vxpose.xlu0.b32.cont [11/16] 0.0, 128
        %5964 = vxpose.xlu0.b32.cont [12/16] 0.0, 128
        %5965 = vxpose.xlu0.b32.cont [13/16] 0.0, 128
        %5966 = vxpose.xlu0.b32.cont [14/16] 0.0, 128
        %5967 = vxpose.xlu0.b32.cont [15/16] 0.0, 128
        %5968 = vxpose.xlu0.b32.end [16/16] 0.0, 128
        %v5969 = vpop.trf.xlu0
        %v5970 = vpop.trf.xlu0
        %v5971 = vpop.trf.xlu0
        %v5972 = vpop.trf.xlu0
        %v5973 = vpop.trf.xlu0
        %v5974 = vpop.trf.xlu0
        %v5975 = vpop.trf.xlu0
        %v5976 = vpop.trf.xlu0
        %v5977 = vpop.trf.xlu0
        %v5978 = vpop.trf.xlu0
        %v5979 = vpop.trf.xlu0
        %v5980 = vpop.trf.xlu0
        %v5981 = vpop.trf.xlu0
        %v5982 = vpop.trf.xlu0
        %v5983 = vpop.trf.xlu0
        %v5984 = vpop.trf.xlu0
        %5985 = vxpose.xlu0.b32.start [1/16] %v5493, 128
        %5986 = vxpose.xlu0.b32.cont [2/16] %v5498, 128
        %5987 = vxpose.xlu0.b32.cont [3/16] 0.0, 128
        %5988 = vxpose.xlu0.b32.cont [4/16] 0.0, 128
        %5989 = vxpose.xlu0.b32.cont [5/16] 0.0, 128
        %5990 = vxpose.xlu0.b32.cont [6/16] 0.0, 128
        %5991 = vxpose.xlu0.b32.cont [7/16] 0.0, 128
        %5992 = vxpose.xlu0.b32.cont [8/16] 0.0, 128
        %5993 = vxpose.xlu0.b32.cont [9/16] 0.0, 128
        %5994 = vxpose.xlu0.b32.cont [10/16] 0.0, 128
        %5995 = vxpose.xlu0.b32.cont [11/16] 0.0, 128
        %5996 = vxpose.xlu0.b32.cont [12/16] 0.0, 128
        %5997 = vxpose.xlu0.b32.cont [13/16] 0.0, 128
        %5998 = vxpose.xlu0.b32.cont [14/16] 0.0, 128
        %5999 = vxpose.xlu0.b32.cont [15/16] 0.0, 128
        %6000 = vxpose.xlu0.b32.end [16/16] 0.0, 128
        %v6001 = vpop.trf.xlu0
        %v6002 = vpop.trf.xlu0
        %v6003 = vpop.trf.xlu0
        %v6004 = vpop.trf.xlu0
        %v6005 = vpop.trf.xlu0
        %v6006 = vpop.trf.xlu0
        %v6007 = vpop.trf.xlu0
        %v6008 = vpop.trf.xlu0
        %v6009 = vpop.trf.xlu0
        %v6010 = vpop.trf.xlu0
        %v6011 = vpop.trf.xlu0
        %v6012 = vpop.trf.xlu0
        %v6013 = vpop.trf.xlu0
        %v6014 = vpop.trf.xlu0
        %v6015 = vpop.trf.xlu0
        %v6016 = vpop.trf.xlu0
        %6017 = vxpose.xlu0.b32.start [1/16] %v5577, 128
        %6018 = vxpose.xlu0.b32.cont [2/16] %v5582, 128
        %6019 = vxpose.xlu0.b32.cont [3/16] 0.0, 128
        %6020 = vxpose.xlu0.b32.cont [4/16] 0.0, 128
        %6021 = vxpose.xlu0.b32.cont [5/16] 0.0, 128
        %6022 = vxpose.xlu0.b32.cont [6/16] 0.0, 128
        %6023 = vxpose.xlu0.b32.cont [7/16] 0.0, 128
        %6024 = vxpose.xlu0.b32.cont [8/16] 0.0, 128
        %6025 = vxpose.xlu0.b32.cont [9/16] 0.0, 128
        %6026 = vxpose.xlu0.b32.cont [10/16] 0.0, 128
        %6027 = vxpose.xlu0.b32.cont [11/16] 0.0, 128
        %6028 = vxpose.xlu0.b32.cont [12/16] 0.0, 128
        %6029 = vxpose.xlu0.b32.cont [13/16] 0.0, 128
        %6030 = vxpose.xlu0.b32.cont [14/16] 0.0, 128
        %6031 = vxpose.xlu0.b32.cont [15/16] 0.0, 128
        %6032 = vxpose.xlu0.b32.end [16/16] 0.0, 128
        %v6033 = vpop.trf.xlu0
        %v6034 = vpop.trf.xlu0
        %v6035 = vpop.trf.xlu0
        %v6036 = vpop.trf.xlu0
        %v6037 = vpop.trf.xlu0
        %v6038 = vpop.trf.xlu0
        %v6039 = vpop.trf.xlu0
        %v6040 = vpop.trf.xlu0
        %v6041 = vpop.trf.xlu0
        %v6042 = vpop.trf.xlu0
        %v6043 = vpop.trf.xlu0
        %v6044 = vpop.trf.xlu0
        %v6045 = vpop.trf.xlu0
        %v6046 = vpop.trf.xlu0
        %v6047 = vpop.trf.xlu0
        %v6048 = vpop.trf.xlu0
        %6049 = vxpose.xlu0.b32.start [1/16] %v5661, 128
        %6050 = vxpose.xlu0.b32.cont [2/16] %v5666, 128
        %6051 = vxpose.xlu0.b32.cont [3/16] 0.0, 128
        %6052 = vxpose.xlu0.b32.cont [4/16] 0.0, 128
        %6053 = vxpose.xlu0.b32.cont [5/16] 0.0, 128
        %6054 = vxpose.xlu0.b32.cont [6/16] 0.0, 128
        %6055 = vxpose.xlu0.b32.cont [7/16] 0.0, 128
        %6056 = vxpose.xlu0.b32.cont [8/16] 0.0, 128
        %6057 = vxpose.xlu0.b32.cont [9/16] 0.0, 128
        %6058 = vxpose.xlu0.b32.cont [10/16] 0.0, 128
        %6059 = vxpose.xlu0.b32.cont [11/16] 0.0, 128
        %6060 = vxpose.xlu0.b32.cont [12/16] 0.0, 128
        %6061 = vxpose.xlu0.b32.cont [13/16] 0.0, 128
        %6062 = vxpose.xlu0.b32.cont [14/16] 0.0, 128
        %6063 = vxpose.xlu0.b32.cont [15/16] 0.0, 128
        %6064 = vxpose.xlu0.b32.end [16/16] 0.0, 128
        %v6065 = vpop.trf.xlu0
        %v6066 = vpop.trf.xlu0
        %v6067 = vpop.trf.xlu0
        %v6068 = vpop.trf.xlu0
        %v6069 = vpop.trf.xlu0
        %v6070 = vpop.trf.xlu0
        %v6071 = vpop.trf.xlu0
        %v6072 = vpop.trf.xlu0
        %v6073 = vpop.trf.xlu0
        %v6074 = vpop.trf.xlu0
        %v6075 = vpop.trf.xlu0
        %v6076 = vpop.trf.xlu0
        %v6077 = vpop.trf.xlu0
        %v6078 = vpop.trf.xlu0
        %v6079 = vpop.trf.xlu0
        %v6080 = vpop.trf.xlu0
        %6081 = vxpose.xlu0.b32.start [1/16] %v5745, 128
        %6082 = vxpose.xlu0.b32.cont [2/16] %v5750, 128
        %6083 = vxpose.xlu0.b32.cont [3/16] 0.0, 128
        %6084 = vxpose.xlu0.b32.cont [4/16] 0.0, 128
        %6085 = vxpose.xlu0.b32.cont [5/16] 0.0, 128
        %6086 = vxpose.xlu0.b32.cont [6/16] 0.0, 128
        %6087 = vxpose.xlu0.b32.cont [7/16] 0.0, 128
        %6088 = vxpose.xlu0.b32.cont [8/16] 0.0, 128
        %6089 = vxpose.xlu0.b32.cont [9/16] 0.0, 128
        %6090 = vxpose.xlu0.b32.cont [10/16] 0.0, 128
        %6091 = vxpose.xlu0.b32.cont [11/16] 0.0, 128
        %6092 = vxpose.xlu0.b32.cont [12/16] 0.0, 128
        %6093 = vxpose.xlu0.b32.cont [13/16] 0.0, 128
        %6094 = vxpose.xlu0.b32.cont [14/16] 0.0, 128
        %6095 = vxpose.xlu0.b32.cont [15/16] 0.0, 128
        %6096 = vxpose.xlu0.b32.end [16/16] 0.0, 128
        %v6097 = vpop.trf.xlu0
        %v6098 = vpop.trf.xlu0
        %v6099 = vpop.trf.xlu0
        %v6100 = vpop.trf.xlu0
        %v6101 = vpop.trf.xlu0
        %v6102 = vpop.trf.xlu0
        %v6103 = vpop.trf.xlu0
        %v6104 = vpop.trf.xlu0
        %v6105 = vpop.trf.xlu0
        %v6106 = vpop.trf.xlu0
        %v6107 = vpop.trf.xlu0
        %v6108 = vpop.trf.xlu0
        %v6109 = vpop.trf.xlu0
        %v6110 = vpop.trf.xlu0
        %v6111 = vpop.trf.xlu0
        %v6112 = vpop.trf.xlu0
        %6113 = vxpose.xlu0.b32.start [1/16] %v5829, 128
        %6114 = vxpose.xlu0.b32.cont [2/16] %v5834, 128
        %6115 = vxpose.xlu0.b32.cont [3/16] 0.0, 128
        %6116 = vxpose.xlu0.b32.cont [4/16] 0.0, 128
        %6117 = vxpose.xlu0.b32.cont [5/16] 0.0, 128
        %6118 = vxpose.xlu0.b32.cont [6/16] 0.0, 128
        %6119 = vxpose.xlu0.b32.cont [7/16] 0.0, 128
        %6120 = vxpose.xlu0.b32.cont [8/16] 0.0, 128
        %6121 = vxpose.xlu0.b32.cont [9/16] 0.0, 128
        %6122 = vxpose.xlu0.b32.cont [10/16] 0.0, 128
        %6123 = vxpose.xlu0.b32.cont [11/16] 0.0, 128
        %6124 = vxpose.xlu0.b32.cont [12/16] 0.0, 128
        %6125 = vxpose.xlu0.b32.cont [13/16] 0.0, 128
        %6126 = vxpose.xlu0.b32.cont [14/16] 0.0, 128
        %6127 = vxpose.xlu0.b32.cont [15/16] 0.0, 128
        %6128 = vxpose.xlu0.b32.end [16/16] 0.0, 128
        %v6129 = vpop.trf.xlu0
        %v6130 = vpop.trf.xlu0
        %v6131 = vpop.trf.xlu0
        %v6132 = vpop.trf.xlu0
        %v6133 = vpop.trf.xlu0
        %v6134 = vpop.trf.xlu0
        %v6135 = vpop.trf.xlu0
        %v6136 = vpop.trf.xlu0
        %v6137 = vpop.trf.xlu0
        %v6138 = vpop.trf.xlu0
        %v6139 = vpop.trf.xlu0
        %v6140 = vpop.trf.xlu0
        %v6141 = vpop.trf.xlu0
        %v6142 = vpop.trf.xlu0
        %v6143 = vpop.trf.xlu0
        %v6144 = vpop.trf.xlu0
        %6145 = vxpose.xlu0.b32.start [1/16] %v5913, 128
        %6146 = vxpose.xlu0.b32.cont [2/16] %v5918, 128
        %6147 = vxpose.xlu0.b32.cont [3/16] 0.0, 128
        %6148 = vxpose.xlu0.b32.cont [4/16] 0.0, 128
        %6149 = vxpose.xlu0.b32.cont [5/16] 0.0, 128
        %6150 = vxpose.xlu0.b32.cont [6/16] 0.0, 128
        %6151 = vxpose.xlu0.b32.cont [7/16] 0.0, 128
        %6152 = vxpose.xlu0.b32.cont [8/16] 0.0, 128
        %6153 = vxpose.xlu0.b32.cont [9/16] 0.0, 128
        %6154 = vxpose.xlu0.b32.cont [10/16] 0.0, 128
        %6155 = vxpose.xlu0.b32.cont [11/16] 0.0, 128
        %6156 = vxpose.xlu0.b32.cont [12/16] 0.0, 128
        %6157 = vxpose.xlu0.b32.cont [13/16] 0.0, 128
        %6158 = vxpose.xlu0.b32.cont [14/16] 0.0, 128
        %6159 = vxpose.xlu0.b32.cont [15/16] 0.0, 128
        %6160 = vxpose.xlu0.b32.end [16/16] 0.0, 128
        %v6161 = vpop.trf.xlu0
        %v6162 = vpop.trf.xlu0
        %v6163 = vpop.trf.xlu0
        %v6164 = vpop.trf.xlu0
        %v6165 = vpop.trf.xlu0
        %v6166 = vpop.trf.xlu0
        %v6167 = vpop.trf.xlu0
        %v6168 = vpop.trf.xlu0
        %v6169 = vpop.trf.xlu0
        %v6170 = vpop.trf.xlu0
        %v6171 = vpop.trf.xlu0
        %v6172 = vpop.trf.xlu0
        %v6173 = vpop.trf.xlu0
        %v6174 = vpop.trf.xlu0
        %v6175 = vpop.trf.xlu0
        %v6176 = vpop.trf.xlu0
        %v6177 = vcombine.low %v5937, %v6001
        %v6178 = vcombine.high %v5937, %v6001
        %v6180 = vunpack.c.l.s4 1983009808
        %v6181 = vunpack.c.0.s8 %v6180
        %v6182 = vlaneseq
        %v6183 = vshrl.u32 %v6182, 7
        %v6184 = vsub.s32 %v6181, %v6183
        %v6185 = vrot.slane %v6177, %v6184
        %v6187 = vunpack.c.l.s4 1983009808
        %v6188 = vunpack.c.0.s8 %v6187
        %v6189 = vlaneseq
        %v6190 = vshrl.u32 %v6189, 7
        %v6191 = vsub.s32 %v6188, %v6190
        %v6192 = vrot.slane %v6178, %v6191
        %v6193 = vcombine.low %v5969, %v6033
        %v6194 = vcombine.high %v5969, %v6033
        %v6196 = vunpack.c.l.s4 1983009808
        %v6197 = vunpack.c.0.s8 %v6196
        %v6198 = vlaneseq
        %v6199 = vshrl.u32 %v6198, 7
        %v6200 = vsub.s32 %v6197, %v6199
        %v6201 = vrot.slane %v6193, %v6200
        %v6203 = vunpack.c.l.s4 1983009808
        %v6204 = vunpack.c.0.s8 %v6203
        %v6205 = vlaneseq
        %v6206 = vshrl.u32 %v6205, 7
        %v6207 = vsub.s32 %v6204, %v6206
        %v6208 = vrot.slane %v6194, %v6207
        %v6209 = vcombine.low %v6065, %v6129
        %v6210 = vcombine.high %v6065, %v6129
        %v6212 = vunpack.c.l.s4 1983009808
        %v6213 = vunpack.c.0.s8 %v6212
        %v6214 = vlaneseq
        %v6215 = vshrl.u32 %v6214, 7
        %v6216 = vsub.s32 %v6213, %v6215
        %v6217 = vrot.slane %v6209, %v6216
        %v6219 = vunpack.c.l.s4 1983009808
        %v6220 = vunpack.c.0.s8 %v6219
        %v6221 = vlaneseq
        %v6222 = vshrl.u32 %v6221, 7
        %v6223 = vsub.s32 %v6220, %v6222
        %v6224 = vrot.slane %v6210, %v6223
        %v6225 = vcombine.low %v6097, %v6161
        %v6226 = vcombine.high %v6097, %v6161
        %v6228 = vunpack.c.l.s4 1983009808
        %v6229 = vunpack.c.0.s8 %v6228
        %v6230 = vlaneseq
        %v6231 = vshrl.u32 %v6230, 7
        %v6232 = vsub.s32 %v6229, %v6231
        %v6233 = vrot.slane %v6225, %v6232
        %v6235 = vunpack.c.l.s4 1983009808
        %v6236 = vunpack.c.0.s8 %v6235
        %v6237 = vlaneseq
        %v6238 = vshrl.u32 %v6237, 7
        %v6239 = vsub.s32 %v6236, %v6238
        %v6240 = vrot.slane %v6226, %v6239
        %v6241 = vcombine.low %v6185, %v6201
        %v6242 = vcombine.high %v6185, %v6201
        %v6244 = vunpack.c.l.s4 1934713408
        %v6245 = vunpack.c.0.s8 %v6244
        %v6246 = vlaneseq
        %v6247 = vshrl.u32 %v6246, 7
        %v6248 = vsub.s32 %v6245, %v6247
        %v6249 = vrot.slane %v6241, %v6248
        %v6251 = vunpack.c.l.s4 1934713408
        %v6252 = vunpack.c.0.s8 %v6251
        %v6253 = vlaneseq
        %v6254 = vshrl.u32 %v6253, 7
        %v6255 = vsub.s32 %v6252, %v6254
        %v6256 = vrot.slane %v6242, %v6255
        %v6257 = vcombine.low %v6192, %v6208
        %v6258 = vcombine.high %v6192, %v6208
        %v6260 = vunpack.c.l.s4 1934713408
        %v6261 = vunpack.c.0.s8 %v6260
        %v6262 = vlaneseq
        %v6263 = vshrl.u32 %v6262, 7
        %v6264 = vsub.s32 %v6261, %v6263
        %v6265 = vrot.slane %v6257, %v6264
        %v6267 = vunpack.c.l.s4 1934713408
        %v6268 = vunpack.c.0.s8 %v6267
        %v6269 = vlaneseq
        %v6270 = vshrl.u32 %v6269, 7
        %v6271 = vsub.s32 %v6268, %v6270
        %v6272 = vrot.slane %v6258, %v6271
        %v6273 = vcombine.low %v6217, %v6233
        %v6274 = vcombine.high %v6217, %v6233
        %v6276 = vunpack.c.l.s4 1934713408
        %v6277 = vunpack.c.0.s8 %v6276
        %v6278 = vlaneseq
        %v6279 = vshrl.u32 %v6278, 7
        %v6280 = vsub.s32 %v6277, %v6279
        %v6281 = vrot.slane %v6273, %v6280
        %v6283 = vunpack.c.l.s4 1934713408
        %v6284 = vunpack.c.0.s8 %v6283
        %v6285 = vlaneseq
        %v6286 = vshrl.u32 %v6285, 7
        %v6287 = vsub.s32 %v6284, %v6286
        %v6288 = vrot.slane %v6274, %v6287
        %v6289 = vcombine.low %v6224, %v6240
        %v6290 = vcombine.high %v6224, %v6240
        %v6292 = vunpack.c.l.s4 1934713408
        %v6293 = vunpack.c.0.s8 %v6292
        %v6294 = vlaneseq
        %v6295 = vshrl.u32 %v6294, 7
        %v6296 = vsub.s32 %v6293, %v6295
        %v6297 = vrot.slane %v6289, %v6296
        %v6299 = vunpack.c.l.s4 1934713408
        %v6300 = vunpack.c.0.s8 %v6299
        %v6301 = vlaneseq
        %v6302 = vshrl.u32 %v6301, 7
        %v6303 = vsub.s32 %v6300, %v6302
        %v6304 = vrot.slane %v6290, %v6303
        %v6305 = vcombine.low %v6249, %v6281
        %v6306 = vcombine.high %v6249, %v6281
        %v6307 = vcombine.low %v6256, %v6288
        %v6308 = vcombine.high %v6256, %v6288
        %v6309 = vcombine.low %v6265, %v6297
        %v6310 = vcombine.high %v6265, %v6297
        %v6311 = vcombine.low %v6272, %v6304
        %v6312 = vcombine.high %v6272, %v6304
        %v6313 = vcombine.low %v6305, %v6307
        %v6314 = vcombine.high %v6305, %v6307
        %v6316 = vunpack.c.l.s4 1983009808
        %v6317 = vunpack.c.0.s8 %v6316
        %v6318 = vlaneseq
        %v6319 = vshrl.u32 %v6318, 7
        %v6320 = vsub.s32 %v6317, %v6319
        %v6321 = vrot.slane %v6313, %v6320
        %v6323 = vunpack.c.l.s4 1983009808
        %v6324 = vunpack.c.0.s8 %v6323
        %v6325 = vlaneseq
        %v6326 = vshrl.u32 %v6325, 7
        %v6327 = vsub.s32 %v6324, %v6326
        %v6328 = vrot.slane %v6314, %v6327
        %v6329 = vcombine.low %v6306, %v6308
        %v6330 = vcombine.high %v6306, %v6308
        %v6332 = vunpack.c.l.s4 1983009808
        %v6333 = vunpack.c.0.s8 %v6332
        %v6334 = vlaneseq
        %v6335 = vshrl.u32 %v6334, 7
        %v6336 = vsub.s32 %v6333, %v6335
        %v6337 = vrot.slane %v6329, %v6336
        %v6339 = vunpack.c.l.s4 1983009808
        %v6340 = vunpack.c.0.s8 %v6339
        %v6341 = vlaneseq
        %v6342 = vshrl.u32 %v6341, 7
        %v6343 = vsub.s32 %v6340, %v6342
        %v6344 = vrot.slane %v6330, %v6343
        %v6345 = vcombine.low %v6309, %v6311
        %v6346 = vcombine.high %v6309, %v6311
        %v6348 = vunpack.c.l.s4 1983009808
        %v6349 = vunpack.c.0.s8 %v6348
        %v6350 = vlaneseq
        %v6351 = vshrl.u32 %v6350, 7
        %v6352 = vsub.s32 %v6349, %v6351
        %v6353 = vrot.slane %v6345, %v6352
        %v6355 = vunpack.c.l.s4 1983009808
        %v6356 = vunpack.c.0.s8 %v6355
        %v6357 = vlaneseq
        %v6358 = vshrl.u32 %v6357, 7
        %v6359 = vsub.s32 %v6356, %v6358
        %v6360 = vrot.slane %v6346, %v6359
        %v6361 = vcombine.low %v6310, %v6312
        %v6362 = vcombine.high %v6310, %v6312
        %v6364 = vunpack.c.l.s4 1983009808
        %v6365 = vunpack.c.0.s8 %v6364
        %v6366 = vlaneseq
        %v6367 = vshrl.u32 %v6366, 7
        %v6368 = vsub.s32 %v6365, %v6367
        %v6369 = vrot.slane %v6361, %v6368
        %v6371 = vunpack.c.l.s4 1983009808
        %v6372 = vunpack.c.0.s8 %v6371
        %v6373 = vlaneseq
        %v6374 = vshrl.u32 %v6373, 7
        %v6375 = vsub.s32 %v6372, %v6374
        %v6376 = vrot.slane %v6362, %v6375
        %v6377 = vcombine.low %v6321, %v6337
        %v6378 = vcombine.high %v6321, %v6337
        %v6380 = vunpack.c.l.s4 1934713408
        %v6381 = vunpack.c.0.s8 %v6380
        %v6382 = vlaneseq
        %v6383 = vshrl.u32 %v6382, 7
        %v6384 = vsub.s32 %v6381, %v6383
        %v6385 = vrot.slane %v6377, %v6384
        %v6387 = vunpack.c.l.s4 1934713408
        %v6388 = vunpack.c.0.s8 %v6387
        %v6389 = vlaneseq
        %v6390 = vshrl.u32 %v6389, 7
        %v6391 = vsub.s32 %v6388, %v6390
        %v6392 = vrot.slane %v6378, %v6391
        %v6393 = vcombine.low %v6328, %v6344
        %v6394 = vcombine.high %v6328, %v6344
        %v6396 = vunpack.c.l.s4 1934713408
        %v6397 = vunpack.c.0.s8 %v6396
        %v6398 = vlaneseq
        %v6399 = vshrl.u32 %v6398, 7
        %v6400 = vsub.s32 %v6397, %v6399
        %v6401 = vrot.slane %v6393, %v6400
        %v6403 = vunpack.c.l.s4 1934713408
        %v6404 = vunpack.c.0.s8 %v6403
        %v6405 = vlaneseq
        %v6406 = vshrl.u32 %v6405, 7
        %v6407 = vsub.s32 %v6404, %v6406
        %v6408 = vrot.slane %v6394, %v6407
        %v6409 = vcombine.low %v6353, %v6369
        %v6410 = vcombine.high %v6353, %v6369
        %v6412 = vunpack.c.l.s4 1934713408
        %v6413 = vunpack.c.0.s8 %v6412
        %v6414 = vlaneseq
        %v6415 = vshrl.u32 %v6414, 7
        %v6416 = vsub.s32 %v6413, %v6415
        %v6417 = vrot.slane %v6409, %v6416
        %v6419 = vunpack.c.l.s4 1934713408
        %v6420 = vunpack.c.0.s8 %v6419
        %v6421 = vlaneseq
        %v6422 = vshrl.u32 %v6421, 7
        %v6423 = vsub.s32 %v6420, %v6422
        %v6424 = vrot.slane %v6410, %v6423
        %v6425 = vcombine.low %v6360, %v6376
        %v6426 = vcombine.high %v6360, %v6376
        %v6428 = vunpack.c.l.s4 1934713408
        %v6429 = vunpack.c.0.s8 %v6428
        %v6430 = vlaneseq
        %v6431 = vshrl.u32 %v6430, 7
        %v6432 = vsub.s32 %v6429, %v6431
        %v6433 = vrot.slane %v6425, %v6432
        %v6435 = vunpack.c.l.s4 1934713408
        %v6436 = vunpack.c.0.s8 %v6435
        %v6437 = vlaneseq
        %v6438 = vshrl.u32 %v6437, 7
        %v6439 = vsub.s32 %v6436, %v6438
        %v6440 = vrot.slane %v6426, %v6439
        %v6441 = vcombine.low %v6385, %v6417
        %v6442 = vcombine.high %v6385, %v6417
        %v6443 = vcombine.low %v6392, %v6424
        %v6444 = vcombine.high %v6392, %v6424
        %v6445 = vcombine.low %v6401, %v6433
        %v6446 = vcombine.high %v6401, %v6433
        %v6447 = vcombine.low %v6408, %v6440
        %v6448 = vcombine.high %v6408, %v6440
        %6450 = vrot.lane.b32.xlu0 %v6442, 16
        %v6451 = vpop.permute.xlu0 %6450
        %6454 = vrot.lane.b32.xlu0 %v6443, 32
        %v6455 = vpop.permute.xlu0 %6454
        %6458 = vrot.lane.b32.xlu0 %v6444, 48
        %v6459 = vpop.permute.xlu0 %6458
        %6462 = vrot.lane.b32.xlu0 %v6445, 64
        %v6463 = vpop.permute.xlu0 %6462
        %6466 = vrot.lane.b32.xlu0 %v6446, 80
        %v6467 = vpop.permute.xlu0 %6466
        %6470 = vrot.lane.b32.xlu0 %v6447, 96
        %v6471 = vpop.permute.xlu0 %6470
        %6474 = vrot.lane.b32.xlu0 %v6448, 112
        %v6475 = vpop.permute.xlu0 %6474
        %v6477 = vsel %vm1251, %v6441, %v6451
        %v6478 = vsel %vm3410, %v6477, %v6455
        %v6479 = vsel %vm3412, %v6478, %v6459
        %v6480 = vsel %vm3414, %v6479, %v6463
        %v6481 = vsel %vm3416, %v6480, %v6467
        %v6482 = vsel %vm3418, %v6481, %v6471
        %v6483 = vsel %vm3420, %v6482, %v6475
        %s6484 = scalar_lea.vmem [#allocation7], 128
        %v6485 = vld [vmem:[%s6484] sm:$0xff]
        %v6486 = vld [vmem:[%s6484 + $0x8] sm:$0xff]
        %v6487 = vld [vmem:[%s6484 + $0x10] sm:$0xff]
        %v6488 = vld [vmem:[%s6484 + $0x18] sm:$0xff]
        %v6489 = vld [vmem:[%s6484 + $0x20] sm:$0xff]
        %v6490 = vld [vmem:[%s6484 + $0x28] sm:$0xff]
        %v6491 = vld [vmem:[%s6484 + $0x30] sm:$0xff]
        %v6492 = vld [vmem:[%s6484 + $0x38] sm:$0xff]
        %v6493 = vld [vmem:[%s6484 + $0x40] sm:$0xff]
        %v6494 = vld [vmem:[%s6484 + $0x48] sm:$0xff]
        %v6495 = vld [vmem:[%s6484 + $0x50] sm:$0xff]
        %v6496 = vld [vmem:[%s6484 + $0x58] sm:$0xff]
        %v6497 = vld [vmem:[%s6484 + $0x60] sm:$0xff]
        %v6498 = vld [vmem:[%s6484 + $0x68] sm:$0xff]
        %v6499 = vld [vmem:[%s6484 + $0x70] sm:$0xff]
        %v6500 = vld [vmem:[%s6484 + $0x78] sm:$0xff]
        %s6501 = scalar_lea.vmem %s6, 1
        %v6502 = vld [vmem:[%s6501] sm:$0x1]
        %v6504 = vlaneseq
        %v6505 = vshrl.u32 %v6504, 7
        %v6506 = vsub.s32 0, %v6505
        %v6507 = vrot.slane %v6502, %v6506
        %6509 = vmatprep.subr.mxu0 0.0
        %6510 = vmatpush1.msra.mxu0 %v6485
        %6511 = vmatprep.subr.mxu0 0.0
        %6512 = vmatpush1.msra.mxu0 %v6486
        %6513 = vmatprep.subr.mxu0 0.0
        %6514 = vmatpush1.msra.mxu0 %v6487
        %6515 = vmatprep.subr.mxu0 0.0
        %6516 = vmatpush1.msra.mxu0 %v6488
        %6517 = vmatprep.subr.mxu0 0.0
        %6518 = vmatpush1.msra.mxu0 %v6489
        %6519 = vmatprep.subr.mxu0 0.0
        %6520 = vmatpush1.msra.mxu0 %v6490
        %6521 = vmatprep.subr.mxu0 0.0
        %6522 = vmatpush1.msra.mxu0 %v6491
        %6523 = vmatprep.subr.mxu0 0.0
        %6524 = vmatpush1.msra.mxu0 %v6492
        %6525 = vmatprep.subr.mxu0 0.0
        %6526 = vmatpush1.msra.mxu0 %v6493
        %6527 = vmatprep.subr.mxu0 0.0
        %6528 = vmatpush1.msra.mxu0 %v6494
        %6529 = vmatprep.subr.mxu0 0.0
        %6530 = vmatpush1.msra.mxu0 %v6495
        %6531 = vmatprep.subr.mxu0 0.0
        %6532 = vmatpush1.msra.mxu0 %v6496
        %6533 = vmatprep.subr.mxu0 0.0
        %6534 = vmatpush1.msra.mxu0 %v6497
        %6535 = vmatprep.subr.mxu0 0.0
        %6536 = vmatpush1.msra.mxu0 %v6498
        %6537 = vmatprep.subr.mxu0 0.0
        %6538 = vmatpush1.msra.mxu0 %v6499
        %6539 = vmatprep.subr.mxu0 0.0
        %6540 = vmatpush1.msra.mxu0 %v6500
        %6541 = vmatprep.subr.mxu0 0.0
        %6542 = vmatpush1.msra.mxu0 0.0
        %6543 = vmatprep.subr.mxu0 0.0
        %6544 = vmatpush1.msra.mxu0 0.0
        %6545 = vmatprep.subr.mxu0 0.0
        %6546 = vmatpush1.msra.mxu0 0.0
        %6547 = vmatprep.subr.mxu0 0.0
        %6548 = vmatpush1.msra.mxu0 0.0
        %6549 = vmatprep.subr.mxu0 0.0
        %6550 = vmatpush1.msra.mxu0 0.0
        %6551 = vmatprep.subr.mxu0 0.0
        %6552 = vmatpush1.msra.mxu0 0.0
        %6553 = vmatprep.subr.mxu0 0.0
        %6554 = vmatpush1.msra.mxu0 0.0
        %6555 = vmatprep.subr.mxu0 0.0
        %6556 = vmatpush1.msra.mxu0 0.0
        %6557 = vmatprep.subr.mxu0 0.0
        %6558 = vmatpush1.msra.mxu0 0.0
        %6559 = vmatprep.subr.mxu0 0.0
        %6560 = vmatpush1.msra.mxu0 0.0
        %6561 = vmatprep.subr.mxu0 0.0
        %6562 = vmatpush1.msra.mxu0 0.0
        %6563 = vmatprep.subr.mxu0 0.0
        %6564 = vmatpush1.msra.mxu0 0.0
        %6565 = vmatprep.subr.mxu0 0.0
        %6566 = vmatpush1.msra.mxu0 0.0
        %6567 = vmatprep.subr.mxu0 0.0
        %6568 = vmatpush1.msra.mxu0 0.0
        %6569 = vmatprep.subr.mxu0 0.0
        %6570 = vmatpush1.msra.mxu0 0.0
        %6571 = vmatprep.subr.mxu0 0.0
        %6572 = vmatpush1.msra.mxu0 0.0
        %6573 = vmatprep.mubr.f32.mxu0 0.0
        %6574 = vmatmul.mubr.f32.gmra.mrb[0].mxu0 %v6483
        %v6575 = vpop.f32.mrb[0].mxu0
        %v6576 = vadd.f32 %v6507, %v6575
        %v6577 = vpop.f32.mrb[0].mxu0
        %6578 = vdwg.mxu0
        %v6579 = vadd.f32 %v3797, %v6576
        %s6580 = scalar_lea.vmem %s7, 1
        %v6581 = vld [vmem:[%s6580] sm:$0x1]
        %s6582 = scalar_lea.vmem %s8, 1
        %v6583 = vld [vmem:[%s6582] sm:$0x1]
        %6584 = vadd.xlane.f32.xlu0 %v6579
        %v6585 = vpop.xlane.xlu0 %6584
        %v6586 = vmul.f32 %v6585, %v3520
        %v6587 = vsub.f32 %v6579, %v6586
        %v6588 = vmul.f32 %v6587, %v6587
        %6589 = vadd.xlane.f32.xlu0 %v6588
        %v6590 = vpop.xlane.xlu0 %6589
        %v6591 = vmul.f32 %v6590, %v3520
        %v6592 = vadd.f32 %v6591, 1e-05
        %v6593 = vrsqrt.pop %v6592
        %v6594 = vmul.f32 %v6587, %v6593
        %v6596 = vlaneseq
        %v6597 = vshrl.u32 %v6596, 7
        %v6598 = vsub.s32 0, %v6597
        %v6599 = vrot.slane %v6581, %v6598
        %v6601 = vmul.f32 %v6594, %v6599
        %v6603 = vlaneseq
        %v6604 = vshrl.u32 %v6603, 7
        %v6605 = vsub.s32 0, %v6604
        %v6606 = vrot.slane %v6583, %v6605
        %v6608 = vadd.f32 %v6601, %v6606
        %s6609 = scalar_lea.vmem [#allocation8], 256
        %v6610 = vld [vmem:[%s6609] sm:$0xff]
        %v6611 = vld [vmem:[%s6609 + $0x8] sm:$0xff]
        %v6612 = vld [vmem:[%s6609 + $0x10] sm:$0xff]
        %v6613 = vld [vmem:[%s6609 + $0x18] sm:$0xff]
        %v6614 = vld [vmem:[%s6609 + $0x20] sm:$0xff]
        %v6615 = vld [vmem:[%s6609 + $0x28] sm:$0xff]
        %v6616 = vld [vmem:[%s6609 + $0x30] sm:$0xff]
        %v6617 = vld [vmem:[%s6609 + $0x38] sm:$0xff]
        %v6618 = vld [vmem:[%s6609 + $0x40] sm:$0xff]
        %v6619 = vld [vmem:[%s6609 + $0x48] sm:$0xff]
        %v6620 = vld [vmem:[%s6609 + $0x50] sm:$0xff]
        %v6621 = vld [vmem:[%s6609 + $0x58] sm:$0xff]
        %v6622 = vld [vmem:[%s6609 + $0x60] sm:$0xff]
        %v6623 = vld [vmem:[%s6609 + $0x68] sm:$0xff]
        %v6624 = vld [vmem:[%s6609 + $0x70] sm:$0xff]
        %v6625 = vld [vmem:[%s6609 + $0x78] sm:$0xff]
        %v6626 = vld [vmem:[%s6609 + $0x80] sm:$0xff]
        %v6627 = vld [vmem:[%s6609 + $0x88] sm:$0xff]
        %v6628 = vld [vmem:[%s6609 + $0x90] sm:$0xff]
        %v6629 = vld [vmem:[%s6609 + $0x98] sm:$0xff]
        %v6630 = vld [vmem:[%s6609 + $0xa0] sm:$0xff]
        %v6631 = vld [vmem:[%s6609 + $0xa8] sm:$0xff]
        %v6632 = vld [vmem:[%s6609 + $0xb0] sm:$0xff]
        %v6633 = vld [vmem:[%s6609 + $0xb8] sm:$0xff]
        %v6634 = vld [vmem:[%s6609 + $0xc0] sm:$0xff]
        %v6635 = vld [vmem:[%s6609 + $0xc8] sm:$0xff]
        %v6636 = vld [vmem:[%s6609 + $0xd0] sm:$0xff]
        %v6637 = vld [vmem:[%s6609 + $0xd8] sm:$0xff]
        %v6638 = vld [vmem:[%s6609 + $0xe0] sm:$0xff]
        %v6639 = vld [vmem:[%s6609 + $0xe8] sm:$0xff]
        %v6640 = vld [vmem:[%s6609 + $0xf0] sm:$0xff]
        %v6641 = vld [vmem:[%s6609 + $0xf8] sm:$0xff]
        %s6642 = scalar_lea.vmem %s10, 2
        %v6643 = vld [vmem:[%s6642] sm:$0x3]
        %v6645 = vlaneseq
        %v6646 = vshrl.u32 %v6645, 7
        %v6647 = vsub.s32 0, %v6646
        %v6648 = vrot.slane %v6643, %v6647
        %v6649 = vlaneseq
        %v6650 = vshrl.u32 %v6649, 7
        %v6651 = vsub.s32 1, %v6650
        %v6652 = vrot.slane %v6643, %v6651
        %6655 = vmatprep.subr.mxu0 %v6611
        %6656 = vmatpush1.msra.mxu0 %v6610
        %6657 = vmatprep.subr.mxu0 %v6613
        %6658 = vmatpush1.msra.mxu0 %v6612
        %6659 = vmatprep.subr.mxu0 %v6615
        %6660 = vmatpush1.msra.mxu0 %v6614
        %6661 = vmatprep.subr.mxu0 %v6617
        %6662 = vmatpush1.msra.mxu0 %v6616
        %6663 = vmatprep.subr.mxu0 %v6619
        %6664 = vmatpush1.msra.mxu0 %v6618
        %6665 = vmatprep.subr.mxu0 %v6621
        %6666 = vmatpush1.msra.mxu0 %v6620
        %6667 = vmatprep.subr.mxu0 %v6623
        %6668 = vmatpush1.msra.mxu0 %v6622
        %6669 = vmatprep.subr.mxu0 %v6625
        %6670 = vmatpush1.msra.mxu0 %v6624
        %6671 = vmatprep.subr.mxu0 %v6627
        %6672 = vmatpush1.msra.mxu0 %v6626
        %6673 = vmatprep.subr.mxu0 %v6629
        %6674 = vmatpush1.msra.mxu0 %v6628
        %6675 = vmatprep.subr.mxu0 %v6631
        %6676 = vmatpush1.msra.mxu0 %v6630
        %6677 = vmatprep.subr.mxu0 %v6633
        %6678 = vmatpush1.msra.mxu0 %v6632
        %6679 = vmatprep.subr.mxu0 %v6635
        %6680 = vmatpush1.msra.mxu0 %v6634
        %6681 = vmatprep.subr.mxu0 %v6637
        %6682 = vmatpush1.msra.mxu0 %v6636
        %6683 = vmatprep.subr.mxu0 %v6639
        %6684 = vmatpush1.msra.mxu0 %v6638
        %6685 = vmatprep.subr.mxu0 %v6641
        %6686 = vmatpush1.msra.mxu0 %v6640
        %6687 = vmatprep.subr.mxu0 0.0
        %6688 = vmatpush1.msra.mxu0 0.0
        %6689 = vmatprep.subr.mxu0 0.0
        %6690 = vmatpush1.msra.mxu0 0.0
        %6691 = vmatprep.subr.mxu0 0.0
        %6692 = vmatpush1.msra.mxu0 0.0
        %6693 = vmatprep.subr.mxu0 0.0
        %6694 = vmatpush1.msra.mxu0 0.0
        %6695 = vmatprep.subr.mxu0 0.0
        %6696 = vmatpush1.msra.mxu0 0.0
        %6697 = vmatprep.subr.mxu0 0.0
        %6698 = vmatpush1.msra.mxu0 0.0
        %6699 = vmatprep.subr.mxu0 0.0
        %6700 = vmatpush1.msra.mxu0 0.0
        %6701 = vmatprep.subr.mxu0 0.0
        %6702 = vmatpush1.msra.mxu0 0.0
        %6703 = vmatprep.subr.mxu0 0.0
        %6704 = vmatpush1.msra.mxu0 0.0
        %6705 = vmatprep.subr.mxu0 0.0
        %6706 = vmatpush1.msra.mxu0 0.0
        %6707 = vmatprep.subr.mxu0 0.0
        %6708 = vmatpush1.msra.mxu0 0.0
        %6709 = vmatprep.subr.mxu0 0.0
        %6710 = vmatpush1.msra.mxu0 0.0
        %6711 = vmatprep.subr.mxu0 0.0
        %6712 = vmatpush1.msra.mxu0 0.0
        %6713 = vmatprep.subr.mxu0 0.0
        %6714 = vmatpush1.msra.mxu0 0.0
        %6715 = vmatprep.subr.mxu0 0.0
        %6716 = vmatpush1.msra.mxu0 0.0
        %6717 = vmatprep.subr.mxu0 0.0
        %6718 = vmatpush1.msra.mxu0 0.0
        %6719 = vmatprep.mubr.f32.mxu0 0.0
        %6720 = vmatmul.mubr.f32.gmra.mrb[0].mxu0 %v6608
        %v6721 = vpop.f32.mrb[0].mxu0
        %v6722 = vadd.f32 %v6648, %v6721
        %v6723 = vpop.f32.mrb[0].mxu0
        %v6724 = vadd.f32 %v6652, %v6723
        %6725 = vdwg.mxu0
        %v6726 = vmax.f32 %v6722, 0.0
        %v6727 = vmax.f32 %v6724, 0.0
        %s6728 = scalar_lea.vmem [#allocation10], 256
        %v6729 = vld [vmem:[%s6728] sm:$0xff]
        %v6730 = vld [vmem:[%s6728 + $0x8] sm:$0xff]
        %v6731 = vld [vmem:[%s6728 + $0x10] sm:$0xff]
        %v6732 = vld [vmem:[%s6728 + $0x18] sm:$0xff]
        %v6733 = vld [vmem:[%s6728 + $0x20] sm:$0xff]
        %v6734 = vld [vmem:[%s6728 + $0x28] sm:$0xff]
        %v6735 = vld [vmem:[%s6728 + $0x30] sm:$0xff]
        %v6736 = vld [vmem:[%s6728 + $0x38] sm:$0xff]
        %v6737 = vld [vmem:[%s6728 + $0x40] sm:$0xff]
        %v6738 = vld [vmem:[%s6728 + $0x48] sm:$0xff]
        %v6739 = vld [vmem:[%s6728 + $0x50] sm:$0xff]
        %v6740 = vld [vmem:[%s6728 + $0x58] sm:$0xff]
        %v6741 = vld [vmem:[%s6728 + $0x60] sm:$0xff]
        %v6742 = vld [vmem:[%s6728 + $0x68] sm:$0xff]
        %v6743 = vld [vmem:[%s6728 + $0x70] sm:$0xff]
        %v6744 = vld [vmem:[%s6728 + $0x78] sm:$0xff]
        %v6745 = vld [vmem:[%s6728 + $0x80] sm:$0xff]
        %v6746 = vld [vmem:[%s6728 + $0x88] sm:$0xff]
        %v6747 = vld [vmem:[%s6728 + $0x90] sm:$0xff]
        %v6748 = vld [vmem:[%s6728 + $0x98] sm:$0xff]
        %v6749 = vld [vmem:[%s6728 + $0xa0] sm:$0xff]
        %v6750 = vld [vmem:[%s6728 + $0xa8] sm:$0xff]
        %v6751 = vld [vmem:[%s6728 + $0xb0] sm:$0xff]
        %v6752 = vld [vmem:[%s6728 + $0xb8] sm:$0xff]
        %v6753 = vld [vmem:[%s6728 + $0xc0] sm:$0xff]
        %v6754 = vld [vmem:[%s6728 + $0xc8] sm:$0xff]
        %v6755 = vld [vmem:[%s6728 + $0xd0] sm:$0xff]
        %v6756 = vld [vmem:[%s6728 + $0xd8] sm:$0xff]
        %v6757 = vld [vmem:[%s6728 + $0xe0] sm:$0xff]
        %v6758 = vld [vmem:[%s6728 + $0xe8] sm:$0xff]
        %v6759 = vld [vmem:[%s6728 + $0xf0] sm:$0xff]
        %v6760 = vld [vmem:[%s6728 + $0xf8] sm:$0xff]
        %s6761 = scalar_lea.vmem %s12, 1
        %v6762 = vld [vmem:[%s6761] sm:$0x1]
        %v6764 = vlaneseq
        %v6765 = vshrl.u32 %v6764, 7
        %v6766 = vsub.s32 0, %v6765
        %v6767 = vrot.slane %v6762, %v6766
        %6769 = vmatprep.subr.mxu0 0.0
        %6770 = vmatpush1.msra.mxu0 %v6729
        %6771 = vmatprep.subr.mxu0 0.0
        %6772 = vmatpush1.msra.mxu0 %v6730
        %6773 = vmatprep.subr.mxu0 0.0
        %6774 = vmatpush1.msra.mxu0 %v6731
        %6775 = vmatprep.subr.mxu0 0.0
        %6776 = vmatpush1.msra.mxu0 %v6732
        %6777 = vmatprep.subr.mxu0 0.0
        %6778 = vmatpush1.msra.mxu0 %v6733
        %6779 = vmatprep.subr.mxu0 0.0
        %6780 = vmatpush1.msra.mxu0 %v6734
        %6781 = vmatprep.subr.mxu0 0.0
        %6782 = vmatpush1.msra.mxu0 %v6735
        %6783 = vmatprep.subr.mxu0 0.0
        %6784 = vmatpush1.msra.mxu0 %v6736
        %6785 = vmatprep.subr.mxu0 0.0
        %6786 = vmatpush1.msra.mxu0 %v6737
        %6787 = vmatprep.subr.mxu0 0.0
        %6788 = vmatpush1.msra.mxu0 %v6738
        %6789 = vmatprep.subr.mxu0 0.0
        %6790 = vmatpush1.msra.mxu0 %v6739
        %6791 = vmatprep.subr.mxu0 0.0
        %6792 = vmatpush1.msra.mxu0 %v6740
        %6793 = vmatprep.subr.mxu0 0.0
        %6794 = vmatpush1.msra.mxu0 %v6741
        %6795 = vmatprep.subr.mxu0 0.0
        %6796 = vmatpush1.msra.mxu0 %v6742
        %6797 = vmatprep.subr.mxu0 0.0
        %6798 = vmatpush1.msra.mxu0 %v6743
        %6799 = vmatprep.subr.mxu0 0.0
        %6800 = vmatpush1.msra.mxu0 %v6744
        %6801 = vmatprep.subr.mxu0 0.0
        %6802 = vmatpush1.msra.mxu0 %v6745
        %6803 = vmatprep.subr.mxu0 0.0
        %6804 = vmatpush1.msra.mxu0 %v6746
        %6805 = vmatprep.subr.mxu0 0.0
        %6806 = vmatpush1.msra.mxu0 %v6747
        %6807 = vmatprep.subr.mxu0 0.0
        %6808 = vmatpush1.msra.mxu0 %v6748
        %6809 = vmatprep.subr.mxu0 0.0
        %6810 = vmatpush1.msra.mxu0 %v6749
        %6811 = vmatprep.subr.mxu0 0.0
        %6812 = vmatpush1.msra.mxu0 %v6750
        %6813 = vmatprep.subr.mxu0 0.0
        %6814 = vmatpush1.msra.mxu0 %v6751
        %6815 = vmatprep.subr.mxu0 0.0
        %6816 = vmatpush1.msra.mxu0 %v6752
        %6817 = vmatprep.subr.mxu0 0.0
        %6818 = vmatpush1.msra.mxu0 %v6753
        %6819 = vmatprep.subr.mxu0 0.0
        %6820 = vmatpush1.msra.mxu0 %v6754
        %6821 = vmatprep.subr.mxu0 0.0
        %6822 = vmatpush1.msra.mxu0 %v6755
        %6823 = vmatprep.subr.mxu0 0.0
        %6824 = vmatpush1.msra.mxu0 %v6756
        %6825 = vmatprep.subr.mxu0 0.0
        %6826 = vmatpush1.msra.mxu0 %v6757
        %6827 = vmatprep.subr.mxu0 0.0
        %6828 = vmatpush1.msra.mxu0 %v6758
        %6829 = vmatprep.subr.mxu0 0.0
        %6830 = vmatpush1.msra.mxu0 %v6759
        %6831 = vmatprep.subr.mxu0 0.0
        %6832 = vmatpush1.msra.mxu0 %v6760
        %6833 = vmatprep.mubr.f32.mxu0 %v6727
        %6834 = vmatmul.mubr.f32.gmra.mrb[0].mxu0 %v6726
        %v6835 = vpop.f32.mrb[0].mxu0
        %v6836 = vadd.f32 %v6767, %v6835
        %v6837 = vpop.f32.mrb[0].mxu0
        %6838 = vdwg.mxu0
        %v6839 = vadd.f32 %v6608, %v6836
        %s6840 = scalar_lea.vmem %s13, 1
        %v6841 = vld [vmem:[%s6840] sm:$0x1]
        %s6842 = scalar_lea.vmem %s14, 1
        %v6843 = vld [vmem:[%s6842] sm:$0x1]
        %6844 = vadd.xlane.f32.xlu0 %v6839
        %v6845 = vpop.xlane.xlu0 %6844
        %v6846 = vmul.f32 %v6845, %v3520
        %v6847 = vsub.f32 %v6839, %v6846
        %v6848 = vmul.f32 %v6847, %v6847
        %6849 = vadd.xlane.f32.xlu0 %v6848
        %v6850 = vpop.xlane.xlu0 %6849
        %v6851 = vmul.f32 %v6850, %v3520
        %v6852 = vadd.f32 %v6851, 1e-05
        %v6853 = vrsqrt.pop %v6852
        %v6854 = vmul.f32 %v6847, %v6853
        %v6856 = vlaneseq
        %v6857 = vshrl.u32 %v6856, 7
        %v6858 = vsub.s32 0, %v6857
        %v6859 = vrot.slane %v6841, %v6858
        %v6861 = vmul.f32 %v6854, %v6859
        %v6863 = vlaneseq
        %v6864 = vshrl.u32 %v6863, 7
        %v6865 = vsub.s32 0, %v6864
        %v6866 = vrot.slane %v6843, %v6865
        %v6868 = vadd.f32 %v6861, %v6866
        %v6869 = vld [vmem:[#allocation11] sm:$0xff]
        %v6870 = vld [vmem:[#allocation11 + $0x8] sm:$0xff]
        %v6871 = vld [vmem:[#allocation11 + $0x10] sm:$0xff]
        %v6872 = vld [vmem:[#allocation11 + $0x18] sm:$0xff]
        %v6873 = vld [vmem:[#allocation11 + $0x20] sm:$0xff]
        %v6874 = vld [vmem:[#allocation11 + $0x28] sm:$0xff]
        %v6875 = vld [vmem:[#allocation11 + $0x30] sm:$0xff]
        %v6876 = vld [vmem:[#allocation11 + $0x38] sm:$0xff]
        %v6877 = vld [vmem:[#allocation11 + $0x40] sm:$0xff]
        %v6878 = vld [vmem:[#allocation11 + $0x48] sm:$0xff]
        %v6879 = vld [vmem:[#allocation11 + $0x50] sm:$0xff]
        %v6880 = vld [vmem:[#allocation11 + $0x58] sm:$0xff]
        %v6881 = vld [vmem:[#allocation11 + $0x60] sm:$0xff]
        %v6882 = vld [vmem:[#allocation11 + $0x68] sm:$0xff]
        %v6883 = vld [vmem:[#allocation11 + $0x70] sm:$0xff]
        %v6884 = vld [vmem:[#allocation11 + $0x78] sm:$0xff]
        %v6885 = vld [vmem:[%s16] sm:$0x1]
        %v6887 = vlaneseq
        %v6888 = vshrl.u32 %v6887, 7
        %v6889 = vsub.s32 0, %v6888
        %v6890 = vrot.slane %v6885, %v6889
        %6892 = vmatprep.subr.mxu0 0.0
        %6893 = vmatpush1.msra.mxu0 %v6869
        %6894 = vmatprep.subr.mxu0 0.0
        %6895 = vmatpush1.msra.mxu0 %v6870
        %6896 = vmatprep.subr.mxu0 0.0
        %6897 = vmatpush1.msra.mxu0 %v6871
        %6898 = vmatprep.subr.mxu0 0.0
        %6899 = vmatpush1.msra.mxu0 %v6872
        %6900 = vmatprep.subr.mxu0 0.0
        %6901 = vmatpush1.msra.mxu0 %v6873
        %6902 = vmatprep.subr.mxu0 0.0
        %6903 = vmatpush1.msra.mxu0 %v6874
        %6904 = vmatprep.subr.mxu0 0.0
        %6905 = vmatpush1.msra.mxu0 %v6875
        %6906 = vmatprep.subr.mxu0 0.0
        %6907 = vmatpush1.msra.mxu0 %v6876
        %6908 = vmatprep.subr.mxu0 0.0
        %6909 = vmatpush1.msra.mxu0 %v6877
        %6910 = vmatprep.subr.mxu0 0.0
        %6911 = vmatpush1.msra.mxu0 %v6878
        %6912 = vmatprep.subr.mxu0 0.0
        %6913 = vmatpush1.msra.mxu0 %v6879
        %6914 = vmatprep.subr.mxu0 0.0
        %6915 = vmatpush1.msra.mxu0 %v6880
        %6916 = vmatprep.subr.mxu0 0.0
        %6917 = vmatpush1.msra.mxu0 %v6881
        %6918 = vmatprep.subr.mxu0 0.0
        %6919 = vmatpush1.msra.mxu0 %v6882
        %6920 = vmatprep.subr.mxu0 0.0
        %6921 = vmatpush1.msra.mxu0 %v6883
        %6922 = vmatprep.subr.mxu0 0.0
        %6923 = vmatpush1.msra.mxu0 %v6884
        %6924 = vmatprep.subr.mxu0 0.0
        %6925 = vmatpush1.msra.mxu0 0.0
        %6926 = vmatprep.subr.mxu0 0.0
        %6927 = vmatpush1.msra.mxu0 0.0
        %6928 = vmatprep.subr.mxu0 0.0
        %6929 = vmatpush1.msra.mxu0 0.0
        %6930 = vmatprep.subr.mxu0 0.0
        %6931 = vmatpush1.msra.mxu0 0.0
        %6932 = vmatprep.subr.mxu0 0.0
        %6933 = vmatpush1.msra.mxu0 0.0
        %6934 = vmatprep.subr.mxu0 0.0
        %6935 = vmatpush1.msra.mxu0 0.0
        %6936 = vmatprep.subr.mxu0 0.0
        %6937 = vmatpush1.msra.mxu0 0.0
        %6938 = vmatprep.subr.mxu0 0.0
        %6939 = vmatpush1.msra.mxu0 0.0
        %6940 = vmatprep.subr.mxu0 0.0
        %6941 = vmatpush1.msra.mxu0 0.0
        %6942 = vmatprep.subr.mxu0 0.0
        %6943 = vmatpush1.msra.mxu0 0.0
        %6944 = vmatprep.subr.mxu0 0.0
        %6945 = vmatpush1.msra.mxu0 0.0
        %6946 = vmatprep.subr.mxu0 0.0
        %6947 = vmatpush1.msra.mxu0 0.0
        %6948 = vmatprep.subr.mxu0 0.0
        %6949 = vmatpush1.msra.mxu0 0.0
        %6950 = vmatprep.subr.mxu0 0.0
        %6951 = vmatpush1.msra.mxu0 0.0
        %6952 = vmatprep.subr.mxu0 0.0
        %6953 = vmatpush1.msra.mxu0 0.0
        %6954 = vmatprep.subr.mxu0 0.0
        %6955 = vmatpush1.msra.mxu0 0.0
        %6956 = vmatprep.mubr.f32.mxu0 0.0
        %6957 = vmatmul.mubr.f32.gmra.mrb[0].mxu0 %v6868
        %v6958 = vpop.f32.mrb[0].mxu0
        %v6959 = vadd.f32 %v6890, %v6958
        %v6960 = vpop.f32.mrb[0].mxu0
        %6961 = vdwg.mxu0
        %6962 = vst [vmem:[%s627] sm:$0xff] %v6959
        %s6963 = sand.u32 %s405, 1
        %s6964 = scalar_lea.sflag [#allocation4], %s6963
        %s6965 = sand.u32 %s405, 1
        %s6966 = smul.addr %s6965, 8
        %s6967 = scalar_lea.vmem [#allocation13], %s6966
        // Predicated region
        $region113: #{transformer_forward.1} parent=87 // pred_check
          %p6968 = pneg %p415
        $region114: #{transformer_forward.1} parent=87 // pred_check_branch
          %6970 = sbr.rel (%p6968) target = $region116
        $region115: #{transformer_forward.1} parent=87 // pred_region
          %s6972 = ssub.s32 128, 128
          %6973 = vsyncadd %s6964, %s6972
          %s6974 = smul.addr %s35, 128
          %s6975 = scalar_lea.hbm %s17, %s6974
          %s6977 = sshll.u32 %s6967, 4
          %s6978 = int_to_ptr.vmem [resolvable:$true] %s6977
          %6980 = dma.vmem_to_hbm [thread:$0]  %s6978, 128, %s6975, %s6964
        $region116: #{transformer_forward.1} parent=87 // pred_fallthru
          _
      $region88: #{transformer_forward.1} parent=5 // pred_fallthru
        _
      %p6981 = scmp.le.s32.totalorder 2, %s30
      // Predicated region
      $region117: #{transformer_forward.1} parent=5 // pred_check
        %p6982 = pneg %p6981
      $region118: #{transformer_forward.1} parent=5 // pred_check_branch
        %6984 = sbr.rel (%p6982) target = $region120
      $region119: #{transformer_forward.1} parent=5 // pred_region
        %s6985 = ssub.s32 %s30, 2
        // Predicated region
        $region121: #{transformer_forward.1} parent=119 // pred_check
          %p6986 = pneg %p421
        $region122: #{transformer_forward.1} parent=119 // pred_check_branch
          %6988 = sbr.rel (%p6986) target = $region124
        $region123: #{transformer_forward.1} parent=119 // pred_region
          %s6989 = sand.u32 %s406, 1
          %s6990 = scalar_lea.sflag [#allocation4], %s6989
          %s6991 = sand.u32 %s406, 1
          %s6992 = smul.addr %s6991, 8
          %s6993 = scalar_lea.vmem [#allocation13], %s6992
          %6994 = dma.done %s6990, 128
        $region124: #{transformer_forward.1} parent=119 // pred_fallthru
          _
      $region120: #{transformer_forward.1} parent=5 // pred_fallthru
        _
    $region6: #{transformer_forward.1} parent=1 // loop_footer
      %s34 = sadd.s32 1, %s30
    $region7: #{transformer_forward.1} parent=1 // loop_footer_branch
      %29 = sbr.rel target = $region3
    $region8: #{transformer_forward.1} parent=1 // loop_exit
      _
    %6995 = vsyncpa [#allocation3], 1
    %s6996 = scalar_lea.sflag [#allocation3], 1
    %6997 = vsyncpa %s6996, 1
    %6998 = vsyncpa [#allocation6], 1
    %6999 = vsyncpa [#allocation9], 1
    %7000 = vsyncpa [#allocation12], 1
    %7001 = vsyncpa [#allocation4], 1
    %s7002 = scalar_lea.sflag [#allocation4], 1
    %7003 = vsyncpa %s7002, 1

</llo_original>
